<compile_context>
chip_gen: v5e
topology: v5e:2x2
jax: 0.10.0
libtpu: 0.0.40
codegen_flags: <defaults>
</compile_context>

<pallas_src>
import functools

import jax
import jax.numpy as jnp
from jax.experimental import pallas as pl
from jax.experimental.pallas import tpu as pltpu

FEA_DIM = 768          # fea_dim in the PyTorch module
OUT_DIM = 3            # final Linear(fea_dim, 3)
OUT_PAD = 128          # lane-padded output width (sliced back to 3 after)
PATCH = 16             # stand-in backbone patch/stride
EPS = 1e-6             # GeM eps
LEAKY_SLOPE = 0.01     # nn.LeakyReLU default negative_slope
TB_MAX = 64            # max samples per grid step


def _sag_gem_kernel(patches_ref, wstem_ref, bstem_ref,
                    w1_ref, b1_ref, w2_ref, b2_ref, out_ref,
                    *, num_patches, p):
    rows, _ = patches_ref.shape                  # (TB*num_patches, din) bf16
    tb = rows // num_patches

    # --- stem "conv" (patchify linear projection): bf16 MXU, f32 accumulate ---
    feat = jnp.dot(patches_ref[...], wstem_ref[...],
                   preferred_element_type=jnp.float32) + bstem_ref[...]
    # feat: (TB*num_patches, FEA_DIM) f32

    # --- GeM pooling: (mean over spatial of clamp(x, eps)^p)^(1/p), f32 VPU ---
    # The EPS clamp keeps log() safe on the generic-p path and keeps the
    # zero-padded samples finite (their output rows are discarded anyway).
    clamped = jnp.maximum(feat, EPS)
    if p == 3.0:
        # p == 3 fast path (trace-time constant): two VPU multiplies instead
        # of exp/log over the full pre-pool tensor through the one EUP slot.
        powed = clamped * clamped * clamped
    else:
        powed = jnp.exp(p * jnp.log(clamped))            # x^p, generic p
    pooled = jnp.mean(powed.reshape(tb, num_patches, FEA_DIM), axis=1)
    # Post-pool 1/p root only touches (TB, 768); pooled >= EPS^p > 0.
    pooled = jnp.exp(jnp.log(pooled) * (1.0 / p))

    # Dropout(0.1) is identity at inference time.

    # --- head: Linear(768,768) -> LeakyReLU -> Linear(768, 3 padded to 128) ---
    h1 = jnp.dot(pooled.astype(jnp.bfloat16), w1_ref[...],
                 preferred_element_type=jnp.float32) + b1_ref[...]
    h1 = jnp.where(h1 > 0, h1, LEAKY_SLOPE * h1)
    out = jnp.dot(h1.astype(jnp.bfloat16), w2_ref[...],
                  preferred_element_type=jnp.float32) + b2_ref[...]   # (TB, OUT_PAD)

    out_ref[...] = out


def _pick_tb(n):
    """Samples per grid step: multiple of 8 (keeps the (tb, 128) output block
    sublane-aligned), capped at TB_MAX, and aiming for >= 4 grid steps when n
    is large enough so both v7x TensorCores get >= 2 steps each."""
    tb = 8 * max(1, n // 32)
    return min(TB_MAX, tb)


def sag_model_25d_gem2_forward(x, cond, params):
    """Pallas forward. x: (b, k, d, h, w), cond: unused (as in PyTorch)."""
    del cond  # `cond` is never used in the reference forward
    b, k, d, h, w = x.shape
    assert h % PATCH == 0 and w % PATCH == 0, "spatial dims must be multiples of the stem stride"
    n = b * k
    hp, wp = h // PATCH, w // PATCH
    num_patches = hp * wp
    din = PATCH * PATCH * d

    tb = _pick_tb(n)
    n_pad = pl.cdiv(n, tb) * tb
    rows = tb * num_patches

    # Single wrapper-side rearrange: (n, d, h, w) f32 -> (n*np, din) bf16 patch
    # matrix with din in (c, dy, dx) order.  W_stem rows use the same order, so
    # the old NCHW->NHWC transpose is folded into the weight layout; the
    # (b,k)->n merge and the patch split/merge reshapes are free metadata ops,
    # leaving one transpose-copy (cast fused) plus an optional small pad.
    xi = x.astype(jnp.bfloat16).reshape(n, d, hp, PATCH, wp, PATCH)
    patches = xi.transpose(0, 2, 4, 1, 3, 5).reshape(n, num_patches, din)
    if n_pad != n:
        # Padded samples are all-zero -> stem bias -> clamp(eps) -> finite;
        # their rows are sliced off below (the EPS clamp matters here).
        patches = jnp.pad(patches, ((0, n_pad - n), (0, 0), (0, 0)))
    patches = patches.reshape(n_pad * num_patches, din)

    # GeM p is a learnable scalar; bake it as a trace-time constant so the
    # kernel can pick the p==3 cube fast path (no SMEM scalar operand).
    p_val = float(params["p"][0])

    # bf16 weights for the MXU; biases stay f32. Pad W2/b2 to lane-dense 128.
    w_stem = params["w_stem"].astype(jnp.bfloat16)
    w1 = params["w1"].astype(jnp.bfloat16)
    w2 = jnp.pad(params["w2"], ((0, 0), (0, OUT_PAD - OUT_DIM))).astype(jnp.bfloat16)
    b2 = jnp.pad(params["b2"], ((0, 0), (0, OUT_PAD - OUT_DIM)))

    const = lambda i: (0, 0)

    out = pl.pallas_call(
        functools.partial(_sag_gem_kernel, num_patches=num_patches, p=p_val),
        out_shape=jax.ShapeDtypeStruct((n_pad, OUT_PAD), jnp.float32),
        grid=(n_pad // tb,),
        in_specs=[
            pl.BlockSpec((rows, din), lambda i: (i, 0)),           # patches (TB samples)
            pl.BlockSpec((din, FEA_DIM), const),                   # W_stem (bf16)
            pl.BlockSpec((1, FEA_DIM), const),                     # b_stem (f32)
            pl.BlockSpec((FEA_DIM, FEA_DIM), const),               # W1 (bf16)
            pl.BlockSpec((1, FEA_DIM), const),                     # b1 (f32)
            pl.BlockSpec((FEA_DIM, OUT_PAD), const),               # W2 padded (bf16)
            pl.BlockSpec((1, OUT_PAD), const),                     # b2 padded (f32)
        ],
        out_specs=pl.BlockSpec((tb, OUT_PAD), lambda i: (i, 0)),
        compiler_params=pltpu.CompilerParams(
            # Sample axis is fully independent -> shardable across v7x's 2 TCs.
            dimension_semantics=("parallel",),
        ),
    )(patches, w_stem, params["b_stem"], w1, params["b1"], w2, b2)

    # drop sample padding + lane padding; x.reshape(b, k, 3).reshape(b, -1)
    return out[:n, :OUT_DIM].reshape(b, k * OUT_DIM)


def init_params(in_chans):
    """Deterministic synthetic parameters (module shapes; no checkpoint load).
    W_stem rows are in (c, dy, dx) order to match the wrapper's patch layout."""
    din = PATCH * PATCH * in_chans
    key = jax.random.PRNGKey(42)
    k0, k1, k2, k3 = jax.random.split(key, 4)
    return {
        "p": jnp.array([3.0], dtype=jnp.float32),                  # GeM p = ones(1)*3
        "w_stem": 0.02 * jax.random.normal(k0, (din, FEA_DIM), jnp.float32),
        "b_stem": 0.02 * jax.random.normal(k1, (1, FEA_DIM), jnp.float32),
        "w1": 0.02 * jax.random.normal(k2, (FEA_DIM, FEA_DIM), jnp.float32),
        "b1": jnp.zeros((1, FEA_DIM), jnp.float32),
        "w2": 0.02 * jax.random.normal(k3, (FEA_DIM, OUT_DIM), jnp.float32),
        "b2": jnp.zeros((1, OUT_DIM), jnp.float32),
    }


if __name__ == "__main__":
    # Small shapes consistent with the module: b=2, k=5 (levels = k//5 = 1),
    # d=in_chans=3, spatial 64x64 (divisible by the stand-in stem stride).
    b, k, d, h, w = 2, 5, 3, 64, 64
    key = jax.random.PRNGKey(0)
    kx, kc = jax.random.split(key)
    x = jax.random.normal(kx, (b, k, d, h, w), dtype=jnp.float32)
    cond = jax.random.normal(kc, (b, k), dtype=jnp.float32)   # unused by forward

    params = init_params(d)
    out = sag_model_25d_gem2_forward(x, cond, params)
    out = jax.block_until_ready(out)

    assert out.shape == (b, k * OUT_DIM), out.shape
    assert bool(jnp.all(jnp.isfinite(out)))
    print("KERNEL_OK")
</pallas_src>

<mosaic_0001>
module attributes {stable_mosaic.version = 11 : i64} {
  func.func @_sag_gem_kernel(%arg0: i32, %arg1: memref<128x768xbf16, #tpu.memory_space<vmem>>, %arg2: memref<768x768xbf16, #tpu.memory_space<vmem>>, %arg3: memref<1x768xf32, #tpu.memory_space<vmem>>, %arg4: memref<768x768xbf16, #tpu.memory_space<vmem>>, %arg5: memref<1x768xf32, #tpu.memory_space<vmem>>, %arg6: memref<768x128xbf16, #tpu.memory_space<vmem>>, %arg7: memref<1x128xf32, #tpu.memory_space<vmem>>, %arg8: memref<8x128xf32, #tpu.memory_space<vmem>>) attributes {dimension_semantics = [#tpu.dimension_semantics<parallel>], iteration_bounds = array<i64: 2>, scalar_prefetch = 0 : i64, scratch_operands = 0 : i64, tpu.core_type = #tpu.core_type<tc>, window_params = [{transform_indices = @transform_0, window_bounds = array<i64: 128, 768>}, {pipeline_mode = #tpu.pipeline_mode<synchronous>, transform_indices = @transform_1, window_bounds = array<i64: 768, 768>}, {pipeline_mode = #tpu.pipeline_mode<synchronous>, transform_indices = @transform_2, window_bounds = array<i64: 1, 768>}, {pipeline_mode = #tpu.pipeline_mode<synchronous>, transform_indices = @transform_3, window_bounds = array<i64: 768, 768>}, {pipeline_mode = #tpu.pipeline_mode<synchronous>, transform_indices = @transform_4, window_bounds = array<i64: 1, 768>}, {pipeline_mode = #tpu.pipeline_mode<synchronous>, transform_indices = @transform_5, window_bounds = array<i64: 768, 128>}, {pipeline_mode = #tpu.pipeline_mode<synchronous>, transform_indices = @transform_6, window_bounds = array<i64: 1, 128>}, {transform_indices = @transform_7, window_bounds = array<i64: 8, 128>}]} {
    %c0 = arith.constant 0 : index
    %c0_0 = arith.constant 0 : index
    %0 = vector.load %arg1[%c0, %c0_0] : memref<128x768xbf16, #tpu.memory_space<vmem>>, vector<128x768xbf16>
    %c0_1 = arith.constant 0 : index
    %c0_2 = arith.constant 0 : index
    %1 = vector.load %arg2[%c0_1, %c0_2] : memref<768x768xbf16, #tpu.memory_space<vmem>>, vector<768x768xbf16>
    %cst = arith.constant dense<0.000000e+00> : vector<128x768xf32>
    %2 = tpu.matmul %0, %1, %cst {dimension_numbers = #tpu.dot_dimension_numbers<[1], [0], [0], [1], [0, 0, 1, 1], [], []>} : vector<128x768xbf16>, vector<768x768xbf16>, vector<128x768xf32> -> vector<128x768xf32>
    %c0_3 = arith.constant 0 : index
    %c0_4 = arith.constant 0 : index
    %3 = vector.load %arg3[%c0_3, %c0_4] : memref<1x768xf32, #tpu.memory_space<vmem>>, vector<1x768xf32>
    %4 = vector.broadcast %3 : vector<1x768xf32> to vector<128x768xf32>
    %5 = arith.addf %2, %4 : vector<128x768xf32>
    %cst_5 = arith.constant 9.99999997E-7 : f32
    %6 = vector.broadcast %cst_5 : f32 to vector<128x768xf32>
    %7 = arith.maximumf %5, %6 : vector<128x768xf32>
    %8 = arith.mulf %7, %7 : vector<128x768xf32>
    %9 = arith.mulf %8, %7 : vector<128x768xf32>
    %10 = vector.shape_cast %9 : vector<128x768xf32> to vector<8x16x768xf32>
    %cst_6 = arith.constant dense<0.000000e+00> : vector<8x768xf32>
    %11 = vector.multi_reduction <add>, %10, %cst_6 [1] : vector<8x16x768xf32> to vector<8x768xf32>
    %cst_7 = arith.constant 1.600000e+01 : f32
    %12 = vector.broadcast %cst_7 : f32 to vector<8x768xf32>
    %13 = arith.divf %11, %12 : vector<8x768xf32>
    %14 = math.log %13 : vector<8x768xf32>
    %cst_8 = arith.constant 0.333333343 : f32
    %15 = vector.broadcast %cst_8 : f32 to vector<8x768xf32>
    %16 = arith.mulf %14, %15 : vector<8x768xf32>
    %17 = math.exp %16 : vector<8x768xf32>
    %18 = arith.truncf %17 : vector<8x768xf32> to vector<8x768xbf16>
    %c0_9 = arith.constant 0 : index
    %c0_10 = arith.constant 0 : index
    %19 = vector.load %arg4[%c0_9, %c0_10] : memref<768x768xbf16, #tpu.memory_space<vmem>>, vector<768x768xbf16>
    %cst_11 = arith.constant dense<0.000000e+00> : vector<8x768xf32>
    %20 = tpu.matmul %18, %19, %cst_11 {dimension_numbers = #tpu.dot_dimension_numbers<[1], [0], [0], [1], [0, 0, 1, 1], [], []>} : vector<8x768xbf16>, vector<768x768xbf16>, vector<8x768xf32> -> vector<8x768xf32>
    %c0_12 = arith.constant 0 : index
    %c0_13 = arith.constant 0 : index
    %21 = vector.load %arg5[%c0_12, %c0_13] : memref<1x768xf32, #tpu.memory_space<vmem>>, vector<1x768xf32>
    %22 = vector.broadcast %21 : vector<1x768xf32> to vector<8x768xf32>
    %23 = arith.addf %20, %22 : vector<8x768xf32>
    %cst_14 = arith.constant 0.000000e+00 : f32
    %24 = vector.broadcast %cst_14 : f32 to vector<8x768xf32>
    %25 = arith.cmpf ogt, %23, %24 : vector<8x768xf32>
    %cst_15 = arith.constant 0.00999999977 : f32
    %26 = vector.broadcast %cst_15 : f32 to vector<8x768xf32>
    %27 = arith.mulf %26, %23 : vector<8x768xf32>
    %28 = arith.select %25, %23, %27 : vector<8x768xi1>, vector<8x768xf32>
    %29 = arith.truncf %28 : vector<8x768xf32> to vector<8x768xbf16>
    %c0_16 = arith.constant 0 : index
    %c0_17 = arith.constant 0 : index
    %30 = vector.load %arg6[%c0_16, %c0_17] : memref<768x128xbf16, #tpu.memory_space<vmem>>, vector<768x128xbf16>
    %cst_18 = arith.constant dense<0.000000e+00> : vector<8x128xf32>
    %31 = tpu.matmul %29, %30, %cst_18 {dimension_numbers = #tpu.dot_dimension_numbers<[1], [0], [0], [1], [0, 0, 1, 1], [], []>} : vector<8x768xbf16>, vector<768x128xbf16>, vector<8x128xf32> -> vector<8x128xf32>
    %c0_19 = arith.constant 0 : index
    %c0_20 = arith.constant 0 : index
    %32 = vector.load %arg7[%c0_19, %c0_20] : memref<1x128xf32, #tpu.memory_space<vmem>>, vector<1x128xf32>
    %33 = vector.broadcast %32 : vector<1x128xf32> to vector<8x128xf32>
    %34 = arith.addf %31, %33 : vector<8x128xf32>
    %c0_21 = arith.constant 0 : index
    %c0_22 = arith.constant 0 : index
    %35 = vector.load %arg8[%c0_21, %c0_22] : memref<8x128xf32, #tpu.memory_space<vmem>>, vector<8x128xf32>
    tpu.vector_store %arg8[%c0_21, %c0_22], %34 {strides = array<i32>} : memref<8x128xf32, #tpu.memory_space<vmem>>, vector<8x128xf32>,
    return
  }
  func.func @transform_0(%arg0: i32) -> (i32, i32) {
    %c0_i32 = arith.constant 0 : i32
    %c0_i32_0 = arith.constant 0 : i32
    return %arg0, %c0_i32 : i32, i32
  }
  func.func @transform_1(%arg0: i32) -> (i32, i32) {
    %c0_i32 = arith.constant 0 : i32
    %c0_i32_0 = arith.constant 0 : i32
    %c0_i32_1 = arith.constant 0 : i32
    return %c0_i32, %c0_i32_0 : i32, i32
  }
  func.func @transform_2(%arg0: i32) -> (i32, i32) {
    %c0_i32 = arith.constant 0 : i32
    %c0_i32_0 = arith.constant 0 : i32
    %c0_i32_1 = arith.constant 0 : i32
    return %c0_i32, %c0_i32_0 : i32, i32
  }
  func.func @transform_3(%arg0: i32) -> (i32, i32) {
    %c0_i32 = arith.constant 0 : i32
    %c0_i32_0 = arith.constant 0 : i32
    %c0_i32_1 = arith.constant 0 : i32
    return %c0_i32, %c0_i32_0 : i32, i32
  }
  func.func @transform_4(%arg0: i32) -> (i32, i32) {
    %c0_i32 = arith.constant 0 : i32
    %c0_i32_0 = arith.constant 0 : i32
    %c0_i32_1 = arith.constant 0 : i32
    return %c0_i32, %c0_i32_0 : i32, i32
  }
  func.func @transform_5(%arg0: i32) -> (i32, i32) {
    %c0_i32 = arith.constant 0 : i32
    %c0_i32_0 = arith.constant 0 : i32
    %c0_i32_1 = arith.constant 0 : i32
    return %c0_i32, %c0_i32_0 : i32, i32
  }
  func.func @transform_6(%arg0: i32) -> (i32, i32) {
    %c0_i32 = arith.constant 0 : i32
    %c0_i32_0 = arith.constant 0 : i32
    %c0_i32_1 = arith.constant 0 : i32
    return %c0_i32, %c0_i32_0 : i32, i32
  }
  func.func @transform_7(%arg0: i32) -> (i32, i32) {
    %c0_i32 = arith.constant 0 : i32
    %c0_i32_0 = arith.constant 0 : i32
    return %arg0, %c0_i32 : i32, i32
  }
}

</mosaic_0001>

<llo_original>
// kernel: tpu_custom_call.1
$region0: #{tpu_custom_call.1}
  #allocation0 [shape = 'u32[]', space=smem, size = 0x4, offset = 0x4, fixed_abs, tag = 'smem constant byte address 0x4 - core index']
  #allocation1 [shape = 'u32[72,128]{1,0:T(1,128)}', space=vmem, size = 0x9000, scoped, tag = 'internal scratch']
  %s0 = inlined_call_operand.hbm [shape: bf16[256,768], index: 0, kind: input, shape index: {}]
  %s1 = inlined_call_operand.hbm [shape: bf16[768,768], index: 1, kind: input, shape index: {}]
  %s2 = inlined_call_operand.hbm [shape: f32[1,768], index: 2, kind: input, shape index: {}]
  %s3 = inlined_call_operand.hbm [shape: bf16[768,768], index: 3, kind: input, shape index: {}]
  %s4 = inlined_call_operand.hbm [shape: f32[1,768], index: 4, kind: input, shape index: {}]
  %s5 = inlined_call_operand.hbm [shape: bf16[768,128], index: 5, kind: input, shape index: {}]
  %s6 = inlined_call_operand.hbm [shape: f32[1,128], index: 6, kind: input, shape index: {}]
  %s7 = inlined_call_operand.hbm [shape: f32[16,128], index: 7, kind: output, shape index: {}]
  %s8 = sld [smem:[#allocation0]]
  $region89: #{tpu_custom_call.1} parent=0
    _
  %s10 = ssub.s32 1, %s8
  %s11 = scalar_select 0, %s10, %s8
  $region1: #{tpu_custom_call.1} parent=0
    #allocation2 [shape = 'u8[393216]{0}', space=vmem, size = 0x60000, scoped, tag = 'input window, operand 0']
    #allocation3 [shape = 's32[2]{0}', space=sflag, size = 0x8, scoped, tag = 'scoped memory for tpu_custom_call.1']
    #allocation4 [shape = 's32[2]{0}', space=sflag, size = 0x8, scoped, tag = 'scoped memory for tpu_custom_call.1']
    #allocation5 [shape = 'u8[1179648]{0}', space=vmem, size = 0x120000, scoped, tag = 'input window, operand 1, single buffered']
    #allocation6 [shape = 's32[1]{0}', space=sflag, size = 0x4, scoped, tag = 'scoped memory for tpu_custom_call.1']
    #allocation7 [shape = 'u8[3072]{0}', space=vmem, size = 0xc00, scoped, tag = 'input window, operand 2, single buffered']
    #allocation8 [shape = 'u8[1179648]{0}', space=vmem, size = 0x120000, scoped, tag = 'input window, operand 3, single buffered']
    #allocation9 [shape = 's32[1]{0}', space=sflag, size = 0x4, scoped, tag = 'scoped memory for tpu_custom_call.1']
    #allocation10 [shape = 'u8[3072]{0}', space=vmem, size = 0xc00, scoped, tag = 'input window, operand 4, single buffered']
    #allocation11 [shape = 'u8[196608]{0}', space=vmem, size = 0x30000, scoped, tag = 'input window, operand 5, single buffered']
    #allocation12 [shape = 's32[1]{0}', space=sflag, size = 0x4, scoped, tag = 'scoped memory for tpu_custom_call.1']
    #allocation13 [shape = 'u8[512]{0}', space=vmem, size = 0x400, scoped, tag = 'input window, operand 6, single buffered']
    #allocation14 [shape = 'u8[8192]{0}', space=vmem, size = 0x2000, scoped, tag = 'output window, operand 0']
    %12 = vsyncpa [#allocation3], 0
    %s13 = scalar_lea.sflag [#allocation3], 1
    %14 = vsyncpa %s13, 0
    %15 = vsyncpa [#allocation6], 0
    %16 = vsyncpa [#allocation9], 0
    %17 = vsyncpa [#allocation12], 0
    %18 = vsyncpa [#allocation4], 0
    %s19 = scalar_lea.sflag [#allocation4], 1
    %20 = vsyncpa %s19, 0
    loop: start=0, step=1, limit=4
    $region2: #{tpu_custom_call.1} parent=1 // loop_pre_header
      _
    $region3: #{tpu_custom_call.1} parent=1 // loop_header
      %s22 = sphi 0, %s26
      %p23 = scmp.ge.s32.totalorder %s22, 4
      %s32 = sphi 0, %s34
      %s35 = sphi 0, %s32
      %s36 = sphi 0, %s35
      %s52 = sphi 0, %s36
      %s56 = sphi 0, %s56
      %s58 = sphi 0, %s56
      %s59 = sphi 0, %s58
      %s73 = sphi 0, %s59
      %s77 = sphi 0, %s77
      %s79 = sphi 0, %s77
      %s80 = sphi 0, %s79
      %s94 = sphi 0, %s80
      %s98 = sphi 0, %s98
      %s100 = sphi 0, %s98
      %s101 = sphi 0, %s100
      %s115 = sphi 0, %s101
      %s119 = sphi 0, %s119
      %s121 = sphi 0, %s119
      %s122 = sphi 0, %s121
      %s136 = sphi 0, %s122
      %s140 = sphi 0, %s140
      %s142 = sphi 0, %s140
      %s143 = sphi 0, %s142
      %s157 = sphi 0, %s143
      %s161 = sphi 0, %s161
      %s163 = sphi 0, %s161
      %s164 = sphi 0, %s163
      %s178 = sphi 0, %s164
      %s184 = sphi 0, %s186
      %s187 = sphi 0, %s184
      %s188 = sphi 0, %s187
      %s204 = sphi 0, %s188
    $region4: #{tpu_custom_call.1} parent=1 // loop_header_branch
      %25 = sbr.rel (%p23) target = $region8
    $region5: #{tpu_custom_call.1} parent=1 // loop_body
      %s27 = ssub.s32 %s22, 1
      %s28 = ssub.s32 %s22, 2
      %s29 = sadd.s32 %s22, 1
      %s30 = ssub.s32 %s22, %s29
      %p31 = scmp.eq.s32.totalorder %s30, 0
      %s33 = sadd.s32 %s32, 1
      %s34 = scalar_select %p31, %s32, %s33
      %p37 = pneg %p31
      %p38 = scmp.eq.s32.totalorder %s22, 1
      %p39 = por %p37, %p38
      %p40 = scmp.ne.s32.totalorder %s32, %s35
      %p41 = scmp.eq.s32.totalorder %s22, 0
      %p42 = por %p40, %p41
      %p43 = scmp.ne.s32.totalorder %s32, %s35
      %p44 = scmp.eq.s32.totalorder %s27, 1
      %p45 = por %p43, %p44
      %p46 = scmp.ne.s32.totalorder %s35, %s36
      %p47 = scmp.eq.s32.totalorder %s27, 0
      %p48 = por %p46, %p47
      %p49 = scmp.ne.s32.totalorder %s35, %s36
      %p50 = scmp.eq.s32.totalorder %s28, 1
      %p51 = por %p49, %p50
      %p53 = scmp.ne.s32.totalorder %s36, %s52
      %p54 = scmp.eq.s32.totalorder %s28, 0
      %p55 = por %p53, %p54
      %s57 = sadd.s32 %s56, 1
      %p60 = scmp.eq.s32.totalorder %s22, 1
      %p61 = scmp.ne.s32.totalorder %s56, %s58
      %p62 = scmp.eq.s32.totalorder %s22, 0
      %p63 = por %p61, %p62
      %p64 = scmp.ne.s32.totalorder %s56, %s58
      %p65 = scmp.eq.s32.totalorder %s27, 1
      %p66 = por %p64, %p65
      %p67 = scmp.ne.s32.totalorder %s58, %s59
      %p68 = scmp.eq.s32.totalorder %s27, 0
      %p69 = por %p67, %p68
      %p70 = scmp.ne.s32.totalorder %s58, %s59
      %p71 = scmp.eq.s32.totalorder %s28, 1
      %p72 = por %p70, %p71
      %p74 = scmp.ne.s32.totalorder %s59, %s73
      %p75 = scmp.eq.s32.totalorder %s28, 0
      %p76 = por %p74, %p75
      %s78 = sadd.s32 %s77, 1
      %p81 = scmp.eq.s32.totalorder %s22, 1
      %p82 = scmp.ne.s32.totalorder %s77, %s79
      %p83 = scmp.eq.s32.totalorder %s22, 0
      %p84 = por %p82, %p83
      %p85 = scmp.ne.s32.totalorder %s77, %s79
      %p86 = scmp.eq.s32.totalorder %s27, 1
      %p87 = por %p85, %p86
      %p88 = scmp.ne.s32.totalorder %s79, %s80
      %p89 = scmp.eq.s32.totalorder %s27, 0
      %p90 = por %p88, %p89
      %p91 = scmp.ne.s32.totalorder %s79, %s80
      %p92 = scmp.eq.s32.totalorder %s28, 1
      %p93 = por %p91, %p92
      %p95 = scmp.ne.s32.totalorder %s80, %s94
      %p96 = scmp.eq.s32.totalorder %s28, 0
      %p97 = por %p95, %p96
      %s99 = sadd.s32 %s98, 1
      %p102 = scmp.eq.s32.totalorder %s22, 1
      %p103 = scmp.ne.s32.totalorder %s98, %s100
      %p104 = scmp.eq.s32.totalorder %s22, 0
      %p105 = por %p103, %p104
      %p106 = scmp.ne.s32.totalorder %s98, %s100
      %p107 = scmp.eq.s32.totalorder %s27, 1
      %p108 = por %p106, %p107
      %p109 = scmp.ne.s32.totalorder %s100, %s101
      %p110 = scmp.eq.s32.totalorder %s27, 0
      %p111 = por %p109, %p110
      %p112 = scmp.ne.s32.totalorder %s100, %s101
      %p113 = scmp.eq.s32.totalorder %s28, 1
      %p114 = por %p112, %p113
      %p116 = scmp.ne.s32.totalorder %s101, %s115
      %p117 = scmp.eq.s32.totalorder %s28, 0
      %p118 = por %p116, %p117
      %s120 = sadd.s32 %s119, 1
      %p123 = scmp.eq.s32.totalorder %s22, 1
      %p124 = scmp.ne.s32.totalorder %s119, %s121
      %p125 = scmp.eq.s32.totalorder %s22, 0
      %p126 = por %p124, %p125
      %p127 = scmp.ne.s32.totalorder %s119, %s121
      %p128 = scmp.eq.s32.totalorder %s27, 1
      %p129 = por %p127, %p128
      %p130 = scmp.ne.s32.totalorder %s121, %s122
      %p131 = scmp.eq.s32.totalorder %s27, 0
      %p132 = por %p130, %p131
      %p133 = scmp.ne.s32.totalorder %s121, %s122
      %p134 = scmp.eq.s32.totalorder %s28, 1
      %p135 = por %p133, %p134
      %p137 = scmp.ne.s32.totalorder %s122, %s136
      %p138 = scmp.eq.s32.totalorder %s28, 0
      %p139 = por %p137, %p138
      %s141 = sadd.s32 %s140, 1
      %p144 = scmp.eq.s32.totalorder %s22, 1
      %p145 = scmp.ne.s32.totalorder %s140, %s142
      %p146 = scmp.eq.s32.totalorder %s22, 0
      %p147 = por %p145, %p146
      %p148 = scmp.ne.s32.totalorder %s140, %s142
      %p149 = scmp.eq.s32.totalorder %s27, 1
      %p150 = por %p148, %p149
      %p151 = scmp.ne.s32.totalorder %s142, %s143
      %p152 = scmp.eq.s32.totalorder %s27, 0
      %p153 = por %p151, %p152
      %p154 = scmp.ne.s32.totalorder %s142, %s143
      %p155 = scmp.eq.s32.totalorder %s28, 1
      %p156 = por %p154, %p155
      %p158 = scmp.ne.s32.totalorder %s143, %s157
      %p159 = scmp.eq.s32.totalorder %s28, 0
      %p160 = por %p158, %p159
      %s162 = sadd.s32 %s161, 1
      %p165 = scmp.eq.s32.totalorder %s22, 1
      %p166 = scmp.ne.s32.totalorder %s161, %s163
      %p167 = scmp.eq.s32.totalorder %s22, 0
      %p168 = por %p166, %p167
      %p169 = scmp.ne.s32.totalorder %s161, %s163
      %p170 = scmp.eq.s32.totalorder %s27, 1
      %p171 = por %p169, %p170
      %p172 = scmp.ne.s32.totalorder %s163, %s164
      %p173 = scmp.eq.s32.totalorder %s27, 0
      %p174 = por %p172, %p173
      %p175 = scmp.ne.s32.totalorder %s163, %s164
      %p176 = scmp.eq.s32.totalorder %s28, 1
      %p177 = por %p175, %p176
      %p179 = scmp.ne.s32.totalorder %s164, %s178
      %p180 = scmp.eq.s32.totalorder %s28, 0
      %p181 = por %p179, %p180
      %s182 = ssub.s32 %s22, %s29
      %p183 = scmp.eq.s32.totalorder %s182, 0
      %s185 = sadd.s32 %s184, 1
      %s186 = scalar_select %p183, %s184, %s185
      %p189 = pneg %p183
      %p190 = scmp.eq.s32.totalorder %s22, 1
      %p191 = por %p189, %p190
      %p192 = scmp.ne.s32.totalorder %s184, %s187
      %p193 = scmp.eq.s32.totalorder %s22, 0
      %p194 = por %p192, %p193
      %p195 = scmp.ne.s32.totalorder %s184, %s187
      %p196 = scmp.eq.s32.totalorder %s27, 1
      %p197 = por %p195, %p196
      %p198 = scmp.ne.s32.totalorder %s187, %s188
      %p199 = scmp.eq.s32.totalorder %s27, 0
      %p200 = por %p198, %p199
      %p201 = scmp.ne.s32.totalorder %s187, %s188
      %p202 = scmp.eq.s32.totalorder %s28, 1
      %p203 = por %p201, %p202
      %p205 = scmp.ne.s32.totalorder %s188, %s204
      %p206 = scmp.eq.s32.totalorder %s28, 0
      %p207 = por %p205, %p206
      %p208 = scmp.le.s32.totalorder 1, %s22
      %p209 = scmp.lt.s32.totalorder %s22, 3
      %p210 = pnand %p208, %p209
      %p211 = pneg %p210
      // Predicated region
      $region9: #{tpu_custom_call.1} parent=5 // pred_check
        _
      $region10: #{tpu_custom_call.1} parent=5 // pred_check_branch
        %213 = sbr.rel (%p210) target = $region12
      $region11: #{tpu_custom_call.1} parent=5 // pred_region
        %s214 = ssub.s32 %s22, 1
        // Predicated region
        $region13: #{tpu_custom_call.1} parent=11 // pred_check
          %p215 = pneg %p69
        $region14: #{tpu_custom_call.1} parent=11 // pred_check_branch
          %217 = sbr.rel (%p215) target = $region16
        $region15: #{tpu_custom_call.1} parent=11 // pred_region
          %219 = vsyncadd [#allocation6], 0
          %s220 = sshll.u32 %s1, 4
          %s221 = int_to_ptr.hbm [resolvable:$true] %s220
          %s222 = sshll.u32 [#allocation5], 4
          %s223 = int_to_ptr.vmem [resolvable:$true] %s222
          %228 = dma.hbm_to_vmem [thread:$0]  %s221, 36864, %s223, [#allocation6], 384, 384, 24
        $region16: #{tpu_custom_call.1} parent=11 // pred_fallthru
          _
        // Predicated region
        $region17: #{tpu_custom_call.1} parent=11 // pred_check
          %p229 = pneg %p90
        $region18: #{tpu_custom_call.1} parent=11 // pred_check_branch
          %231 = sbr.rel (%p229) target = $region20
        $region19: #{tpu_custom_call.1} parent=11 // pred_region
          %233 = vsyncadd [#allocation6], 0
          %s235 = sshll.u32 %s2, 4
          %s236 = int_to_ptr.hbm [resolvable:$true] %s235
          %s237 = sshll.u32 [#allocation7], 4
          %s238 = int_to_ptr.vmem [resolvable:$true] %s237
          %240 = dma.hbm_to_vmem [thread:$0]  %s236, 96, %s238, [#allocation6]
        $region20: #{tpu_custom_call.1} parent=11 // pred_fallthru
          _
        // Predicated region
        $region21: #{tpu_custom_call.1} parent=11 // pred_check
          %p241 = pneg %p111
        $region22: #{tpu_custom_call.1} parent=11 // pred_check_branch
          %243 = sbr.rel (%p241) target = $region24
        $region23: #{tpu_custom_call.1} parent=11 // pred_region
          %245 = vsyncadd [#allocation9], 0
          %s246 = sshll.u32 %s3, 4
          %s247 = int_to_ptr.hbm [resolvable:$true] %s246
          %s248 = sshll.u32 [#allocation8], 4
          %s249 = int_to_ptr.vmem [resolvable:$true] %s248
          %254 = dma.hbm_to_vmem [thread:$0]  %s247, 36864, %s249, [#allocation9], 384, 384, 24
        $region24: #{tpu_custom_call.1} parent=11 // pred_fallthru
          _
        // Predicated region
        $region25: #{tpu_custom_call.1} parent=11 // pred_check
          %p255 = pneg %p132
        $region26: #{tpu_custom_call.1} parent=11 // pred_check_branch
          %257 = sbr.rel (%p255) target = $region28
        $region27: #{tpu_custom_call.1} parent=11 // pred_region
          %259 = vsyncadd [#allocation9], 0
          %s261 = sshll.u32 %s4, 4
          %s262 = int_to_ptr.hbm [resolvable:$true] %s261
          %s263 = sshll.u32 [#allocation10], 4
          %s264 = int_to_ptr.vmem [resolvable:$true] %s263
          %266 = dma.hbm_to_vmem [thread:$0]  %s262, 96, %s264, [#allocation9]
        $region28: #{tpu_custom_call.1} parent=11 // pred_fallthru
          _
        // Predicated region
        $region29: #{tpu_custom_call.1} parent=11 // pred_check
          %p267 = pneg %p153
        $region30: #{tpu_custom_call.1} parent=11 // pred_check_branch
          %269 = sbr.rel (%p267) target = $region32
        $region31: #{tpu_custom_call.1} parent=11 // pred_region
          %271 = vsyncadd [#allocation12], 0
          %s272 = sshll.u32 %s5, 4
          %s273 = int_to_ptr.hbm [resolvable:$true] %s272
          %s274 = sshll.u32 [#allocation11], 4
          %s275 = int_to_ptr.vmem [resolvable:$true] %s274
          %280 = dma.hbm_to_vmem [thread:$0]  %s273, 6144, %s275, [#allocation12], 64, 64, 4
        $region32: #{tpu_custom_call.1} parent=11 // pred_fallthru
          _
        // Predicated region
        $region33: #{tpu_custom_call.1} parent=11 // pred_check
          %p281 = pneg %p174
        $region34: #{tpu_custom_call.1} parent=11 // pred_check_branch
          %283 = sbr.rel (%p281) target = $region36
        $region35: #{tpu_custom_call.1} parent=11 // pred_region
          %285 = vsyncadd [#allocation12], 0
          %s287 = sshll.u32 %s6, 4
          %s288 = int_to_ptr.hbm [resolvable:$true] %s287
          %s289 = sshll.u32 [#allocation13], 4
          %s290 = int_to_ptr.vmem [resolvable:$true] %s289
          %292 = dma.hbm_to_vmem [thread:$0]  %s288, 16, %s290, [#allocation12]
        $region36: #{tpu_custom_call.1} parent=11 // pred_fallthru
          _
      $region12: #{tpu_custom_call.1} parent=5 // pred_fallthru
        _
      %p293 = scmp.lt.s32.totalorder %s22, 2
      // Predicated region
      $region37: #{tpu_custom_call.1} parent=5 // pred_check
        %p294 = pneg %p293
      $region38: #{tpu_custom_call.1} parent=5 // pred_check_branch
        %296 = sbr.rel (%p294) target = $region40
      $region39: #{tpu_custom_call.1} parent=5 // pred_region
        // Predicated region
        $region41: #{tpu_custom_call.1} parent=39 // pred_check
          %p297 = pneg %p42
        $region42: #{tpu_custom_call.1} parent=39 // pred_check_branch
          %299 = sbr.rel (%p297) target = $region44
        $region43: #{tpu_custom_call.1} parent=39 // pred_region
          %s300 = sand.u32 %s32, 1
          %s301 = scalar_lea.sflag [#allocation3], %s300
          %s302 = sand.u32 %s32, 1
          %s303 = smul.addr %s302, 384
          %s304 = scalar_lea.vmem [#allocation2], %s303
          %s305 = smul.u32 16, %s22
          %307 = vsyncadd %s301, 0
          %s308 = smul.addr %s305, 6
          %s309 = smul.addr %s308, 4
          %s310 = scalar_lea.hbm %s0, %s309
          %s311 = sshll.u32 %s310, 4
          %s312 = int_to_ptr.hbm [resolvable:$true] %s311
          %s313 = sshll.u32 %s304, 4
          %s314 = int_to_ptr.vmem [resolvable:$true] %s313
          %319 = dma.hbm_to_vmem [thread:$0]  %s312, 6144, %s314, %s301, 384, 384, 24
        $region44: #{tpu_custom_call.1} parent=39 // pred_fallthru
          _
      $region40: #{tpu_custom_call.1} parent=5 // pred_fallthru
        _
      %p320 = scmp.le.s32.totalorder 1, %s22
      %p321 = scmp.lt.s32.totalorder %s22, 3
      %p322 = pnand %p320, %p321
      %p323 = pneg %p322
      // Predicated region
      $region45: #{tpu_custom_call.1} parent=5 // pred_check
        _
      $region46: #{tpu_custom_call.1} parent=5 // pred_check_branch
        %325 = sbr.rel (%p322) target = $region48
      $region47: #{tpu_custom_call.1} parent=5 // pred_region
        %s326 = ssub.s32 %s22, 1
        %s327 = sand.u32 %s35, 1
        %s328 = scalar_lea.sflag [#allocation3], %s327
        %s329 = sand.u32 %s35, 1
        %s330 = smul.addr %s329, 384
        %s331 = scalar_lea.vmem [#allocation2], %s330
        // Predicated region
        $region49: #{tpu_custom_call.1} parent=47 // pred_check
          %p332 = pneg %p48
        $region50: #{tpu_custom_call.1} parent=47 // pred_check_branch
          %334 = sbr.rel (%p332) target = $region52
        $region51: #{tpu_custom_call.1} parent=47 // pred_region
          %336 = dma.done %s328, 6144
        $region52: #{tpu_custom_call.1} parent=47 // pred_fallthru
          _
        // Predicated region
        $region53: #{tpu_custom_call.1} parent=47 // pred_check
          %p337 = pneg %p69
        $region54: #{tpu_custom_call.1} parent=47 // pred_check_branch
          %339 = sbr.rel (%p337) target = $region56
        $region55: #{tpu_custom_call.1} parent=47 // pred_region
          %341 = dma.done [#allocation6], 36864
        $region56: #{tpu_custom_call.1} parent=47 // pred_fallthru
          _
        // Predicated region
        $region57: #{tpu_custom_call.1} parent=47 // pred_check
          %p342 = pneg %p90
        $region58: #{tpu_custom_call.1} parent=47 // pred_check_branch
          %344 = sbr.rel (%p342) target = $region60
        $region59: #{tpu_custom_call.1} parent=47 // pred_region
          %346 = dma.done [#allocation6], 96
        $region60: #{tpu_custom_call.1} parent=47 // pred_fallthru
          _
        // Predicated region
        $region61: #{tpu_custom_call.1} parent=47 // pred_check
          %p347 = pneg %p111
        $region62: #{tpu_custom_call.1} parent=47 // pred_check_branch
          %349 = sbr.rel (%p347) target = $region64
        $region63: #{tpu_custom_call.1} parent=47 // pred_region
          %351 = dma.done [#allocation9], 36864
        $region64: #{tpu_custom_call.1} parent=47 // pred_fallthru
          _
        // Predicated region
        $region65: #{tpu_custom_call.1} parent=47 // pred_check
          %p352 = pneg %p132
        $region66: #{tpu_custom_call.1} parent=47 // pred_check_branch
          %354 = sbr.rel (%p352) target = $region68
        $region67: #{tpu_custom_call.1} parent=47 // pred_region
          %356 = dma.done [#allocation9], 96
        $region68: #{tpu_custom_call.1} parent=47 // pred_fallthru
          _
        // Predicated region
        $region69: #{tpu_custom_call.1} parent=47 // pred_check
          %p357 = pneg %p153
        $region70: #{tpu_custom_call.1} parent=47 // pred_check_branch
          %359 = sbr.rel (%p357) target = $region72
        $region71: #{tpu_custom_call.1} parent=47 // pred_region
          %361 = dma.done [#allocation12], 6144
        $region72: #{tpu_custom_call.1} parent=47 // pred_fallthru
          _
        // Predicated region
        $region73: #{tpu_custom_call.1} parent=47 // pred_check
          %p362 = pneg %p174
        $region74: #{tpu_custom_call.1} parent=47 // pred_check_branch
          %364 = sbr.rel (%p362) target = $region76
        $region75: #{tpu_custom_call.1} parent=47 // pred_region
          %366 = dma.done [#allocation12], 16
        $region76: #{tpu_custom_call.1} parent=47 // pred_fallthru
          _
        %s367 = sand.u32 %s35, 1
        %s368 = scalar_lea.sflag [#allocation3], %s367
        %s369 = sand.u32 %s35, 1
        %s370 = smul.addr %s369, 384
        %s371 = scalar_lea.vmem [#allocation2], %s370
        %p372 = pneg %p48
        %p373 = pneg %p45
        %p374 = pneg %p69
        %p375 = pneg %p66
        %p376 = pneg %p90
        %p377 = pneg %p87
        %p378 = pneg %p111
        %p379 = pneg %p108
        %p380 = pneg %p132
        %p381 = pneg %p129
        %p382 = pneg %p153
        %p383 = pneg %p150
        %p384 = pneg %p174
        %p385 = pneg %p171
        %p386 = pneg %p200
        %p387 = pneg %p197
        %s388 = sand.u32 %s187, 1
        %s389 = scalar_lea.sflag [#allocation4], %s388
        %s390 = sand.u32 %s187, 1
        %s391 = smul.addr %s390, 8
        %s392 = scalar_lea.vmem [#allocation14], %s391
        %s393 = smul.u32 16, %s27
        %v394 = vld [vmem:[%s331] sm:$0xff]
        %v395 = vld [vmem:[%s331 + $0x8] sm:$0xff]
        %v396 = vld [vmem:[%s331 + $0x10] sm:$0xff]
        %v397 = vld [vmem:[%s331 + $0x18] sm:$0xff]
        %v398 = vld [vmem:[%s331 + $0x20] sm:$0xff]
        %v399 = vld [vmem:[%s331 + $0x28] sm:$0xff]
        %v400 = vld [vmem:[%s331 + $0x30] sm:$0xff]
        %v401 = vld [vmem:[%s331 + $0x38] sm:$0xff]
        %v402 = vld [vmem:[%s331 + $0x40] sm:$0xff]
        %v403 = vld [vmem:[%s331 + $0x48] sm:$0xff]
        %v404 = vld [vmem:[%s331 + $0x50] sm:$0xff]
        %v405 = vld [vmem:[%s331 + $0x58] sm:$0xff]
        %v406 = vld [vmem:[%s331 + $0x60] sm:$0xff]
        %v407 = vld [vmem:[%s331 + $0x68] sm:$0xff]
        %v408 = vld [vmem:[%s331 + $0x70] sm:$0xff]
        %v409 = vld [vmem:[%s331 + $0x78] sm:$0xff]
        %v410 = vld [vmem:[%s331 + $0x80] sm:$0xff]
        %v411 = vld [vmem:[%s331 + $0x88] sm:$0xff]
        %v412 = vld [vmem:[%s331 + $0x90] sm:$0xff]
        %v413 = vld [vmem:[%s331 + $0x98] sm:$0xff]
        %v414 = vld [vmem:[%s331 + $0xa0] sm:$0xff]
        %v415 = vld [vmem:[%s331 + $0xa8] sm:$0xff]
        %v416 = vld [vmem:[%s331 + $0xb0] sm:$0xff]
        %v417 = vld [vmem:[%s331 + $0xb8] sm:$0xff]
        %v418 = vld [vmem:[%s331 + $0xc0] sm:$0xff]
        %v419 = vld [vmem:[%s331 + $0xc8] sm:$0xff]
        %v420 = vld [vmem:[%s331 + $0xd0] sm:$0xff]
        %v421 = vld [vmem:[%s331 + $0xd8] sm:$0xff]
        %v422 = vld [vmem:[%s331 + $0xe0] sm:$0xff]
        %v423 = vld [vmem:[%s331 + $0xe8] sm:$0xff]
        %v424 = vld [vmem:[%s331 + $0xf0] sm:$0xff]
        %v425 = vld [vmem:[%s331 + $0xf8] sm:$0xff]
        %v426 = vld [vmem:[%s331 + $0x100] sm:$0xff]
        %v427 = vld [vmem:[%s331 + $0x108] sm:$0xff]
        %v428 = vld [vmem:[%s331 + $0x110] sm:$0xff]
        %v429 = vld [vmem:[%s331 + $0x118] sm:$0xff]
        %v430 = vld [vmem:[%s331 + $0x120] sm:$0xff]
        %v431 = vld [vmem:[%s331 + $0x128] sm:$0xff]
        %v432 = vld [vmem:[%s331 + $0x130] sm:$0xff]
        %v433 = vld [vmem:[%s331 + $0x138] sm:$0xff]
        %v434 = vld [vmem:[%s331 + $0x140] sm:$0xff]
        %v435 = vld [vmem:[%s331 + $0x148] sm:$0xff]
        %v436 = vld [vmem:[%s331 + $0x150] sm:$0xff]
        %v437 = vld [vmem:[%s331 + $0x158] sm:$0xff]
        %v438 = vld [vmem:[%s331 + $0x160] sm:$0xff]
        %v439 = vld [vmem:[%s331 + $0x168] sm:$0xff]
        %v440 = vld [vmem:[%s331 + $0x170] sm:$0xff]
        %v441 = vld [vmem:[%s331 + $0x178] sm:$0xff]
        %v442 = vld [vmem:[#allocation5] sm:$0xff]
        %v443 = vld [vmem:[#allocation5 + $0x8] sm:$0xff]
        %v444 = vld [vmem:[#allocation5 + $0x10] sm:$0xff]
        %v445 = vld [vmem:[#allocation5 + $0x18] sm:$0xff]
        %v446 = vld [vmem:[#allocation5 + $0x20] sm:$0xff]
        %v447 = vld [vmem:[#allocation5 + $0x28] sm:$0xff]
        %v448 = vld [vmem:[#allocation5 + $0x30] sm:$0xff]
        %v449 = vld [vmem:[#allocation5 + $0x38] sm:$0xff]
        %v450 = vld [vmem:[#allocation5 + $0x40] sm:$0xff]
        %v451 = vld [vmem:[#allocation5 + $0x48] sm:$0xff]
        %v452 = vld [vmem:[#allocation5 + $0x50] sm:$0xff]
        %v453 = vld [vmem:[#allocation5 + $0x58] sm:$0xff]
        %v454 = vld [vmem:[#allocation5 + $0x60] sm:$0xff]
        %v455 = vld [vmem:[#allocation5 + $0x68] sm:$0xff]
        %v456 = vld [vmem:[#allocation5 + $0x70] sm:$0xff]
        %v457 = vld [vmem:[#allocation5 + $0x78] sm:$0xff]
        %v458 = vld [vmem:[#allocation5 + $0x80] sm:$0xff]
        %v459 = vld [vmem:[#allocation5 + $0x88] sm:$0xff]
        %v460 = vld [vmem:[#allocation5 + $0x90] sm:$0xff]
        %v461 = vld [vmem:[#allocation5 + $0x98] sm:$0xff]
        %v462 = vld [vmem:[#allocation5 + $0xa0] sm:$0xff]
        %v463 = vld [vmem:[#allocation5 + $0xa8] sm:$0xff]
        %v464 = vld [vmem:[#allocation5 + $0xb0] sm:$0xff]
        %v465 = vld [vmem:[#allocation5 + $0xb8] sm:$0xff]
        %v466 = vld [vmem:[#allocation5 + $0xc0] sm:$0xff]
        %v467 = vld [vmem:[#allocation5 + $0xc8] sm:$0xff]
        %v468 = vld [vmem:[#allocation5 + $0xd0] sm:$0xff]
        %v469 = vld [vmem:[#allocation5 + $0xd8] sm:$0xff]
        %v470 = vld [vmem:[#allocation5 + $0xe0] sm:$0xff]
        %v471 = vld [vmem:[#allocation5 + $0xe8] sm:$0xff]
        %v472 = vld [vmem:[#allocation5 + $0xf0] sm:$0xff]
        %v473 = vld [vmem:[#allocation5 + $0xf8] sm:$0xff]
        %v474 = vld [vmem:[#allocation5 + $0x100] sm:$0xff]
        %v475 = vld [vmem:[#allocation5 + $0x108] sm:$0xff]
        %v476 = vld [vmem:[#allocation5 + $0x110] sm:$0xff]
        %v477 = vld [vmem:[#allocation5 + $0x118] sm:$0xff]
        %v478 = vld [vmem:[#allocation5 + $0x120] sm:$0xff]
        %v479 = vld [vmem:[#allocation5 + $0x128] sm:$0xff]
        %v480 = vld [vmem:[#allocation5 + $0x130] sm:$0xff]
        %v481 = vld [vmem:[#allocation5 + $0x138] sm:$0xff]
        %v482 = vld [vmem:[#allocation5 + $0x140] sm:$0xff]
        %v483 = vld [vmem:[#allocation5 + $0x148] sm:$0xff]
        %v484 = vld [vmem:[#allocation5 + $0x150] sm:$0xff]
        %v485 = vld [vmem:[#allocation5 + $0x158] sm:$0xff]
        %v486 = vld [vmem:[#allocation5 + $0x160] sm:$0xff]
        %v487 = vld [vmem:[#allocation5 + $0x168] sm:$0xff]
        %v488 = vld [vmem:[#allocation5 + $0x170] sm:$0xff]
        %v489 = vld [vmem:[#allocation5 + $0x178] sm:$0xff]
        %v490 = vld [vmem:[#allocation5 + $0x180] sm:$0xff]
        %v491 = vld [vmem:[#allocation5 + $0x188] sm:$0xff]
        %v492 = vld [vmem:[#allocation5 + $0x190] sm:$0xff]
        %v493 = vld [vmem:[#allocation5 + $0x198] sm:$0xff]
        %v494 = vld [vmem:[#allocation5 + $0x1a0] sm:$0xff]
        %v495 = vld [vmem:[#allocation5 + $0x1a8] sm:$0xff]
        %v496 = vld [vmem:[#allocation5 + $0x1b0] sm:$0xff]
        %v497 = vld [vmem:[#allocation5 + $0x1b8] sm:$0xff]
        %v498 = vld [vmem:[#allocation5 + $0x1c0] sm:$0xff]
        %v499 = vld [vmem:[#allocation5 + $0x1c8] sm:$0xff]
        %v500 = vld [vmem:[#allocation5 + $0x1d0] sm:$0xff]
        %v501 = vld [vmem:[#allocation5 + $0x1d8] sm:$0xff]
        %v502 = vld [vmem:[#allocation5 + $0x1e0] sm:$0xff]
        %v503 = vld [vmem:[#allocation5 + $0x1e8] sm:$0xff]
        %v504 = vld [vmem:[#allocation5 + $0x1f0] sm:$0xff]
        %v505 = vld [vmem:[#allocation5 + $0x1f8] sm:$0xff]
        %v506 = vld [vmem:[#allocation5 + $0x200] sm:$0xff]
        %v507 = vld [vmem:[#allocation5 + $0x208] sm:$0xff]
        %v508 = vld [vmem:[#allocation5 + $0x210] sm:$0xff]
        %v509 = vld [vmem:[#allocation5 + $0x218] sm:$0xff]
        %v510 = vld [vmem:[#allocation5 + $0x220] sm:$0xff]
        %v511 = vld [vmem:[#allocation5 + $0x228] sm:$0xff]
        %v512 = vld [vmem:[#allocation5 + $0x230] sm:$0xff]
        %v513 = vld [vmem:[#allocation5 + $0x238] sm:$0xff]
        %v514 = vld [vmem:[#allocation5 + $0x240] sm:$0xff]
        %v515 = vld [vmem:[#allocation5 + $0x248] sm:$0xff]
        %v516 = vld [vmem:[#allocation5 + $0x250] sm:$0xff]
        %v517 = vld [vmem:[#allocation5 + $0x258] sm:$0xff]
        %v518 = vld [vmem:[#allocation5 + $0x260] sm:$0xff]
        %v519 = vld [vmem:[#allocation5 + $0x268] sm:$0xff]
        %v520 = vld [vmem:[#allocation5 + $0x270] sm:$0xff]
        %v521 = vld [vmem:[#allocation5 + $0x278] sm:$0xff]
        %v522 = vld [vmem:[#allocation5 + $0x280] sm:$0xff]
        %v523 = vld [vmem:[#allocation5 + $0x288] sm:$0xff]
        %v524 = vld [vmem:[#allocation5 + $0x290] sm:$0xff]
        %v525 = vld [vmem:[#allocation5 + $0x298] sm:$0xff]
        %v526 = vld [vmem:[#allocation5 + $0x2a0] sm:$0xff]
        %v527 = vld [vmem:[#allocation5 + $0x2a8] sm:$0xff]
        %v528 = vld [vmem:[#allocation5 + $0x2b0] sm:$0xff]
        %v529 = vld [vmem:[#allocation5 + $0x2b8] sm:$0xff]
        %v530 = vld [vmem:[#allocation5 + $0x2c0] sm:$0xff]
        %v531 = vld [vmem:[#allocation5 + $0x2c8] sm:$0xff]
        %v532 = vld [vmem:[#allocation5 + $0x2d0] sm:$0xff]
        %v533 = vld [vmem:[#allocation5 + $0x2d8] sm:$0xff]
        %v534 = vld [vmem:[#allocation5 + $0x2e0] sm:$0xff]
        %v535 = vld [vmem:[#allocation5 + $0x2e8] sm:$0xff]
        %v536 = vld [vmem:[#allocation5 + $0x2f0] sm:$0xff]
        %v537 = vld [vmem:[#allocation5 + $0x2f8] sm:$0xff]
        %v538 = vld [vmem:[#allocation5 + $0x300] sm:$0xff]
        %v539 = vld [vmem:[#allocation5 + $0x308] sm:$0xff]
        %v540 = vld [vmem:[#allocation5 + $0x310] sm:$0xff]
        %v541 = vld [vmem:[#allocation5 + $0x318] sm:$0xff]
        %v542 = vld [vmem:[#allocation5 + $0x320] sm:$0xff]
        %v543 = vld [vmem:[#allocation5 + $0x328] sm:$0xff]
        %v544 = vld [vmem:[#allocation5 + $0x330] sm:$0xff]
        %v545 = vld [vmem:[#allocation5 + $0x338] sm:$0xff]
        %v546 = vld [vmem:[#allocation5 + $0x340] sm:$0xff]
        %v547 = vld [vmem:[#allocation5 + $0x348] sm:$0xff]
        %v548 = vld [vmem:[#allocation5 + $0x350] sm:$0xff]
        %v549 = vld [vmem:[#allocation5 + $0x358] sm:$0xff]
        %v550 = vld [vmem:[#allocation5 + $0x360] sm:$0xff]
        %v551 = vld [vmem:[#allocation5 + $0x368] sm:$0xff]
        %v552 = vld [vmem:[#allocation5 + $0x370] sm:$0xff]
        %v553 = vld [vmem:[#allocation5 + $0x378] sm:$0xff]
        %v554 = vld [vmem:[#allocation5 + $0x380] sm:$0xff]
        %v555 = vld [vmem:[#allocation5 + $0x388] sm:$0xff]
        %v556 = vld [vmem:[#allocation5 + $0x390] sm:$0xff]
        %v557 = vld [vmem:[#allocation5 + $0x398] sm:$0xff]
        %v558 = vld [vmem:[#allocation5 + $0x3a0] sm:$0xff]
        %v559 = vld [vmem:[#allocation5 + $0x3a8] sm:$0xff]
        %v560 = vld [vmem:[#allocation5 + $0x3b0] sm:$0xff]
        %v561 = vld [vmem:[#allocation5 + $0x3b8] sm:$0xff]
        %v562 = vld [vmem:[#allocation5 + $0x3c0] sm:$0xff]
        %v563 = vld [vmem:[#allocation5 + $0x3c8] sm:$0xff]
        %v564 = vld [vmem:[#allocation5 + $0x3d0] sm:$0xff]
        %v565 = vld [vmem:[#allocation5 + $0x3d8] sm:$0xff]
        %v566 = vld [vmem:[#allocation5 + $0x3e0] sm:$0xff]
        %v567 = vld [vmem:[#allocation5 + $0x3e8] sm:$0xff]
        %v568 = vld [vmem:[#allocation5 + $0x3f0] sm:$0xff]
        %v569 = vld [vmem:[#allocation5 + $0x3f8] sm:$0xff]
        %v570 = vld [vmem:[#allocation5 + $0x400] sm:$0xff]
        %v571 = vld [vmem:[#allocation5 + $0x408] sm:$0xff]
        %v572 = vld [vmem:[#allocation5 + $0x410] sm:$0xff]
        %v573 = vld [vmem:[#allocation5 + $0x418] sm:$0xff]
        %v574 = vld [vmem:[#allocation5 + $0x420] sm:$0xff]
        %v575 = vld [vmem:[#allocation5 + $0x428] sm:$0xff]
        %v576 = vld [vmem:[#allocation5 + $0x430] sm:$0xff]
        %v577 = vld [vmem:[#allocation5 + $0x438] sm:$0xff]
        %v578 = vld [vmem:[#allocation5 + $0x440] sm:$0xff]
        %v579 = vld [vmem:[#allocation5 + $0x448] sm:$0xff]
        %v580 = vld [vmem:[#allocation5 + $0x450] sm:$0xff]
        %v581 = vld [vmem:[#allocation5 + $0x458] sm:$0xff]
        %v582 = vld [vmem:[#allocation5 + $0x460] sm:$0xff]
        %v583 = vld [vmem:[#allocation5 + $0x468] sm:$0xff]
        %v584 = vld [vmem:[#allocation5 + $0x470] sm:$0xff]
        %v585 = vld [vmem:[#allocation5 + $0x478] sm:$0xff]
        %v586 = vld [vmem:[#allocation5 + $0x480] sm:$0xff]
        %v587 = vld [vmem:[#allocation5 + $0x488] sm:$0xff]
        %v588 = vld [vmem:[#allocation5 + $0x490] sm:$0xff]
        %v589 = vld [vmem:[#allocation5 + $0x498] sm:$0xff]
        %v590 = vld [vmem:[#allocation5 + $0x4a0] sm:$0xff]
        %v591 = vld [vmem:[#allocation5 + $0x4a8] sm:$0xff]
        %v592 = vld [vmem:[#allocation5 + $0x4b0] sm:$0xff]
        %v593 = vld [vmem:[#allocation5 + $0x4b8] sm:$0xff]
        %v594 = vld [vmem:[#allocation5 + $0x4c0] sm:$0xff]
        %v595 = vld [vmem:[#allocation5 + $0x4c8] sm:$0xff]
        %v596 = vld [vmem:[#allocation5 + $0x4d0] sm:$0xff]
        %v597 = vld [vmem:[#allocation5 + $0x4d8] sm:$0xff]
        %v598 = vld [vmem:[#allocation5 + $0x4e0] sm:$0xff]
        %v599 = vld [vmem:[#allocation5 + $0x4e8] sm:$0xff]
        %v600 = vld [vmem:[#allocation5 + $0x4f0] sm:$0xff]
        %v601 = vld [vmem:[#allocation5 + $0x4f8] sm:$0xff]
        %v602 = vld [vmem:[#allocation5 + $0x500] sm:$0xff]
        %v603 = vld [vmem:[#allocation5 + $0x508] sm:$0xff]
        %v604 = vld [vmem:[#allocation5 + $0x510] sm:$0xff]
        %v605 = vld [vmem:[#allocation5 + $0x518] sm:$0xff]
        %v606 = vld [vmem:[#allocation5 + $0x520] sm:$0xff]
        %v607 = vld [vmem:[#allocation5 + $0x528] sm:$0xff]
        %v608 = vld [vmem:[#allocation5 + $0x530] sm:$0xff]
        %v609 = vld [vmem:[#allocation5 + $0x538] sm:$0xff]
        %v610 = vld [vmem:[#allocation5 + $0x540] sm:$0xff]
        %v611 = vld [vmem:[#allocation5 + $0x548] sm:$0xff]
        %v612 = vld [vmem:[#allocation5 + $0x550] sm:$0xff]
        %v613 = vld [vmem:[#allocation5 + $0x558] sm:$0xff]
        %v614 = vld [vmem:[#allocation5 + $0x560] sm:$0xff]
        %v615 = vld [vmem:[#allocation5 + $0x568] sm:$0xff]
        %v616 = vld [vmem:[#allocation5 + $0x570] sm:$0xff]
        %v617 = vld [vmem:[#allocation5 + $0x578] sm:$0xff]
        %v618 = vld [vmem:[#allocation5 + $0x580] sm:$0xff]
        %v619 = vld [vmem:[#allocation5 + $0x588] sm:$0xff]
        %v620 = vld [vmem:[#allocation5 + $0x590] sm:$0xff]
        %v621 = vld [vmem:[#allocation5 + $0x598] sm:$0xff]
        %v622 = vld [vmem:[#allocation5 + $0x5a0] sm:$0xff]
        %v623 = vld [vmem:[#allocation5 + $0x5a8] sm:$0xff]
        %v624 = vld [vmem:[#allocation5 + $0x5b0] sm:$0xff]
        %v625 = vld [vmem:[#allocation5 + $0x5b8] sm:$0xff]
        %v626 = vld [vmem:[#allocation5 + $0x5c0] sm:$0xff]
        %v627 = vld [vmem:[#allocation5 + $0x5c8] sm:$0xff]
        %v628 = vld [vmem:[#allocation5 + $0x5d0] sm:$0xff]
        %v629 = vld [vmem:[#allocation5 + $0x5d8] sm:$0xff]
        %v630 = vld [vmem:[#allocation5 + $0x5e0] sm:$0xff]
        %v631 = vld [vmem:[#allocation5 + $0x5e8] sm:$0xff]
        %v632 = vld [vmem:[#allocation5 + $0x5f0] sm:$0xff]
        %v633 = vld [vmem:[#allocation5 + $0x5f8] sm:$0xff]
        %v634 = vld [vmem:[#allocation5 + $0x600] sm:$0xff]
        %v635 = vld [vmem:[#allocation5 + $0x608] sm:$0xff]
        %v636 = vld [vmem:[#allocation5 + $0x610] sm:$0xff]
        %v637 = vld [vmem:[#allocation5 + $0x618] sm:$0xff]
        %v638 = vld [vmem:[#allocation5 + $0x620] sm:$0xff]
        %v639 = vld [vmem:[#allocation5 + $0x628] sm:$0xff]
        %v640 = vld [vmem:[#allocation5 + $0x630] sm:$0xff]
        %v641 = vld [vmem:[#allocation5 + $0x638] sm:$0xff]
        %v642 = vld [vmem:[#allocation5 + $0x640] sm:$0xff]
        %v643 = vld [vmem:[#allocation5 + $0x648] sm:$0xff]
        %v644 = vld [vmem:[#allocation5 + $0x650] sm:$0xff]
        %v645 = vld [vmem:[#allocation5 + $0x658] sm:$0xff]
        %v646 = vld [vmem:[#allocation5 + $0x660] sm:$0xff]
        %v647 = vld [vmem:[#allocation5 + $0x668] sm:$0xff]
        %v648 = vld [vmem:[#allocation5 + $0x670] sm:$0xff]
        %v649 = vld [vmem:[#allocation5 + $0x678] sm:$0xff]
        %v650 = vld [vmem:[#allocation5 + $0x680] sm:$0xff]
        %v651 = vld [vmem:[#allocation5 + $0x688] sm:$0xff]
        %v652 = vld [vmem:[#allocation5 + $0x690] sm:$0xff]
        %v653 = vld [vmem:[#allocation5 + $0x698] sm:$0xff]
        %v654 = vld [vmem:[#allocation5 + $0x6a0] sm:$0xff]
        %v655 = vld [vmem:[#allocation5 + $0x6a8] sm:$0xff]
        %v656 = vld [vmem:[#allocation5 + $0x6b0] sm:$0xff]
        %v657 = vld [vmem:[#allocation5 + $0x6b8] sm:$0xff]
        %v658 = vld [vmem:[#allocation5 + $0x6c0] sm:$0xff]
        %v659 = vld [vmem:[#allocation5 + $0x6c8] sm:$0xff]
        %v660 = vld [vmem:[#allocation5 + $0x6d0] sm:$0xff]
        %v661 = vld [vmem:[#allocation5 + $0x6d8] sm:$0xff]
        %v662 = vld [vmem:[#allocation5 + $0x6e0] sm:$0xff]
        %v663 = vld [vmem:[#allocation5 + $0x6e8] sm:$0xff]
        %v664 = vld [vmem:[#allocation5 + $0x6f0] sm:$0xff]
        %v665 = vld [vmem:[#allocation5 + $0x6f8] sm:$0xff]
        %v666 = vld [vmem:[#allocation5 + $0x700] sm:$0xff]
        %v667 = vld [vmem:[#allocation5 + $0x708] sm:$0xff]
        %v668 = vld [vmem:[#allocation5 + $0x710] sm:$0xff]
        %v669 = vld [vmem:[#allocation5 + $0x718] sm:$0xff]
        %v670 = vld [vmem:[#allocation5 + $0x720] sm:$0xff]
        %v671 = vld [vmem:[#allocation5 + $0x728] sm:$0xff]
        %v672 = vld [vmem:[#allocation5 + $0x730] sm:$0xff]
        %v673 = vld [vmem:[#allocation5 + $0x738] sm:$0xff]
        %v674 = vld [vmem:[#allocation5 + $0x740] sm:$0xff]
        %v675 = vld [vmem:[#allocation5 + $0x748] sm:$0xff]
        %v676 = vld [vmem:[#allocation5 + $0x750] sm:$0xff]
        %v677 = vld [vmem:[#allocation5 + $0x758] sm:$0xff]
        %v678 = vld [vmem:[#allocation5 + $0x760] sm:$0xff]
        %v679 = vld [vmem:[#allocation5 + $0x768] sm:$0xff]
        %v680 = vld [vmem:[#allocation5 + $0x770] sm:$0xff]
        %v681 = vld [vmem:[#allocation5 + $0x778] sm:$0xff]
        %v682 = vld [vmem:[#allocation5 + $0x780] sm:$0xff]
        %v683 = vld [vmem:[#allocation5 + $0x788] sm:$0xff]
        %v684 = vld [vmem:[#allocation5 + $0x790] sm:$0xff]
        %v685 = vld [vmem:[#allocation5 + $0x798] sm:$0xff]
        %v686 = vld [vmem:[#allocation5 + $0x7a0] sm:$0xff]
        %v687 = vld [vmem:[#allocation5 + $0x7a8] sm:$0xff]
        %v688 = vld [vmem:[#allocation5 + $0x7b0] sm:$0xff]
        %v689 = vld [vmem:[#allocation5 + $0x7b8] sm:$0xff]
        %v690 = vld [vmem:[#allocation5 + $0x7c0] sm:$0xff]
        %v691 = vld [vmem:[#allocation5 + $0x7c8] sm:$0xff]
        %v692 = vld [vmem:[#allocation5 + $0x7d0] sm:$0xff]
        %v693 = vld [vmem:[#allocation5 + $0x7d8] sm:$0xff]
        %v694 = vld [vmem:[#allocation5 + $0x7e0] sm:$0xff]
        %v695 = vld [vmem:[#allocation5 + $0x7e8] sm:$0xff]
        %v696 = vld [vmem:[#allocation5 + $0x7f0] sm:$0xff]
        %v697 = vld [vmem:[#allocation5 + $0x7f8] sm:$0xff]
        %v698 = vld [vmem:[#allocation5 + $0x800] sm:$0xff]
        %v699 = vld [vmem:[#allocation5 + $0x808] sm:$0xff]
        %v700 = vld [vmem:[#allocation5 + $0x810] sm:$0xff]
        %v701 = vld [vmem:[#allocation5 + $0x818] sm:$0xff]
        %v702 = vld [vmem:[#allocation5 + $0x820] sm:$0xff]
        %v703 = vld [vmem:[#allocation5 + $0x828] sm:$0xff]
        %v704 = vld [vmem:[#allocation5 + $0x830] sm:$0xff]
        %v705 = vld [vmem:[#allocation5 + $0x838] sm:$0xff]
        %v706 = vld [vmem:[#allocation5 + $0x840] sm:$0xff]
        %v707 = vld [vmem:[#allocation5 + $0x848] sm:$0xff]
        %v708 = vld [vmem:[#allocation5 + $0x850] sm:$0xff]
        %v709 = vld [vmem:[#allocation5 + $0x858] sm:$0xff]
        %v710 = vld [vmem:[#allocation5 + $0x860] sm:$0xff]
        %v711 = vld [vmem:[#allocation5 + $0x868] sm:$0xff]
        %v712 = vld [vmem:[#allocation5 + $0x870] sm:$0xff]
        %v713 = vld [vmem:[#allocation5 + $0x878] sm:$0xff]
        %v714 = vld [vmem:[#allocation5 + $0x880] sm:$0xff]
        %v715 = vld [vmem:[#allocation5 + $0x888] sm:$0xff]
        %v716 = vld [vmem:[#allocation5 + $0x890] sm:$0xff]
        %v717 = vld [vmem:[#allocation5 + $0x898] sm:$0xff]
        %v718 = vld [vmem:[#allocation5 + $0x8a0] sm:$0xff]
        %v719 = vld [vmem:[#allocation5 + $0x8a8] sm:$0xff]
        %v720 = vld [vmem:[#allocation5 + $0x8b0] sm:$0xff]
        %v721 = vld [vmem:[#allocation5 + $0x8b8] sm:$0xff]
        %v722 = vld [vmem:[#allocation5 + $0x8c0] sm:$0xff]
        %v723 = vld [vmem:[#allocation5 + $0x8c8] sm:$0xff]
        %v724 = vld [vmem:[#allocation5 + $0x8d0] sm:$0xff]
        %v725 = vld [vmem:[#allocation5 + $0x8d8] sm:$0xff]
        %v726 = vld [vmem:[#allocation5 + $0x8e0] sm:$0xff]
        %v727 = vld [vmem:[#allocation5 + $0x8e8] sm:$0xff]
        %v728 = vld [vmem:[#allocation5 + $0x8f0] sm:$0xff]
        %v729 = vld [vmem:[#allocation5 + $0x8f8] sm:$0xff]
        %v730 = vld [vmem:[#allocation7] sm:$0x3f]
        %v732 = vperm.slane %v730, 0
        %v733 = vperm.slane %v730, 1
        %v734 = vperm.slane %v730, 2
        %v735 = vperm.slane %v730, 3
        %v736 = vperm.slane %v730, 4
        %v737 = vperm.slane %v730, 5
        %v792 = vunpack.c.l.b16 %v394
        %v793 = vunpack.c.h.b16 %v394
        %v794 = vunpack.c.l.b16 %v395
        %v795 = vunpack.c.h.b16 %v395
        %v796 = vunpack.c.l.b16 %v396
        %v797 = vunpack.c.h.b16 %v396
        %v798 = vunpack.c.l.b16 %v397
        %v799 = vunpack.c.h.b16 %v397
        %v800 = vunpack.c.l.b16 %v398
        %v801 = vunpack.c.h.b16 %v398
        %v802 = vunpack.c.l.b16 %v399
        %v803 = vunpack.c.h.b16 %v399
        %v804 = vunpack.c.l.b16 %v400
        %v805 = vunpack.c.h.b16 %v400
        %v806 = vunpack.c.l.b16 %v401
        %v807 = vunpack.c.h.b16 %v401
        %v808 = vunpack.c.l.b16 %v402
        %v809 = vunpack.c.h.b16 %v402
        %v810 = vunpack.c.l.b16 %v403
        %v811 = vunpack.c.h.b16 %v403
        %v812 = vunpack.c.l.b16 %v404
        %v813 = vunpack.c.h.b16 %v404
        %v814 = vunpack.c.l.b16 %v405
        %v815 = vunpack.c.h.b16 %v405
        %v816 = vunpack.c.l.b16 %v406
        %v817 = vunpack.c.h.b16 %v406
        %v818 = vunpack.c.l.b16 %v407
        %v819 = vunpack.c.h.b16 %v407
        %v820 = vunpack.c.l.b16 %v408
        %v821 = vunpack.c.h.b16 %v408
        %v822 = vunpack.c.l.b16 %v409
        %v823 = vunpack.c.h.b16 %v409
        %v824 = vunpack.c.l.b16 %v410
        %v825 = vunpack.c.h.b16 %v410
        %v826 = vunpack.c.l.b16 %v411
        %v827 = vunpack.c.h.b16 %v411
        %v828 = vunpack.c.l.b16 %v412
        %v829 = vunpack.c.h.b16 %v412
        %v830 = vunpack.c.l.b16 %v413
        %v831 = vunpack.c.h.b16 %v413
        %v832 = vunpack.c.l.b16 %v414
        %v833 = vunpack.c.h.b16 %v414
        %v834 = vunpack.c.l.b16 %v415
        %v835 = vunpack.c.h.b16 %v415
        %v836 = vunpack.c.l.b16 %v416
        %v837 = vunpack.c.h.b16 %v416
        %v838 = vunpack.c.l.b16 %v417
        %v839 = vunpack.c.h.b16 %v417
        %v840 = vunpack.c.l.b16 %v418
        %v841 = vunpack.c.h.b16 %v418
        %v842 = vunpack.c.l.b16 %v419
        %v843 = vunpack.c.h.b16 %v419
        %v844 = vunpack.c.l.b16 %v420
        %v845 = vunpack.c.h.b16 %v420
        %v846 = vunpack.c.l.b16 %v421
        %v847 = vunpack.c.h.b16 %v421
        %v848 = vunpack.c.l.b16 %v422
        %v849 = vunpack.c.h.b16 %v422
        %v850 = vunpack.c.l.b16 %v423
        %v851 = vunpack.c.h.b16 %v423
        %v852 = vunpack.c.l.b16 %v424
        %v853 = vunpack.c.h.b16 %v424
        %v854 = vunpack.c.l.b16 %v425
        %v855 = vunpack.c.h.b16 %v425
        %v856 = vunpack.c.l.b16 %v426
        %v857 = vunpack.c.h.b16 %v426
        %v858 = vunpack.c.l.b16 %v427
        %v859 = vunpack.c.h.b16 %v427
        %v860 = vunpack.c.l.b16 %v428
        %v861 = vunpack.c.h.b16 %v428
        %v862 = vunpack.c.l.b16 %v429
        %v863 = vunpack.c.h.b16 %v429
        %v864 = vunpack.c.l.b16 %v430
        %v865 = vunpack.c.h.b16 %v430
        %v866 = vunpack.c.l.b16 %v431
        %v867 = vunpack.c.h.b16 %v431
        %v868 = vunpack.c.l.b16 %v432
        %v869 = vunpack.c.h.b16 %v432
        %v870 = vunpack.c.l.b16 %v433
        %v871 = vunpack.c.h.b16 %v433
        %v872 = vunpack.c.l.b16 %v434
        %v873 = vunpack.c.h.b16 %v434
        %v874 = vunpack.c.l.b16 %v435
        %v875 = vunpack.c.h.b16 %v435
        %v876 = vunpack.c.l.b16 %v436
        %v877 = vunpack.c.h.b16 %v436
        %v878 = vunpack.c.l.b16 %v437
        %v879 = vunpack.c.h.b16 %v437
        %v880 = vunpack.c.l.b16 %v438
        %v881 = vunpack.c.h.b16 %v438
        %v882 = vunpack.c.l.b16 %v439
        %v883 = vunpack.c.h.b16 %v439
        %v884 = vunpack.c.l.b16 %v440
        %v885 = vunpack.c.h.b16 %v440
        %v886 = vunpack.c.l.b16 %v441
        %v887 = vunpack.c.h.b16 %v441
        %v888 = vpack.c.b16 %v798, %v792
        %v889 = vpack.c.b16 %v799, %v793
        %v890 = vpack.c.b16 %v800, %v794
        %v891 = vpack.c.b16 %v801, %v795
        %v892 = vpack.c.b16 %v802, %v796
        %v893 = vpack.c.b16 %v803, %v797
        %v894 = vpack.c.b16 %v810, %v804
        %v895 = vpack.c.b16 %v811, %v805
        %v896 = vpack.c.b16 %v812, %v806
        %v897 = vpack.c.b16 %v813, %v807
        %v898 = vpack.c.b16 %v814, %v808
        %v899 = vpack.c.b16 %v815, %v809
        %v900 = vpack.c.b16 %v822, %v816
        %v901 = vpack.c.b16 %v823, %v817
        %v902 = vpack.c.b16 %v824, %v818
        %v903 = vpack.c.b16 %v825, %v819
        %v904 = vpack.c.b16 %v826, %v820
        %v905 = vpack.c.b16 %v827, %v821
        %v906 = vpack.c.b16 %v834, %v828
        %v907 = vpack.c.b16 %v835, %v829
        %v908 = vpack.c.b16 %v836, %v830
        %v909 = vpack.c.b16 %v837, %v831
        %v910 = vpack.c.b16 %v838, %v832
        %v911 = vpack.c.b16 %v839, %v833
        %v912 = vpack.c.b16 %v846, %v840
        %v913 = vpack.c.b16 %v847, %v841
        %v914 = vpack.c.b16 %v848, %v842
        %v915 = vpack.c.b16 %v849, %v843
        %v916 = vpack.c.b16 %v850, %v844
        %v917 = vpack.c.b16 %v851, %v845
        %v918 = vpack.c.b16 %v858, %v852
        %v919 = vpack.c.b16 %v859, %v853
        %v920 = vpack.c.b16 %v860, %v854
        %v921 = vpack.c.b16 %v861, %v855
        %v922 = vpack.c.b16 %v862, %v856
        %v923 = vpack.c.b16 %v863, %v857
        %v924 = vpack.c.b16 %v870, %v864
        %v925 = vpack.c.b16 %v871, %v865
        %v926 = vpack.c.b16 %v872, %v866
        %v927 = vpack.c.b16 %v873, %v867
        %v928 = vpack.c.b16 %v874, %v868
        %v929 = vpack.c.b16 %v875, %v869
        %v930 = vpack.c.b16 %v882, %v876
        %v931 = vpack.c.b16 %v883, %v877
        %v932 = vpack.c.b16 %v884, %v878
        %v933 = vpack.c.b16 %v885, %v879
        %v934 = vpack.c.b16 %v886, %v880
        %v935 = vpack.c.b16 %v887, %v881
        %v1272 = vunpack.c.l.b16 %v442
        %v1273 = vunpack.c.h.b16 %v442
        %v1274 = vunpack.c.l.b16 %v443
        %v1275 = vunpack.c.h.b16 %v443
        %v1276 = vunpack.c.l.b16 %v444
        %v1277 = vunpack.c.h.b16 %v444
        %v1278 = vunpack.c.l.b16 %v445
        %v1279 = vunpack.c.h.b16 %v445
        %v1280 = vunpack.c.l.b16 %v446
        %v1281 = vunpack.c.h.b16 %v446
        %v1282 = vunpack.c.l.b16 %v447
        %v1283 = vunpack.c.h.b16 %v447
        %v1284 = vunpack.c.l.b16 %v448
        %v1285 = vunpack.c.h.b16 %v448
        %v1286 = vunpack.c.l.b16 %v449
        %v1287 = vunpack.c.h.b16 %v449
        %v1288 = vunpack.c.l.b16 %v450
        %v1289 = vunpack.c.h.b16 %v450
        %v1290 = vunpack.c.l.b16 %v451
        %v1291 = vunpack.c.h.b16 %v451
        %v1292 = vunpack.c.l.b16 %v452
        %v1293 = vunpack.c.h.b16 %v452
        %v1294 = vunpack.c.l.b16 %v453
        %v1295 = vunpack.c.h.b16 %v453
        %v1296 = vunpack.c.l.b16 %v454
        %v1297 = vunpack.c.h.b16 %v454
        %v1298 = vunpack.c.l.b16 %v455
        %v1299 = vunpack.c.h.b16 %v455
        %v1300 = vunpack.c.l.b16 %v456
        %v1301 = vunpack.c.h.b16 %v456
        %v1302 = vunpack.c.l.b16 %v457
        %v1303 = vunpack.c.h.b16 %v457
        %v1304 = vunpack.c.l.b16 %v458
        %v1305 = vunpack.c.h.b16 %v458
        %v1306 = vunpack.c.l.b16 %v459
        %v1307 = vunpack.c.h.b16 %v459
        %v1308 = vunpack.c.l.b16 %v460
        %v1309 = vunpack.c.h.b16 %v460
        %v1310 = vunpack.c.l.b16 %v461
        %v1311 = vunpack.c.h.b16 %v461
        %v1312 = vunpack.c.l.b16 %v462
        %v1313 = vunpack.c.h.b16 %v462
        %v1314 = vunpack.c.l.b16 %v463
        %v1315 = vunpack.c.h.b16 %v463
        %v1316 = vunpack.c.l.b16 %v464
        %v1317 = vunpack.c.h.b16 %v464
        %v1318 = vunpack.c.l.b16 %v465
        %v1319 = vunpack.c.h.b16 %v465
        %v1320 = vunpack.c.l.b16 %v466
        %v1321 = vunpack.c.h.b16 %v466
        %v1322 = vunpack.c.l.b16 %v467
        %v1323 = vunpack.c.h.b16 %v467
        %v1324 = vunpack.c.l.b16 %v468
        %v1325 = vunpack.c.h.b16 %v468
        %v1326 = vunpack.c.l.b16 %v469
        %v1327 = vunpack.c.h.b16 %v469
        %v1328 = vunpack.c.l.b16 %v470
        %v1329 = vunpack.c.h.b16 %v470
        %v1330 = vunpack.c.l.b16 %v471
        %v1331 = vunpack.c.h.b16 %v471
        %v1332 = vunpack.c.l.b16 %v472
        %v1333 = vunpack.c.h.b16 %v472
        %v1334 = vunpack.c.l.b16 %v473
        %v1335 = vunpack.c.h.b16 %v473
        %v1336 = vunpack.c.l.b16 %v474
        %v1337 = vunpack.c.h.b16 %v474
        %v1338 = vunpack.c.l.b16 %v475
        %v1339 = vunpack.c.h.b16 %v475
        %v1340 = vunpack.c.l.b16 %v476
        %v1341 = vunpack.c.h.b16 %v476
        %v1342 = vunpack.c.l.b16 %v477
        %v1343 = vunpack.c.h.b16 %v477
        %v1344 = vunpack.c.l.b16 %v478
        %v1345 = vunpack.c.h.b16 %v478
        %v1346 = vunpack.c.l.b16 %v479
        %v1347 = vunpack.c.h.b16 %v479
        %v1348 = vunpack.c.l.b16 %v480
        %v1349 = vunpack.c.h.b16 %v480
        %v1350 = vunpack.c.l.b16 %v481
        %v1351 = vunpack.c.h.b16 %v481
        %v1352 = vunpack.c.l.b16 %v482
        %v1353 = vunpack.c.h.b16 %v482
        %v1354 = vunpack.c.l.b16 %v483
        %v1355 = vunpack.c.h.b16 %v483
        %v1356 = vunpack.c.l.b16 %v484
        %v1357 = vunpack.c.h.b16 %v484
        %v1358 = vunpack.c.l.b16 %v485
        %v1359 = vunpack.c.h.b16 %v485
        %v1360 = vunpack.c.l.b16 %v486
        %v1361 = vunpack.c.h.b16 %v486
        %v1362 = vunpack.c.l.b16 %v487
        %v1363 = vunpack.c.h.b16 %v487
        %v1364 = vunpack.c.l.b16 %v488
        %v1365 = vunpack.c.h.b16 %v488
        %v1366 = vunpack.c.l.b16 %v489
        %v1367 = vunpack.c.h.b16 %v489
        %v1368 = vunpack.c.l.b16 %v490
        %v1369 = vunpack.c.h.b16 %v490
        %v1370 = vunpack.c.l.b16 %v491
        %v1371 = vunpack.c.h.b16 %v491
        %v1372 = vunpack.c.l.b16 %v492
        %v1373 = vunpack.c.h.b16 %v492
        %v1374 = vunpack.c.l.b16 %v493
        %v1375 = vunpack.c.h.b16 %v493
        %v1376 = vunpack.c.l.b16 %v494
        %v1377 = vunpack.c.h.b16 %v494
        %v1378 = vunpack.c.l.b16 %v495
        %v1379 = vunpack.c.h.b16 %v495
        %v1380 = vunpack.c.l.b16 %v496
        %v1381 = vunpack.c.h.b16 %v496
        %v1382 = vunpack.c.l.b16 %v497
        %v1383 = vunpack.c.h.b16 %v497
        %v1384 = vunpack.c.l.b16 %v498
        %v1385 = vunpack.c.h.b16 %v498
        %v1386 = vunpack.c.l.b16 %v499
        %v1387 = vunpack.c.h.b16 %v499
        %v1388 = vunpack.c.l.b16 %v500
        %v1389 = vunpack.c.h.b16 %v500
        %v1390 = vunpack.c.l.b16 %v501
        %v1391 = vunpack.c.h.b16 %v501
        %v1392 = vunpack.c.l.b16 %v502
        %v1393 = vunpack.c.h.b16 %v502
        %v1394 = vunpack.c.l.b16 %v503
        %v1395 = vunpack.c.h.b16 %v503
        %v1396 = vunpack.c.l.b16 %v504
        %v1397 = vunpack.c.h.b16 %v504
        %v1398 = vunpack.c.l.b16 %v505
        %v1399 = vunpack.c.h.b16 %v505
        %v1400 = vunpack.c.l.b16 %v506
        %v1401 = vunpack.c.h.b16 %v506
        %v1402 = vunpack.c.l.b16 %v507
        %v1403 = vunpack.c.h.b16 %v507
        %v1404 = vunpack.c.l.b16 %v508
        %v1405 = vunpack.c.h.b16 %v508
        %v1406 = vunpack.c.l.b16 %v509
        %v1407 = vunpack.c.h.b16 %v509
        %v1408 = vunpack.c.l.b16 %v510
        %v1409 = vunpack.c.h.b16 %v510
        %v1410 = vunpack.c.l.b16 %v511
        %v1411 = vunpack.c.h.b16 %v511
        %v1412 = vunpack.c.l.b16 %v512
        %v1413 = vunpack.c.h.b16 %v512
        %v1414 = vunpack.c.l.b16 %v513
        %v1415 = vunpack.c.h.b16 %v513
        %v1416 = vunpack.c.l.b16 %v514
        %v1417 = vunpack.c.h.b16 %v514
        %v1418 = vunpack.c.l.b16 %v515
        %v1419 = vunpack.c.h.b16 %v515
        %v1420 = vunpack.c.l.b16 %v516
        %v1421 = vunpack.c.h.b16 %v516
        %v1422 = vunpack.c.l.b16 %v517
        %v1423 = vunpack.c.h.b16 %v517
        %v1424 = vunpack.c.l.b16 %v518
        %v1425 = vunpack.c.h.b16 %v518
        %v1426 = vunpack.c.l.b16 %v519
        %v1427 = vunpack.c.h.b16 %v519
        %v1428 = vunpack.c.l.b16 %v520
        %v1429 = vunpack.c.h.b16 %v520
        %v1430 = vunpack.c.l.b16 %v521
        %v1431 = vunpack.c.h.b16 %v521
        %v1432 = vunpack.c.l.b16 %v522
        %v1433 = vunpack.c.h.b16 %v522
        %v1434 = vunpack.c.l.b16 %v523
        %v1435 = vunpack.c.h.b16 %v523
        %v1436 = vunpack.c.l.b16 %v524
        %v1437 = vunpack.c.h.b16 %v524
        %v1438 = vunpack.c.l.b16 %v525
        %v1439 = vunpack.c.h.b16 %v525
        %v1440 = vunpack.c.l.b16 %v526
        %v1441 = vunpack.c.h.b16 %v526
        %v1442 = vunpack.c.l.b16 %v527
        %v1443 = vunpack.c.h.b16 %v527
        %v1444 = vunpack.c.l.b16 %v528
        %v1445 = vunpack.c.h.b16 %v528
        %v1446 = vunpack.c.l.b16 %v529
        %v1447 = vunpack.c.h.b16 %v529
        %v1448 = vunpack.c.l.b16 %v530
        %v1449 = vunpack.c.h.b16 %v530
        %v1450 = vunpack.c.l.b16 %v531
        %v1451 = vunpack.c.h.b16 %v531
        %v1452 = vunpack.c.l.b16 %v532
        %v1453 = vunpack.c.h.b16 %v532
        %v1454 = vunpack.c.l.b16 %v533
        %v1455 = vunpack.c.h.b16 %v533
        %v1456 = vunpack.c.l.b16 %v534
        %v1457 = vunpack.c.h.b16 %v534
        %v1458 = vunpack.c.l.b16 %v535
        %v1459 = vunpack.c.h.b16 %v535
        %v1460 = vunpack.c.l.b16 %v536
        %v1461 = vunpack.c.h.b16 %v536
        %v1462 = vunpack.c.l.b16 %v537
        %v1463 = vunpack.c.h.b16 %v537
        %v1464 = vunpack.c.l.b16 %v538
        %v1465 = vunpack.c.h.b16 %v538
        %v1466 = vunpack.c.l.b16 %v539
        %v1467 = vunpack.c.h.b16 %v539
        %v1468 = vunpack.c.l.b16 %v540
        %v1469 = vunpack.c.h.b16 %v540
        %v1470 = vunpack.c.l.b16 %v541
        %v1471 = vunpack.c.h.b16 %v541
        %v1472 = vunpack.c.l.b16 %v542
        %v1473 = vunpack.c.h.b16 %v542
        %v1474 = vunpack.c.l.b16 %v543
        %v1475 = vunpack.c.h.b16 %v543
        %v1476 = vunpack.c.l.b16 %v544
        %v1477 = vunpack.c.h.b16 %v544
        %v1478 = vunpack.c.l.b16 %v545
        %v1479 = vunpack.c.h.b16 %v545
        %v1480 = vunpack.c.l.b16 %v546
        %v1481 = vunpack.c.h.b16 %v546
        %v1482 = vunpack.c.l.b16 %v547
        %v1483 = vunpack.c.h.b16 %v547
        %v1484 = vunpack.c.l.b16 %v548
        %v1485 = vunpack.c.h.b16 %v548
        %v1486 = vunpack.c.l.b16 %v549
        %v1487 = vunpack.c.h.b16 %v549
        %v1488 = vunpack.c.l.b16 %v550
        %v1489 = vunpack.c.h.b16 %v550
        %v1490 = vunpack.c.l.b16 %v551
        %v1491 = vunpack.c.h.b16 %v551
        %v1492 = vunpack.c.l.b16 %v552
        %v1493 = vunpack.c.h.b16 %v552
        %v1494 = vunpack.c.l.b16 %v553
        %v1495 = vunpack.c.h.b16 %v553
        %v1496 = vunpack.c.l.b16 %v554
        %v1497 = vunpack.c.h.b16 %v554
        %v1498 = vunpack.c.l.b16 %v555
        %v1499 = vunpack.c.h.b16 %v555
        %v1500 = vunpack.c.l.b16 %v556
        %v1501 = vunpack.c.h.b16 %v556
        %v1502 = vunpack.c.l.b16 %v557
        %v1503 = vunpack.c.h.b16 %v557
        %v1504 = vunpack.c.l.b16 %v558
        %v1505 = vunpack.c.h.b16 %v558
        %v1506 = vunpack.c.l.b16 %v559
        %v1507 = vunpack.c.h.b16 %v559
        %v1508 = vunpack.c.l.b16 %v560
        %v1509 = vunpack.c.h.b16 %v560
        %v1510 = vunpack.c.l.b16 %v561
        %v1511 = vunpack.c.h.b16 %v561
        %v1512 = vunpack.c.l.b16 %v562
        %v1513 = vunpack.c.h.b16 %v562
        %v1514 = vunpack.c.l.b16 %v563
        %v1515 = vunpack.c.h.b16 %v563
        %v1516 = vunpack.c.l.b16 %v564
        %v1517 = vunpack.c.h.b16 %v564
        %v1518 = vunpack.c.l.b16 %v565
        %v1519 = vunpack.c.h.b16 %v565
        %v1520 = vunpack.c.l.b16 %v566
        %v1521 = vunpack.c.h.b16 %v566
        %v1522 = vunpack.c.l.b16 %v567
        %v1523 = vunpack.c.h.b16 %v567
        %v1524 = vunpack.c.l.b16 %v568
        %v1525 = vunpack.c.h.b16 %v568
        %v1526 = vunpack.c.l.b16 %v569
        %v1527 = vunpack.c.h.b16 %v569
        %v1528 = vunpack.c.l.b16 %v570
        %v1529 = vunpack.c.h.b16 %v570
        %v1530 = vunpack.c.l.b16 %v571
        %v1531 = vunpack.c.h.b16 %v571
        %v1532 = vunpack.c.l.b16 %v572
        %v1533 = vunpack.c.h.b16 %v572
        %v1534 = vunpack.c.l.b16 %v573
        %v1535 = vunpack.c.h.b16 %v573
        %v1536 = vunpack.c.l.b16 %v574
        %v1537 = vunpack.c.h.b16 %v574
        %v1538 = vunpack.c.l.b16 %v575
        %v1539 = vunpack.c.h.b16 %v575
        %v1540 = vunpack.c.l.b16 %v576
        %v1541 = vunpack.c.h.b16 %v576
        %v1542 = vunpack.c.l.b16 %v577
        %v1543 = vunpack.c.h.b16 %v577
        %v1544 = vunpack.c.l.b16 %v578
        %v1545 = vunpack.c.h.b16 %v578
        %v1546 = vunpack.c.l.b16 %v579
        %v1547 = vunpack.c.h.b16 %v579
        %v1548 = vunpack.c.l.b16 %v580
        %v1549 = vunpack.c.h.b16 %v580
        %v1550 = vunpack.c.l.b16 %v581
        %v1551 = vunpack.c.h.b16 %v581
        %v1552 = vunpack.c.l.b16 %v582
        %v1553 = vunpack.c.h.b16 %v582
        %v1554 = vunpack.c.l.b16 %v583
        %v1555 = vunpack.c.h.b16 %v583
        %v1556 = vunpack.c.l.b16 %v584
        %v1557 = vunpack.c.h.b16 %v584
        %v1558 = vunpack.c.l.b16 %v585
        %v1559 = vunpack.c.h.b16 %v585
        %v1560 = vunpack.c.l.b16 %v586
        %v1561 = vunpack.c.h.b16 %v586
        %v1562 = vunpack.c.l.b16 %v587
        %v1563 = vunpack.c.h.b16 %v587
        %v1564 = vunpack.c.l.b16 %v588
        %v1565 = vunpack.c.h.b16 %v588
        %v1566 = vunpack.c.l.b16 %v589
        %v1567 = vunpack.c.h.b16 %v589
        %v1568 = vunpack.c.l.b16 %v590
        %v1569 = vunpack.c.h.b16 %v590
        %v1570 = vunpack.c.l.b16 %v591
        %v1571 = vunpack.c.h.b16 %v591
        %v1572 = vunpack.c.l.b16 %v592
        %v1573 = vunpack.c.h.b16 %v592
        %v1574 = vunpack.c.l.b16 %v593
        %v1575 = vunpack.c.h.b16 %v593
        %v1576 = vunpack.c.l.b16 %v594
        %v1577 = vunpack.c.h.b16 %v594
        %v1578 = vunpack.c.l.b16 %v595
        %v1579 = vunpack.c.h.b16 %v595
        %v1580 = vunpack.c.l.b16 %v596
        %v1581 = vunpack.c.h.b16 %v596
        %v1582 = vunpack.c.l.b16 %v597
        %v1583 = vunpack.c.h.b16 %v597
        %v1584 = vunpack.c.l.b16 %v598
        %v1585 = vunpack.c.h.b16 %v598
        %v1586 = vunpack.c.l.b16 %v599
        %v1587 = vunpack.c.h.b16 %v599
        %v1588 = vunpack.c.l.b16 %v600
        %v1589 = vunpack.c.h.b16 %v600
        %v1590 = vunpack.c.l.b16 %v601
        %v1591 = vunpack.c.h.b16 %v601
        %v1592 = vunpack.c.l.b16 %v602
        %v1593 = vunpack.c.h.b16 %v602
        %v1594 = vunpack.c.l.b16 %v603
        %v1595 = vunpack.c.h.b16 %v603
        %v1596 = vunpack.c.l.b16 %v604
        %v1597 = vunpack.c.h.b16 %v604
        %v1598 = vunpack.c.l.b16 %v605
        %v1599 = vunpack.c.h.b16 %v605
        %v1600 = vunpack.c.l.b16 %v606
        %v1601 = vunpack.c.h.b16 %v606
        %v1602 = vunpack.c.l.b16 %v607
        %v1603 = vunpack.c.h.b16 %v607
        %v1604 = vunpack.c.l.b16 %v608
        %v1605 = vunpack.c.h.b16 %v608
        %v1606 = vunpack.c.l.b16 %v609
        %v1607 = vunpack.c.h.b16 %v609
        %v1608 = vunpack.c.l.b16 %v610
        %v1609 = vunpack.c.h.b16 %v610
        %v1610 = vunpack.c.l.b16 %v611
        %v1611 = vunpack.c.h.b16 %v611
        %v1612 = vunpack.c.l.b16 %v612
        %v1613 = vunpack.c.h.b16 %v612
        %v1614 = vunpack.c.l.b16 %v613
        %v1615 = vunpack.c.h.b16 %v613
        %v1616 = vunpack.c.l.b16 %v614
        %v1617 = vunpack.c.h.b16 %v614
        %v1618 = vunpack.c.l.b16 %v615
        %v1619 = vunpack.c.h.b16 %v615
        %v1620 = vunpack.c.l.b16 %v616
        %v1621 = vunpack.c.h.b16 %v616
        %v1622 = vunpack.c.l.b16 %v617
        %v1623 = vunpack.c.h.b16 %v617
        %v1624 = vunpack.c.l.b16 %v618
        %v1625 = vunpack.c.h.b16 %v618
        %v1626 = vunpack.c.l.b16 %v619
        %v1627 = vunpack.c.h.b16 %v619
        %v1628 = vunpack.c.l.b16 %v620
        %v1629 = vunpack.c.h.b16 %v620
        %v1630 = vunpack.c.l.b16 %v621
        %v1631 = vunpack.c.h.b16 %v621
        %v1632 = vunpack.c.l.b16 %v622
        %v1633 = vunpack.c.h.b16 %v622
        %v1634 = vunpack.c.l.b16 %v623
        %v1635 = vunpack.c.h.b16 %v623
        %v1636 = vunpack.c.l.b16 %v624
        %v1637 = vunpack.c.h.b16 %v624
        %v1638 = vunpack.c.l.b16 %v625
        %v1639 = vunpack.c.h.b16 %v625
        %v1640 = vunpack.c.l.b16 %v626
        %v1641 = vunpack.c.h.b16 %v626
        %v1642 = vunpack.c.l.b16 %v627
        %v1643 = vunpack.c.h.b16 %v627
        %v1644 = vunpack.c.l.b16 %v628
        %v1645 = vunpack.c.h.b16 %v628
        %v1646 = vunpack.c.l.b16 %v629
        %v1647 = vunpack.c.h.b16 %v629
        %v1648 = vunpack.c.l.b16 %v630
        %v1649 = vunpack.c.h.b16 %v630
        %v1650 = vunpack.c.l.b16 %v631
        %v1651 = vunpack.c.h.b16 %v631
        %v1652 = vunpack.c.l.b16 %v632
        %v1653 = vunpack.c.h.b16 %v632
        %v1654 = vunpack.c.l.b16 %v633
        %v1655 = vunpack.c.h.b16 %v633
        %v1656 = vunpack.c.l.b16 %v634
        %v1657 = vunpack.c.h.b16 %v634
        %v1658 = vunpack.c.l.b16 %v635
        %v1659 = vunpack.c.h.b16 %v635
        %v1660 = vunpack.c.l.b16 %v636
        %v1661 = vunpack.c.h.b16 %v636
        %v1662 = vunpack.c.l.b16 %v637
        %v1663 = vunpack.c.h.b16 %v637
        %v1664 = vunpack.c.l.b16 %v638
        %v1665 = vunpack.c.h.b16 %v638
        %v1666 = vunpack.c.l.b16 %v639
        %v1667 = vunpack.c.h.b16 %v639
        %v1668 = vunpack.c.l.b16 %v640
        %v1669 = vunpack.c.h.b16 %v640
        %v1670 = vunpack.c.l.b16 %v641
        %v1671 = vunpack.c.h.b16 %v641
        %v1672 = vunpack.c.l.b16 %v642
        %v1673 = vunpack.c.h.b16 %v642
        %v1674 = vunpack.c.l.b16 %v643
        %v1675 = vunpack.c.h.b16 %v643
        %v1676 = vunpack.c.l.b16 %v644
        %v1677 = vunpack.c.h.b16 %v644
        %v1678 = vunpack.c.l.b16 %v645
        %v1679 = vunpack.c.h.b16 %v645
        %v1680 = vunpack.c.l.b16 %v646
        %v1681 = vunpack.c.h.b16 %v646
        %v1682 = vunpack.c.l.b16 %v647
        %v1683 = vunpack.c.h.b16 %v647
        %v1684 = vunpack.c.l.b16 %v648
        %v1685 = vunpack.c.h.b16 %v648
        %v1686 = vunpack.c.l.b16 %v649
        %v1687 = vunpack.c.h.b16 %v649
        %v1688 = vunpack.c.l.b16 %v650
        %v1689 = vunpack.c.h.b16 %v650
        %v1690 = vunpack.c.l.b16 %v651
        %v1691 = vunpack.c.h.b16 %v651
        %v1692 = vunpack.c.l.b16 %v652
        %v1693 = vunpack.c.h.b16 %v652
        %v1694 = vunpack.c.l.b16 %v653
        %v1695 = vunpack.c.h.b16 %v653
        %v1696 = vunpack.c.l.b16 %v654
        %v1697 = vunpack.c.h.b16 %v654
        %v1698 = vunpack.c.l.b16 %v655
        %v1699 = vunpack.c.h.b16 %v655
        %v1700 = vunpack.c.l.b16 %v656
        %v1701 = vunpack.c.h.b16 %v656
        %v1702 = vunpack.c.l.b16 %v657
        %v1703 = vunpack.c.h.b16 %v657
        %v1704 = vunpack.c.l.b16 %v658
        %v1705 = vunpack.c.h.b16 %v658
        %v1706 = vunpack.c.l.b16 %v659
        %v1707 = vunpack.c.h.b16 %v659
        %v1708 = vunpack.c.l.b16 %v660
        %v1709 = vunpack.c.h.b16 %v660
        %v1710 = vunpack.c.l.b16 %v661
        %v1711 = vunpack.c.h.b16 %v661
        %v1712 = vunpack.c.l.b16 %v662
        %v1713 = vunpack.c.h.b16 %v662
        %v1714 = vunpack.c.l.b16 %v663
        %v1715 = vunpack.c.h.b16 %v663
        %v1716 = vunpack.c.l.b16 %v664
        %v1717 = vunpack.c.h.b16 %v664
        %v1718 = vunpack.c.l.b16 %v665
        %v1719 = vunpack.c.h.b16 %v665
        %v1720 = vunpack.c.l.b16 %v666
        %v1721 = vunpack.c.h.b16 %v666
        %v1722 = vunpack.c.l.b16 %v667
        %v1723 = vunpack.c.h.b16 %v667
        %v1724 = vunpack.c.l.b16 %v668
        %v1725 = vunpack.c.h.b16 %v668
        %v1726 = vunpack.c.l.b16 %v669
        %v1727 = vunpack.c.h.b16 %v669
        %v1728 = vunpack.c.l.b16 %v670
        %v1729 = vunpack.c.h.b16 %v670
        %v1730 = vunpack.c.l.b16 %v671
        %v1731 = vunpack.c.h.b16 %v671
        %v1732 = vunpack.c.l.b16 %v672
        %v1733 = vunpack.c.h.b16 %v672
        %v1734 = vunpack.c.l.b16 %v673
        %v1735 = vunpack.c.h.b16 %v673
        %v1736 = vunpack.c.l.b16 %v674
        %v1737 = vunpack.c.h.b16 %v674
        %v1738 = vunpack.c.l.b16 %v675
        %v1739 = vunpack.c.h.b16 %v675
        %v1740 = vunpack.c.l.b16 %v676
        %v1741 = vunpack.c.h.b16 %v676
        %v1742 = vunpack.c.l.b16 %v677
        %v1743 = vunpack.c.h.b16 %v677
        %v1744 = vunpack.c.l.b16 %v678
        %v1745 = vunpack.c.h.b16 %v678
        %v1746 = vunpack.c.l.b16 %v679
        %v1747 = vunpack.c.h.b16 %v679
        %v1748 = vunpack.c.l.b16 %v680
        %v1749 = vunpack.c.h.b16 %v680
        %v1750 = vunpack.c.l.b16 %v681
        %v1751 = vunpack.c.h.b16 %v681
        %v1752 = vunpack.c.l.b16 %v682
        %v1753 = vunpack.c.h.b16 %v682
        %v1754 = vunpack.c.l.b16 %v683
        %v1755 = vunpack.c.h.b16 %v683
        %v1756 = vunpack.c.l.b16 %v684
        %v1757 = vunpack.c.h.b16 %v684
        %v1758 = vunpack.c.l.b16 %v685
        %v1759 = vunpack.c.h.b16 %v685
        %v1760 = vunpack.c.l.b16 %v686
        %v1761 = vunpack.c.h.b16 %v686
        %v1762 = vunpack.c.l.b16 %v687
        %v1763 = vunpack.c.h.b16 %v687
        %v1764 = vunpack.c.l.b16 %v688
        %v1765 = vunpack.c.h.b16 %v688
        %v1766 = vunpack.c.l.b16 %v689
        %v1767 = vunpack.c.h.b16 %v689
        %v1768 = vunpack.c.l.b16 %v690
        %v1769 = vunpack.c.h.b16 %v690
        %v1770 = vunpack.c.l.b16 %v691
        %v1771 = vunpack.c.h.b16 %v691
        %v1772 = vunpack.c.l.b16 %v692
        %v1773 = vunpack.c.h.b16 %v692
        %v1774 = vunpack.c.l.b16 %v693
        %v1775 = vunpack.c.h.b16 %v693
        %v1776 = vunpack.c.l.b16 %v694
        %v1777 = vunpack.c.h.b16 %v694
        %v1778 = vunpack.c.l.b16 %v695
        %v1779 = vunpack.c.h.b16 %v695
        %v1780 = vunpack.c.l.b16 %v696
        %v1781 = vunpack.c.h.b16 %v696
        %v1782 = vunpack.c.l.b16 %v697
        %v1783 = vunpack.c.h.b16 %v697
        %v1784 = vunpack.c.l.b16 %v698
        %v1785 = vunpack.c.h.b16 %v698
        %v1786 = vunpack.c.l.b16 %v699
        %v1787 = vunpack.c.h.b16 %v699
        %v1788 = vunpack.c.l.b16 %v700
        %v1789 = vunpack.c.h.b16 %v700
        %v1790 = vunpack.c.l.b16 %v701
        %v1791 = vunpack.c.h.b16 %v701
        %v1792 = vunpack.c.l.b16 %v702
        %v1793 = vunpack.c.h.b16 %v702
        %v1794 = vunpack.c.l.b16 %v703
        %v1795 = vunpack.c.h.b16 %v703
        %v1796 = vunpack.c.l.b16 %v704
        %v1797 = vunpack.c.h.b16 %v704
        %v1798 = vunpack.c.l.b16 %v705
        %v1799 = vunpack.c.h.b16 %v705
        %v1800 = vunpack.c.l.b16 %v706
        %v1801 = vunpack.c.h.b16 %v706
        %v1802 = vunpack.c.l.b16 %v707
        %v1803 = vunpack.c.h.b16 %v707
        %v1804 = vunpack.c.l.b16 %v708
        %v1805 = vunpack.c.h.b16 %v708
        %v1806 = vunpack.c.l.b16 %v709
        %v1807 = vunpack.c.h.b16 %v709
        %v1808 = vunpack.c.l.b16 %v710
        %v1809 = vunpack.c.h.b16 %v710
        %v1810 = vunpack.c.l.b16 %v711
        %v1811 = vunpack.c.h.b16 %v711
        %v1812 = vunpack.c.l.b16 %v712
        %v1813 = vunpack.c.h.b16 %v712
        %v1814 = vunpack.c.l.b16 %v713
        %v1815 = vunpack.c.h.b16 %v713
        %v1816 = vunpack.c.l.b16 %v714
        %v1817 = vunpack.c.h.b16 %v714
        %v1818 = vunpack.c.l.b16 %v715
        %v1819 = vunpack.c.h.b16 %v715
        %v1820 = vunpack.c.l.b16 %v716
        %v1821 = vunpack.c.h.b16 %v716
        %v1822 = vunpack.c.l.b16 %v717
        %v1823 = vunpack.c.h.b16 %v717
        %v1824 = vunpack.c.l.b16 %v718
        %v1825 = vunpack.c.h.b16 %v718
        %v1826 = vunpack.c.l.b16 %v719
        %v1827 = vunpack.c.h.b16 %v719
        %v1828 = vunpack.c.l.b16 %v720
        %v1829 = vunpack.c.h.b16 %v720
        %v1830 = vunpack.c.l.b16 %v721
        %v1831 = vunpack.c.h.b16 %v721
        %v1832 = vunpack.c.l.b16 %v722
        %v1833 = vunpack.c.h.b16 %v722
        %v1834 = vunpack.c.l.b16 %v723
        %v1835 = vunpack.c.h.b16 %v723
        %v1836 = vunpack.c.l.b16 %v724
        %v1837 = vunpack.c.h.b16 %v724
        %v1838 = vunpack.c.l.b16 %v725
        %v1839 = vunpack.c.h.b16 %v725
        %v1840 = vunpack.c.l.b16 %v726
        %v1841 = vunpack.c.h.b16 %v726
        %v1842 = vunpack.c.l.b16 %v727
        %v1843 = vunpack.c.h.b16 %v727
        %v1844 = vunpack.c.l.b16 %v728
        %v1845 = vunpack.c.h.b16 %v728
        %v1846 = vunpack.c.l.b16 %v729
        %v1847 = vunpack.c.h.b16 %v729
        %v1848 = vpack.c.b16 %v1278, %v1272
        %v1849 = vpack.c.b16 %v1279, %v1273
        %v1850 = vpack.c.b16 %v1280, %v1274
        %v1851 = vpack.c.b16 %v1281, %v1275
        %v1852 = vpack.c.b16 %v1282, %v1276
        %v1853 = vpack.c.b16 %v1283, %v1277
        %v1854 = vpack.c.b16 %v1290, %v1284
        %v1855 = vpack.c.b16 %v1291, %v1285
        %v1856 = vpack.c.b16 %v1292, %v1286
        %v1857 = vpack.c.b16 %v1293, %v1287
        %v1858 = vpack.c.b16 %v1294, %v1288
        %v1859 = vpack.c.b16 %v1295, %v1289
        %v1860 = vpack.c.b16 %v1302, %v1296
        %v1861 = vpack.c.b16 %v1303, %v1297
        %v1862 = vpack.c.b16 %v1304, %v1298
        %v1863 = vpack.c.b16 %v1305, %v1299
        %v1864 = vpack.c.b16 %v1306, %v1300
        %v1865 = vpack.c.b16 %v1307, %v1301
        %v1866 = vpack.c.b16 %v1314, %v1308
        %v1867 = vpack.c.b16 %v1315, %v1309
        %v1868 = vpack.c.b16 %v1316, %v1310
        %v1869 = vpack.c.b16 %v1317, %v1311
        %v1870 = vpack.c.b16 %v1318, %v1312
        %v1871 = vpack.c.b16 %v1319, %v1313
        %v1872 = vpack.c.b16 %v1326, %v1320
        %v1873 = vpack.c.b16 %v1327, %v1321
        %v1874 = vpack.c.b16 %v1328, %v1322
        %v1875 = vpack.c.b16 %v1329, %v1323
        %v1876 = vpack.c.b16 %v1330, %v1324
        %v1877 = vpack.c.b16 %v1331, %v1325
        %v1878 = vpack.c.b16 %v1338, %v1332
        %v1879 = vpack.c.b16 %v1339, %v1333
        %v1880 = vpack.c.b16 %v1340, %v1334
        %v1881 = vpack.c.b16 %v1341, %v1335
        %v1882 = vpack.c.b16 %v1342, %v1336
        %v1883 = vpack.c.b16 %v1343, %v1337
        %v1884 = vpack.c.b16 %v1350, %v1344
        %v1885 = vpack.c.b16 %v1351, %v1345
        %v1886 = vpack.c.b16 %v1352, %v1346
        %v1887 = vpack.c.b16 %v1353, %v1347
        %v1888 = vpack.c.b16 %v1354, %v1348
        %v1889 = vpack.c.b16 %v1355, %v1349
        %v1890 = vpack.c.b16 %v1362, %v1356
        %v1891 = vpack.c.b16 %v1363, %v1357
        %v1892 = vpack.c.b16 %v1364, %v1358
        %v1893 = vpack.c.b16 %v1365, %v1359
        %v1894 = vpack.c.b16 %v1366, %v1360
        %v1895 = vpack.c.b16 %v1367, %v1361
        %v1896 = vpack.c.b16 %v1374, %v1368
        %v1897 = vpack.c.b16 %v1375, %v1369
        %v1898 = vpack.c.b16 %v1376, %v1370
        %v1899 = vpack.c.b16 %v1377, %v1371
        %v1900 = vpack.c.b16 %v1378, %v1372
        %v1901 = vpack.c.b16 %v1379, %v1373
        %v1902 = vpack.c.b16 %v1386, %v1380
        %v1903 = vpack.c.b16 %v1387, %v1381
        %v1904 = vpack.c.b16 %v1388, %v1382
        %v1905 = vpack.c.b16 %v1389, %v1383
        %v1906 = vpack.c.b16 %v1390, %v1384
        %v1907 = vpack.c.b16 %v1391, %v1385
        %v1908 = vpack.c.b16 %v1398, %v1392
        %v1909 = vpack.c.b16 %v1399, %v1393
        %v1910 = vpack.c.b16 %v1400, %v1394
        %v1911 = vpack.c.b16 %v1401, %v1395
        %v1912 = vpack.c.b16 %v1402, %v1396
        %v1913 = vpack.c.b16 %v1403, %v1397
        %v1914 = vpack.c.b16 %v1410, %v1404
        %v1915 = vpack.c.b16 %v1411, %v1405
        %v1916 = vpack.c.b16 %v1412, %v1406
        %v1917 = vpack.c.b16 %v1413, %v1407
        %v1918 = vpack.c.b16 %v1414, %v1408
        %v1919 = vpack.c.b16 %v1415, %v1409
        %v1920 = vpack.c.b16 %v1422, %v1416
        %v1921 = vpack.c.b16 %v1423, %v1417
        %v1922 = vpack.c.b16 %v1424, %v1418
        %v1923 = vpack.c.b16 %v1425, %v1419
        %v1924 = vpack.c.b16 %v1426, %v1420
        %v1925 = vpack.c.b16 %v1427, %v1421
        %v1926 = vpack.c.b16 %v1434, %v1428
        %v1927 = vpack.c.b16 %v1435, %v1429
        %v1928 = vpack.c.b16 %v1436, %v1430
        %v1929 = vpack.c.b16 %v1437, %v1431
        %v1930 = vpack.c.b16 %v1438, %v1432
        %v1931 = vpack.c.b16 %v1439, %v1433
        %v1932 = vpack.c.b16 %v1446, %v1440
        %v1933 = vpack.c.b16 %v1447, %v1441
        %v1934 = vpack.c.b16 %v1448, %v1442
        %v1935 = vpack.c.b16 %v1449, %v1443
        %v1936 = vpack.c.b16 %v1450, %v1444
        %v1937 = vpack.c.b16 %v1451, %v1445
        %v1938 = vpack.c.b16 %v1458, %v1452
        %v1939 = vpack.c.b16 %v1459, %v1453
        %v1940 = vpack.c.b16 %v1460, %v1454
        %v1941 = vpack.c.b16 %v1461, %v1455
        %v1942 = vpack.c.b16 %v1462, %v1456
        %v1943 = vpack.c.b16 %v1463, %v1457
        %v1944 = vpack.c.b16 %v1470, %v1464
        %v1945 = vpack.c.b16 %v1471, %v1465
        %v1946 = vpack.c.b16 %v1472, %v1466
        %v1947 = vpack.c.b16 %v1473, %v1467
        %v1948 = vpack.c.b16 %v1474, %v1468
        %v1949 = vpack.c.b16 %v1475, %v1469
        %v1950 = vpack.c.b16 %v1482, %v1476
        %v1951 = vpack.c.b16 %v1483, %v1477
        %v1952 = vpack.c.b16 %v1484, %v1478
        %v1953 = vpack.c.b16 %v1485, %v1479
        %v1954 = vpack.c.b16 %v1486, %v1480
        %v1955 = vpack.c.b16 %v1487, %v1481
        %v1956 = vpack.c.b16 %v1494, %v1488
        %v1957 = vpack.c.b16 %v1495, %v1489
        %v1958 = vpack.c.b16 %v1496, %v1490
        %v1959 = vpack.c.b16 %v1497, %v1491
        %v1960 = vpack.c.b16 %v1498, %v1492
        %v1961 = vpack.c.b16 %v1499, %v1493
        %v1962 = vpack.c.b16 %v1506, %v1500
        %v1963 = vpack.c.b16 %v1507, %v1501
        %v1964 = vpack.c.b16 %v1508, %v1502
        %v1965 = vpack.c.b16 %v1509, %v1503
        %v1966 = vpack.c.b16 %v1510, %v1504
        %v1967 = vpack.c.b16 %v1511, %v1505
        %v1968 = vpack.c.b16 %v1518, %v1512
        %v1969 = vpack.c.b16 %v1519, %v1513
        %v1970 = vpack.c.b16 %v1520, %v1514
        %v1971 = vpack.c.b16 %v1521, %v1515
        %v1972 = vpack.c.b16 %v1522, %v1516
        %v1973 = vpack.c.b16 %v1523, %v1517
        %v1974 = vpack.c.b16 %v1530, %v1524
        %v1975 = vpack.c.b16 %v1531, %v1525
        %v1976 = vpack.c.b16 %v1532, %v1526
        %v1977 = vpack.c.b16 %v1533, %v1527
        %v1978 = vpack.c.b16 %v1534, %v1528
        %v1979 = vpack.c.b16 %v1535, %v1529
        %v1980 = vpack.c.b16 %v1542, %v1536
        %v1981 = vpack.c.b16 %v1543, %v1537
        %v1982 = vpack.c.b16 %v1544, %v1538
        %v1983 = vpack.c.b16 %v1545, %v1539
        %v1984 = vpack.c.b16 %v1546, %v1540
        %v1985 = vpack.c.b16 %v1547, %v1541
        %v1986 = vpack.c.b16 %v1554, %v1548
        %v1987 = vpack.c.b16 %v1555, %v1549
        %v1988 = vpack.c.b16 %v1556, %v1550
        %v1989 = vpack.c.b16 %v1557, %v1551
        %v1990 = vpack.c.b16 %v1558, %v1552
        %v1991 = vpack.c.b16 %v1559, %v1553
        %v1992 = vpack.c.b16 %v1566, %v1560
        %v1993 = vpack.c.b16 %v1567, %v1561
        %v1994 = vpack.c.b16 %v1568, %v1562
        %v1995 = vpack.c.b16 %v1569, %v1563
        %v1996 = vpack.c.b16 %v1570, %v1564
        %v1997 = vpack.c.b16 %v1571, %v1565
        %v1998 = vpack.c.b16 %v1578, %v1572
        %v1999 = vpack.c.b16 %v1579, %v1573
        %v2000 = vpack.c.b16 %v1580, %v1574
        %v2001 = vpack.c.b16 %v1581, %v1575
        %v2002 = vpack.c.b16 %v1582, %v1576
        %v2003 = vpack.c.b16 %v1583, %v1577
        %v2004 = vpack.c.b16 %v1590, %v1584
        %v2005 = vpack.c.b16 %v1591, %v1585
        %v2006 = vpack.c.b16 %v1592, %v1586
        %v2007 = vpack.c.b16 %v1593, %v1587
        %v2008 = vpack.c.b16 %v1594, %v1588
        %v2009 = vpack.c.b16 %v1595, %v1589
        %v2010 = vpack.c.b16 %v1602, %v1596
        %v2011 = vpack.c.b16 %v1603, %v1597
        %v2012 = vpack.c.b16 %v1604, %v1598
        %v2013 = vpack.c.b16 %v1605, %v1599
        %v2014 = vpack.c.b16 %v1606, %v1600
        %v2015 = vpack.c.b16 %v1607, %v1601
        %v2016 = vpack.c.b16 %v1614, %v1608
        %v2017 = vpack.c.b16 %v1615, %v1609
        %v2018 = vpack.c.b16 %v1616, %v1610
        %v2019 = vpack.c.b16 %v1617, %v1611
        %v2020 = vpack.c.b16 %v1618, %v1612
        %v2021 = vpack.c.b16 %v1619, %v1613
        %v2022 = vpack.c.b16 %v1626, %v1620
        %v2023 = vpack.c.b16 %v1627, %v1621
        %v2024 = vpack.c.b16 %v1628, %v1622
        %v2025 = vpack.c.b16 %v1629, %v1623
        %v2026 = vpack.c.b16 %v1630, %v1624
        %v2027 = vpack.c.b16 %v1631, %v1625
        %v2028 = vpack.c.b16 %v1638, %v1632
        %v2029 = vpack.c.b16 %v1639, %v1633
        %v2030 = vpack.c.b16 %v1640, %v1634
        %v2031 = vpack.c.b16 %v1641, %v1635
        %v2032 = vpack.c.b16 %v1642, %v1636
        %v2033 = vpack.c.b16 %v1643, %v1637
        %v2034 = vpack.c.b16 %v1650, %v1644
        %v2035 = vpack.c.b16 %v1651, %v1645
        %v2036 = vpack.c.b16 %v1652, %v1646
        %v2037 = vpack.c.b16 %v1653, %v1647
        %v2038 = vpack.c.b16 %v1654, %v1648
        %v2039 = vpack.c.b16 %v1655, %v1649
        %v2040 = vpack.c.b16 %v1662, %v1656
        %v2041 = vpack.c.b16 %v1663, %v1657
        %v2042 = vpack.c.b16 %v1664, %v1658
        %v2043 = vpack.c.b16 %v1665, %v1659
        %v2044 = vpack.c.b16 %v1666, %v1660
        %v2045 = vpack.c.b16 %v1667, %v1661
        %v2046 = vpack.c.b16 %v1674, %v1668
        %v2047 = vpack.c.b16 %v1675, %v1669
        %v2048 = vpack.c.b16 %v1676, %v1670
        %v2049 = vpack.c.b16 %v1677, %v1671
        %v2050 = vpack.c.b16 %v1678, %v1672
        %v2051 = vpack.c.b16 %v1679, %v1673
        %v2052 = vpack.c.b16 %v1686, %v1680
        %v2053 = vpack.c.b16 %v1687, %v1681
        %v2054 = vpack.c.b16 %v1688, %v1682
        %v2055 = vpack.c.b16 %v1689, %v1683
        %v2056 = vpack.c.b16 %v1690, %v1684
        %v2057 = vpack.c.b16 %v1691, %v1685
        %v2058 = vpack.c.b16 %v1698, %v1692
        %v2059 = vpack.c.b16 %v1699, %v1693
        %v2060 = vpack.c.b16 %v1700, %v1694
        %v2061 = vpack.c.b16 %v1701, %v1695
        %v2062 = vpack.c.b16 %v1702, %v1696
        %v2063 = vpack.c.b16 %v1703, %v1697
        %v2064 = vpack.c.b16 %v1710, %v1704
        %v2065 = vpack.c.b16 %v1711, %v1705
        %v2066 = vpack.c.b16 %v1712, %v1706
        %v2067 = vpack.c.b16 %v1713, %v1707
        %v2068 = vpack.c.b16 %v1714, %v1708
        %v2069 = vpack.c.b16 %v1715, %v1709
        %v2070 = vpack.c.b16 %v1722, %v1716
        %v2071 = vpack.c.b16 %v1723, %v1717
        %v2072 = vpack.c.b16 %v1724, %v1718
        %v2073 = vpack.c.b16 %v1725, %v1719
        %v2074 = vpack.c.b16 %v1726, %v1720
        %v2075 = vpack.c.b16 %v1727, %v1721
        %v2076 = vpack.c.b16 %v1734, %v1728
        %v2077 = vpack.c.b16 %v1735, %v1729
        %v2078 = vpack.c.b16 %v1736, %v1730
        %v2079 = vpack.c.b16 %v1737, %v1731
        %v2080 = vpack.c.b16 %v1738, %v1732
        %v2081 = vpack.c.b16 %v1739, %v1733
        %v2082 = vpack.c.b16 %v1746, %v1740
        %v2083 = vpack.c.b16 %v1747, %v1741
        %v2084 = vpack.c.b16 %v1748, %v1742
        %v2085 = vpack.c.b16 %v1749, %v1743
        %v2086 = vpack.c.b16 %v1750, %v1744
        %v2087 = vpack.c.b16 %v1751, %v1745
        %v2088 = vpack.c.b16 %v1758, %v1752
        %v2089 = vpack.c.b16 %v1759, %v1753
        %v2090 = vpack.c.b16 %v1760, %v1754
        %v2091 = vpack.c.b16 %v1761, %v1755
        %v2092 = vpack.c.b16 %v1762, %v1756
        %v2093 = vpack.c.b16 %v1763, %v1757
        %v2094 = vpack.c.b16 %v1770, %v1764
        %v2095 = vpack.c.b16 %v1771, %v1765
        %v2096 = vpack.c.b16 %v1772, %v1766
        %v2097 = vpack.c.b16 %v1773, %v1767
        %v2098 = vpack.c.b16 %v1774, %v1768
        %v2099 = vpack.c.b16 %v1775, %v1769
        %v2100 = vpack.c.b16 %v1782, %v1776
        %v2101 = vpack.c.b16 %v1783, %v1777
        %v2102 = vpack.c.b16 %v1784, %v1778
        %v2103 = vpack.c.b16 %v1785, %v1779
        %v2104 = vpack.c.b16 %v1786, %v1780
        %v2105 = vpack.c.b16 %v1787, %v1781
        %v2106 = vpack.c.b16 %v1794, %v1788
        %v2107 = vpack.c.b16 %v1795, %v1789
        %v2108 = vpack.c.b16 %v1796, %v1790
        %v2109 = vpack.c.b16 %v1797, %v1791
        %v2110 = vpack.c.b16 %v1798, %v1792
        %v2111 = vpack.c.b16 %v1799, %v1793
        %v2112 = vpack.c.b16 %v1806, %v1800
        %v2113 = vpack.c.b16 %v1807, %v1801
        %v2114 = vpack.c.b16 %v1808, %v1802
        %v2115 = vpack.c.b16 %v1809, %v1803
        %v2116 = vpack.c.b16 %v1810, %v1804
        %v2117 = vpack.c.b16 %v1811, %v1805
        %v2118 = vpack.c.b16 %v1818, %v1812
        %v2119 = vpack.c.b16 %v1819, %v1813
        %v2120 = vpack.c.b16 %v1820, %v1814
        %v2121 = vpack.c.b16 %v1821, %v1815
        %v2122 = vpack.c.b16 %v1822, %v1816
        %v2123 = vpack.c.b16 %v1823, %v1817
        %v2124 = vpack.c.b16 %v1830, %v1824
        %v2125 = vpack.c.b16 %v1831, %v1825
        %v2126 = vpack.c.b16 %v1832, %v1826
        %v2127 = vpack.c.b16 %v1833, %v1827
        %v2128 = vpack.c.b16 %v1834, %v1828
        %v2129 = vpack.c.b16 %v1835, %v1829
        %v2130 = vpack.c.b16 %v1842, %v1836
        %v2131 = vpack.c.b16 %v1843, %v1837
        %v2132 = vpack.c.b16 %v1844, %v1838
        %v2133 = vpack.c.b16 %v1845, %v1839
        %v2134 = vpack.c.b16 %v1846, %v1840
        %v2135 = vpack.c.b16 %v1847, %v1841
        %2424 = vmatpush.bf16.msra.mxu0 %v1890
        %2425 = vmatpush.bf16.msra.mxu0 %v1884
        %2426 = vmatpush.bf16.msra.mxu0 %v1878
        %2427 = vmatpush.bf16.msra.mxu0 %v1872
        %2428 = vmatpush.bf16.msra.mxu0 %v1866
        %2429 = vmatpush.bf16.msra.mxu0 %v1860
        %2430 = vmatpush.bf16.msra.mxu0 %v1854
        %2431 = vmatpush.bf16.msra.mxu0 %v1848
        %2432 = vmatmul.bf16.gmra.mxu0 %v888
        %v2433 = vpop.f32.mrf.mxu0
        %v2434 = vadd.f32 %v732, %v2433
        %v2435 = vpop.f32.mrf.mxu0
        %v2436 = vadd.f32 %v732, %v2435
        %2437 = vmatmul.bf16.gmra.mxu0 %v894
        %v2438 = vpop.f32.mrf.mxu0
        %v2439 = vadd.f32 %v732, %v2438
        %v2440 = vpop.f32.mrf.mxu0
        %v2441 = vadd.f32 %v732, %v2440
        %2442 = vmatmul.bf16.gmra.mxu0 %v900
        %v2443 = vpop.f32.mrf.mxu0
        %v2444 = vadd.f32 %v732, %v2443
        %v2445 = vpop.f32.mrf.mxu0
        %v2446 = vadd.f32 %v732, %v2445
        %2447 = vmatmul.bf16.gmra.mxu0 %v906
        %v2448 = vpop.f32.mrf.mxu0
        %v2449 = vadd.f32 %v732, %v2448
        %v2450 = vpop.f32.mrf.mxu0
        %v2451 = vadd.f32 %v732, %v2450
        %2452 = vmatmul.bf16.gmra.mxu0 %v912
        %v2453 = vpop.f32.mrf.mxu0
        %v2454 = vadd.f32 %v732, %v2453
        %v2455 = vpop.f32.mrf.mxu0
        %v2456 = vadd.f32 %v732, %v2455
        %2457 = vmatmul.bf16.gmra.mxu0 %v918
        %v2458 = vpop.f32.mrf.mxu0
        %v2459 = vadd.f32 %v732, %v2458
        %v2460 = vpop.f32.mrf.mxu0
        %v2461 = vadd.f32 %v732, %v2460
        %2462 = vmatmul.bf16.gmra.mxu0 %v924
        %v2463 = vpop.f32.mrf.mxu0
        %v2464 = vadd.f32 %v732, %v2463
        %v2465 = vpop.f32.mrf.mxu0
        %v2466 = vadd.f32 %v732, %v2465
        %2467 = vmatmul.bf16.gmra.mxu0 %v930
        %v2468 = vpop.f32.mrf.mxu0
        %v2469 = vadd.f32 %v732, %v2468
        %v2470 = vpop.f32.mrf.mxu0
        %v2471 = vadd.f32 %v732, %v2470
        %2472 = vdwg.mxu0
        %2473 = vmatpush.bf16.msra.mxu0 %v1938
        %2474 = vmatpush.bf16.msra.mxu0 %v1932
        %2475 = vmatpush.bf16.msra.mxu0 %v1926
        %2476 = vmatpush.bf16.msra.mxu0 %v1920
        %2477 = vmatpush.bf16.msra.mxu0 %v1914
        %2478 = vmatpush.bf16.msra.mxu0 %v1908
        %2479 = vmatpush.bf16.msra.mxu0 %v1902
        %2480 = vmatpush.bf16.msra.mxu0 %v1896
        %2481 = vmatmul.bf16.gmra.mxu0 %v889
        %v2482 = vpop.f32.mrf.mxu0
        %v2483 = vadd.f32 %v2434, %v2482
        %v2484 = vpop.f32.mrf.mxu0
        %v2485 = vadd.f32 %v2436, %v2484
        %2486 = vmatmul.bf16.gmra.mxu0 %v895
        %v2487 = vpop.f32.mrf.mxu0
        %v2488 = vadd.f32 %v2439, %v2487
        %v2489 = vpop.f32.mrf.mxu0
        %v2490 = vadd.f32 %v2441, %v2489
        %2491 = vmatmul.bf16.gmra.mxu0 %v901
        %v2492 = vpop.f32.mrf.mxu0
        %v2493 = vadd.f32 %v2444, %v2492
        %v2494 = vpop.f32.mrf.mxu0
        %v2495 = vadd.f32 %v2446, %v2494
        %2496 = vmatmul.bf16.gmra.mxu0 %v907
        %v2497 = vpop.f32.mrf.mxu0
        %v2498 = vadd.f32 %v2449, %v2497
        %v2499 = vpop.f32.mrf.mxu0
        %v2500 = vadd.f32 %v2451, %v2499
        %2501 = vmatmul.bf16.gmra.mxu0 %v913
        %v2502 = vpop.f32.mrf.mxu0
        %v2503 = vadd.f32 %v2454, %v2502
        %v2504 = vpop.f32.mrf.mxu0
        %v2505 = vadd.f32 %v2456, %v2504
        %2506 = vmatmul.bf16.gmra.mxu0 %v919
        %v2507 = vpop.f32.mrf.mxu0
        %v2508 = vadd.f32 %v2459, %v2507
        %v2509 = vpop.f32.mrf.mxu0
        %v2510 = vadd.f32 %v2461, %v2509
        %2511 = vmatmul.bf16.gmra.mxu0 %v925
        %v2512 = vpop.f32.mrf.mxu0
        %v2513 = vadd.f32 %v2464, %v2512
        %v2514 = vpop.f32.mrf.mxu0
        %v2515 = vadd.f32 %v2466, %v2514
        %2516 = vmatmul.bf16.gmra.mxu0 %v931
        %v2517 = vpop.f32.mrf.mxu0
        %v2518 = vadd.f32 %v2469, %v2517
        %v2519 = vpop.f32.mrf.mxu0
        %v2520 = vadd.f32 %v2471, %v2519
        %2521 = vdwg.mxu0
        %2522 = vmatpush.bf16.msra.mxu0 %v1986
        %2523 = vmatpush.bf16.msra.mxu0 %v1980
        %2524 = vmatpush.bf16.msra.mxu0 %v1974
        %2525 = vmatpush.bf16.msra.mxu0 %v1968
        %2526 = vmatpush.bf16.msra.mxu0 %v1962
        %2527 = vmatpush.bf16.msra.mxu0 %v1956
        %2528 = vmatpush.bf16.msra.mxu0 %v1950
        %2529 = vmatpush.bf16.msra.mxu0 %v1944
        %2530 = vmatmul.bf16.gmra.mxu0 %v890
        %v2531 = vpop.f32.mrf.mxu0
        %v2532 = vadd.f32 %v2483, %v2531
        %v2533 = vpop.f32.mrf.mxu0
        %v2534 = vadd.f32 %v2485, %v2533
        %2535 = vmatmul.bf16.gmra.mxu0 %v896
        %v2536 = vpop.f32.mrf.mxu0
        %v2537 = vadd.f32 %v2488, %v2536
        %v2538 = vpop.f32.mrf.mxu0
        %v2539 = vadd.f32 %v2490, %v2538
        %2540 = vmatmul.bf16.gmra.mxu0 %v902
        %v2541 = vpop.f32.mrf.mxu0
        %v2542 = vadd.f32 %v2493, %v2541
        %v2543 = vpop.f32.mrf.mxu0
        %v2544 = vadd.f32 %v2495, %v2543
        %2545 = vmatmul.bf16.gmra.mxu0 %v908
        %v2546 = vpop.f32.mrf.mxu0
        %v2547 = vadd.f32 %v2498, %v2546
        %v2548 = vpop.f32.mrf.mxu0
        %v2549 = vadd.f32 %v2500, %v2548
        %2550 = vmatmul.bf16.gmra.mxu0 %v914
        %v2551 = vpop.f32.mrf.mxu0
        %v2552 = vadd.f32 %v2503, %v2551
        %v2553 = vpop.f32.mrf.mxu0
        %v2554 = vadd.f32 %v2505, %v2553
        %2555 = vmatmul.bf16.gmra.mxu0 %v920
        %v2556 = vpop.f32.mrf.mxu0
        %v2557 = vadd.f32 %v2508, %v2556
        %v2558 = vpop.f32.mrf.mxu0
        %v2559 = vadd.f32 %v2510, %v2558
        %2560 = vmatmul.bf16.gmra.mxu0 %v926
        %v2561 = vpop.f32.mrf.mxu0
        %v2562 = vadd.f32 %v2513, %v2561
        %v2563 = vpop.f32.mrf.mxu0
        %v2564 = vadd.f32 %v2515, %v2563
        %2565 = vmatmul.bf16.gmra.mxu0 %v932
        %v2566 = vpop.f32.mrf.mxu0
        %v2567 = vadd.f32 %v2518, %v2566
        %v2568 = vpop.f32.mrf.mxu0
        %v2569 = vadd.f32 %v2520, %v2568
        %2570 = vdwg.mxu0
        %2571 = vmatpush.bf16.msra.mxu0 %v2034
        %2572 = vmatpush.bf16.msra.mxu0 %v2028
        %2573 = vmatpush.bf16.msra.mxu0 %v2022
        %2574 = vmatpush.bf16.msra.mxu0 %v2016
        %2575 = vmatpush.bf16.msra.mxu0 %v2010
        %2576 = vmatpush.bf16.msra.mxu0 %v2004
        %2577 = vmatpush.bf16.msra.mxu0 %v1998
        %2578 = vmatpush.bf16.msra.mxu0 %v1992
        %2579 = vmatmul.bf16.gmra.mxu0 %v891
        %v2580 = vpop.f32.mrf.mxu0
        %v2581 = vadd.f32 %v2532, %v2580
        %v2582 = vpop.f32.mrf.mxu0
        %v2583 = vadd.f32 %v2534, %v2582
        %2584 = vmatmul.bf16.gmra.mxu0 %v897
        %v2585 = vpop.f32.mrf.mxu0
        %v2586 = vadd.f32 %v2537, %v2585
        %v2587 = vpop.f32.mrf.mxu0
        %v2588 = vadd.f32 %v2539, %v2587
        %2589 = vmatmul.bf16.gmra.mxu0 %v903
        %v2590 = vpop.f32.mrf.mxu0
        %v2591 = vadd.f32 %v2542, %v2590
        %v2592 = vpop.f32.mrf.mxu0
        %v2593 = vadd.f32 %v2544, %v2592
        %2594 = vmatmul.bf16.gmra.mxu0 %v909
        %v2595 = vpop.f32.mrf.mxu0
        %v2596 = vadd.f32 %v2547, %v2595
        %v2597 = vpop.f32.mrf.mxu0
        %v2598 = vadd.f32 %v2549, %v2597
        %2599 = vmatmul.bf16.gmra.mxu0 %v915
        %v2600 = vpop.f32.mrf.mxu0
        %v2601 = vadd.f32 %v2552, %v2600
        %v2602 = vpop.f32.mrf.mxu0
        %v2603 = vadd.f32 %v2554, %v2602
        %2604 = vmatmul.bf16.gmra.mxu0 %v921
        %v2605 = vpop.f32.mrf.mxu0
        %v2606 = vadd.f32 %v2557, %v2605
        %v2607 = vpop.f32.mrf.mxu0
        %v2608 = vadd.f32 %v2559, %v2607
        %2609 = vmatmul.bf16.gmra.mxu0 %v927
        %v2610 = vpop.f32.mrf.mxu0
        %v2611 = vadd.f32 %v2562, %v2610
        %v2612 = vpop.f32.mrf.mxu0
        %v2613 = vadd.f32 %v2564, %v2612
        %2614 = vmatmul.bf16.gmra.mxu0 %v933
        %v2615 = vpop.f32.mrf.mxu0
        %v2616 = vadd.f32 %v2567, %v2615
        %v2617 = vpop.f32.mrf.mxu0
        %v2618 = vadd.f32 %v2569, %v2617
        %2619 = vdwg.mxu0
        %2620 = vmatpush.bf16.msra.mxu0 %v2082
        %2621 = vmatpush.bf16.msra.mxu0 %v2076
        %2622 = vmatpush.bf16.msra.mxu0 %v2070
        %2623 = vmatpush.bf16.msra.mxu0 %v2064
        %2624 = vmatpush.bf16.msra.mxu0 %v2058
        %2625 = vmatpush.bf16.msra.mxu0 %v2052
        %2626 = vmatpush.bf16.msra.mxu0 %v2046
        %2627 = vmatpush.bf16.msra.mxu0 %v2040
        %2628 = vmatmul.bf16.gmra.mxu0 %v892
        %v2629 = vpop.f32.mrf.mxu0
        %v2630 = vadd.f32 %v2581, %v2629
        %v2631 = vpop.f32.mrf.mxu0
        %v2632 = vadd.f32 %v2583, %v2631
        %2633 = vmatmul.bf16.gmra.mxu0 %v898
        %v2634 = vpop.f32.mrf.mxu0
        %v2635 = vadd.f32 %v2586, %v2634
        %v2636 = vpop.f32.mrf.mxu0
        %v2637 = vadd.f32 %v2588, %v2636
        %2638 = vmatmul.bf16.gmra.mxu0 %v904
        %v2639 = vpop.f32.mrf.mxu0
        %v2640 = vadd.f32 %v2591, %v2639
        %v2641 = vpop.f32.mrf.mxu0
        %v2642 = vadd.f32 %v2593, %v2641
        %2643 = vmatmul.bf16.gmra.mxu0 %v910
        %v2644 = vpop.f32.mrf.mxu0
        %v2645 = vadd.f32 %v2596, %v2644
        %v2646 = vpop.f32.mrf.mxu0
        %v2647 = vadd.f32 %v2598, %v2646
        %2648 = vmatmul.bf16.gmra.mxu0 %v916
        %v2649 = vpop.f32.mrf.mxu0
        %v2650 = vadd.f32 %v2601, %v2649
        %v2651 = vpop.f32.mrf.mxu0
        %v2652 = vadd.f32 %v2603, %v2651
        %2653 = vmatmul.bf16.gmra.mxu0 %v922
        %v2654 = vpop.f32.mrf.mxu0
        %v2655 = vadd.f32 %v2606, %v2654
        %v2656 = vpop.f32.mrf.mxu0
        %v2657 = vadd.f32 %v2608, %v2656
        %2658 = vmatmul.bf16.gmra.mxu0 %v928
        %v2659 = vpop.f32.mrf.mxu0
        %v2660 = vadd.f32 %v2611, %v2659
        %v2661 = vpop.f32.mrf.mxu0
        %v2662 = vadd.f32 %v2613, %v2661
        %2663 = vmatmul.bf16.gmra.mxu0 %v934
        %v2664 = vpop.f32.mrf.mxu0
        %v2665 = vadd.f32 %v2616, %v2664
        %v2666 = vpop.f32.mrf.mxu0
        %v2667 = vadd.f32 %v2618, %v2666
        %2668 = vdwg.mxu0
        %2669 = vmatpush.bf16.msra.mxu0 %v2130
        %2670 = vmatpush.bf16.msra.mxu0 %v2124
        %2671 = vmatpush.bf16.msra.mxu0 %v2118
        %2672 = vmatpush.bf16.msra.mxu0 %v2112
        %2673 = vmatpush.bf16.msra.mxu0 %v2106
        %2674 = vmatpush.bf16.msra.mxu0 %v2100
        %2675 = vmatpush.bf16.msra.mxu0 %v2094
        %2676 = vmatpush.bf16.msra.mxu0 %v2088
        %2677 = vmatmul.bf16.gmra.mxu0 %v893
        %v2678 = vpop.f32.mrf.mxu0
        %v2679 = vadd.f32 %v2630, %v2678
        %v2680 = vpop.f32.mrf.mxu0
        %v2681 = vadd.f32 %v2632, %v2680
        %2682 = vmatmul.bf16.gmra.mxu0 %v899
        %v2683 = vpop.f32.mrf.mxu0
        %v2684 = vadd.f32 %v2635, %v2683
        %v2685 = vpop.f32.mrf.mxu0
        %v2686 = vadd.f32 %v2637, %v2685
        %2687 = vmatmul.bf16.gmra.mxu0 %v905
        %v2688 = vpop.f32.mrf.mxu0
        %v2689 = vadd.f32 %v2640, %v2688
        %v2690 = vpop.f32.mrf.mxu0
        %v2691 = vadd.f32 %v2642, %v2690
        %2692 = vmatmul.bf16.gmra.mxu0 %v911
        %v2693 = vpop.f32.mrf.mxu0
        %v2694 = vadd.f32 %v2645, %v2693
        %v2695 = vpop.f32.mrf.mxu0
        %v2696 = vadd.f32 %v2647, %v2695
        %2697 = vmatmul.bf16.gmra.mxu0 %v917
        %v2698 = vpop.f32.mrf.mxu0
        %v2699 = vadd.f32 %v2650, %v2698
        %v2700 = vpop.f32.mrf.mxu0
        %v2701 = vadd.f32 %v2652, %v2700
        %2702 = vmatmul.bf16.gmra.mxu0 %v923
        %v2703 = vpop.f32.mrf.mxu0
        %v2704 = vadd.f32 %v2655, %v2703
        %v2705 = vpop.f32.mrf.mxu0
        %v2706 = vadd.f32 %v2657, %v2705
        %2707 = vmatmul.bf16.gmra.mxu0 %v929
        %v2708 = vpop.f32.mrf.mxu0
        %v2709 = vadd.f32 %v2660, %v2708
        %v2710 = vpop.f32.mrf.mxu0
        %v2711 = vadd.f32 %v2662, %v2710
        %2712 = vmatmul.bf16.gmra.mxu0 %v935
        %v2713 = vpop.f32.mrf.mxu0
        %v2714 = vadd.f32 %v2665, %v2713
        %v2715 = vpop.f32.mrf.mxu0
        %v2716 = vadd.f32 %v2667, %v2715
        %2717 = vdwg.mxu0
        %2718 = vmatpush.bf16.msra.mxu0 %v1891
        %2719 = vmatpush.bf16.msra.mxu0 %v1885
        %2720 = vmatpush.bf16.msra.mxu0 %v1879
        %2721 = vmatpush.bf16.msra.mxu0 %v1873
        %2722 = vmatpush.bf16.msra.mxu0 %v1867
        %2723 = vmatpush.bf16.msra.mxu0 %v1861
        %2724 = vmatpush.bf16.msra.mxu0 %v1855
        %2725 = vmatpush.bf16.msra.mxu0 %v1849
        %2726 = vmatmul.bf16.gmra.mxu0 %v888
        %v2727 = vpop.f32.mrf.mxu0
        %v2728 = vadd.f32 %v733, %v2727
        %v2729 = vpop.f32.mrf.mxu0
        %v2730 = vadd.f32 %v733, %v2729
        %2731 = vmatmul.bf16.gmra.mxu0 %v894
        %v2732 = vpop.f32.mrf.mxu0
        %v2733 = vadd.f32 %v733, %v2732
        %v2734 = vpop.f32.mrf.mxu0
        %v2735 = vadd.f32 %v733, %v2734
        %2736 = vmatmul.bf16.gmra.mxu0 %v900
        %v2737 = vpop.f32.mrf.mxu0
        %v2738 = vadd.f32 %v733, %v2737
        %v2739 = vpop.f32.mrf.mxu0
        %v2740 = vadd.f32 %v733, %v2739
        %2741 = vmatmul.bf16.gmra.mxu0 %v906
        %v2742 = vpop.f32.mrf.mxu0
        %v2743 = vadd.f32 %v733, %v2742
        %v2744 = vpop.f32.mrf.mxu0
        %v2745 = vadd.f32 %v733, %v2744
        %2746 = vmatmul.bf16.gmra.mxu0 %v912
        %v2747 = vpop.f32.mrf.mxu0
        %v2748 = vadd.f32 %v733, %v2747
        %v2749 = vpop.f32.mrf.mxu0
        %v2750 = vadd.f32 %v733, %v2749
        %2751 = vmatmul.bf16.gmra.mxu0 %v918
        %v2752 = vpop.f32.mrf.mxu0
        %v2753 = vadd.f32 %v733, %v2752
        %v2754 = vpop.f32.mrf.mxu0
        %v2755 = vadd.f32 %v733, %v2754
        %2756 = vmatmul.bf16.gmra.mxu0 %v924
        %v2757 = vpop.f32.mrf.mxu0
        %v2758 = vadd.f32 %v733, %v2757
        %v2759 = vpop.f32.mrf.mxu0
        %v2760 = vadd.f32 %v733, %v2759
        %2761 = vmatmul.bf16.gmra.mxu0 %v930
        %v2762 = vpop.f32.mrf.mxu0
        %v2763 = vadd.f32 %v733, %v2762
        %v2764 = vpop.f32.mrf.mxu0
        %v2765 = vadd.f32 %v733, %v2764
        %2766 = vdwg.mxu0
        %2767 = vmatpush.bf16.msra.mxu0 %v1939
        %2768 = vmatpush.bf16.msra.mxu0 %v1933
        %2769 = vmatpush.bf16.msra.mxu0 %v1927
        %2770 = vmatpush.bf16.msra.mxu0 %v1921
        %2771 = vmatpush.bf16.msra.mxu0 %v1915
        %2772 = vmatpush.bf16.msra.mxu0 %v1909
        %2773 = vmatpush.bf16.msra.mxu0 %v1903
        %2774 = vmatpush.bf16.msra.mxu0 %v1897
        %2775 = vmatmul.bf16.gmra.mxu0 %v889
        %v2776 = vpop.f32.mrf.mxu0
        %v2777 = vadd.f32 %v2728, %v2776
        %v2778 = vpop.f32.mrf.mxu0
        %v2779 = vadd.f32 %v2730, %v2778
        %2780 = vmatmul.bf16.gmra.mxu0 %v895
        %v2781 = vpop.f32.mrf.mxu0
        %v2782 = vadd.f32 %v2733, %v2781
        %v2783 = vpop.f32.mrf.mxu0
        %v2784 = vadd.f32 %v2735, %v2783
        %2785 = vmatmul.bf16.gmra.mxu0 %v901
        %v2786 = vpop.f32.mrf.mxu0
        %v2787 = vadd.f32 %v2738, %v2786
        %v2788 = vpop.f32.mrf.mxu0
        %v2789 = vadd.f32 %v2740, %v2788
        %2790 = vmatmul.bf16.gmra.mxu0 %v907
        %v2791 = vpop.f32.mrf.mxu0
        %v2792 = vadd.f32 %v2743, %v2791
        %v2793 = vpop.f32.mrf.mxu0
        %v2794 = vadd.f32 %v2745, %v2793
        %2795 = vmatmul.bf16.gmra.mxu0 %v913
        %v2796 = vpop.f32.mrf.mxu0
        %v2797 = vadd.f32 %v2748, %v2796
        %v2798 = vpop.f32.mrf.mxu0
        %v2799 = vadd.f32 %v2750, %v2798
        %2800 = vmatmul.bf16.gmra.mxu0 %v919
        %v2801 = vpop.f32.mrf.mxu0
        %v2802 = vadd.f32 %v2753, %v2801
        %v2803 = vpop.f32.mrf.mxu0
        %v2804 = vadd.f32 %v2755, %v2803
        %2805 = vmatmul.bf16.gmra.mxu0 %v925
        %v2806 = vpop.f32.mrf.mxu0
        %v2807 = vadd.f32 %v2758, %v2806
        %v2808 = vpop.f32.mrf.mxu0
        %v2809 = vadd.f32 %v2760, %v2808
        %2810 = vmatmul.bf16.gmra.mxu0 %v931
        %v2811 = vpop.f32.mrf.mxu0
        %v2812 = vadd.f32 %v2763, %v2811
        %v2813 = vpop.f32.mrf.mxu0
        %v2814 = vadd.f32 %v2765, %v2813
        %2815 = vdwg.mxu0
        %2816 = vmatpush.bf16.msra.mxu0 %v1987
        %2817 = vmatpush.bf16.msra.mxu0 %v1981
        %2818 = vmatpush.bf16.msra.mxu0 %v1975
        %2819 = vmatpush.bf16.msra.mxu0 %v1969
        %2820 = vmatpush.bf16.msra.mxu0 %v1963
        %2821 = vmatpush.bf16.msra.mxu0 %v1957
        %2822 = vmatpush.bf16.msra.mxu0 %v1951
        %2823 = vmatpush.bf16.msra.mxu0 %v1945
        %2824 = vmatmul.bf16.gmra.mxu0 %v890
        %v2825 = vpop.f32.mrf.mxu0
        %v2826 = vadd.f32 %v2777, %v2825
        %v2827 = vpop.f32.mrf.mxu0
        %v2828 = vadd.f32 %v2779, %v2827
        %2829 = vmatmul.bf16.gmra.mxu0 %v896
        %v2830 = vpop.f32.mrf.mxu0
        %v2831 = vadd.f32 %v2782, %v2830
        %v2832 = vpop.f32.mrf.mxu0
        %v2833 = vadd.f32 %v2784, %v2832
        %2834 = vmatmul.bf16.gmra.mxu0 %v902
        %v2835 = vpop.f32.mrf.mxu0
        %v2836 = vadd.f32 %v2787, %v2835
        %v2837 = vpop.f32.mrf.mxu0
        %v2838 = vadd.f32 %v2789, %v2837
        %2839 = vmatmul.bf16.gmra.mxu0 %v908
        %v2840 = vpop.f32.mrf.mxu0
        %v2841 = vadd.f32 %v2792, %v2840
        %v2842 = vpop.f32.mrf.mxu0
        %v2843 = vadd.f32 %v2794, %v2842
        %2844 = vmatmul.bf16.gmra.mxu0 %v914
        %v2845 = vpop.f32.mrf.mxu0
        %v2846 = vadd.f32 %v2797, %v2845
        %v2847 = vpop.f32.mrf.mxu0
        %v2848 = vadd.f32 %v2799, %v2847
        %2849 = vmatmul.bf16.gmra.mxu0 %v920
        %v2850 = vpop.f32.mrf.mxu0
        %v2851 = vadd.f32 %v2802, %v2850
        %v2852 = vpop.f32.mrf.mxu0
        %v2853 = vadd.f32 %v2804, %v2852
        %2854 = vmatmul.bf16.gmra.mxu0 %v926
        %v2855 = vpop.f32.mrf.mxu0
        %v2856 = vadd.f32 %v2807, %v2855
        %v2857 = vpop.f32.mrf.mxu0
        %v2858 = vadd.f32 %v2809, %v2857
        %2859 = vmatmul.bf16.gmra.mxu0 %v932
        %v2860 = vpop.f32.mrf.mxu0
        %v2861 = vadd.f32 %v2812, %v2860
        %v2862 = vpop.f32.mrf.mxu0
        %v2863 = vadd.f32 %v2814, %v2862
        %2864 = vdwg.mxu0
        %2865 = vmatpush.bf16.msra.mxu0 %v2035
        %2866 = vmatpush.bf16.msra.mxu0 %v2029
        %2867 = vmatpush.bf16.msra.mxu0 %v2023
        %2868 = vmatpush.bf16.msra.mxu0 %v2017
        %2869 = vmatpush.bf16.msra.mxu0 %v2011
        %2870 = vmatpush.bf16.msra.mxu0 %v2005
        %2871 = vmatpush.bf16.msra.mxu0 %v1999
        %2872 = vmatpush.bf16.msra.mxu0 %v1993
        %2873 = vmatmul.bf16.gmra.mxu0 %v891
        %v2874 = vpop.f32.mrf.mxu0
        %v2875 = vadd.f32 %v2826, %v2874
        %v2876 = vpop.f32.mrf.mxu0
        %v2877 = vadd.f32 %v2828, %v2876
        %2878 = vmatmul.bf16.gmra.mxu0 %v897
        %v2879 = vpop.f32.mrf.mxu0
        %v2880 = vadd.f32 %v2831, %v2879
        %v2881 = vpop.f32.mrf.mxu0
        %v2882 = vadd.f32 %v2833, %v2881
        %2883 = vmatmul.bf16.gmra.mxu0 %v903
        %v2884 = vpop.f32.mrf.mxu0
        %v2885 = vadd.f32 %v2836, %v2884
        %v2886 = vpop.f32.mrf.mxu0
        %v2887 = vadd.f32 %v2838, %v2886
        %2888 = vmatmul.bf16.gmra.mxu0 %v909
        %v2889 = vpop.f32.mrf.mxu0
        %v2890 = vadd.f32 %v2841, %v2889
        %v2891 = vpop.f32.mrf.mxu0
        %v2892 = vadd.f32 %v2843, %v2891
        %2893 = vmatmul.bf16.gmra.mxu0 %v915
        %v2894 = vpop.f32.mrf.mxu0
        %v2895 = vadd.f32 %v2846, %v2894
        %v2896 = vpop.f32.mrf.mxu0
        %v2897 = vadd.f32 %v2848, %v2896
        %2898 = vmatmul.bf16.gmra.mxu0 %v921
        %v2899 = vpop.f32.mrf.mxu0
        %v2900 = vadd.f32 %v2851, %v2899
        %v2901 = vpop.f32.mrf.mxu0
        %v2902 = vadd.f32 %v2853, %v2901
        %2903 = vmatmul.bf16.gmra.mxu0 %v927
        %v2904 = vpop.f32.mrf.mxu0
        %v2905 = vadd.f32 %v2856, %v2904
        %v2906 = vpop.f32.mrf.mxu0
        %v2907 = vadd.f32 %v2858, %v2906
        %2908 = vmatmul.bf16.gmra.mxu0 %v933
        %v2909 = vpop.f32.mrf.mxu0
        %v2910 = vadd.f32 %v2861, %v2909
        %v2911 = vpop.f32.mrf.mxu0
        %v2912 = vadd.f32 %v2863, %v2911
        %2913 = vdwg.mxu0
        %2914 = vmatpush.bf16.msra.mxu0 %v2083
        %2915 = vmatpush.bf16.msra.mxu0 %v2077
        %2916 = vmatpush.bf16.msra.mxu0 %v2071
        %2917 = vmatpush.bf16.msra.mxu0 %v2065
        %2918 = vmatpush.bf16.msra.mxu0 %v2059
        %2919 = vmatpush.bf16.msra.mxu0 %v2053
        %2920 = vmatpush.bf16.msra.mxu0 %v2047
        %2921 = vmatpush.bf16.msra.mxu0 %v2041
        %2922 = vmatmul.bf16.gmra.mxu0 %v892
        %v2923 = vpop.f32.mrf.mxu0
        %v2924 = vadd.f32 %v2875, %v2923
        %v2925 = vpop.f32.mrf.mxu0
        %v2926 = vadd.f32 %v2877, %v2925
        %2927 = vmatmul.bf16.gmra.mxu0 %v898
        %v2928 = vpop.f32.mrf.mxu0
        %v2929 = vadd.f32 %v2880, %v2928
        %v2930 = vpop.f32.mrf.mxu0
        %v2931 = vadd.f32 %v2882, %v2930
        %2932 = vmatmul.bf16.gmra.mxu0 %v904
        %v2933 = vpop.f32.mrf.mxu0
        %v2934 = vadd.f32 %v2885, %v2933
        %v2935 = vpop.f32.mrf.mxu0
        %v2936 = vadd.f32 %v2887, %v2935
        %2937 = vmatmul.bf16.gmra.mxu0 %v910
        %v2938 = vpop.f32.mrf.mxu0
        %v2939 = vadd.f32 %v2890, %v2938
        %v2940 = vpop.f32.mrf.mxu0
        %v2941 = vadd.f32 %v2892, %v2940
        %2942 = vmatmul.bf16.gmra.mxu0 %v916
        %v2943 = vpop.f32.mrf.mxu0
        %v2944 = vadd.f32 %v2895, %v2943
        %v2945 = vpop.f32.mrf.mxu0
        %v2946 = vadd.f32 %v2897, %v2945
        %2947 = vmatmul.bf16.gmra.mxu0 %v922
        %v2948 = vpop.f32.mrf.mxu0
        %v2949 = vadd.f32 %v2900, %v2948
        %v2950 = vpop.f32.mrf.mxu0
        %v2951 = vadd.f32 %v2902, %v2950
        %2952 = vmatmul.bf16.gmra.mxu0 %v928
        %v2953 = vpop.f32.mrf.mxu0
        %v2954 = vadd.f32 %v2905, %v2953
        %v2955 = vpop.f32.mrf.mxu0
        %v2956 = vadd.f32 %v2907, %v2955
        %2957 = vmatmul.bf16.gmra.mxu0 %v934
        %v2958 = vpop.f32.mrf.mxu0
        %v2959 = vadd.f32 %v2910, %v2958
        %v2960 = vpop.f32.mrf.mxu0
        %v2961 = vadd.f32 %v2912, %v2960
        %2962 = vdwg.mxu0
        %2963 = vmatpush.bf16.msra.mxu0 %v2131
        %2964 = vmatpush.bf16.msra.mxu0 %v2125
        %2965 = vmatpush.bf16.msra.mxu0 %v2119
        %2966 = vmatpush.bf16.msra.mxu0 %v2113
        %2967 = vmatpush.bf16.msra.mxu0 %v2107
        %2968 = vmatpush.bf16.msra.mxu0 %v2101
        %2969 = vmatpush.bf16.msra.mxu0 %v2095
        %2970 = vmatpush.bf16.msra.mxu0 %v2089
        %2971 = vmatmul.bf16.gmra.mxu0 %v893
        %v2972 = vpop.f32.mrf.mxu0
        %v2973 = vadd.f32 %v2924, %v2972
        %v2974 = vpop.f32.mrf.mxu0
        %v2975 = vadd.f32 %v2926, %v2974
        %2976 = vmatmul.bf16.gmra.mxu0 %v899
        %v2977 = vpop.f32.mrf.mxu0
        %v2978 = vadd.f32 %v2929, %v2977
        %v2979 = vpop.f32.mrf.mxu0
        %v2980 = vadd.f32 %v2931, %v2979
        %2981 = vmatmul.bf16.gmra.mxu0 %v905
        %v2982 = vpop.f32.mrf.mxu0
        %v2983 = vadd.f32 %v2934, %v2982
        %v2984 = vpop.f32.mrf.mxu0
        %v2985 = vadd.f32 %v2936, %v2984
        %2986 = vmatmul.bf16.gmra.mxu0 %v911
        %v2987 = vpop.f32.mrf.mxu0
        %v2988 = vadd.f32 %v2939, %v2987
        %v2989 = vpop.f32.mrf.mxu0
        %v2990 = vadd.f32 %v2941, %v2989
        %2991 = vmatmul.bf16.gmra.mxu0 %v917
        %v2992 = vpop.f32.mrf.mxu0
        %v2993 = vadd.f32 %v2944, %v2992
        %v2994 = vpop.f32.mrf.mxu0
        %v2995 = vadd.f32 %v2946, %v2994
        %2996 = vmatmul.bf16.gmra.mxu0 %v923
        %v2997 = vpop.f32.mrf.mxu0
        %v2998 = vadd.f32 %v2949, %v2997
        %v2999 = vpop.f32.mrf.mxu0
        %v3000 = vadd.f32 %v2951, %v2999
        %3001 = vmatmul.bf16.gmra.mxu0 %v929
        %v3002 = vpop.f32.mrf.mxu0
        %v3003 = vadd.f32 %v2954, %v3002
        %v3004 = vpop.f32.mrf.mxu0
        %v3005 = vadd.f32 %v2956, %v3004
        %3006 = vmatmul.bf16.gmra.mxu0 %v935
        %v3007 = vpop.f32.mrf.mxu0
        %v3008 = vadd.f32 %v2959, %v3007
        %v3009 = vpop.f32.mrf.mxu0
        %v3010 = vadd.f32 %v2961, %v3009
        %3011 = vdwg.mxu0
        %3012 = vmatpush.bf16.msra.mxu0 %v1892
        %3013 = vmatpush.bf16.msra.mxu0 %v1886
        %3014 = vmatpush.bf16.msra.mxu0 %v1880
        %3015 = vmatpush.bf16.msra.mxu0 %v1874
        %3016 = vmatpush.bf16.msra.mxu0 %v1868
        %3017 = vmatpush.bf16.msra.mxu0 %v1862
        %3018 = vmatpush.bf16.msra.mxu0 %v1856
        %3019 = vmatpush.bf16.msra.mxu0 %v1850
        %3020 = vmatmul.bf16.gmra.mxu0 %v888
        %v3021 = vpop.f32.mrf.mxu0
        %v3022 = vadd.f32 %v734, %v3021
        %v3023 = vpop.f32.mrf.mxu0
        %v3024 = vadd.f32 %v734, %v3023
        %3025 = vmatmul.bf16.gmra.mxu0 %v894
        %v3026 = vpop.f32.mrf.mxu0
        %v3027 = vadd.f32 %v734, %v3026
        %v3028 = vpop.f32.mrf.mxu0
        %v3029 = vadd.f32 %v734, %v3028
        %3030 = vmatmul.bf16.gmra.mxu0 %v900
        %v3031 = vpop.f32.mrf.mxu0
        %v3032 = vadd.f32 %v734, %v3031
        %v3033 = vpop.f32.mrf.mxu0
        %v3034 = vadd.f32 %v734, %v3033
        %3035 = vmatmul.bf16.gmra.mxu0 %v906
        %v3036 = vpop.f32.mrf.mxu0
        %v3037 = vadd.f32 %v734, %v3036
        %v3038 = vpop.f32.mrf.mxu0
        %v3039 = vadd.f32 %v734, %v3038
        %3040 = vmatmul.bf16.gmra.mxu0 %v912
        %v3041 = vpop.f32.mrf.mxu0
        %v3042 = vadd.f32 %v734, %v3041
        %v3043 = vpop.f32.mrf.mxu0
        %v3044 = vadd.f32 %v734, %v3043
        %3045 = vmatmul.bf16.gmra.mxu0 %v918
        %v3046 = vpop.f32.mrf.mxu0
        %v3047 = vadd.f32 %v734, %v3046
        %v3048 = vpop.f32.mrf.mxu0
        %v3049 = vadd.f32 %v734, %v3048
        %3050 = vmatmul.bf16.gmra.mxu0 %v924
        %v3051 = vpop.f32.mrf.mxu0
        %v3052 = vadd.f32 %v734, %v3051
        %v3053 = vpop.f32.mrf.mxu0
        %v3054 = vadd.f32 %v734, %v3053
        %3055 = vmatmul.bf16.gmra.mxu0 %v930
        %v3056 = vpop.f32.mrf.mxu0
        %v3057 = vadd.f32 %v734, %v3056
        %v3058 = vpop.f32.mrf.mxu0
        %v3059 = vadd.f32 %v734, %v3058
        %3060 = vdwg.mxu0
        %3061 = vmatpush.bf16.msra.mxu0 %v1940
        %3062 = vmatpush.bf16.msra.mxu0 %v1934
        %3063 = vmatpush.bf16.msra.mxu0 %v1928
        %3064 = vmatpush.bf16.msra.mxu0 %v1922
        %3065 = vmatpush.bf16.msra.mxu0 %v1916
        %3066 = vmatpush.bf16.msra.mxu0 %v1910
        %3067 = vmatpush.bf16.msra.mxu0 %v1904
        %3068 = vmatpush.bf16.msra.mxu0 %v1898
        %3069 = vmatmul.bf16.gmra.mxu0 %v889
        %v3070 = vpop.f32.mrf.mxu0
        %v3071 = vadd.f32 %v3022, %v3070
        %v3072 = vpop.f32.mrf.mxu0
        %v3073 = vadd.f32 %v3024, %v3072
        %3074 = vmatmul.bf16.gmra.mxu0 %v895
        %v3075 = vpop.f32.mrf.mxu0
        %v3076 = vadd.f32 %v3027, %v3075
        %v3077 = vpop.f32.mrf.mxu0
        %v3078 = vadd.f32 %v3029, %v3077
        %3079 = vmatmul.bf16.gmra.mxu0 %v901
        %v3080 = vpop.f32.mrf.mxu0
        %v3081 = vadd.f32 %v3032, %v3080
        %v3082 = vpop.f32.mrf.mxu0
        %v3083 = vadd.f32 %v3034, %v3082
        %3084 = vmatmul.bf16.gmra.mxu0 %v907
        %v3085 = vpop.f32.mrf.mxu0
        %v3086 = vadd.f32 %v3037, %v3085
        %v3087 = vpop.f32.mrf.mxu0
        %v3088 = vadd.f32 %v3039, %v3087
        %3089 = vmatmul.bf16.gmra.mxu0 %v913
        %v3090 = vpop.f32.mrf.mxu0
        %v3091 = vadd.f32 %v3042, %v3090
        %v3092 = vpop.f32.mrf.mxu0
        %v3093 = vadd.f32 %v3044, %v3092
        %3094 = vmatmul.bf16.gmra.mxu0 %v919
        %v3095 = vpop.f32.mrf.mxu0
        %v3096 = vadd.f32 %v3047, %v3095
        %v3097 = vpop.f32.mrf.mxu0
        %v3098 = vadd.f32 %v3049, %v3097
        %3099 = vmatmul.bf16.gmra.mxu0 %v925
        %v3100 = vpop.f32.mrf.mxu0
        %v3101 = vadd.f32 %v3052, %v3100
        %v3102 = vpop.f32.mrf.mxu0
        %v3103 = vadd.f32 %v3054, %v3102
        %3104 = vmatmul.bf16.gmra.mxu0 %v931
        %v3105 = vpop.f32.mrf.mxu0
        %v3106 = vadd.f32 %v3057, %v3105
        %v3107 = vpop.f32.mrf.mxu0
        %v3108 = vadd.f32 %v3059, %v3107
        %3109 = vdwg.mxu0
        %3110 = vmatpush.bf16.msra.mxu0 %v1988
        %3111 = vmatpush.bf16.msra.mxu0 %v1982
        %3112 = vmatpush.bf16.msra.mxu0 %v1976
        %3113 = vmatpush.bf16.msra.mxu0 %v1970
        %3114 = vmatpush.bf16.msra.mxu0 %v1964
        %3115 = vmatpush.bf16.msra.mxu0 %v1958
        %3116 = vmatpush.bf16.msra.mxu0 %v1952
        %3117 = vmatpush.bf16.msra.mxu0 %v1946
        %3118 = vmatmul.bf16.gmra.mxu0 %v890
        %v3119 = vpop.f32.mrf.mxu0
        %v3120 = vadd.f32 %v3071, %v3119
        %v3121 = vpop.f32.mrf.mxu0
        %v3122 = vadd.f32 %v3073, %v3121
        %3123 = vmatmul.bf16.gmra.mxu0 %v896
        %v3124 = vpop.f32.mrf.mxu0
        %v3125 = vadd.f32 %v3076, %v3124
        %v3126 = vpop.f32.mrf.mxu0
        %v3127 = vadd.f32 %v3078, %v3126
        %3128 = vmatmul.bf16.gmra.mxu0 %v902
        %v3129 = vpop.f32.mrf.mxu0
        %v3130 = vadd.f32 %v3081, %v3129
        %v3131 = vpop.f32.mrf.mxu0
        %v3132 = vadd.f32 %v3083, %v3131
        %3133 = vmatmul.bf16.gmra.mxu0 %v908
        %v3134 = vpop.f32.mrf.mxu0
        %v3135 = vadd.f32 %v3086, %v3134
        %v3136 = vpop.f32.mrf.mxu0
        %v3137 = vadd.f32 %v3088, %v3136
        %3138 = vmatmul.bf16.gmra.mxu0 %v914
        %v3139 = vpop.f32.mrf.mxu0
        %v3140 = vadd.f32 %v3091, %v3139
        %v3141 = vpop.f32.mrf.mxu0
        %v3142 = vadd.f32 %v3093, %v3141
        %3143 = vmatmul.bf16.gmra.mxu0 %v920
        %v3144 = vpop.f32.mrf.mxu0
        %v3145 = vadd.f32 %v3096, %v3144
        %v3146 = vpop.f32.mrf.mxu0
        %v3147 = vadd.f32 %v3098, %v3146
        %3148 = vmatmul.bf16.gmra.mxu0 %v926
        %v3149 = vpop.f32.mrf.mxu0
        %v3150 = vadd.f32 %v3101, %v3149
        %v3151 = vpop.f32.mrf.mxu0
        %v3152 = vadd.f32 %v3103, %v3151
        %3153 = vmatmul.bf16.gmra.mxu0 %v932
        %v3154 = vpop.f32.mrf.mxu0
        %v3155 = vadd.f32 %v3106, %v3154
        %v3156 = vpop.f32.mrf.mxu0
        %v3157 = vadd.f32 %v3108, %v3156
        %3158 = vdwg.mxu0
        %3159 = vmatpush.bf16.msra.mxu0 %v2036
        %3160 = vmatpush.bf16.msra.mxu0 %v2030
        %3161 = vmatpush.bf16.msra.mxu0 %v2024
        %3162 = vmatpush.bf16.msra.mxu0 %v2018
        %3163 = vmatpush.bf16.msra.mxu0 %v2012
        %3164 = vmatpush.bf16.msra.mxu0 %v2006
        %3165 = vmatpush.bf16.msra.mxu0 %v2000
        %3166 = vmatpush.bf16.msra.mxu0 %v1994
        %3167 = vmatmul.bf16.gmra.mxu0 %v891
        %v3168 = vpop.f32.mrf.mxu0
        %v3169 = vadd.f32 %v3120, %v3168
        %v3170 = vpop.f32.mrf.mxu0
        %v3171 = vadd.f32 %v3122, %v3170
        %3172 = vmatmul.bf16.gmra.mxu0 %v897
        %v3173 = vpop.f32.mrf.mxu0
        %v3174 = vadd.f32 %v3125, %v3173
        %v3175 = vpop.f32.mrf.mxu0
        %v3176 = vadd.f32 %v3127, %v3175
        %3177 = vmatmul.bf16.gmra.mxu0 %v903
        %v3178 = vpop.f32.mrf.mxu0
        %v3179 = vadd.f32 %v3130, %v3178
        %v3180 = vpop.f32.mrf.mxu0
        %v3181 = vadd.f32 %v3132, %v3180
        %3182 = vmatmul.bf16.gmra.mxu0 %v909
        %v3183 = vpop.f32.mrf.mxu0
        %v3184 = vadd.f32 %v3135, %v3183
        %v3185 = vpop.f32.mrf.mxu0
        %v3186 = vadd.f32 %v3137, %v3185
        %3187 = vmatmul.bf16.gmra.mxu0 %v915
        %v3188 = vpop.f32.mrf.mxu0
        %v3189 = vadd.f32 %v3140, %v3188
        %v3190 = vpop.f32.mrf.mxu0
        %v3191 = vadd.f32 %v3142, %v3190
        %3192 = vmatmul.bf16.gmra.mxu0 %v921
        %v3193 = vpop.f32.mrf.mxu0
        %v3194 = vadd.f32 %v3145, %v3193
        %v3195 = vpop.f32.mrf.mxu0
        %v3196 = vadd.f32 %v3147, %v3195
        %3197 = vmatmul.bf16.gmra.mxu0 %v927
        %v3198 = vpop.f32.mrf.mxu0
        %v3199 = vadd.f32 %v3150, %v3198
        %v3200 = vpop.f32.mrf.mxu0
        %v3201 = vadd.f32 %v3152, %v3200
        %3202 = vmatmul.bf16.gmra.mxu0 %v933
        %v3203 = vpop.f32.mrf.mxu0
        %v3204 = vadd.f32 %v3155, %v3203
        %v3205 = vpop.f32.mrf.mxu0
        %v3206 = vadd.f32 %v3157, %v3205
        %3207 = vdwg.mxu0
        %3208 = vmatpush.bf16.msra.mxu0 %v2084
        %3209 = vmatpush.bf16.msra.mxu0 %v2078
        %3210 = vmatpush.bf16.msra.mxu0 %v2072
        %3211 = vmatpush.bf16.msra.mxu0 %v2066
        %3212 = vmatpush.bf16.msra.mxu0 %v2060
        %3213 = vmatpush.bf16.msra.mxu0 %v2054
        %3214 = vmatpush.bf16.msra.mxu0 %v2048
        %3215 = vmatpush.bf16.msra.mxu0 %v2042
        %3216 = vmatmul.bf16.gmra.mxu0 %v892
        %v3217 = vpop.f32.mrf.mxu0
        %v3218 = vadd.f32 %v3169, %v3217
        %v3219 = vpop.f32.mrf.mxu0
        %v3220 = vadd.f32 %v3171, %v3219
        %3221 = vmatmul.bf16.gmra.mxu0 %v898
        %v3222 = vpop.f32.mrf.mxu0
        %v3223 = vadd.f32 %v3174, %v3222
        %v3224 = vpop.f32.mrf.mxu0
        %v3225 = vadd.f32 %v3176, %v3224
        %3226 = vmatmul.bf16.gmra.mxu0 %v904
        %v3227 = vpop.f32.mrf.mxu0
        %v3228 = vadd.f32 %v3179, %v3227
        %v3229 = vpop.f32.mrf.mxu0
        %v3230 = vadd.f32 %v3181, %v3229
        %3231 = vmatmul.bf16.gmra.mxu0 %v910
        %v3232 = vpop.f32.mrf.mxu0
        %v3233 = vadd.f32 %v3184, %v3232
        %v3234 = vpop.f32.mrf.mxu0
        %v3235 = vadd.f32 %v3186, %v3234
        %3236 = vmatmul.bf16.gmra.mxu0 %v916
        %v3237 = vpop.f32.mrf.mxu0
        %v3238 = vadd.f32 %v3189, %v3237
        %v3239 = vpop.f32.mrf.mxu0
        %v3240 = vadd.f32 %v3191, %v3239
        %3241 = vmatmul.bf16.gmra.mxu0 %v922
        %v3242 = vpop.f32.mrf.mxu0
        %v3243 = vadd.f32 %v3194, %v3242
        %v3244 = vpop.f32.mrf.mxu0
        %v3245 = vadd.f32 %v3196, %v3244
        %3246 = vmatmul.bf16.gmra.mxu0 %v928
        %v3247 = vpop.f32.mrf.mxu0
        %v3248 = vadd.f32 %v3199, %v3247
        %v3249 = vpop.f32.mrf.mxu0
        %v3250 = vadd.f32 %v3201, %v3249
        %3251 = vmatmul.bf16.gmra.mxu0 %v934
        %v3252 = vpop.f32.mrf.mxu0
        %v3253 = vadd.f32 %v3204, %v3252
        %v3254 = vpop.f32.mrf.mxu0
        %v3255 = vadd.f32 %v3206, %v3254
        %3256 = vdwg.mxu0
        %3257 = vmatpush.bf16.msra.mxu0 %v2132
        %3258 = vmatpush.bf16.msra.mxu0 %v2126
        %3259 = vmatpush.bf16.msra.mxu0 %v2120
        %3260 = vmatpush.bf16.msra.mxu0 %v2114
        %3261 = vmatpush.bf16.msra.mxu0 %v2108
        %3262 = vmatpush.bf16.msra.mxu0 %v2102
        %3263 = vmatpush.bf16.msra.mxu0 %v2096
        %3264 = vmatpush.bf16.msra.mxu0 %v2090
        %3265 = vmatmul.bf16.gmra.mxu0 %v893
        %v3266 = vpop.f32.mrf.mxu0
        %v3267 = vadd.f32 %v3218, %v3266
        %v3268 = vpop.f32.mrf.mxu0
        %v3269 = vadd.f32 %v3220, %v3268
        %3270 = vmatmul.bf16.gmra.mxu0 %v899
        %v3271 = vpop.f32.mrf.mxu0
        %v3272 = vadd.f32 %v3223, %v3271
        %v3273 = vpop.f32.mrf.mxu0
        %v3274 = vadd.f32 %v3225, %v3273
        %3275 = vmatmul.bf16.gmra.mxu0 %v905
        %v3276 = vpop.f32.mrf.mxu0
        %v3277 = vadd.f32 %v3228, %v3276
        %v3278 = vpop.f32.mrf.mxu0
        %v3279 = vadd.f32 %v3230, %v3278
        %3280 = vmatmul.bf16.gmra.mxu0 %v911
        %v3281 = vpop.f32.mrf.mxu0
        %v3282 = vadd.f32 %v3233, %v3281
        %v3283 = vpop.f32.mrf.mxu0
        %v3284 = vadd.f32 %v3235, %v3283
        %3285 = vmatmul.bf16.gmra.mxu0 %v917
        %v3286 = vpop.f32.mrf.mxu0
        %v3287 = vadd.f32 %v3238, %v3286
        %v3288 = vpop.f32.mrf.mxu0
        %v3289 = vadd.f32 %v3240, %v3288
        %3290 = vmatmul.bf16.gmra.mxu0 %v923
        %v3291 = vpop.f32.mrf.mxu0
        %v3292 = vadd.f32 %v3243, %v3291
        %v3293 = vpop.f32.mrf.mxu0
        %v3294 = vadd.f32 %v3245, %v3293
        %3295 = vmatmul.bf16.gmra.mxu0 %v929
        %v3296 = vpop.f32.mrf.mxu0
        %v3297 = vadd.f32 %v3248, %v3296
        %v3298 = vpop.f32.mrf.mxu0
        %v3299 = vadd.f32 %v3250, %v3298
        %3300 = vmatmul.bf16.gmra.mxu0 %v935
        %v3301 = vpop.f32.mrf.mxu0
        %v3302 = vadd.f32 %v3253, %v3301
        %v3303 = vpop.f32.mrf.mxu0
        %v3304 = vadd.f32 %v3255, %v3303
        %3305 = vdwg.mxu0
        %3306 = vmatpush.bf16.msra.mxu0 %v1893
        %3307 = vmatpush.bf16.msra.mxu0 %v1887
        %3308 = vmatpush.bf16.msra.mxu0 %v1881
        %3309 = vmatpush.bf16.msra.mxu0 %v1875
        %3310 = vmatpush.bf16.msra.mxu0 %v1869
        %3311 = vmatpush.bf16.msra.mxu0 %v1863
        %3312 = vmatpush.bf16.msra.mxu0 %v1857
        %3313 = vmatpush.bf16.msra.mxu0 %v1851
        %3314 = vmatmul.bf16.gmra.mxu0 %v888
        %v3315 = vpop.f32.mrf.mxu0
        %v3316 = vadd.f32 %v735, %v3315
        %v3317 = vpop.f32.mrf.mxu0
        %v3318 = vadd.f32 %v735, %v3317
        %3319 = vmatmul.bf16.gmra.mxu0 %v894
        %v3320 = vpop.f32.mrf.mxu0
        %v3321 = vadd.f32 %v735, %v3320
        %v3322 = vpop.f32.mrf.mxu0
        %v3323 = vadd.f32 %v735, %v3322
        %3324 = vmatmul.bf16.gmra.mxu0 %v900
        %v3325 = vpop.f32.mrf.mxu0
        %v3326 = vadd.f32 %v735, %v3325
        %v3327 = vpop.f32.mrf.mxu0
        %v3328 = vadd.f32 %v735, %v3327
        %3329 = vmatmul.bf16.gmra.mxu0 %v906
        %v3330 = vpop.f32.mrf.mxu0
        %v3331 = vadd.f32 %v735, %v3330
        %v3332 = vpop.f32.mrf.mxu0
        %v3333 = vadd.f32 %v735, %v3332
        %3334 = vmatmul.bf16.gmra.mxu0 %v912
        %v3335 = vpop.f32.mrf.mxu0
        %v3336 = vadd.f32 %v735, %v3335
        %v3337 = vpop.f32.mrf.mxu0
        %v3338 = vadd.f32 %v735, %v3337
        %3339 = vmatmul.bf16.gmra.mxu0 %v918
        %v3340 = vpop.f32.mrf.mxu0
        %v3341 = vadd.f32 %v735, %v3340
        %v3342 = vpop.f32.mrf.mxu0
        %v3343 = vadd.f32 %v735, %v3342
        %3344 = vmatmul.bf16.gmra.mxu0 %v924
        %v3345 = vpop.f32.mrf.mxu0
        %v3346 = vadd.f32 %v735, %v3345
        %v3347 = vpop.f32.mrf.mxu0
        %v3348 = vadd.f32 %v735, %v3347
        %3349 = vmatmul.bf16.gmra.mxu0 %v930
        %v3350 = vpop.f32.mrf.mxu0
        %v3351 = vadd.f32 %v735, %v3350
        %v3352 = vpop.f32.mrf.mxu0
        %v3353 = vadd.f32 %v735, %v3352
        %3354 = vdwg.mxu0
        %3355 = vmatpush.bf16.msra.mxu0 %v1941
        %3356 = vmatpush.bf16.msra.mxu0 %v1935
        %3357 = vmatpush.bf16.msra.mxu0 %v1929
        %3358 = vmatpush.bf16.msra.mxu0 %v1923
        %3359 = vmatpush.bf16.msra.mxu0 %v1917
        %3360 = vmatpush.bf16.msra.mxu0 %v1911
        %3361 = vmatpush.bf16.msra.mxu0 %v1905
        %3362 = vmatpush.bf16.msra.mxu0 %v1899
        %3363 = vmatmul.bf16.gmra.mxu0 %v889
        %v3364 = vpop.f32.mrf.mxu0
        %v3365 = vadd.f32 %v3316, %v3364
        %v3366 = vpop.f32.mrf.mxu0
        %v3367 = vadd.f32 %v3318, %v3366
        %3368 = vmatmul.bf16.gmra.mxu0 %v895
        %v3369 = vpop.f32.mrf.mxu0
        %v3370 = vadd.f32 %v3321, %v3369
        %v3371 = vpop.f32.mrf.mxu0
        %v3372 = vadd.f32 %v3323, %v3371
        %3373 = vmatmul.bf16.gmra.mxu0 %v901
        %v3374 = vpop.f32.mrf.mxu0
        %v3375 = vadd.f32 %v3326, %v3374
        %v3376 = vpop.f32.mrf.mxu0
        %v3377 = vadd.f32 %v3328, %v3376
        %3378 = vmatmul.bf16.gmra.mxu0 %v907
        %v3379 = vpop.f32.mrf.mxu0
        %v3380 = vadd.f32 %v3331, %v3379
        %v3381 = vpop.f32.mrf.mxu0
        %v3382 = vadd.f32 %v3333, %v3381
        %3383 = vmatmul.bf16.gmra.mxu0 %v913
        %v3384 = vpop.f32.mrf.mxu0
        %v3385 = vadd.f32 %v3336, %v3384
        %v3386 = vpop.f32.mrf.mxu0
        %v3387 = vadd.f32 %v3338, %v3386
        %3388 = vmatmul.bf16.gmra.mxu0 %v919
        %v3389 = vpop.f32.mrf.mxu0
        %v3390 = vadd.f32 %v3341, %v3389
        %v3391 = vpop.f32.mrf.mxu0
        %v3392 = vadd.f32 %v3343, %v3391
        %3393 = vmatmul.bf16.gmra.mxu0 %v925
        %v3394 = vpop.f32.mrf.mxu0
        %v3395 = vadd.f32 %v3346, %v3394
        %v3396 = vpop.f32.mrf.mxu0
        %v3397 = vadd.f32 %v3348, %v3396
        %3398 = vmatmul.bf16.gmra.mxu0 %v931
        %v3399 = vpop.f32.mrf.mxu0
        %v3400 = vadd.f32 %v3351, %v3399
        %v3401 = vpop.f32.mrf.mxu0
        %v3402 = vadd.f32 %v3353, %v3401
        %3403 = vdwg.mxu0
        %3404 = vmatpush.bf16.msra.mxu0 %v1989
        %3405 = vmatpush.bf16.msra.mxu0 %v1983
        %3406 = vmatpush.bf16.msra.mxu0 %v1977
        %3407 = vmatpush.bf16.msra.mxu0 %v1971
        %3408 = vmatpush.bf16.msra.mxu0 %v1965
        %3409 = vmatpush.bf16.msra.mxu0 %v1959
        %3410 = vmatpush.bf16.msra.mxu0 %v1953
        %3411 = vmatpush.bf16.msra.mxu0 %v1947
        %3412 = vmatmul.bf16.gmra.mxu0 %v890
        %v3413 = vpop.f32.mrf.mxu0
        %v3414 = vadd.f32 %v3365, %v3413
        %v3415 = vpop.f32.mrf.mxu0
        %v3416 = vadd.f32 %v3367, %v3415
        %3417 = vmatmul.bf16.gmra.mxu0 %v896
        %v3418 = vpop.f32.mrf.mxu0
        %v3419 = vadd.f32 %v3370, %v3418
        %v3420 = vpop.f32.mrf.mxu0
        %v3421 = vadd.f32 %v3372, %v3420
        %3422 = vmatmul.bf16.gmra.mxu0 %v902
        %v3423 = vpop.f32.mrf.mxu0
        %v3424 = vadd.f32 %v3375, %v3423
        %v3425 = vpop.f32.mrf.mxu0
        %v3426 = vadd.f32 %v3377, %v3425
        %3427 = vmatmul.bf16.gmra.mxu0 %v908
        %v3428 = vpop.f32.mrf.mxu0
        %v3429 = vadd.f32 %v3380, %v3428
        %v3430 = vpop.f32.mrf.mxu0
        %v3431 = vadd.f32 %v3382, %v3430
        %3432 = vmatmul.bf16.gmra.mxu0 %v914
        %v3433 = vpop.f32.mrf.mxu0
        %v3434 = vadd.f32 %v3385, %v3433
        %v3435 = vpop.f32.mrf.mxu0
        %v3436 = vadd.f32 %v3387, %v3435
        %3437 = vmatmul.bf16.gmra.mxu0 %v920
        %v3438 = vpop.f32.mrf.mxu0
        %v3439 = vadd.f32 %v3390, %v3438
        %v3440 = vpop.f32.mrf.mxu0
        %v3441 = vadd.f32 %v3392, %v3440
        %3442 = vmatmul.bf16.gmra.mxu0 %v926
        %v3443 = vpop.f32.mrf.mxu0
        %v3444 = vadd.f32 %v3395, %v3443
        %v3445 = vpop.f32.mrf.mxu0
        %v3446 = vadd.f32 %v3397, %v3445
        %3447 = vmatmul.bf16.gmra.mxu0 %v932
        %v3448 = vpop.f32.mrf.mxu0
        %v3449 = vadd.f32 %v3400, %v3448
        %v3450 = vpop.f32.mrf.mxu0
        %v3451 = vadd.f32 %v3402, %v3450
        %3452 = vdwg.mxu0
        %3453 = vmatpush.bf16.msra.mxu0 %v2037
        %3454 = vmatpush.bf16.msra.mxu0 %v2031
        %3455 = vmatpush.bf16.msra.mxu0 %v2025
        %3456 = vmatpush.bf16.msra.mxu0 %v2019
        %3457 = vmatpush.bf16.msra.mxu0 %v2013
        %3458 = vmatpush.bf16.msra.mxu0 %v2007
        %3459 = vmatpush.bf16.msra.mxu0 %v2001
        %3460 = vmatpush.bf16.msra.mxu0 %v1995
        %3461 = vmatmul.bf16.gmra.mxu0 %v891
        %v3462 = vpop.f32.mrf.mxu0
        %v3463 = vadd.f32 %v3414, %v3462
        %v3464 = vpop.f32.mrf.mxu0
        %v3465 = vadd.f32 %v3416, %v3464
        %3466 = vmatmul.bf16.gmra.mxu0 %v897
        %v3467 = vpop.f32.mrf.mxu0
        %v3468 = vadd.f32 %v3419, %v3467
        %v3469 = vpop.f32.mrf.mxu0
        %v3470 = vadd.f32 %v3421, %v3469
        %3471 = vmatmul.bf16.gmra.mxu0 %v903
        %v3472 = vpop.f32.mrf.mxu0
        %v3473 = vadd.f32 %v3424, %v3472
        %v3474 = vpop.f32.mrf.mxu0
        %v3475 = vadd.f32 %v3426, %v3474
        %3476 = vmatmul.bf16.gmra.mxu0 %v909
        %v3477 = vpop.f32.mrf.mxu0
        %v3478 = vadd.f32 %v3429, %v3477
        %v3479 = vpop.f32.mrf.mxu0
        %v3480 = vadd.f32 %v3431, %v3479
        %3481 = vmatmul.bf16.gmra.mxu0 %v915
        %v3482 = vpop.f32.mrf.mxu0
        %v3483 = vadd.f32 %v3434, %v3482
        %v3484 = vpop.f32.mrf.mxu0
        %v3485 = vadd.f32 %v3436, %v3484
        %3486 = vmatmul.bf16.gmra.mxu0 %v921
        %v3487 = vpop.f32.mrf.mxu0
        %v3488 = vadd.f32 %v3439, %v3487
        %v3489 = vpop.f32.mrf.mxu0
        %v3490 = vadd.f32 %v3441, %v3489
        %3491 = vmatmul.bf16.gmra.mxu0 %v927
        %v3492 = vpop.f32.mrf.mxu0
        %v3493 = vadd.f32 %v3444, %v3492
        %v3494 = vpop.f32.mrf.mxu0
        %v3495 = vadd.f32 %v3446, %v3494
        %3496 = vmatmul.bf16.gmra.mxu0 %v933
        %v3497 = vpop.f32.mrf.mxu0
        %v3498 = vadd.f32 %v3449, %v3497
        %v3499 = vpop.f32.mrf.mxu0
        %v3500 = vadd.f32 %v3451, %v3499
        %3501 = vdwg.mxu0
        %3502 = vmatpush.bf16.msra.mxu0 %v2085
        %3503 = vmatpush.bf16.msra.mxu0 %v2079
        %3504 = vmatpush.bf16.msra.mxu0 %v2073
        %3505 = vmatpush.bf16.msra.mxu0 %v2067
        %3506 = vmatpush.bf16.msra.mxu0 %v2061
        %3507 = vmatpush.bf16.msra.mxu0 %v2055
        %3508 = vmatpush.bf16.msra.mxu0 %v2049
        %3509 = vmatpush.bf16.msra.mxu0 %v2043
        %3510 = vmatmul.bf16.gmra.mxu0 %v892
        %v3511 = vpop.f32.mrf.mxu0
        %v3512 = vadd.f32 %v3463, %v3511
        %v3513 = vpop.f32.mrf.mxu0
        %v3514 = vadd.f32 %v3465, %v3513
        %3515 = vmatmul.bf16.gmra.mxu0 %v898
        %v3516 = vpop.f32.mrf.mxu0
        %v3517 = vadd.f32 %v3468, %v3516
        %v3518 = vpop.f32.mrf.mxu0
        %v3519 = vadd.f32 %v3470, %v3518
        %3520 = vmatmul.bf16.gmra.mxu0 %v904
        %v3521 = vpop.f32.mrf.mxu0
        %v3522 = vadd.f32 %v3473, %v3521
        %v3523 = vpop.f32.mrf.mxu0
        %v3524 = vadd.f32 %v3475, %v3523
        %3525 = vmatmul.bf16.gmra.mxu0 %v910
        %v3526 = vpop.f32.mrf.mxu0
        %v3527 = vadd.f32 %v3478, %v3526
        %v3528 = vpop.f32.mrf.mxu0
        %v3529 = vadd.f32 %v3480, %v3528
        %3530 = vmatmul.bf16.gmra.mxu0 %v916
        %v3531 = vpop.f32.mrf.mxu0
        %v3532 = vadd.f32 %v3483, %v3531
        %v3533 = vpop.f32.mrf.mxu0
        %v3534 = vadd.f32 %v3485, %v3533
        %3535 = vmatmul.bf16.gmra.mxu0 %v922
        %v3536 = vpop.f32.mrf.mxu0
        %v3537 = vadd.f32 %v3488, %v3536
        %v3538 = vpop.f32.mrf.mxu0
        %v3539 = vadd.f32 %v3490, %v3538
        %3540 = vmatmul.bf16.gmra.mxu0 %v928
        %v3541 = vpop.f32.mrf.mxu0
        %v3542 = vadd.f32 %v3493, %v3541
        %v3543 = vpop.f32.mrf.mxu0
        %v3544 = vadd.f32 %v3495, %v3543
        %3545 = vmatmul.bf16.gmra.mxu0 %v934
        %v3546 = vpop.f32.mrf.mxu0
        %v3547 = vadd.f32 %v3498, %v3546
        %v3548 = vpop.f32.mrf.mxu0
        %v3549 = vadd.f32 %v3500, %v3548
        %3550 = vdwg.mxu0
        %3551 = vmatpush.bf16.msra.mxu0 %v2133
        %3552 = vmatpush.bf16.msra.mxu0 %v2127
        %3553 = vmatpush.bf16.msra.mxu0 %v2121
        %3554 = vmatpush.bf16.msra.mxu0 %v2115
        %3555 = vmatpush.bf16.msra.mxu0 %v2109
        %3556 = vmatpush.bf16.msra.mxu0 %v2103
        %3557 = vmatpush.bf16.msra.mxu0 %v2097
        %3558 = vmatpush.bf16.msra.mxu0 %v2091
        %3559 = vmatmul.bf16.gmra.mxu0 %v893
        %v3560 = vpop.f32.mrf.mxu0
        %v3561 = vadd.f32 %v3512, %v3560
        %v3562 = vpop.f32.mrf.mxu0
        %v3563 = vadd.f32 %v3514, %v3562
        %3564 = vmatmul.bf16.gmra.mxu0 %v899
        %v3565 = vpop.f32.mrf.mxu0
        %v3566 = vadd.f32 %v3517, %v3565
        %v3567 = vpop.f32.mrf.mxu0
        %v3568 = vadd.f32 %v3519, %v3567
        %3569 = vmatmul.bf16.gmra.mxu0 %v905
        %v3570 = vpop.f32.mrf.mxu0
        %v3571 = vadd.f32 %v3522, %v3570
        %v3572 = vpop.f32.mrf.mxu0
        %v3573 = vadd.f32 %v3524, %v3572
        %3574 = vmatmul.bf16.gmra.mxu0 %v911
        %v3575 = vpop.f32.mrf.mxu0
        %v3576 = vadd.f32 %v3527, %v3575
        %v3577 = vpop.f32.mrf.mxu0
        %v3578 = vadd.f32 %v3529, %v3577
        %3579 = vmatmul.bf16.gmra.mxu0 %v917
        %v3580 = vpop.f32.mrf.mxu0
        %v3581 = vadd.f32 %v3532, %v3580
        %v3582 = vpop.f32.mrf.mxu0
        %v3583 = vadd.f32 %v3534, %v3582
        %3584 = vmatmul.bf16.gmra.mxu0 %v923
        %v3585 = vpop.f32.mrf.mxu0
        %v3586 = vadd.f32 %v3537, %v3585
        %v3587 = vpop.f32.mrf.mxu0
        %v3588 = vadd.f32 %v3539, %v3587
        %3589 = vmatmul.bf16.gmra.mxu0 %v929
        %v3590 = vpop.f32.mrf.mxu0
        %v3591 = vadd.f32 %v3542, %v3590
        %v3592 = vpop.f32.mrf.mxu0
        %v3593 = vadd.f32 %v3544, %v3592
        %3594 = vmatmul.bf16.gmra.mxu0 %v935
        %v3595 = vpop.f32.mrf.mxu0
        %v3596 = vadd.f32 %v3547, %v3595
        %v3597 = vpop.f32.mrf.mxu0
        %v3598 = vadd.f32 %v3549, %v3597
        %3599 = vdwg.mxu0
        %3600 = vmatpush.bf16.msra.mxu0 %v1894
        %3601 = vmatpush.bf16.msra.mxu0 %v1888
        %3602 = vmatpush.bf16.msra.mxu0 %v1882
        %3603 = vmatpush.bf16.msra.mxu0 %v1876
        %3604 = vmatpush.bf16.msra.mxu0 %v1870
        %3605 = vmatpush.bf16.msra.mxu0 %v1864
        %3606 = vmatpush.bf16.msra.mxu0 %v1858
        %3607 = vmatpush.bf16.msra.mxu0 %v1852
        %3608 = vmatmul.bf16.gmra.mxu0 %v888
        %v3609 = vpop.f32.mrf.mxu0
        %v3610 = vadd.f32 %v736, %v3609
        %v3611 = vpop.f32.mrf.mxu0
        %v3612 = vadd.f32 %v736, %v3611
        %3613 = vmatmul.bf16.gmra.mxu0 %v894
        %v3614 = vpop.f32.mrf.mxu0
        %v3615 = vadd.f32 %v736, %v3614
        %v3616 = vpop.f32.mrf.mxu0
        %v3617 = vadd.f32 %v736, %v3616
        %3618 = vmatmul.bf16.gmra.mxu0 %v900
        %v3619 = vpop.f32.mrf.mxu0
        %v3620 = vadd.f32 %v736, %v3619
        %v3621 = vpop.f32.mrf.mxu0
        %v3622 = vadd.f32 %v736, %v3621
        %3623 = vmatmul.bf16.gmra.mxu0 %v906
        %v3624 = vpop.f32.mrf.mxu0
        %v3625 = vadd.f32 %v736, %v3624
        %v3626 = vpop.f32.mrf.mxu0
        %v3627 = vadd.f32 %v736, %v3626
        %3628 = vmatmul.bf16.gmra.mxu0 %v912
        %v3629 = vpop.f32.mrf.mxu0
        %v3630 = vadd.f32 %v736, %v3629
        %v3631 = vpop.f32.mrf.mxu0
        %v3632 = vadd.f32 %v736, %v3631
        %3633 = vmatmul.bf16.gmra.mxu0 %v918
        %v3634 = vpop.f32.mrf.mxu0
        %v3635 = vadd.f32 %v736, %v3634
        %v3636 = vpop.f32.mrf.mxu0
        %v3637 = vadd.f32 %v736, %v3636
        %3638 = vmatmul.bf16.gmra.mxu0 %v924
        %v3639 = vpop.f32.mrf.mxu0
        %v3640 = vadd.f32 %v736, %v3639
        %v3641 = vpop.f32.mrf.mxu0
        %v3642 = vadd.f32 %v736, %v3641
        %3643 = vmatmul.bf16.gmra.mxu0 %v930
        %v3644 = vpop.f32.mrf.mxu0
        %v3645 = vadd.f32 %v736, %v3644
        %v3646 = vpop.f32.mrf.mxu0
        %v3647 = vadd.f32 %v736, %v3646
        %3648 = vdwg.mxu0
        %3649 = vmatpush.bf16.msra.mxu0 %v1942
        %3650 = vmatpush.bf16.msra.mxu0 %v1936
        %3651 = vmatpush.bf16.msra.mxu0 %v1930
        %3652 = vmatpush.bf16.msra.mxu0 %v1924
        %3653 = vmatpush.bf16.msra.mxu0 %v1918
        %3654 = vmatpush.bf16.msra.mxu0 %v1912
        %3655 = vmatpush.bf16.msra.mxu0 %v1906
        %3656 = vmatpush.bf16.msra.mxu0 %v1900
        %3657 = vmatmul.bf16.gmra.mxu0 %v889
        %v3658 = vpop.f32.mrf.mxu0
        %v3659 = vadd.f32 %v3610, %v3658
        %v3660 = vpop.f32.mrf.mxu0
        %v3661 = vadd.f32 %v3612, %v3660
        %3662 = vmatmul.bf16.gmra.mxu0 %v895
        %v3663 = vpop.f32.mrf.mxu0
        %v3664 = vadd.f32 %v3615, %v3663
        %v3665 = vpop.f32.mrf.mxu0
        %v3666 = vadd.f32 %v3617, %v3665
        %3667 = vmatmul.bf16.gmra.mxu0 %v901
        %v3668 = vpop.f32.mrf.mxu0
        %v3669 = vadd.f32 %v3620, %v3668
        %v3670 = vpop.f32.mrf.mxu0
        %v3671 = vadd.f32 %v3622, %v3670
        %3672 = vmatmul.bf16.gmra.mxu0 %v907
        %v3673 = vpop.f32.mrf.mxu0
        %v3674 = vadd.f32 %v3625, %v3673
        %v3675 = vpop.f32.mrf.mxu0
        %v3676 = vadd.f32 %v3627, %v3675
        %3677 = vmatmul.bf16.gmra.mxu0 %v913
        %v3678 = vpop.f32.mrf.mxu0
        %v3679 = vadd.f32 %v3630, %v3678
        %v3680 = vpop.f32.mrf.mxu0
        %v3681 = vadd.f32 %v3632, %v3680
        %3682 = vmatmul.bf16.gmra.mxu0 %v919
        %v3683 = vpop.f32.mrf.mxu0
        %v3684 = vadd.f32 %v3635, %v3683
        %v3685 = vpop.f32.mrf.mxu0
        %v3686 = vadd.f32 %v3637, %v3685
        %3687 = vmatmul.bf16.gmra.mxu0 %v925
        %v3688 = vpop.f32.mrf.mxu0
        %v3689 = vadd.f32 %v3640, %v3688
        %v3690 = vpop.f32.mrf.mxu0
        %v3691 = vadd.f32 %v3642, %v3690
        %3692 = vmatmul.bf16.gmra.mxu0 %v931
        %v3693 = vpop.f32.mrf.mxu0
        %v3694 = vadd.f32 %v3645, %v3693
        %v3695 = vpop.f32.mrf.mxu0
        %v3696 = vadd.f32 %v3647, %v3695
        %3697 = vdwg.mxu0
        %3698 = vmatpush.bf16.msra.mxu0 %v1990
        %3699 = vmatpush.bf16.msra.mxu0 %v1984
        %3700 = vmatpush.bf16.msra.mxu0 %v1978
        %3701 = vmatpush.bf16.msra.mxu0 %v1972
        %3702 = vmatpush.bf16.msra.mxu0 %v1966
        %3703 = vmatpush.bf16.msra.mxu0 %v1960
        %3704 = vmatpush.bf16.msra.mxu0 %v1954
        %3705 = vmatpush.bf16.msra.mxu0 %v1948
        %3706 = vmatmul.bf16.gmra.mxu0 %v890
        %v3707 = vpop.f32.mrf.mxu0
        %v3708 = vadd.f32 %v3659, %v3707
        %v3709 = vpop.f32.mrf.mxu0
        %v3710 = vadd.f32 %v3661, %v3709
        %3711 = vmatmul.bf16.gmra.mxu0 %v896
        %v3712 = vpop.f32.mrf.mxu0
        %v3713 = vadd.f32 %v3664, %v3712
        %v3714 = vpop.f32.mrf.mxu0
        %v3715 = vadd.f32 %v3666, %v3714
        %3716 = vmatmul.bf16.gmra.mxu0 %v902
        %v3717 = vpop.f32.mrf.mxu0
        %v3718 = vadd.f32 %v3669, %v3717
        %v3719 = vpop.f32.mrf.mxu0
        %v3720 = vadd.f32 %v3671, %v3719
        %3721 = vmatmul.bf16.gmra.mxu0 %v908
        %v3722 = vpop.f32.mrf.mxu0
        %v3723 = vadd.f32 %v3674, %v3722
        %v3724 = vpop.f32.mrf.mxu0
        %v3725 = vadd.f32 %v3676, %v3724
        %3726 = vmatmul.bf16.gmra.mxu0 %v914
        %v3727 = vpop.f32.mrf.mxu0
        %v3728 = vadd.f32 %v3679, %v3727
        %v3729 = vpop.f32.mrf.mxu0
        %v3730 = vadd.f32 %v3681, %v3729
        %3731 = vmatmul.bf16.gmra.mxu0 %v920
        %v3732 = vpop.f32.mrf.mxu0
        %v3733 = vadd.f32 %v3684, %v3732
        %v3734 = vpop.f32.mrf.mxu0
        %v3735 = vadd.f32 %v3686, %v3734
        %3736 = vmatmul.bf16.gmra.mxu0 %v926
        %v3737 = vpop.f32.mrf.mxu0
        %v3738 = vadd.f32 %v3689, %v3737
        %v3739 = vpop.f32.mrf.mxu0
        %v3740 = vadd.f32 %v3691, %v3739
        %3741 = vmatmul.bf16.gmra.mxu0 %v932
        %v3742 = vpop.f32.mrf.mxu0
        %v3743 = vadd.f32 %v3694, %v3742
        %v3744 = vpop.f32.mrf.mxu0
        %v3745 = vadd.f32 %v3696, %v3744
        %3746 = vdwg.mxu0
        %3747 = vmatpush.bf16.msra.mxu0 %v2038
        %3748 = vmatpush.bf16.msra.mxu0 %v2032
        %3749 = vmatpush.bf16.msra.mxu0 %v2026
        %3750 = vmatpush.bf16.msra.mxu0 %v2020
        %3751 = vmatpush.bf16.msra.mxu0 %v2014
        %3752 = vmatpush.bf16.msra.mxu0 %v2008
        %3753 = vmatpush.bf16.msra.mxu0 %v2002
        %3754 = vmatpush.bf16.msra.mxu0 %v1996
        %3755 = vmatmul.bf16.gmra.mxu0 %v891
        %v3756 = vpop.f32.mrf.mxu0
        %v3757 = vadd.f32 %v3708, %v3756
        %v3758 = vpop.f32.mrf.mxu0
        %v3759 = vadd.f32 %v3710, %v3758
        %3760 = vmatmul.bf16.gmra.mxu0 %v897
        %v3761 = vpop.f32.mrf.mxu0
        %v3762 = vadd.f32 %v3713, %v3761
        %v3763 = vpop.f32.mrf.mxu0
        %v3764 = vadd.f32 %v3715, %v3763
        %3765 = vmatmul.bf16.gmra.mxu0 %v903
        %v3766 = vpop.f32.mrf.mxu0
        %v3767 = vadd.f32 %v3718, %v3766
        %v3768 = vpop.f32.mrf.mxu0
        %v3769 = vadd.f32 %v3720, %v3768
        %3770 = vmatmul.bf16.gmra.mxu0 %v909
        %v3771 = vpop.f32.mrf.mxu0
        %v3772 = vadd.f32 %v3723, %v3771
        %v3773 = vpop.f32.mrf.mxu0
        %v3774 = vadd.f32 %v3725, %v3773
        %3775 = vmatmul.bf16.gmra.mxu0 %v915
        %v3776 = vpop.f32.mrf.mxu0
        %v3777 = vadd.f32 %v3728, %v3776
        %v3778 = vpop.f32.mrf.mxu0
        %v3779 = vadd.f32 %v3730, %v3778
        %3780 = vmatmul.bf16.gmra.mxu0 %v921
        %v3781 = vpop.f32.mrf.mxu0
        %v3782 = vadd.f32 %v3733, %v3781
        %v3783 = vpop.f32.mrf.mxu0
        %v3784 = vadd.f32 %v3735, %v3783
        %3785 = vmatmul.bf16.gmra.mxu0 %v927
        %v3786 = vpop.f32.mrf.mxu0
        %v3787 = vadd.f32 %v3738, %v3786
        %v3788 = vpop.f32.mrf.mxu0
        %v3789 = vadd.f32 %v3740, %v3788
        %3790 = vmatmul.bf16.gmra.mxu0 %v933
        %v3791 = vpop.f32.mrf.mxu0
        %v3792 = vadd.f32 %v3743, %v3791
        %v3793 = vpop.f32.mrf.mxu0
        %v3794 = vadd.f32 %v3745, %v3793
        %3795 = vdwg.mxu0
        %3796 = vmatpush.bf16.msra.mxu0 %v2086
        %3797 = vmatpush.bf16.msra.mxu0 %v2080
        %3798 = vmatpush.bf16.msra.mxu0 %v2074
        %3799 = vmatpush.bf16.msra.mxu0 %v2068
        %3800 = vmatpush.bf16.msra.mxu0 %v2062
        %3801 = vmatpush.bf16.msra.mxu0 %v2056
        %3802 = vmatpush.bf16.msra.mxu0 %v2050
        %3803 = vmatpush.bf16.msra.mxu0 %v2044
        %3804 = vmatmul.bf16.gmra.mxu0 %v892
        %v3805 = vpop.f32.mrf.mxu0
        %v3806 = vadd.f32 %v3757, %v3805
        %v3807 = vpop.f32.mrf.mxu0
        %v3808 = vadd.f32 %v3759, %v3807
        %3809 = vmatmul.bf16.gmra.mxu0 %v898
        %v3810 = vpop.f32.mrf.mxu0
        %v3811 = vadd.f32 %v3762, %v3810
        %v3812 = vpop.f32.mrf.mxu0
        %v3813 = vadd.f32 %v3764, %v3812
        %3814 = vmatmul.bf16.gmra.mxu0 %v904
        %v3815 = vpop.f32.mrf.mxu0
        %v3816 = vadd.f32 %v3767, %v3815
        %v3817 = vpop.f32.mrf.mxu0
        %v3818 = vadd.f32 %v3769, %v3817
        %3819 = vmatmul.bf16.gmra.mxu0 %v910
        %v3820 = vpop.f32.mrf.mxu0
        %v3821 = vadd.f32 %v3772, %v3820
        %v3822 = vpop.f32.mrf.mxu0
        %v3823 = vadd.f32 %v3774, %v3822
        %3824 = vmatmul.bf16.gmra.mxu0 %v916
        %v3825 = vpop.f32.mrf.mxu0
        %v3826 = vadd.f32 %v3777, %v3825
        %v3827 = vpop.f32.mrf.mxu0
        %v3828 = vadd.f32 %v3779, %v3827
        %3829 = vmatmul.bf16.gmra.mxu0 %v922
        %v3830 = vpop.f32.mrf.mxu0
        %v3831 = vadd.f32 %v3782, %v3830
        %v3832 = vpop.f32.mrf.mxu0
        %v3833 = vadd.f32 %v3784, %v3832
        %3834 = vmatmul.bf16.gmra.mxu0 %v928
        %v3835 = vpop.f32.mrf.mxu0
        %v3836 = vadd.f32 %v3787, %v3835
        %v3837 = vpop.f32.mrf.mxu0
        %v3838 = vadd.f32 %v3789, %v3837
        %3839 = vmatmul.bf16.gmra.mxu0 %v934
        %v3840 = vpop.f32.mrf.mxu0
        %v3841 = vadd.f32 %v3792, %v3840
        %v3842 = vpop.f32.mrf.mxu0
        %v3843 = vadd.f32 %v3794, %v3842
        %3844 = vdwg.mxu0
        %3845 = vmatpush.bf16.msra.mxu0 %v2134
        %3846 = vmatpush.bf16.msra.mxu0 %v2128
        %3847 = vmatpush.bf16.msra.mxu0 %v2122
        %3848 = vmatpush.bf16.msra.mxu0 %v2116
        %3849 = vmatpush.bf16.msra.mxu0 %v2110
        %3850 = vmatpush.bf16.msra.mxu0 %v2104
        %3851 = vmatpush.bf16.msra.mxu0 %v2098
        %3852 = vmatpush.bf16.msra.mxu0 %v2092
        %3853 = vmatmul.bf16.gmra.mxu0 %v893
        %v3854 = vpop.f32.mrf.mxu0
        %v3855 = vadd.f32 %v3806, %v3854
        %v3856 = vpop.f32.mrf.mxu0
        %v3857 = vadd.f32 %v3808, %v3856
        %3858 = vmatmul.bf16.gmra.mxu0 %v899
        %v3859 = vpop.f32.mrf.mxu0
        %v3860 = vadd.f32 %v3811, %v3859
        %v3861 = vpop.f32.mrf.mxu0
        %v3862 = vadd.f32 %v3813, %v3861
        %3863 = vmatmul.bf16.gmra.mxu0 %v905
        %v3864 = vpop.f32.mrf.mxu0
        %v3865 = vadd.f32 %v3816, %v3864
        %v3866 = vpop.f32.mrf.mxu0
        %v3867 = vadd.f32 %v3818, %v3866
        %3868 = vmatmul.bf16.gmra.mxu0 %v911
        %v3869 = vpop.f32.mrf.mxu0
        %v3870 = vadd.f32 %v3821, %v3869
        %v3871 = vpop.f32.mrf.mxu0
        %v3872 = vadd.f32 %v3823, %v3871
        %3873 = vmatmul.bf16.gmra.mxu0 %v917
        %v3874 = vpop.f32.mrf.mxu0
        %v3875 = vadd.f32 %v3826, %v3874
        %v3876 = vpop.f32.mrf.mxu0
        %v3877 = vadd.f32 %v3828, %v3876
        %3878 = vmatmul.bf16.gmra.mxu0 %v923
        %v3879 = vpop.f32.mrf.mxu0
        %v3880 = vadd.f32 %v3831, %v3879
        %v3881 = vpop.f32.mrf.mxu0
        %v3882 = vadd.f32 %v3833, %v3881
        %3883 = vmatmul.bf16.gmra.mxu0 %v929
        %v3884 = vpop.f32.mrf.mxu0
        %v3885 = vadd.f32 %v3836, %v3884
        %v3886 = vpop.f32.mrf.mxu0
        %v3887 = vadd.f32 %v3838, %v3886
        %3888 = vmatmul.bf16.gmra.mxu0 %v935
        %v3889 = vpop.f32.mrf.mxu0
        %v3890 = vadd.f32 %v3841, %v3889
        %v3891 = vpop.f32.mrf.mxu0
        %v3892 = vadd.f32 %v3843, %v3891
        %3893 = vdwg.mxu0
        %3894 = vmatpush.bf16.msra.mxu0 %v1895
        %3895 = vmatpush.bf16.msra.mxu0 %v1889
        %3896 = vmatpush.bf16.msra.mxu0 %v1883
        %3897 = vmatpush.bf16.msra.mxu0 %v1877
        %3898 = vmatpush.bf16.msra.mxu0 %v1871
        %3899 = vmatpush.bf16.msra.mxu0 %v1865
        %3900 = vmatpush.bf16.msra.mxu0 %v1859
        %3901 = vmatpush.bf16.msra.mxu0 %v1853
        %3902 = vmatmul.bf16.gmra.mxu0 %v888
        %v3903 = vpop.f32.mrf.mxu0
        %v3904 = vadd.f32 %v737, %v3903
        %v3905 = vpop.f32.mrf.mxu0
        %v3906 = vadd.f32 %v737, %v3905
        %3907 = vmatmul.bf16.gmra.mxu0 %v894
        %v3908 = vpop.f32.mrf.mxu0
        %v3909 = vadd.f32 %v737, %v3908
        %v3910 = vpop.f32.mrf.mxu0
        %v3911 = vadd.f32 %v737, %v3910
        %3912 = vmatmul.bf16.gmra.mxu0 %v900
        %v3913 = vpop.f32.mrf.mxu0
        %v3914 = vadd.f32 %v737, %v3913
        %v3915 = vpop.f32.mrf.mxu0
        %v3916 = vadd.f32 %v737, %v3915
        %3917 = vmatmul.bf16.gmra.mxu0 %v906
        %v3918 = vpop.f32.mrf.mxu0
        %v3919 = vadd.f32 %v737, %v3918
        %v3920 = vpop.f32.mrf.mxu0
        %v3921 = vadd.f32 %v737, %v3920
        %3922 = vmatmul.bf16.gmra.mxu0 %v912
        %v3923 = vpop.f32.mrf.mxu0
        %v3924 = vadd.f32 %v737, %v3923
        %v3925 = vpop.f32.mrf.mxu0
        %v3926 = vadd.f32 %v737, %v3925
        %3927 = vmatmul.bf16.gmra.mxu0 %v918
        %v3928 = vpop.f32.mrf.mxu0
        %v3929 = vadd.f32 %v737, %v3928
        %v3930 = vpop.f32.mrf.mxu0
        %v3931 = vadd.f32 %v737, %v3930
        %3932 = vmatmul.bf16.gmra.mxu0 %v924
        %v3933 = vpop.f32.mrf.mxu0
        %v3934 = vadd.f32 %v737, %v3933
        %v3935 = vpop.f32.mrf.mxu0
        %v3936 = vadd.f32 %v737, %v3935
        %3937 = vmatmul.bf16.gmra.mxu0 %v930
        %v3938 = vpop.f32.mrf.mxu0
        %v3939 = vadd.f32 %v737, %v3938
        %v3940 = vpop.f32.mrf.mxu0
        %v3941 = vadd.f32 %v737, %v3940
        %3942 = vdwg.mxu0
        %3943 = vmatpush.bf16.msra.mxu0 %v1943
        %3944 = vmatpush.bf16.msra.mxu0 %v1937
        %3945 = vmatpush.bf16.msra.mxu0 %v1931
        %3946 = vmatpush.bf16.msra.mxu0 %v1925
        %3947 = vmatpush.bf16.msra.mxu0 %v1919
        %3948 = vmatpush.bf16.msra.mxu0 %v1913
        %3949 = vmatpush.bf16.msra.mxu0 %v1907
        %3950 = vmatpush.bf16.msra.mxu0 %v1901
        %3951 = vmatmul.bf16.gmra.mxu0 %v889
        %v3952 = vpop.f32.mrf.mxu0
        %v3953 = vadd.f32 %v3904, %v3952
        %v3954 = vpop.f32.mrf.mxu0
        %v3955 = vadd.f32 %v3906, %v3954
        %3956 = vmatmul.bf16.gmra.mxu0 %v895
        %v3957 = vpop.f32.mrf.mxu0
        %v3958 = vadd.f32 %v3909, %v3957
        %v3959 = vpop.f32.mrf.mxu0
        %v3960 = vadd.f32 %v3911, %v3959
        %3961 = vmatmul.bf16.gmra.mxu0 %v901
        %v3962 = vpop.f32.mrf.mxu0
        %v3963 = vadd.f32 %v3914, %v3962
        %v3964 = vpop.f32.mrf.mxu0
        %v3965 = vadd.f32 %v3916, %v3964
        %3966 = vmatmul.bf16.gmra.mxu0 %v907
        %v3967 = vpop.f32.mrf.mxu0
        %v3968 = vadd.f32 %v3919, %v3967
        %v3969 = vpop.f32.mrf.mxu0
        %v3970 = vadd.f32 %v3921, %v3969
        %3971 = vmatmul.bf16.gmra.mxu0 %v913
        %v3972 = vpop.f32.mrf.mxu0
        %v3973 = vadd.f32 %v3924, %v3972
        %v3974 = vpop.f32.mrf.mxu0
        %v3975 = vadd.f32 %v3926, %v3974
        %3976 = vmatmul.bf16.gmra.mxu0 %v919
        %v3977 = vpop.f32.mrf.mxu0
        %v3978 = vadd.f32 %v3929, %v3977
        %v3979 = vpop.f32.mrf.mxu0
        %v3980 = vadd.f32 %v3931, %v3979
        %3981 = vmatmul.bf16.gmra.mxu0 %v925
        %v3982 = vpop.f32.mrf.mxu0
        %v3983 = vadd.f32 %v3934, %v3982
        %v3984 = vpop.f32.mrf.mxu0
        %v3985 = vadd.f32 %v3936, %v3984
        %3986 = vmatmul.bf16.gmra.mxu0 %v931
        %v3987 = vpop.f32.mrf.mxu0
        %v3988 = vadd.f32 %v3939, %v3987
        %v3989 = vpop.f32.mrf.mxu0
        %v3990 = vadd.f32 %v3941, %v3989
        %3991 = vdwg.mxu0
        %3992 = vmatpush.bf16.msra.mxu0 %v1991
        %3993 = vmatpush.bf16.msra.mxu0 %v1985
        %3994 = vmatpush.bf16.msra.mxu0 %v1979
        %3995 = vmatpush.bf16.msra.mxu0 %v1973
        %3996 = vmatpush.bf16.msra.mxu0 %v1967
        %3997 = vmatpush.bf16.msra.mxu0 %v1961
        %3998 = vmatpush.bf16.msra.mxu0 %v1955
        %3999 = vmatpush.bf16.msra.mxu0 %v1949
        %4000 = vmatmul.bf16.gmra.mxu0 %v890
        %v4001 = vpop.f32.mrf.mxu0
        %v4002 = vadd.f32 %v3953, %v4001
        %v4003 = vpop.f32.mrf.mxu0
        %v4004 = vadd.f32 %v3955, %v4003
        %4005 = vmatmul.bf16.gmra.mxu0 %v896
        %v4006 = vpop.f32.mrf.mxu0
        %v4007 = vadd.f32 %v3958, %v4006
        %v4008 = vpop.f32.mrf.mxu0
        %v4009 = vadd.f32 %v3960, %v4008
        %4010 = vmatmul.bf16.gmra.mxu0 %v902
        %v4011 = vpop.f32.mrf.mxu0
        %v4012 = vadd.f32 %v3963, %v4011
        %v4013 = vpop.f32.mrf.mxu0
        %v4014 = vadd.f32 %v3965, %v4013
        %4015 = vmatmul.bf16.gmra.mxu0 %v908
        %v4016 = vpop.f32.mrf.mxu0
        %v4017 = vadd.f32 %v3968, %v4016
        %v4018 = vpop.f32.mrf.mxu0
        %v4019 = vadd.f32 %v3970, %v4018
        %4020 = vmatmul.bf16.gmra.mxu0 %v914
        %v4021 = vpop.f32.mrf.mxu0
        %v4022 = vadd.f32 %v3973, %v4021
        %v4023 = vpop.f32.mrf.mxu0
        %v4024 = vadd.f32 %v3975, %v4023
        %4025 = vmatmul.bf16.gmra.mxu0 %v920
        %v4026 = vpop.f32.mrf.mxu0
        %v4027 = vadd.f32 %v3978, %v4026
        %v4028 = vpop.f32.mrf.mxu0
        %v4029 = vadd.f32 %v3980, %v4028
        %4030 = vmatmul.bf16.gmra.mxu0 %v926
        %v4031 = vpop.f32.mrf.mxu0
        %v4032 = vadd.f32 %v3983, %v4031
        %v4033 = vpop.f32.mrf.mxu0
        %v4034 = vadd.f32 %v3985, %v4033
        %4035 = vmatmul.bf16.gmra.mxu0 %v932
        %v4036 = vpop.f32.mrf.mxu0
        %v4037 = vadd.f32 %v3988, %v4036
        %v4038 = vpop.f32.mrf.mxu0
        %v4039 = vadd.f32 %v3990, %v4038
        %4040 = vdwg.mxu0
        %4041 = vmatpush.bf16.msra.mxu0 %v2039
        %4042 = vmatpush.bf16.msra.mxu0 %v2033
        %4043 = vmatpush.bf16.msra.mxu0 %v2027
        %4044 = vmatpush.bf16.msra.mxu0 %v2021
        %4045 = vmatpush.bf16.msra.mxu0 %v2015
        %4046 = vmatpush.bf16.msra.mxu0 %v2009
        %4047 = vmatpush.bf16.msra.mxu0 %v2003
        %4048 = vmatpush.bf16.msra.mxu0 %v1997
        %4049 = vmatmul.bf16.gmra.mxu0 %v891
        %v4050 = vpop.f32.mrf.mxu0
        %v4051 = vadd.f32 %v4002, %v4050
        %v4052 = vpop.f32.mrf.mxu0
        %v4053 = vadd.f32 %v4004, %v4052
        %4054 = vmatmul.bf16.gmra.mxu0 %v897
        %v4055 = vpop.f32.mrf.mxu0
        %v4056 = vadd.f32 %v4007, %v4055
        %v4057 = vpop.f32.mrf.mxu0
        %v4058 = vadd.f32 %v4009, %v4057
        %4059 = vmatmul.bf16.gmra.mxu0 %v903
        %v4060 = vpop.f32.mrf.mxu0
        %v4061 = vadd.f32 %v4012, %v4060
        %v4062 = vpop.f32.mrf.mxu0
        %v4063 = vadd.f32 %v4014, %v4062
        %4064 = vmatmul.bf16.gmra.mxu0 %v909
        %v4065 = vpop.f32.mrf.mxu0
        %v4066 = vadd.f32 %v4017, %v4065
        %v4067 = vpop.f32.mrf.mxu0
        %v4068 = vadd.f32 %v4019, %v4067
        %4069 = vmatmul.bf16.gmra.mxu0 %v915
        %v4070 = vpop.f32.mrf.mxu0
        %v4071 = vadd.f32 %v4022, %v4070
        %v4072 = vpop.f32.mrf.mxu0
        %v4073 = vadd.f32 %v4024, %v4072
        %4074 = vmatmul.bf16.gmra.mxu0 %v921
        %v4075 = vpop.f32.mrf.mxu0
        %v4076 = vadd.f32 %v4027, %v4075
        %v4077 = vpop.f32.mrf.mxu0
        %v4078 = vadd.f32 %v4029, %v4077
        %4079 = vmatmul.bf16.gmra.mxu0 %v927
        %v4080 = vpop.f32.mrf.mxu0
        %v4081 = vadd.f32 %v4032, %v4080
        %v4082 = vpop.f32.mrf.mxu0
        %v4083 = vadd.f32 %v4034, %v4082
        %4084 = vmatmul.bf16.gmra.mxu0 %v933
        %v4085 = vpop.f32.mrf.mxu0
        %v4086 = vadd.f32 %v4037, %v4085
        %v4087 = vpop.f32.mrf.mxu0
        %v4088 = vadd.f32 %v4039, %v4087
        %4089 = vdwg.mxu0
        %4090 = vmatpush.bf16.msra.mxu0 %v2087
        %4091 = vmatpush.bf16.msra.mxu0 %v2081
        %4092 = vmatpush.bf16.msra.mxu0 %v2075
        %4093 = vmatpush.bf16.msra.mxu0 %v2069
        %4094 = vmatpush.bf16.msra.mxu0 %v2063
        %4095 = vmatpush.bf16.msra.mxu0 %v2057
        %4096 = vmatpush.bf16.msra.mxu0 %v2051
        %4097 = vmatpush.bf16.msra.mxu0 %v2045
        %4098 = vmatmul.bf16.gmra.mxu0 %v892
        %v4099 = vpop.f32.mrf.mxu0
        %v4100 = vadd.f32 %v4051, %v4099
        %v4101 = vpop.f32.mrf.mxu0
        %v4102 = vadd.f32 %v4053, %v4101
        %4103 = vmatmul.bf16.gmra.mxu0 %v898
        %v4104 = vpop.f32.mrf.mxu0
        %v4105 = vadd.f32 %v4056, %v4104
        %v4106 = vpop.f32.mrf.mxu0
        %v4107 = vadd.f32 %v4058, %v4106
        %4108 = vmatmul.bf16.gmra.mxu0 %v904
        %v4109 = vpop.f32.mrf.mxu0
        %v4110 = vadd.f32 %v4061, %v4109
        %v4111 = vpop.f32.mrf.mxu0
        %v4112 = vadd.f32 %v4063, %v4111
        %4113 = vmatmul.bf16.gmra.mxu0 %v910
        %v4114 = vpop.f32.mrf.mxu0
        %v4115 = vadd.f32 %v4066, %v4114
        %v4116 = vpop.f32.mrf.mxu0
        %v4117 = vadd.f32 %v4068, %v4116
        %4118 = vmatmul.bf16.gmra.mxu0 %v916
        %v4119 = vpop.f32.mrf.mxu0
        %v4120 = vadd.f32 %v4071, %v4119
        %v4121 = vpop.f32.mrf.mxu0
        %v4122 = vadd.f32 %v4073, %v4121
        %4123 = vmatmul.bf16.gmra.mxu0 %v922
        %v4124 = vpop.f32.mrf.mxu0
        %v4125 = vadd.f32 %v4076, %v4124
        %v4126 = vpop.f32.mrf.mxu0
        %v4127 = vadd.f32 %v4078, %v4126
        %4128 = vmatmul.bf16.gmra.mxu0 %v928
        %v4129 = vpop.f32.mrf.mxu0
        %v4130 = vadd.f32 %v4081, %v4129
        %v4131 = vpop.f32.mrf.mxu0
        %v4132 = vadd.f32 %v4083, %v4131
        %4133 = vmatmul.bf16.gmra.mxu0 %v934
        %v4134 = vpop.f32.mrf.mxu0
        %v4135 = vadd.f32 %v4086, %v4134
        %v4136 = vpop.f32.mrf.mxu0
        %v4137 = vadd.f32 %v4088, %v4136
        %4138 = vdwg.mxu0
        %4139 = vmatpush.bf16.msra.mxu0 %v2135
        %4140 = vmatpush.bf16.msra.mxu0 %v2129
        %4141 = vmatpush.bf16.msra.mxu0 %v2123
        %4142 = vmatpush.bf16.msra.mxu0 %v2117
        %4143 = vmatpush.bf16.msra.mxu0 %v2111
        %4144 = vmatpush.bf16.msra.mxu0 %v2105
        %4145 = vmatpush.bf16.msra.mxu0 %v2099
        %4146 = vmatpush.bf16.msra.mxu0 %v2093
        %4147 = vmatmul.bf16.gmra.mxu0 %v893
        %v4148 = vpop.f32.mrf.mxu0
        %v4149 = vadd.f32 %v4100, %v4148
        %v4150 = vpop.f32.mrf.mxu0
        %v4151 = vadd.f32 %v4102, %v4150
        %4152 = vmatmul.bf16.gmra.mxu0 %v899
        %v4153 = vpop.f32.mrf.mxu0
        %v4154 = vadd.f32 %v4105, %v4153
        %v4155 = vpop.f32.mrf.mxu0
        %v4156 = vadd.f32 %v4107, %v4155
        %4157 = vmatmul.bf16.gmra.mxu0 %v905
        %v4158 = vpop.f32.mrf.mxu0
        %v4159 = vadd.f32 %v4110, %v4158
        %v4160 = vpop.f32.mrf.mxu0
        %v4161 = vadd.f32 %v4112, %v4160
        %4162 = vmatmul.bf16.gmra.mxu0 %v911
        %v4163 = vpop.f32.mrf.mxu0
        %v4164 = vadd.f32 %v4115, %v4163
        %v4165 = vpop.f32.mrf.mxu0
        %v4166 = vadd.f32 %v4117, %v4165
        %4167 = vmatmul.bf16.gmra.mxu0 %v917
        %v4168 = vpop.f32.mrf.mxu0
        %v4169 = vadd.f32 %v4120, %v4168
        %v4170 = vpop.f32.mrf.mxu0
        %v4171 = vadd.f32 %v4122, %v4170
        %4172 = vmatmul.bf16.gmra.mxu0 %v923
        %v4173 = vpop.f32.mrf.mxu0
        %v4174 = vadd.f32 %v4125, %v4173
        %v4175 = vpop.f32.mrf.mxu0
        %v4176 = vadd.f32 %v4127, %v4175
        %4177 = vmatmul.bf16.gmra.mxu0 %v929
        %v4178 = vpop.f32.mrf.mxu0
        %v4179 = vadd.f32 %v4130, %v4178
        %v4180 = vpop.f32.mrf.mxu0
        %v4181 = vadd.f32 %v4132, %v4180
        %4182 = vmatmul.bf16.gmra.mxu0 %v935
        %v4183 = vpop.f32.mrf.mxu0
        %v4184 = vadd.f32 %v4135, %v4183
        %v4185 = vpop.f32.mrf.mxu0
        %v4186 = vadd.f32 %v4137, %v4185
        %4187 = vdwg.mxu0
        %v4188 = vmax.f32 %v2679, 1e-06
        %v4189 = vmax.f32 %v2973, 1e-06
        %v4190 = vmax.f32 %v3267, 1e-06
        %v4191 = vmax.f32 %v3561, 1e-06
        %v4192 = vmax.f32 %v3855, 1e-06
        %v4193 = vmax.f32 %v4149, 1e-06
        %v4194 = vmax.f32 %v2681, 1e-06
        %v4195 = vmax.f32 %v2975, 1e-06
        %v4196 = vmax.f32 %v3269, 1e-06
        %v4197 = vmax.f32 %v3563, 1e-06
        %v4198 = vmax.f32 %v3857, 1e-06
        %v4199 = vmax.f32 %v4151, 1e-06
        %v4200 = vmax.f32 %v2684, 1e-06
        %v4201 = vmax.f32 %v2978, 1e-06
        %v4202 = vmax.f32 %v3272, 1e-06
        %v4203 = vmax.f32 %v3566, 1e-06
        %v4204 = vmax.f32 %v3860, 1e-06
        %v4205 = vmax.f32 %v4154, 1e-06
        %v4206 = vmax.f32 %v2686, 1e-06
        %v4207 = vmax.f32 %v2980, 1e-06
        %v4208 = vmax.f32 %v3274, 1e-06
        %v4209 = vmax.f32 %v3568, 1e-06
        %v4210 = vmax.f32 %v3862, 1e-06
        %v4211 = vmax.f32 %v4156, 1e-06
        %v4212 = vmax.f32 %v2689, 1e-06
        %v4213 = vmax.f32 %v2983, 1e-06
        %v4214 = vmax.f32 %v3277, 1e-06
        %v4215 = vmax.f32 %v3571, 1e-06
        %v4216 = vmax.f32 %v3865, 1e-06
        %v4217 = vmax.f32 %v4159, 1e-06
        %v4218 = vmax.f32 %v2691, 1e-06
        %v4219 = vmax.f32 %v2985, 1e-06
        %v4220 = vmax.f32 %v3279, 1e-06
        %v4221 = vmax.f32 %v3573, 1e-06
        %v4222 = vmax.f32 %v3867, 1e-06
        %v4223 = vmax.f32 %v4161, 1e-06
        %v4224 = vmax.f32 %v2694, 1e-06
        %v4225 = vmax.f32 %v2988, 1e-06
        %v4226 = vmax.f32 %v3282, 1e-06
        %v4227 = vmax.f32 %v3576, 1e-06
        %v4228 = vmax.f32 %v3870, 1e-06
        %v4229 = vmax.f32 %v4164, 1e-06
        %v4230 = vmax.f32 %v2696, 1e-06
        %v4231 = vmax.f32 %v2990, 1e-06
        %v4232 = vmax.f32 %v3284, 1e-06
        %v4233 = vmax.f32 %v3578, 1e-06
        %v4234 = vmax.f32 %v3872, 1e-06
        %v4235 = vmax.f32 %v4166, 1e-06
        %v4236 = vmax.f32 %v2699, 1e-06
        %v4237 = vmax.f32 %v2993, 1e-06
        %v4238 = vmax.f32 %v3287, 1e-06
        %v4239 = vmax.f32 %v3581, 1e-06
        %v4240 = vmax.f32 %v3875, 1e-06
        %v4241 = vmax.f32 %v4169, 1e-06
        %v4242 = vmax.f32 %v2701, 1e-06
        %v4243 = vmax.f32 %v2995, 1e-06
        %v4244 = vmax.f32 %v3289, 1e-06
        %v4245 = vmax.f32 %v3583, 1e-06
        %v4246 = vmax.f32 %v3877, 1e-06
        %v4247 = vmax.f32 %v4171, 1e-06
        %v4248 = vmax.f32 %v2704, 1e-06
        %v4249 = vmax.f32 %v2998, 1e-06
        %v4250 = vmax.f32 %v3292, 1e-06
        %v4251 = vmax.f32 %v3586, 1e-06
        %v4252 = vmax.f32 %v3880, 1e-06
        %v4253 = vmax.f32 %v4174, 1e-06
        %v4254 = vmax.f32 %v2706, 1e-06
        %v4255 = vmax.f32 %v3000, 1e-06
        %v4256 = vmax.f32 %v3294, 1e-06
        %v4257 = vmax.f32 %v3588, 1e-06
        %v4258 = vmax.f32 %v3882, 1e-06
        %v4259 = vmax.f32 %v4176, 1e-06
        %v4260 = vmax.f32 %v2709, 1e-06
        %v4261 = vmax.f32 %v3003, 1e-06
        %v4262 = vmax.f32 %v3297, 1e-06
        %v4263 = vmax.f32 %v3591, 1e-06
        %v4264 = vmax.f32 %v3885, 1e-06
        %v4265 = vmax.f32 %v4179, 1e-06
        %v4266 = vmax.f32 %v2711, 1e-06
        %v4267 = vmax.f32 %v3005, 1e-06
        %v4268 = vmax.f32 %v3299, 1e-06
        %v4269 = vmax.f32 %v3593, 1e-06
        %v4270 = vmax.f32 %v3887, 1e-06
        %v4271 = vmax.f32 %v4181, 1e-06
        %v4272 = vmax.f32 %v2714, 1e-06
        %v4273 = vmax.f32 %v3008, 1e-06
        %v4274 = vmax.f32 %v3302, 1e-06
        %v4275 = vmax.f32 %v3596, 1e-06
        %v4276 = vmax.f32 %v3890, 1e-06
        %v4277 = vmax.f32 %v4184, 1e-06
        %v4278 = vmax.f32 %v2716, 1e-06
        %v4279 = vmax.f32 %v3010, 1e-06
        %v4280 = vmax.f32 %v3304, 1e-06
        %v4281 = vmax.f32 %v3598, 1e-06
        %v4282 = vmax.f32 %v3892, 1e-06
        %v4283 = vmax.f32 %v4186, 1e-06
        %v4284 = vmul.f32 %v4188, %v4188
        %v4285 = vmul.f32 %v4189, %v4189
        %v4286 = vmul.f32 %v4190, %v4190
        %v4287 = vmul.f32 %v4191, %v4191
        %v4288 = vmul.f32 %v4192, %v4192
        %v4289 = vmul.f32 %v4193, %v4193
        %v4290 = vmul.f32 %v4194, %v4194
        %v4291 = vmul.f32 %v4195, %v4195
        %v4292 = vmul.f32 %v4196, %v4196
        %v4293 = vmul.f32 %v4197, %v4197
        %v4294 = vmul.f32 %v4198, %v4198
        %v4295 = vmul.f32 %v4199, %v4199
        %v4296 = vmul.f32 %v4200, %v4200
        %v4297 = vmul.f32 %v4201, %v4201
        %v4298 = vmul.f32 %v4202, %v4202
        %v4299 = vmul.f32 %v4203, %v4203
        %v4300 = vmul.f32 %v4204, %v4204
        %v4301 = vmul.f32 %v4205, %v4205
        %v4302 = vmul.f32 %v4206, %v4206
        %v4303 = vmul.f32 %v4207, %v4207
        %v4304 = vmul.f32 %v4208, %v4208
        %v4305 = vmul.f32 %v4209, %v4209
        %v4306 = vmul.f32 %v4210, %v4210
        %v4307 = vmul.f32 %v4211, %v4211
        %v4308 = vmul.f32 %v4212, %v4212
        %v4309 = vmul.f32 %v4213, %v4213
        %v4310 = vmul.f32 %v4214, %v4214
        %v4311 = vmul.f32 %v4215, %v4215
        %v4312 = vmul.f32 %v4216, %v4216
        %v4313 = vmul.f32 %v4217, %v4217
        %v4314 = vmul.f32 %v4218, %v4218
        %v4315 = vmul.f32 %v4219, %v4219
        %v4316 = vmul.f32 %v4220, %v4220
        %v4317 = vmul.f32 %v4221, %v4221
        %v4318 = vmul.f32 %v4222, %v4222
        %v4319 = vmul.f32 %v4223, %v4223
        %v4320 = vmul.f32 %v4224, %v4224
        %v4321 = vmul.f32 %v4225, %v4225
        %v4322 = vmul.f32 %v4226, %v4226
        %v4323 = vmul.f32 %v4227, %v4227
        %v4324 = vmul.f32 %v4228, %v4228
        %v4325 = vmul.f32 %v4229, %v4229
        %v4326 = vmul.f32 %v4230, %v4230
        %v4327 = vmul.f32 %v4231, %v4231
        %v4328 = vmul.f32 %v4232, %v4232
        %v4329 = vmul.f32 %v4233, %v4233
        %v4330 = vmul.f32 %v4234, %v4234
        %v4331 = vmul.f32 %v4235, %v4235
        %v4332 = vmul.f32 %v4236, %v4236
        %v4333 = vmul.f32 %v4237, %v4237
        %v4334 = vmul.f32 %v4238, %v4238
        %v4335 = vmul.f32 %v4239, %v4239
        %v4336 = vmul.f32 %v4240, %v4240
        %v4337 = vmul.f32 %v4241, %v4241
        %v4338 = vmul.f32 %v4242, %v4242
        %v4339 = vmul.f32 %v4243, %v4243
        %v4340 = vmul.f32 %v4244, %v4244
        %v4341 = vmul.f32 %v4245, %v4245
        %v4342 = vmul.f32 %v4246, %v4246
        %v4343 = vmul.f32 %v4247, %v4247
        %v4344 = vmul.f32 %v4248, %v4248
        %v4345 = vmul.f32 %v4249, %v4249
        %v4346 = vmul.f32 %v4250, %v4250
        %v4347 = vmul.f32 %v4251, %v4251
        %v4348 = vmul.f32 %v4252, %v4252
        %v4349 = vmul.f32 %v4253, %v4253
        %v4350 = vmul.f32 %v4254, %v4254
        %v4351 = vmul.f32 %v4255, %v4255
        %v4352 = vmul.f32 %v4256, %v4256
        %v4353 = vmul.f32 %v4257, %v4257
        %v4354 = vmul.f32 %v4258, %v4258
        %v4355 = vmul.f32 %v4259, %v4259
        %v4356 = vmul.f32 %v4260, %v4260
        %v4357 = vmul.f32 %v4261, %v4261
        %v4358 = vmul.f32 %v4262, %v4262
        %v4359 = vmul.f32 %v4263, %v4263
        %v4360 = vmul.f32 %v4264, %v4264
        %v4361 = vmul.f32 %v4265, %v4265
        %v4362 = vmul.f32 %v4266, %v4266
        %v4363 = vmul.f32 %v4267, %v4267
        %v4364 = vmul.f32 %v4268, %v4268
        %v4365 = vmul.f32 %v4269, %v4269
        %v4366 = vmul.f32 %v4270, %v4270
        %v4367 = vmul.f32 %v4271, %v4271
        %v4368 = vmul.f32 %v4272, %v4272
        %v4369 = vmul.f32 %v4273, %v4273
        %v4370 = vmul.f32 %v4274, %v4274
        %v4371 = vmul.f32 %v4275, %v4275
        %v4372 = vmul.f32 %v4276, %v4276
        %v4373 = vmul.f32 %v4277, %v4277
        %v4374 = vmul.f32 %v4278, %v4278
        %v4375 = vmul.f32 %v4279, %v4279
        %v4376 = vmul.f32 %v4280, %v4280
        %v4377 = vmul.f32 %v4281, %v4281
        %v4378 = vmul.f32 %v4282, %v4282
        %v4379 = vmul.f32 %v4283, %v4283
        %v4380 = vmul.f32 %v4284, %v4188
        %v4381 = vmul.f32 %v4285, %v4189
        %v4382 = vmul.f32 %v4286, %v4190
        %v4383 = vmul.f32 %v4287, %v4191
        %v4384 = vmul.f32 %v4288, %v4192
        %v4385 = vmul.f32 %v4289, %v4193
        %v4386 = vmul.f32 %v4290, %v4194
        %v4387 = vmul.f32 %v4291, %v4195
        %v4388 = vmul.f32 %v4292, %v4196
        %v4389 = vmul.f32 %v4293, %v4197
        %v4390 = vmul.f32 %v4294, %v4198
        %v4391 = vmul.f32 %v4295, %v4199
        %v4392 = vmul.f32 %v4296, %v4200
        %v4393 = vmul.f32 %v4297, %v4201
        %v4394 = vmul.f32 %v4298, %v4202
        %v4395 = vmul.f32 %v4299, %v4203
        %v4396 = vmul.f32 %v4300, %v4204
        %v4397 = vmul.f32 %v4301, %v4205
        %v4398 = vmul.f32 %v4302, %v4206
        %v4399 = vmul.f32 %v4303, %v4207
        %v4400 = vmul.f32 %v4304, %v4208
        %v4401 = vmul.f32 %v4305, %v4209
        %v4402 = vmul.f32 %v4306, %v4210
        %v4403 = vmul.f32 %v4307, %v4211
        %v4404 = vmul.f32 %v4308, %v4212
        %v4405 = vmul.f32 %v4309, %v4213
        %v4406 = vmul.f32 %v4310, %v4214
        %v4407 = vmul.f32 %v4311, %v4215
        %v4408 = vmul.f32 %v4312, %v4216
        %v4409 = vmul.f32 %v4313, %v4217
        %v4410 = vmul.f32 %v4314, %v4218
        %v4411 = vmul.f32 %v4315, %v4219
        %v4412 = vmul.f32 %v4316, %v4220
        %v4413 = vmul.f32 %v4317, %v4221
        %v4414 = vmul.f32 %v4318, %v4222
        %v4415 = vmul.f32 %v4319, %v4223
        %v4416 = vmul.f32 %v4320, %v4224
        %v4417 = vmul.f32 %v4321, %v4225
        %v4418 = vmul.f32 %v4322, %v4226
        %v4419 = vmul.f32 %v4323, %v4227
        %v4420 = vmul.f32 %v4324, %v4228
        %v4421 = vmul.f32 %v4325, %v4229
        %v4422 = vmul.f32 %v4326, %v4230
        %v4423 = vmul.f32 %v4327, %v4231
        %v4424 = vmul.f32 %v4328, %v4232
        %v4425 = vmul.f32 %v4329, %v4233
        %v4426 = vmul.f32 %v4330, %v4234
        %v4427 = vmul.f32 %v4331, %v4235
        %v4428 = vmul.f32 %v4332, %v4236
        %v4429 = vmul.f32 %v4333, %v4237
        %v4430 = vmul.f32 %v4334, %v4238
        %v4431 = vmul.f32 %v4335, %v4239
        %v4432 = vmul.f32 %v4336, %v4240
        %v4433 = vmul.f32 %v4337, %v4241
        %v4434 = vmul.f32 %v4338, %v4242
        %v4435 = vmul.f32 %v4339, %v4243
        %v4436 = vmul.f32 %v4340, %v4244
        %v4437 = vmul.f32 %v4341, %v4245
        %v4438 = vmul.f32 %v4342, %v4246
        %v4439 = vmul.f32 %v4343, %v4247
        %v4440 = vmul.f32 %v4344, %v4248
        %v4441 = vmul.f32 %v4345, %v4249
        %v4442 = vmul.f32 %v4346, %v4250
        %v4443 = vmul.f32 %v4347, %v4251
        %v4444 = vmul.f32 %v4348, %v4252
        %v4445 = vmul.f32 %v4349, %v4253
        %v4446 = vmul.f32 %v4350, %v4254
        %v4447 = vmul.f32 %v4351, %v4255
        %v4448 = vmul.f32 %v4352, %v4256
        %v4449 = vmul.f32 %v4353, %v4257
        %v4450 = vmul.f32 %v4354, %v4258
        %v4451 = vmul.f32 %v4355, %v4259
        %v4452 = vmul.f32 %v4356, %v4260
        %v4453 = vmul.f32 %v4357, %v4261
        %v4454 = vmul.f32 %v4358, %v4262
        %v4455 = vmul.f32 %v4359, %v4263
        %v4456 = vmul.f32 %v4360, %v4264
        %v4457 = vmul.f32 %v4361, %v4265
        %v4458 = vmul.f32 %v4362, %v4266
        %v4459 = vmul.f32 %v4363, %v4267
        %v4460 = vmul.f32 %v4364, %v4268
        %v4461 = vmul.f32 %v4365, %v4269
        %v4462 = vmul.f32 %v4366, %v4270
        %v4463 = vmul.f32 %v4367, %v4271
        %v4464 = vmul.f32 %v4368, %v4272
        %v4465 = vmul.f32 %v4369, %v4273
        %v4466 = vmul.f32 %v4370, %v4274
        %v4467 = vmul.f32 %v4371, %v4275
        %v4468 = vmul.f32 %v4372, %v4276
        %v4469 = vmul.f32 %v4373, %v4277
        %v4470 = vmul.f32 %v4374, %v4278
        %v4471 = vmul.f32 %v4375, %v4279
        %v4472 = vmul.f32 %v4376, %v4280
        %v4473 = vmul.f32 %v4377, %v4281
        %v4474 = vmul.f32 %v4378, %v4282
        %v4475 = vmul.f32 %v4379, %v4283
        %v4476 = vadd.f32 %v4380, %v4386
        %v4477 = vrot.slane %v4476, 4
        %v4478 = vadd.f32 %v4476, %v4477
        %v4479 = vrot.slane %v4478, 2
        %v4480 = vadd.f32 %v4478, %v4479
        %v4481 = vrot.slane %v4480, 1
        %v4482 = vadd.f32 %v4480, %v4481
        %v4483 = vadd.f32 %v4381, %v4387
        %v4484 = vrot.slane %v4483, 4
        %v4485 = vadd.f32 %v4483, %v4484
        %v4486 = vrot.slane %v4485, 2
        %v4487 = vadd.f32 %v4485, %v4486
        %v4488 = vrot.slane %v4487, 1
        %v4489 = vadd.f32 %v4487, %v4488
        %v4490 = vadd.f32 %v4382, %v4388
        %v4491 = vrot.slane %v4490, 4
        %v4492 = vadd.f32 %v4490, %v4491
        %v4493 = vrot.slane %v4492, 2
        %v4494 = vadd.f32 %v4492, %v4493
        %v4495 = vrot.slane %v4494, 1
        %v4496 = vadd.f32 %v4494, %v4495
        %v4497 = vadd.f32 %v4383, %v4389
        %v4498 = vrot.slane %v4497, 4
        %v4499 = vadd.f32 %v4497, %v4498
        %v4500 = vrot.slane %v4499, 2
        %v4501 = vadd.f32 %v4499, %v4500
        %v4502 = vrot.slane %v4501, 1
        %v4503 = vadd.f32 %v4501, %v4502
        %v4504 = vadd.f32 %v4384, %v4390
        %v4505 = vrot.slane %v4504, 4
        %v4506 = vadd.f32 %v4504, %v4505
        %v4507 = vrot.slane %v4506, 2
        %v4508 = vadd.f32 %v4506, %v4507
        %v4509 = vrot.slane %v4508, 1
        %v4510 = vadd.f32 %v4508, %v4509
        %v4511 = vadd.f32 %v4385, %v4391
        %v4512 = vrot.slane %v4511, 4
        %v4513 = vadd.f32 %v4511, %v4512
        %v4514 = vrot.slane %v4513, 2
        %v4515 = vadd.f32 %v4513, %v4514
        %v4516 = vrot.slane %v4515, 1
        %v4517 = vadd.f32 %v4515, %v4516
        %v4518 = vadd.f32 %v4392, %v4398
        %v4519 = vrot.slane %v4518, 4
        %v4520 = vadd.f32 %v4518, %v4519
        %v4521 = vrot.slane %v4520, 2
        %v4522 = vadd.f32 %v4520, %v4521
        %v4523 = vrot.slane %v4522, 1
        %v4524 = vadd.f32 %v4522, %v4523
        %v4525 = vadd.f32 %v4393, %v4399
        %v4526 = vrot.slane %v4525, 4
        %v4527 = vadd.f32 %v4525, %v4526
        %v4528 = vrot.slane %v4527, 2
        %v4529 = vadd.f32 %v4527, %v4528
        %v4530 = vrot.slane %v4529, 1
        %v4531 = vadd.f32 %v4529, %v4530
        %v4532 = vadd.f32 %v4394, %v4400
        %v4533 = vrot.slane %v4532, 4
        %v4534 = vadd.f32 %v4532, %v4533
        %v4535 = vrot.slane %v4534, 2
        %v4536 = vadd.f32 %v4534, %v4535
        %v4537 = vrot.slane %v4536, 1
        %v4538 = vadd.f32 %v4536, %v4537
        %v4539 = vadd.f32 %v4395, %v4401
        %v4540 = vrot.slane %v4539, 4
        %v4541 = vadd.f32 %v4539, %v4540
        %v4542 = vrot.slane %v4541, 2
        %v4543 = vadd.f32 %v4541, %v4542
        %v4544 = vrot.slane %v4543, 1
        %v4545 = vadd.f32 %v4543, %v4544
        %v4546 = vadd.f32 %v4396, %v4402
        %v4547 = vrot.slane %v4546, 4
        %v4548 = vadd.f32 %v4546, %v4547
        %v4549 = vrot.slane %v4548, 2
        %v4550 = vadd.f32 %v4548, %v4549
        %v4551 = vrot.slane %v4550, 1
        %v4552 = vadd.f32 %v4550, %v4551
        %v4553 = vadd.f32 %v4397, %v4403
        %v4554 = vrot.slane %v4553, 4
        %v4555 = vadd.f32 %v4553, %v4554
        %v4556 = vrot.slane %v4555, 2
        %v4557 = vadd.f32 %v4555, %v4556
        %v4558 = vrot.slane %v4557, 1
        %v4559 = vadd.f32 %v4557, %v4558
        %v4560 = vadd.f32 %v4404, %v4410
        %v4561 = vrot.slane %v4560, 4
        %v4562 = vadd.f32 %v4560, %v4561
        %v4563 = vrot.slane %v4562, 2
        %v4564 = vadd.f32 %v4562, %v4563
        %v4565 = vrot.slane %v4564, 1
        %v4566 = vadd.f32 %v4564, %v4565
        %v4567 = vadd.f32 %v4405, %v4411
        %v4568 = vrot.slane %v4567, 4
        %v4569 = vadd.f32 %v4567, %v4568
        %v4570 = vrot.slane %v4569, 2
        %v4571 = vadd.f32 %v4569, %v4570
        %v4572 = vrot.slane %v4571, 1
        %v4573 = vadd.f32 %v4571, %v4572
        %v4574 = vadd.f32 %v4406, %v4412
        %v4575 = vrot.slane %v4574, 4
        %v4576 = vadd.f32 %v4574, %v4575
        %v4577 = vrot.slane %v4576, 2
        %v4578 = vadd.f32 %v4576, %v4577
        %v4579 = vrot.slane %v4578, 1
        %v4580 = vadd.f32 %v4578, %v4579
        %v4581 = vadd.f32 %v4407, %v4413
        %v4582 = vrot.slane %v4581, 4
        %v4583 = vadd.f32 %v4581, %v4582
        %v4584 = vrot.slane %v4583, 2
        %v4585 = vadd.f32 %v4583, %v4584
        %v4586 = vrot.slane %v4585, 1
        %v4587 = vadd.f32 %v4585, %v4586
        %v4588 = vadd.f32 %v4408, %v4414
        %v4589 = vrot.slane %v4588, 4
        %v4590 = vadd.f32 %v4588, %v4589
        %v4591 = vrot.slane %v4590, 2
        %v4592 = vadd.f32 %v4590, %v4591
        %v4593 = vrot.slane %v4592, 1
        %v4594 = vadd.f32 %v4592, %v4593
        %v4595 = vadd.f32 %v4409, %v4415
        %v4596 = vrot.slane %v4595, 4
        %v4597 = vadd.f32 %v4595, %v4596
        %v4598 = vrot.slane %v4597, 2
        %v4599 = vadd.f32 %v4597, %v4598
        %v4600 = vrot.slane %v4599, 1
        %v4601 = vadd.f32 %v4599, %v4600
        %v4602 = vadd.f32 %v4416, %v4422
        %v4603 = vrot.slane %v4602, 4
        %v4604 = vadd.f32 %v4602, %v4603
        %v4605 = vrot.slane %v4604, 2
        %v4606 = vadd.f32 %v4604, %v4605
        %v4607 = vrot.slane %v4606, 1
        %v4608 = vadd.f32 %v4606, %v4607
        %v4609 = vadd.f32 %v4417, %v4423
        %v4610 = vrot.slane %v4609, 4
        %v4611 = vadd.f32 %v4609, %v4610
        %v4612 = vrot.slane %v4611, 2
        %v4613 = vadd.f32 %v4611, %v4612
        %v4614 = vrot.slane %v4613, 1
        %v4615 = vadd.f32 %v4613, %v4614
        %v4616 = vadd.f32 %v4418, %v4424
        %v4617 = vrot.slane %v4616, 4
        %v4618 = vadd.f32 %v4616, %v4617
        %v4619 = vrot.slane %v4618, 2
        %v4620 = vadd.f32 %v4618, %v4619
        %v4621 = vrot.slane %v4620, 1
        %v4622 = vadd.f32 %v4620, %v4621
        %v4623 = vadd.f32 %v4419, %v4425
        %v4624 = vrot.slane %v4623, 4
        %v4625 = vadd.f32 %v4623, %v4624
        %v4626 = vrot.slane %v4625, 2
        %v4627 = vadd.f32 %v4625, %v4626
        %v4628 = vrot.slane %v4627, 1
        %v4629 = vadd.f32 %v4627, %v4628
        %v4630 = vadd.f32 %v4420, %v4426
        %v4631 = vrot.slane %v4630, 4
        %v4632 = vadd.f32 %v4630, %v4631
        %v4633 = vrot.slane %v4632, 2
        %v4634 = vadd.f32 %v4632, %v4633
        %v4635 = vrot.slane %v4634, 1
        %v4636 = vadd.f32 %v4634, %v4635
        %v4637 = vadd.f32 %v4421, %v4427
        %v4638 = vrot.slane %v4637, 4
        %v4639 = vadd.f32 %v4637, %v4638
        %v4640 = vrot.slane %v4639, 2
        %v4641 = vadd.f32 %v4639, %v4640
        %v4642 = vrot.slane %v4641, 1
        %v4643 = vadd.f32 %v4641, %v4642
        %v4644 = vadd.f32 %v4428, %v4434
        %v4645 = vrot.slane %v4644, 4
        %v4646 = vadd.f32 %v4644, %v4645
        %v4647 = vrot.slane %v4646, 2
        %v4648 = vadd.f32 %v4646, %v4647
        %v4649 = vrot.slane %v4648, 1
        %v4650 = vadd.f32 %v4648, %v4649
        %v4651 = vadd.f32 %v4429, %v4435
        %v4652 = vrot.slane %v4651, 4
        %v4653 = vadd.f32 %v4651, %v4652
        %v4654 = vrot.slane %v4653, 2
        %v4655 = vadd.f32 %v4653, %v4654
        %v4656 = vrot.slane %v4655, 1
        %v4657 = vadd.f32 %v4655, %v4656
        %v4658 = vadd.f32 %v4430, %v4436
        %v4659 = vrot.slane %v4658, 4
        %v4660 = vadd.f32 %v4658, %v4659
        %v4661 = vrot.slane %v4660, 2
        %v4662 = vadd.f32 %v4660, %v4661
        %v4663 = vrot.slane %v4662, 1
        %v4664 = vadd.f32 %v4662, %v4663
        %v4665 = vadd.f32 %v4431, %v4437
        %v4666 = vrot.slane %v4665, 4
        %v4667 = vadd.f32 %v4665, %v4666
        %v4668 = vrot.slane %v4667, 2
        %v4669 = vadd.f32 %v4667, %v4668
        %v4670 = vrot.slane %v4669, 1
        %v4671 = vadd.f32 %v4669, %v4670
        %v4672 = vadd.f32 %v4432, %v4438
        %v4673 = vrot.slane %v4672, 4
        %v4674 = vadd.f32 %v4672, %v4673
        %v4675 = vrot.slane %v4674, 2
        %v4676 = vadd.f32 %v4674, %v4675
        %v4677 = vrot.slane %v4676, 1
        %v4678 = vadd.f32 %v4676, %v4677
        %v4679 = vadd.f32 %v4433, %v4439
        %v4680 = vrot.slane %v4679, 4
        %v4681 = vadd.f32 %v4679, %v4680
        %v4682 = vrot.slane %v4681, 2
        %v4683 = vadd.f32 %v4681, %v4682
        %v4684 = vrot.slane %v4683, 1
        %v4685 = vadd.f32 %v4683, %v4684
        %v4686 = vadd.f32 %v4440, %v4446
        %v4687 = vrot.slane %v4686, 4
        %v4688 = vadd.f32 %v4686, %v4687
        %v4689 = vrot.slane %v4688, 2
        %v4690 = vadd.f32 %v4688, %v4689
        %v4691 = vrot.slane %v4690, 1
        %v4692 = vadd.f32 %v4690, %v4691
        %v4693 = vadd.f32 %v4441, %v4447
        %v4694 = vrot.slane %v4693, 4
        %v4695 = vadd.f32 %v4693, %v4694
        %v4696 = vrot.slane %v4695, 2
        %v4697 = vadd.f32 %v4695, %v4696
        %v4698 = vrot.slane %v4697, 1
        %v4699 = vadd.f32 %v4697, %v4698
        %v4700 = vadd.f32 %v4442, %v4448
        %v4701 = vrot.slane %v4700, 4
        %v4702 = vadd.f32 %v4700, %v4701
        %v4703 = vrot.slane %v4702, 2
        %v4704 = vadd.f32 %v4702, %v4703
        %v4705 = vrot.slane %v4704, 1
        %v4706 = vadd.f32 %v4704, %v4705
        %v4707 = vadd.f32 %v4443, %v4449
        %v4708 = vrot.slane %v4707, 4
        %v4709 = vadd.f32 %v4707, %v4708
        %v4710 = vrot.slane %v4709, 2
        %v4711 = vadd.f32 %v4709, %v4710
        %v4712 = vrot.slane %v4711, 1
        %v4713 = vadd.f32 %v4711, %v4712
        %v4714 = vadd.f32 %v4444, %v4450
        %v4715 = vrot.slane %v4714, 4
        %v4716 = vadd.f32 %v4714, %v4715
        %v4717 = vrot.slane %v4716, 2
        %v4718 = vadd.f32 %v4716, %v4717
        %v4719 = vrot.slane %v4718, 1
        %v4720 = vadd.f32 %v4718, %v4719
        %v4721 = vadd.f32 %v4445, %v4451
        %v4722 = vrot.slane %v4721, 4
        %v4723 = vadd.f32 %v4721, %v4722
        %v4724 = vrot.slane %v4723, 2
        %v4725 = vadd.f32 %v4723, %v4724
        %v4726 = vrot.slane %v4725, 1
        %v4727 = vadd.f32 %v4725, %v4726
        %v4728 = vadd.f32 %v4452, %v4458
        %v4729 = vrot.slane %v4728, 4
        %v4730 = vadd.f32 %v4728, %v4729
        %v4731 = vrot.slane %v4730, 2
        %v4732 = vadd.f32 %v4730, %v4731
        %v4733 = vrot.slane %v4732, 1
        %v4734 = vadd.f32 %v4732, %v4733
        %v4735 = vadd.f32 %v4453, %v4459
        %v4736 = vrot.slane %v4735, 4
        %v4737 = vadd.f32 %v4735, %v4736
        %v4738 = vrot.slane %v4737, 2
        %v4739 = vadd.f32 %v4737, %v4738
        %v4740 = vrot.slane %v4739, 1
        %v4741 = vadd.f32 %v4739, %v4740
        %v4742 = vadd.f32 %v4454, %v4460
        %v4743 = vrot.slane %v4742, 4
        %v4744 = vadd.f32 %v4742, %v4743
        %v4745 = vrot.slane %v4744, 2
        %v4746 = vadd.f32 %v4744, %v4745
        %v4747 = vrot.slane %v4746, 1
        %v4748 = vadd.f32 %v4746, %v4747
        %v4749 = vadd.f32 %v4455, %v4461
        %v4750 = vrot.slane %v4749, 4
        %v4751 = vadd.f32 %v4749, %v4750
        %v4752 = vrot.slane %v4751, 2
        %v4753 = vadd.f32 %v4751, %v4752
        %v4754 = vrot.slane %v4753, 1
        %v4755 = vadd.f32 %v4753, %v4754
        %v4756 = vadd.f32 %v4456, %v4462
        %v4757 = vrot.slane %v4756, 4
        %v4758 = vadd.f32 %v4756, %v4757
        %v4759 = vrot.slane %v4758, 2
        %v4760 = vadd.f32 %v4758, %v4759
        %v4761 = vrot.slane %v4760, 1
        %v4762 = vadd.f32 %v4760, %v4761
        %v4763 = vadd.f32 %v4457, %v4463
        %v4764 = vrot.slane %v4763, 4
        %v4765 = vadd.f32 %v4763, %v4764
        %v4766 = vrot.slane %v4765, 2
        %v4767 = vadd.f32 %v4765, %v4766
        %v4768 = vrot.slane %v4767, 1
        %v4769 = vadd.f32 %v4767, %v4768
        %v4770 = vadd.f32 %v4464, %v4470
        %v4771 = vrot.slane %v4770, 4
        %v4772 = vadd.f32 %v4770, %v4771
        %v4773 = vrot.slane %v4772, 2
        %v4774 = vadd.f32 %v4772, %v4773
        %v4775 = vrot.slane %v4774, 1
        %v4776 = vadd.f32 %v4774, %v4775
        %v4777 = vadd.f32 %v4465, %v4471
        %v4778 = vrot.slane %v4777, 4
        %v4779 = vadd.f32 %v4777, %v4778
        %v4780 = vrot.slane %v4779, 2
        %v4781 = vadd.f32 %v4779, %v4780
        %v4782 = vrot.slane %v4781, 1
        %v4783 = vadd.f32 %v4781, %v4782
        %v4784 = vadd.f32 %v4466, %v4472
        %v4785 = vrot.slane %v4784, 4
        %v4786 = vadd.f32 %v4784, %v4785
        %v4787 = vrot.slane %v4786, 2
        %v4788 = vadd.f32 %v4786, %v4787
        %v4789 = vrot.slane %v4788, 1
        %v4790 = vadd.f32 %v4788, %v4789
        %v4791 = vadd.f32 %v4467, %v4473
        %v4792 = vrot.slane %v4791, 4
        %v4793 = vadd.f32 %v4791, %v4792
        %v4794 = vrot.slane %v4793, 2
        %v4795 = vadd.f32 %v4793, %v4794
        %v4796 = vrot.slane %v4795, 1
        %v4797 = vadd.f32 %v4795, %v4796
        %v4798 = vadd.f32 %v4468, %v4474
        %v4799 = vrot.slane %v4798, 4
        %v4800 = vadd.f32 %v4798, %v4799
        %v4801 = vrot.slane %v4800, 2
        %v4802 = vadd.f32 %v4800, %v4801
        %v4803 = vrot.slane %v4802, 1
        %v4804 = vadd.f32 %v4802, %v4803
        %v4805 = vadd.f32 %v4469, %v4475
        %v4806 = vrot.slane %v4805, 4
        %v4807 = vadd.f32 %v4805, %v4806
        %v4808 = vrot.slane %v4807, 2
        %v4809 = vadd.f32 %v4807, %v4808
        %v4810 = vrot.slane %v4809, 1
        %v4811 = vadd.f32 %v4809, %v4810
        %v4812 = vrcp.pop 16.0
        %v4813 = vmul.f32 16.0, %v4812
        %v4814 = vsub.f32 1.0, %v4813
        %v4815 = vmul.f32 %v4812, %v4814
        %v4816 = vadd.f32 %v4812, %v4815
        %vm4817 = vweird.f32 %v4812
        %v4818 = vsel %vm4817, %v4812, %v4816
        %v4819 = vmul.f32 %v4482, %v4818
        %v4820 = vmul.f32 %v4489, %v4818
        %v4821 = vmul.f32 %v4496, %v4818
        %v4822 = vmul.f32 %v4503, %v4818
        %v4823 = vmul.f32 %v4510, %v4818
        %v4824 = vmul.f32 %v4517, %v4818
        %v4825 = vmul.f32 %v4524, %v4818
        %v4826 = vmul.f32 %v4531, %v4818
        %v4827 = vmul.f32 %v4538, %v4818
        %v4828 = vmul.f32 %v4545, %v4818
        %v4829 = vmul.f32 %v4552, %v4818
        %v4830 = vmul.f32 %v4559, %v4818
        %v4831 = vmul.f32 %v4566, %v4818
        %v4832 = vmul.f32 %v4573, %v4818
        %v4833 = vmul.f32 %v4580, %v4818
        %v4834 = vmul.f32 %v4587, %v4818
        %v4835 = vmul.f32 %v4594, %v4818
        %v4836 = vmul.f32 %v4601, %v4818
        %v4837 = vmul.f32 %v4608, %v4818
        %v4838 = vmul.f32 %v4615, %v4818
        %v4839 = vmul.f32 %v4622, %v4818
        %v4840 = vmul.f32 %v4629, %v4818
        %v4841 = vmul.f32 %v4636, %v4818
        %v4842 = vmul.f32 %v4643, %v4818
        %v4843 = vmul.f32 %v4650, %v4818
        %v4844 = vmul.f32 %v4657, %v4818
        %v4845 = vmul.f32 %v4664, %v4818
        %v4846 = vmul.f32 %v4671, %v4818
        %v4847 = vmul.f32 %v4678, %v4818
        %v4848 = vmul.f32 %v4685, %v4818
        %v4849 = vmul.f32 %v4692, %v4818
        %v4850 = vmul.f32 %v4699, %v4818
        %v4851 = vmul.f32 %v4706, %v4818
        %v4852 = vmul.f32 %v4713, %v4818
        %v4853 = vmul.f32 %v4720, %v4818
        %v4854 = vmul.f32 %v4727, %v4818
        %v4855 = vmul.f32 %v4734, %v4818
        %v4856 = vmul.f32 %v4741, %v4818
        %v4857 = vmul.f32 %v4748, %v4818
        %v4858 = vmul.f32 %v4755, %v4818
        %v4859 = vmul.f32 %v4762, %v4818
        %v4860 = vmul.f32 %v4769, %v4818
        %v4861 = vmul.f32 %v4776, %v4818
        %v4862 = vmul.f32 %v4783, %v4818
        %v4863 = vmul.f32 %v4790, %v4818
        %v4864 = vmul.f32 %v4797, %v4818
        %v4865 = vmul.f32 %v4804, %v4818
        %v4866 = vmul.f32 %v4811, %v4818
        %v4867 = vlog2.pop %v4819
        %v4868 = vmul.f32 %v4867, 0.6931472
        %v4869 = vlog2.pop %v4820
        %v4870 = vmul.f32 %v4869, 0.6931472
        %v4871 = vlog2.pop %v4821
        %v4872 = vmul.f32 %v4871, 0.6931472
        %v4873 = vlog2.pop %v4822
        %v4874 = vmul.f32 %v4873, 0.6931472
        %v4875 = vlog2.pop %v4823
        %v4876 = vmul.f32 %v4875, 0.6931472
        %v4877 = vlog2.pop %v4824
        %v4878 = vmul.f32 %v4877, 0.6931472
        %v4879 = vlog2.pop %v4825
        %v4880 = vmul.f32 %v4879, 0.6931472
        %v4881 = vlog2.pop %v4826
        %v4882 = vmul.f32 %v4881, 0.6931472
        %v4883 = vlog2.pop %v4827
        %v4884 = vmul.f32 %v4883, 0.6931472
        %v4885 = vlog2.pop %v4828
        %v4886 = vmul.f32 %v4885, 0.6931472
        %v4887 = vlog2.pop %v4829
        %v4888 = vmul.f32 %v4887, 0.6931472
        %v4889 = vlog2.pop %v4830
        %v4890 = vmul.f32 %v4889, 0.6931472
        %v4891 = vlog2.pop %v4831
        %v4892 = vmul.f32 %v4891, 0.6931472
        %v4893 = vlog2.pop %v4832
        %v4894 = vmul.f32 %v4893, 0.6931472
        %v4895 = vlog2.pop %v4833
        %v4896 = vmul.f32 %v4895, 0.6931472
        %v4897 = vlog2.pop %v4834
        %v4898 = vmul.f32 %v4897, 0.6931472
        %v4899 = vlog2.pop %v4835
        %v4900 = vmul.f32 %v4899, 0.6931472
        %v4901 = vlog2.pop %v4836
        %v4902 = vmul.f32 %v4901, 0.6931472
        %v4903 = vlog2.pop %v4837
        %v4904 = vmul.f32 %v4903, 0.6931472
        %v4905 = vlog2.pop %v4838
        %v4906 = vmul.f32 %v4905, 0.6931472
        %v4907 = vlog2.pop %v4839
        %v4908 = vmul.f32 %v4907, 0.6931472
        %v4909 = vlog2.pop %v4840
        %v4910 = vmul.f32 %v4909, 0.6931472
        %v4911 = vlog2.pop %v4841
        %v4912 = vmul.f32 %v4911, 0.6931472
        %v4913 = vlog2.pop %v4842
        %v4914 = vmul.f32 %v4913, 0.6931472
        %v4915 = vlog2.pop %v4843
        %v4916 = vmul.f32 %v4915, 0.6931472
        %v4917 = vlog2.pop %v4844
        %v4918 = vmul.f32 %v4917, 0.6931472
        %v4919 = vlog2.pop %v4845
        %v4920 = vmul.f32 %v4919, 0.6931472
        %v4921 = vlog2.pop %v4846
        %v4922 = vmul.f32 %v4921, 0.6931472
        %v4923 = vlog2.pop %v4847
        %v4924 = vmul.f32 %v4923, 0.6931472
        %v4925 = vlog2.pop %v4848
        %v4926 = vmul.f32 %v4925, 0.6931472
        %v4927 = vlog2.pop %v4849
        %v4928 = vmul.f32 %v4927, 0.6931472
        %v4929 = vlog2.pop %v4850
        %v4930 = vmul.f32 %v4929, 0.6931472
        %v4931 = vlog2.pop %v4851
        %v4932 = vmul.f32 %v4931, 0.6931472
        %v4933 = vlog2.pop %v4852
        %v4934 = vmul.f32 %v4933, 0.6931472
        %v4935 = vlog2.pop %v4853
        %v4936 = vmul.f32 %v4935, 0.6931472
        %v4937 = vlog2.pop %v4854
        %v4938 = vmul.f32 %v4937, 0.6931472
        %v4939 = vlog2.pop %v4855
        %v4940 = vmul.f32 %v4939, 0.6931472
        %v4941 = vlog2.pop %v4856
        %v4942 = vmul.f32 %v4941, 0.6931472
        %v4943 = vlog2.pop %v4857
        %v4944 = vmul.f32 %v4943, 0.6931472
        %v4945 = vlog2.pop %v4858
        %v4946 = vmul.f32 %v4945, 0.6931472
        %v4947 = vlog2.pop %v4859
        %v4948 = vmul.f32 %v4947, 0.6931472
        %v4949 = vlog2.pop %v4860
        %v4950 = vmul.f32 %v4949, 0.6931472
        %v4951 = vlog2.pop %v4861
        %v4952 = vmul.f32 %v4951, 0.6931472
        %v4953 = vlog2.pop %v4862
        %v4954 = vmul.f32 %v4953, 0.6931472
        %v4955 = vlog2.pop %v4863
        %v4956 = vmul.f32 %v4955, 0.6931472
        %v4957 = vlog2.pop %v4864
        %v4958 = vmul.f32 %v4957, 0.6931472
        %v4959 = vlog2.pop %v4865
        %v4960 = vmul.f32 %v4959, 0.6931472
        %v4961 = vlog2.pop %v4866
        %v4962 = vmul.f32 %v4961, 0.6931472
        %v4963 = vmul.f32 %v4868, 0.33333334
        %v4964 = vmul.f32 %v4870, 0.33333334
        %v4965 = vmul.f32 %v4872, 0.33333334
        %v4966 = vmul.f32 %v4874, 0.33333334
        %v4967 = vmul.f32 %v4876, 0.33333334
        %v4968 = vmul.f32 %v4878, 0.33333334
        %v4969 = vmul.f32 %v4880, 0.33333334
        %v4970 = vmul.f32 %v4882, 0.33333334
        %v4971 = vmul.f32 %v4884, 0.33333334
        %v4972 = vmul.f32 %v4886, 0.33333334
        %v4973 = vmul.f32 %v4888, 0.33333334
        %v4974 = vmul.f32 %v4890, 0.33333334
        %v4975 = vmul.f32 %v4892, 0.33333334
        %v4976 = vmul.f32 %v4894, 0.33333334
        %v4977 = vmul.f32 %v4896, 0.33333334
        %v4978 = vmul.f32 %v4898, 0.33333334
        %v4979 = vmul.f32 %v4900, 0.33333334
        %v4980 = vmul.f32 %v4902, 0.33333334
        %v4981 = vmul.f32 %v4904, 0.33333334
        %v4982 = vmul.f32 %v4906, 0.33333334
        %v4983 = vmul.f32 %v4908, 0.33333334
        %v4984 = vmul.f32 %v4910, 0.33333334
        %v4985 = vmul.f32 %v4912, 0.33333334
        %v4986 = vmul.f32 %v4914, 0.33333334
        %v4987 = vmul.f32 %v4916, 0.33333334
        %v4988 = vmul.f32 %v4918, 0.33333334
        %v4989 = vmul.f32 %v4920, 0.33333334
        %v4990 = vmul.f32 %v4922, 0.33333334
        %v4991 = vmul.f32 %v4924, 0.33333334
        %v4992 = vmul.f32 %v4926, 0.33333334
        %v4993 = vmul.f32 %v4928, 0.33333334
        %v4994 = vmul.f32 %v4930, 0.33333334
        %v4995 = vmul.f32 %v4932, 0.33333334
        %v4996 = vmul.f32 %v4934, 0.33333334
        %v4997 = vmul.f32 %v4936, 0.33333334
        %v4998 = vmul.f32 %v4938, 0.33333334
        %v4999 = vmul.f32 %v4940, 0.33333334
        %v5000 = vmul.f32 %v4942, 0.33333334
        %v5001 = vmul.f32 %v4944, 0.33333334
        %v5002 = vmul.f32 %v4946, 0.33333334
        %v5003 = vmul.f32 %v4948, 0.33333334
        %v5004 = vmul.f32 %v4950, 0.33333334
        %v5005 = vmul.f32 %v4952, 0.33333334
        %v5006 = vmul.f32 %v4954, 0.33333334
        %v5007 = vmul.f32 %v4956, 0.33333334
        %v5008 = vmul.f32 %v4958, 0.33333334
        %v5009 = vmul.f32 %v4960, 0.33333334
        %v5010 = vmul.f32 %v4962, 0.33333334
        %v5011 = vmul.f32 %v4963, 1.442695
        %v5012 = vpow.pop %v5011
        %v5013 = vmul.f32 %v4964, 1.442695
        %v5014 = vpow.pop %v5013
        %v5015 = vmul.f32 %v4965, 1.442695
        %v5016 = vpow.pop %v5015
        %v5017 = vmul.f32 %v4966, 1.442695
        %v5018 = vpow.pop %v5017
        %v5019 = vmul.f32 %v4967, 1.442695
        %v5020 = vpow.pop %v5019
        %v5021 = vmul.f32 %v4968, 1.442695
        %v5022 = vpow.pop %v5021
        %v5023 = vmul.f32 %v4969, 1.442695
        %v5024 = vpow.pop %v5023
        %v5025 = vmul.f32 %v4970, 1.442695
        %v5026 = vpow.pop %v5025
        %v5027 = vmul.f32 %v4971, 1.442695
        %v5028 = vpow.pop %v5027
        %v5029 = vmul.f32 %v4972, 1.442695
        %v5030 = vpow.pop %v5029
        %v5031 = vmul.f32 %v4973, 1.442695
        %v5032 = vpow.pop %v5031
        %v5033 = vmul.f32 %v4974, 1.442695
        %v5034 = vpow.pop %v5033
        %v5035 = vmul.f32 %v4975, 1.442695
        %v5036 = vpow.pop %v5035
        %v5037 = vmul.f32 %v4976, 1.442695
        %v5038 = vpow.pop %v5037
        %v5039 = vmul.f32 %v4977, 1.442695
        %v5040 = vpow.pop %v5039
        %v5041 = vmul.f32 %v4978, 1.442695
        %v5042 = vpow.pop %v5041
        %v5043 = vmul.f32 %v4979, 1.442695
        %v5044 = vpow.pop %v5043
        %v5045 = vmul.f32 %v4980, 1.442695
        %v5046 = vpow.pop %v5045
        %v5047 = vmul.f32 %v4981, 1.442695
        %v5048 = vpow.pop %v5047
        %v5049 = vmul.f32 %v4982, 1.442695
        %v5050 = vpow.pop %v5049
        %v5051 = vmul.f32 %v4983, 1.442695
        %v5052 = vpow.pop %v5051
        %v5053 = vmul.f32 %v4984, 1.442695
        %v5054 = vpow.pop %v5053
        %v5055 = vmul.f32 %v4985, 1.442695
        %v5056 = vpow.pop %v5055
        %v5057 = vmul.f32 %v4986, 1.442695
        %v5058 = vpow.pop %v5057
        %v5059 = vmul.f32 %v4987, 1.442695
        %v5060 = vpow.pop %v5059
        %v5061 = vmul.f32 %v4988, 1.442695
        %v5062 = vpow.pop %v5061
        %v5063 = vmul.f32 %v4989, 1.442695
        %v5064 = vpow.pop %v5063
        %v5065 = vmul.f32 %v4990, 1.442695
        %v5066 = vpow.pop %v5065
        %v5067 = vmul.f32 %v4991, 1.442695
        %v5068 = vpow.pop %v5067
        %v5069 = vmul.f32 %v4992, 1.442695
        %v5070 = vpow.pop %v5069
        %v5071 = vmul.f32 %v4993, 1.442695
        %v5072 = vpow.pop %v5071
        %v5073 = vmul.f32 %v4994, 1.442695
        %v5074 = vpow.pop %v5073
        %v5075 = vmul.f32 %v4995, 1.442695
        %v5076 = vpow.pop %v5075
        %v5077 = vmul.f32 %v4996, 1.442695
        %v5078 = vpow.pop %v5077
        %v5079 = vmul.f32 %v4997, 1.442695
        %v5080 = vpow.pop %v5079
        %v5081 = vmul.f32 %v4998, 1.442695
        %v5082 = vpow.pop %v5081
        %v5083 = vmul.f32 %v4999, 1.442695
        %v5084 = vpow.pop %v5083
        %v5085 = vmul.f32 %v5000, 1.442695
        %v5086 = vpow.pop %v5085
        %v5087 = vmul.f32 %v5001, 1.442695
        %v5088 = vpow.pop %v5087
        %v5089 = vmul.f32 %v5002, 1.442695
        %v5090 = vpow.pop %v5089
        %v5091 = vmul.f32 %v5003, 1.442695
        %v5092 = vpow.pop %v5091
        %v5093 = vmul.f32 %v5004, 1.442695
        %v5094 = vpow.pop %v5093
        %v5095 = vmul.f32 %v5005, 1.442695
        %v5096 = vpow.pop %v5095
        %v5097 = vmul.f32 %v5006, 1.442695
        %v5098 = vpow.pop %v5097
        %v5099 = vmul.f32 %v5007, 1.442695
        %v5100 = vpow.pop %v5099
        %v5101 = vmul.f32 %v5008, 1.442695
        %v5102 = vpow.pop %v5101
        %v5103 = vmul.f32 %v5009, 1.442695
        %v5104 = vpow.pop %v5103
        %v5105 = vmul.f32 %v5010, 1.442695
        %v5106 = vpow.pop %v5105
        %v5107 = vpack.c.bf16 %v5012, %v5012
        %v5108 = vpack.c.bf16 %v5014, %v5014
        %v5109 = vpack.c.bf16 %v5016, %v5016
        %v5110 = vpack.c.bf16 %v5018, %v5018
        %v5111 = vpack.c.bf16 %v5020, %v5020
        %v5112 = vpack.c.bf16 %v5022, %v5022
        %v5113 = vpack.c.bf16 %v5024, %v5024
        %v5114 = vpack.c.bf16 %v5026, %v5026
        %v5115 = vpack.c.bf16 %v5028, %v5028
        %v5116 = vpack.c.bf16 %v5030, %v5030
        %v5117 = vpack.c.bf16 %v5032, %v5032
        %v5118 = vpack.c.bf16 %v5034, %v5034
        %v5119 = vpack.c.bf16 %v5036, %v5036
        %v5120 = vpack.c.bf16 %v5038, %v5038
        %v5121 = vpack.c.bf16 %v5040, %v5040
        %v5122 = vpack.c.bf16 %v5042, %v5042
        %v5123 = vpack.c.bf16 %v5044, %v5044
        %v5124 = vpack.c.bf16 %v5046, %v5046
        %v5125 = vpack.c.bf16 %v5048, %v5048
        %v5126 = vpack.c.bf16 %v5050, %v5050
        %v5127 = vpack.c.bf16 %v5052, %v5052
        %v5128 = vpack.c.bf16 %v5054, %v5054
        %v5129 = vpack.c.bf16 %v5056, %v5056
        %v5130 = vpack.c.bf16 %v5058, %v5058
        %v5131 = vpack.c.bf16 %v5060, %v5060
        %v5132 = vpack.c.bf16 %v5062, %v5062
        %v5133 = vpack.c.bf16 %v5064, %v5064
        %v5134 = vpack.c.bf16 %v5066, %v5066
        %v5135 = vpack.c.bf16 %v5068, %v5068
        %v5136 = vpack.c.bf16 %v5070, %v5070
        %v5137 = vpack.c.bf16 %v5072, %v5072
        %v5138 = vpack.c.bf16 %v5074, %v5074
        %v5139 = vpack.c.bf16 %v5076, %v5076
        %v5140 = vpack.c.bf16 %v5078, %v5078
        %v5141 = vpack.c.bf16 %v5080, %v5080
        %v5142 = vpack.c.bf16 %v5082, %v5082
        %v5143 = vpack.c.bf16 %v5084, %v5084
        %v5144 = vpack.c.bf16 %v5086, %v5086
        %v5145 = vpack.c.bf16 %v5088, %v5088
        %v5146 = vpack.c.bf16 %v5090, %v5090
        %v5147 = vpack.c.bf16 %v5092, %v5092
        %v5148 = vpack.c.bf16 %v5094, %v5094
        %v5149 = vpack.c.bf16 %v5096, %v5096
        %v5150 = vpack.c.bf16 %v5098, %v5098
        %v5151 = vpack.c.bf16 %v5100, %v5100
        %v5152 = vpack.c.bf16 %v5102, %v5102
        %v5153 = vpack.c.bf16 %v5104, %v5104
        %v5154 = vpack.c.bf16 %v5106, %v5106
        %v5155 = vld [vmem:[#allocation8] sm:$0xff]
        %v5156 = vld [vmem:[#allocation8 + $0x8] sm:$0xff]
        %v5157 = vld [vmem:[#allocation8 + $0x10] sm:$0xff]
        %v5158 = vld [vmem:[#allocation8 + $0x18] sm:$0xff]
        %v5159 = vld [vmem:[#allocation8 + $0x20] sm:$0xff]
        %v5160 = vld [vmem:[#allocation8 + $0x28] sm:$0xff]
        %v5161 = vld [vmem:[#allocation8 + $0x30] sm:$0xff]
        %v5162 = vld [vmem:[#allocation8 + $0x38] sm:$0xff]
        %v5163 = vld [vmem:[#allocation8 + $0x40] sm:$0xff]
        %v5164 = vld [vmem:[#allocation8 + $0x48] sm:$0xff]
        %v5165 = vld [vmem:[#allocation8 + $0x50] sm:$0xff]
        %v5166 = vld [vmem:[#allocation8 + $0x58] sm:$0xff]
        %v5167 = vld [vmem:[#allocation8 + $0x60] sm:$0xff]
        %v5168 = vld [vmem:[#allocation8 + $0x68] sm:$0xff]
        %v5169 = vld [vmem:[#allocation8 + $0x70] sm:$0xff]
        %v5170 = vld [vmem:[#allocation8 + $0x78] sm:$0xff]
        %v5171 = vld [vmem:[#allocation8 + $0x80] sm:$0xff]
        %v5172 = vld [vmem:[#allocation8 + $0x88] sm:$0xff]
        %v5173 = vld [vmem:[#allocation8 + $0x90] sm:$0xff]
        %v5174 = vld [vmem:[#allocation8 + $0x98] sm:$0xff]
        %v5175 = vld [vmem:[#allocation8 + $0xa0] sm:$0xff]
        %v5176 = vld [vmem:[#allocation8 + $0xa8] sm:$0xff]
        %v5177 = vld [vmem:[#allocation8 + $0xb0] sm:$0xff]
        %v5178 = vld [vmem:[#allocation8 + $0xb8] sm:$0xff]
        %v5179 = vld [vmem:[#allocation8 + $0xc0] sm:$0xff]
        %v5180 = vld [vmem:[#allocation8 + $0xc8] sm:$0xff]
        %v5181 = vld [vmem:[#allocation8 + $0xd0] sm:$0xff]
        %v5182 = vld [vmem:[#allocation8 + $0xd8] sm:$0xff]
        %v5183 = vld [vmem:[#allocation8 + $0xe0] sm:$0xff]
        %v5184 = vld [vmem:[#allocation8 + $0xe8] sm:$0xff]
        %v5185 = vld [vmem:[#allocation8 + $0xf0] sm:$0xff]
        %v5186 = vld [vmem:[#allocation8 + $0xf8] sm:$0xff]
        %v5187 = vld [vmem:[#allocation8 + $0x100] sm:$0xff]
        %v5188 = vld [vmem:[#allocation8 + $0x108] sm:$0xff]
        %v5189 = vld [vmem:[#allocation8 + $0x110] sm:$0xff]
        %v5190 = vld [vmem:[#allocation8 + $0x118] sm:$0xff]
        %v5191 = vld [vmem:[#allocation8 + $0x120] sm:$0xff]
        %v5192 = vld [vmem:[#allocation8 + $0x128] sm:$0xff]
        %v5193 = vld [vmem:[#allocation8 + $0x130] sm:$0xff]
        %v5194 = vld [vmem:[#allocation8 + $0x138] sm:$0xff]
        %v5195 = vld [vmem:[#allocation8 + $0x140] sm:$0xff]
        %v5196 = vld [vmem:[#allocation8 + $0x148] sm:$0xff]
        %v5197 = vld [vmem:[#allocation8 + $0x150] sm:$0xff]
        %v5198 = vld [vmem:[#allocation8 + $0x158] sm:$0xff]
        %v5199 = vld [vmem:[#allocation8 + $0x160] sm:$0xff]
        %v5200 = vld [vmem:[#allocation8 + $0x168] sm:$0xff]
        %v5201 = vld [vmem:[#allocation8 + $0x170] sm:$0xff]
        %v5202 = vld [vmem:[#allocation8 + $0x178] sm:$0xff]
        %v5203 = vld [vmem:[#allocation8 + $0x180] sm:$0xff]
        %v5204 = vld [vmem:[#allocation8 + $0x188] sm:$0xff]
        %v5205 = vld [vmem:[#allocation8 + $0x190] sm:$0xff]
        %v5206 = vld [vmem:[#allocation8 + $0x198] sm:$0xff]
        %v5207 = vld [vmem:[#allocation8 + $0x1a0] sm:$0xff]
        %v5208 = vld [vmem:[#allocation8 + $0x1a8] sm:$0xff]
        %v5209 = vld [vmem:[#allocation8 + $0x1b0] sm:$0xff]
        %v5210 = vld [vmem:[#allocation8 + $0x1b8] sm:$0xff]
        %v5211 = vld [vmem:[#allocation8 + $0x1c0] sm:$0xff]
        %v5212 = vld [vmem:[#allocation8 + $0x1c8] sm:$0xff]
        %v5213 = vld [vmem:[#allocation8 + $0x1d0] sm:$0xff]
        %v5214 = vld [vmem:[#allocation8 + $0x1d8] sm:$0xff]
        %v5215 = vld [vmem:[#allocation8 + $0x1e0] sm:$0xff]
        %v5216 = vld [vmem:[#allocation8 + $0x1e8] sm:$0xff]
        %v5217 = vld [vmem:[#allocation8 + $0x1f0] sm:$0xff]
        %v5218 = vld [vmem:[#allocation8 + $0x1f8] sm:$0xff]
        %v5219 = vld [vmem:[#allocation8 + $0x200] sm:$0xff]
        %v5220 = vld [vmem:[#allocation8 + $0x208] sm:$0xff]
        %v5221 = vld [vmem:[#allocation8 + $0x210] sm:$0xff]
        %v5222 = vld [vmem:[#allocation8 + $0x218] sm:$0xff]
        %v5223 = vld [vmem:[#allocation8 + $0x220] sm:$0xff]
        %v5224 = vld [vmem:[#allocation8 + $0x228] sm:$0xff]
        %v5225 = vld [vmem:[#allocation8 + $0x230] sm:$0xff]
        %v5226 = vld [vmem:[#allocation8 + $0x238] sm:$0xff]
        %v5227 = vld [vmem:[#allocation8 + $0x240] sm:$0xff]
        %v5228 = vld [vmem:[#allocation8 + $0x248] sm:$0xff]
        %v5229 = vld [vmem:[#allocation8 + $0x250] sm:$0xff]
        %v5230 = vld [vmem:[#allocation8 + $0x258] sm:$0xff]
        %v5231 = vld [vmem:[#allocation8 + $0x260] sm:$0xff]
        %v5232 = vld [vmem:[#allocation8 + $0x268] sm:$0xff]
        %v5233 = vld [vmem:[#allocation8 + $0x270] sm:$0xff]
        %v5234 = vld [vmem:[#allocation8 + $0x278] sm:$0xff]
        %v5235 = vld [vmem:[#allocation8 + $0x280] sm:$0xff]
        %v5236 = vld [vmem:[#allocation8 + $0x288] sm:$0xff]
        %v5237 = vld [vmem:[#allocation8 + $0x290] sm:$0xff]
        %v5238 = vld [vmem:[#allocation8 + $0x298] sm:$0xff]
        %v5239 = vld [vmem:[#allocation8 + $0x2a0] sm:$0xff]
        %v5240 = vld [vmem:[#allocation8 + $0x2a8] sm:$0xff]
        %v5241 = vld [vmem:[#allocation8 + $0x2b0] sm:$0xff]
        %v5242 = vld [vmem:[#allocation8 + $0x2b8] sm:$0xff]
        %v5243 = vld [vmem:[#allocation8 + $0x2c0] sm:$0xff]
        %v5244 = vld [vmem:[#allocation8 + $0x2c8] sm:$0xff]
        %v5245 = vld [vmem:[#allocation8 + $0x2d0] sm:$0xff]
        %v5246 = vld [vmem:[#allocation8 + $0x2d8] sm:$0xff]
        %v5247 = vld [vmem:[#allocation8 + $0x2e0] sm:$0xff]
        %v5248 = vld [vmem:[#allocation8 + $0x2e8] sm:$0xff]
        %v5249 = vld [vmem:[#allocation8 + $0x2f0] sm:$0xff]
        %v5250 = vld [vmem:[#allocation8 + $0x2f8] sm:$0xff]
        %v5251 = vld [vmem:[#allocation8 + $0x300] sm:$0xff]
        %v5252 = vld [vmem:[#allocation8 + $0x308] sm:$0xff]
        %v5253 = vld [vmem:[#allocation8 + $0x310] sm:$0xff]
        %v5254 = vld [vmem:[#allocation8 + $0x318] sm:$0xff]
        %v5255 = vld [vmem:[#allocation8 + $0x320] sm:$0xff]
        %v5256 = vld [vmem:[#allocation8 + $0x328] sm:$0xff]
        %v5257 = vld [vmem:[#allocation8 + $0x330] sm:$0xff]
        %v5258 = vld [vmem:[#allocation8 + $0x338] sm:$0xff]
        %v5259 = vld [vmem:[#allocation8 + $0x340] sm:$0xff]
        %v5260 = vld [vmem:[#allocation8 + $0x348] sm:$0xff]
        %v5261 = vld [vmem:[#allocation8 + $0x350] sm:$0xff]
        %v5262 = vld [vmem:[#allocation8 + $0x358] sm:$0xff]
        %v5263 = vld [vmem:[#allocation8 + $0x360] sm:$0xff]
        %v5264 = vld [vmem:[#allocation8 + $0x368] sm:$0xff]
        %v5265 = vld [vmem:[#allocation8 + $0x370] sm:$0xff]
        %v5266 = vld [vmem:[#allocation8 + $0x378] sm:$0xff]
        %v5267 = vld [vmem:[#allocation8 + $0x380] sm:$0xff]
        %v5268 = vld [vmem:[#allocation8 + $0x388] sm:$0xff]
        %v5269 = vld [vmem:[#allocation8 + $0x390] sm:$0xff]
        %v5270 = vld [vmem:[#allocation8 + $0x398] sm:$0xff]
        %v5271 = vld [vmem:[#allocation8 + $0x3a0] sm:$0xff]
        %v5272 = vld [vmem:[#allocation8 + $0x3a8] sm:$0xff]
        %v5273 = vld [vmem:[#allocation8 + $0x3b0] sm:$0xff]
        %v5274 = vld [vmem:[#allocation8 + $0x3b8] sm:$0xff]
        %v5275 = vld [vmem:[#allocation8 + $0x3c0] sm:$0xff]
        %v5276 = vld [vmem:[#allocation8 + $0x3c8] sm:$0xff]
        %v5277 = vld [vmem:[#allocation8 + $0x3d0] sm:$0xff]
        %v5278 = vld [vmem:[#allocation8 + $0x3d8] sm:$0xff]
        %v5279 = vld [vmem:[#allocation8 + $0x3e0] sm:$0xff]
        %v5280 = vld [vmem:[#allocation8 + $0x3e8] sm:$0xff]
        %v5281 = vld [vmem:[#allocation8 + $0x3f0] sm:$0xff]
        %v5282 = vld [vmem:[#allocation8 + $0x3f8] sm:$0xff]
        %v5283 = vld [vmem:[#allocation8 + $0x400] sm:$0xff]
        %v5284 = vld [vmem:[#allocation8 + $0x408] sm:$0xff]
        %v5285 = vld [vmem:[#allocation8 + $0x410] sm:$0xff]
        %v5286 = vld [vmem:[#allocation8 + $0x418] sm:$0xff]
        %v5287 = vld [vmem:[#allocation8 + $0x420] sm:$0xff]
        %v5288 = vld [vmem:[#allocation8 + $0x428] sm:$0xff]
        %v5289 = vld [vmem:[#allocation8 + $0x430] sm:$0xff]
        %v5290 = vld [vmem:[#allocation8 + $0x438] sm:$0xff]
        %v5291 = vld [vmem:[#allocation8 + $0x440] sm:$0xff]
        %v5292 = vld [vmem:[#allocation8 + $0x448] sm:$0xff]
        %v5293 = vld [vmem:[#allocation8 + $0x450] sm:$0xff]
        %v5294 = vld [vmem:[#allocation8 + $0x458] sm:$0xff]
        %v5295 = vld [vmem:[#allocation8 + $0x460] sm:$0xff]
        %v5296 = vld [vmem:[#allocation8 + $0x468] sm:$0xff]
        %v5297 = vld [vmem:[#allocation8 + $0x470] sm:$0xff]
        %v5298 = vld [vmem:[#allocation8 + $0x478] sm:$0xff]
        %v5299 = vld [vmem:[#allocation8 + $0x480] sm:$0xff]
        %v5300 = vld [vmem:[#allocation8 + $0x488] sm:$0xff]
        %v5301 = vld [vmem:[#allocation8 + $0x490] sm:$0xff]
        %v5302 = vld [vmem:[#allocation8 + $0x498] sm:$0xff]
        %v5303 = vld [vmem:[#allocation8 + $0x4a0] sm:$0xff]
        %v5304 = vld [vmem:[#allocation8 + $0x4a8] sm:$0xff]
        %v5305 = vld [vmem:[#allocation8 + $0x4b0] sm:$0xff]
        %v5306 = vld [vmem:[#allocation8 + $0x4b8] sm:$0xff]
        %v5307 = vld [vmem:[#allocation8 + $0x4c0] sm:$0xff]
        %v5308 = vld [vmem:[#allocation8 + $0x4c8] sm:$0xff]
        %v5309 = vld [vmem:[#allocation8 + $0x4d0] sm:$0xff]
        %v5310 = vld [vmem:[#allocation8 + $0x4d8] sm:$0xff]
        %v5311 = vld [vmem:[#allocation8 + $0x4e0] sm:$0xff]
        %v5312 = vld [vmem:[#allocation8 + $0x4e8] sm:$0xff]
        %v5313 = vld [vmem:[#allocation8 + $0x4f0] sm:$0xff]
        %v5314 = vld [vmem:[#allocation8 + $0x4f8] sm:$0xff]
        %v5315 = vld [vmem:[#allocation8 + $0x500] sm:$0xff]
        %v5316 = vld [vmem:[#allocation8 + $0x508] sm:$0xff]
        %v5317 = vld [vmem:[#allocation8 + $0x510] sm:$0xff]
        %v5318 = vld [vmem:[#allocation8 + $0x518] sm:$0xff]
        %v5319 = vld [vmem:[#allocation8 + $0x520] sm:$0xff]
        %v5320 = vld [vmem:[#allocation8 + $0x528] sm:$0xff]
        %v5321 = vld [vmem:[#allocation8 + $0x530] sm:$0xff]
        %v5322 = vld [vmem:[#allocation8 + $0x538] sm:$0xff]
        %v5323 = vld [vmem:[#allocation8 + $0x540] sm:$0xff]
        %v5324 = vld [vmem:[#allocation8 + $0x548] sm:$0xff]
        %v5325 = vld [vmem:[#allocation8 + $0x550] sm:$0xff]
        %v5326 = vld [vmem:[#allocation8 + $0x558] sm:$0xff]
        %v5327 = vld [vmem:[#allocation8 + $0x560] sm:$0xff]
        %v5328 = vld [vmem:[#allocation8 + $0x568] sm:$0xff]
        %v5329 = vld [vmem:[#allocation8 + $0x570] sm:$0xff]
        %v5330 = vld [vmem:[#allocation8 + $0x578] sm:$0xff]
        %v5331 = vld [vmem:[#allocation8 + $0x580] sm:$0xff]
        %v5332 = vld [vmem:[#allocation8 + $0x588] sm:$0xff]
        %v5333 = vld [vmem:[#allocation8 + $0x590] sm:$0xff]
        %v5334 = vld [vmem:[#allocation8 + $0x598] sm:$0xff]
        %v5335 = vld [vmem:[#allocation8 + $0x5a0] sm:$0xff]
        %v5336 = vld [vmem:[#allocation8 + $0x5a8] sm:$0xff]
        %v5337 = vld [vmem:[#allocation8 + $0x5b0] sm:$0xff]
        %v5338 = vld [vmem:[#allocation8 + $0x5b8] sm:$0xff]
        %v5339 = vld [vmem:[#allocation8 + $0x5c0] sm:$0xff]
        %v5340 = vld [vmem:[#allocation8 + $0x5c8] sm:$0xff]
        %v5341 = vld [vmem:[#allocation8 + $0x5d0] sm:$0xff]
        %v5342 = vld [vmem:[#allocation8 + $0x5d8] sm:$0xff]
        %v5343 = vld [vmem:[#allocation8 + $0x5e0] sm:$0xff]
        %v5344 = vld [vmem:[#allocation8 + $0x5e8] sm:$0xff]
        %v5345 = vld [vmem:[#allocation8 + $0x5f0] sm:$0xff]
        %v5346 = vld [vmem:[#allocation8 + $0x5f8] sm:$0xff]
        %v5347 = vld [vmem:[#allocation8 + $0x600] sm:$0xff]
        %v5348 = vld [vmem:[#allocation8 + $0x608] sm:$0xff]
        %v5349 = vld [vmem:[#allocation8 + $0x610] sm:$0xff]
        %v5350 = vld [vmem:[#allocation8 + $0x618] sm:$0xff]
        %v5351 = vld [vmem:[#allocation8 + $0x620] sm:$0xff]
        %v5352 = vld [vmem:[#allocation8 + $0x628] sm:$0xff]
        %v5353 = vld [vmem:[#allocation8 + $0x630] sm:$0xff]
        %v5354 = vld [vmem:[#allocation8 + $0x638] sm:$0xff]
        %v5355 = vld [vmem:[#allocation8 + $0x640] sm:$0xff]
        %v5356 = vld [vmem:[#allocation8 + $0x648] sm:$0xff]
        %v5357 = vld [vmem:[#allocation8 + $0x650] sm:$0xff]
        %v5358 = vld [vmem:[#allocation8 + $0x658] sm:$0xff]
        %v5359 = vld [vmem:[#allocation8 + $0x660] sm:$0xff]
        %v5360 = vld [vmem:[#allocation8 + $0x668] sm:$0xff]
        %v5361 = vld [vmem:[#allocation8 + $0x670] sm:$0xff]
        %v5362 = vld [vmem:[#allocation8 + $0x678] sm:$0xff]
        %v5363 = vld [vmem:[#allocation8 + $0x680] sm:$0xff]
        %v5364 = vld [vmem:[#allocation8 + $0x688] sm:$0xff]
        %v5365 = vld [vmem:[#allocation8 + $0x690] sm:$0xff]
        %v5366 = vld [vmem:[#allocation8 + $0x698] sm:$0xff]
        %v5367 = vld [vmem:[#allocation8 + $0x6a0] sm:$0xff]
        %v5368 = vld [vmem:[#allocation8 + $0x6a8] sm:$0xff]
        %v5369 = vld [vmem:[#allocation8 + $0x6b0] sm:$0xff]
        %v5370 = vld [vmem:[#allocation8 + $0x6b8] sm:$0xff]
        %v5371 = vld [vmem:[#allocation8 + $0x6c0] sm:$0xff]
        %v5372 = vld [vmem:[#allocation8 + $0x6c8] sm:$0xff]
        %v5373 = vld [vmem:[#allocation8 + $0x6d0] sm:$0xff]
        %v5374 = vld [vmem:[#allocation8 + $0x6d8] sm:$0xff]
        %v5375 = vld [vmem:[#allocation8 + $0x6e0] sm:$0xff]
        %v5376 = vld [vmem:[#allocation8 + $0x6e8] sm:$0xff]
        %v5377 = vld [vmem:[#allocation8 + $0x6f0] sm:$0xff]
        %v5378 = vld [vmem:[#allocation8 + $0x6f8] sm:$0xff]
        %v5379 = vld [vmem:[#allocation8 + $0x700] sm:$0xff]
        %v5380 = vld [vmem:[#allocation8 + $0x708] sm:$0xff]
        %v5381 = vld [vmem:[#allocation8 + $0x710] sm:$0xff]
        %v5382 = vld [vmem:[#allocation8 + $0x718] sm:$0xff]
        %v5383 = vld [vmem:[#allocation8 + $0x720] sm:$0xff]
        %v5384 = vld [vmem:[#allocation8 + $0x728] sm:$0xff]
        %v5385 = vld [vmem:[#allocation8 + $0x730] sm:$0xff]
        %v5386 = vld [vmem:[#allocation8 + $0x738] sm:$0xff]
        %v5387 = vld [vmem:[#allocation8 + $0x740] sm:$0xff]
        %v5388 = vld [vmem:[#allocation8 + $0x748] sm:$0xff]
        %v5389 = vld [vmem:[#allocation8 + $0x750] sm:$0xff]
        %v5390 = vld [vmem:[#allocation8 + $0x758] sm:$0xff]
        %v5391 = vld [vmem:[#allocation8 + $0x760] sm:$0xff]
        %v5392 = vld [vmem:[#allocation8 + $0x768] sm:$0xff]
        %v5393 = vld [vmem:[#allocation8 + $0x770] sm:$0xff]
        %v5394 = vld [vmem:[#allocation8 + $0x778] sm:$0xff]
        %v5395 = vld [vmem:[#allocation8 + $0x780] sm:$0xff]
        %v5396 = vld [vmem:[#allocation8 + $0x788] sm:$0xff]
        %v5397 = vld [vmem:[#allocation8 + $0x790] sm:$0xff]
        %v5398 = vld [vmem:[#allocation8 + $0x798] sm:$0xff]
        %v5399 = vld [vmem:[#allocation8 + $0x7a0] sm:$0xff]
        %v5400 = vld [vmem:[#allocation8 + $0x7a8] sm:$0xff]
        %v5401 = vld [vmem:[#allocation8 + $0x7b0] sm:$0xff]
        %v5402 = vld [vmem:[#allocation8 + $0x7b8] sm:$0xff]
        %v5403 = vld [vmem:[#allocation8 + $0x7c0] sm:$0xff]
        %v5404 = vld [vmem:[#allocation8 + $0x7c8] sm:$0xff]
        %v5405 = vld [vmem:[#allocation8 + $0x7d0] sm:$0xff]
        %v5406 = vld [vmem:[#allocation8 + $0x7d8] sm:$0xff]
        %v5407 = vld [vmem:[#allocation8 + $0x7e0] sm:$0xff]
        %v5408 = vld [vmem:[#allocation8 + $0x7e8] sm:$0xff]
        %v5409 = vld [vmem:[#allocation8 + $0x7f0] sm:$0xff]
        %v5410 = vld [vmem:[#allocation8 + $0x7f8] sm:$0xff]
        %v5411 = vld [vmem:[#allocation8 + $0x800] sm:$0xff]
        %v5412 = vld [vmem:[#allocation8 + $0x808] sm:$0xff]
        %v5413 = vld [vmem:[#allocation8 + $0x810] sm:$0xff]
        %v5414 = vld [vmem:[#allocation8 + $0x818] sm:$0xff]
        %v5415 = vld [vmem:[#allocation8 + $0x820] sm:$0xff]
        %v5416 = vld [vmem:[#allocation8 + $0x828] sm:$0xff]
        %v5417 = vld [vmem:[#allocation8 + $0x830] sm:$0xff]
        %v5418 = vld [vmem:[#allocation8 + $0x838] sm:$0xff]
        %v5419 = vld [vmem:[#allocation8 + $0x840] sm:$0xff]
        %v5420 = vld [vmem:[#allocation8 + $0x848] sm:$0xff]
        %v5421 = vld [vmem:[#allocation8 + $0x850] sm:$0xff]
        %v5422 = vld [vmem:[#allocation8 + $0x858] sm:$0xff]
        %v5423 = vld [vmem:[#allocation8 + $0x860] sm:$0xff]
        %v5424 = vld [vmem:[#allocation8 + $0x868] sm:$0xff]
        %v5425 = vld [vmem:[#allocation8 + $0x870] sm:$0xff]
        %v5426 = vld [vmem:[#allocation8 + $0x878] sm:$0xff]
        %v5427 = vld [vmem:[#allocation8 + $0x880] sm:$0xff]
        %v5428 = vld [vmem:[#allocation8 + $0x888] sm:$0xff]
        %v5429 = vld [vmem:[#allocation8 + $0x890] sm:$0xff]
        %v5430 = vld [vmem:[#allocation8 + $0x898] sm:$0xff]
        %v5431 = vld [vmem:[#allocation8 + $0x8a0] sm:$0xff]
        %v5432 = vld [vmem:[#allocation8 + $0x8a8] sm:$0xff]
        %v5433 = vld [vmem:[#allocation8 + $0x8b0] sm:$0xff]
        %v5434 = vld [vmem:[#allocation8 + $0x8b8] sm:$0xff]
        %v5435 = vld [vmem:[#allocation8 + $0x8c0] sm:$0xff]
        %v5436 = vld [vmem:[#allocation8 + $0x8c8] sm:$0xff]
        %v5437 = vld [vmem:[#allocation8 + $0x8d0] sm:$0xff]
        %v5438 = vld [vmem:[#allocation8 + $0x8d8] sm:$0xff]
        %v5439 = vld [vmem:[#allocation8 + $0x8e0] sm:$0xff]
        %v5440 = vld [vmem:[#allocation8 + $0x8e8] sm:$0xff]
        %v5441 = vld [vmem:[#allocation8 + $0x8f0] sm:$0xff]
        %v5442 = vld [vmem:[#allocation8 + $0x8f8] sm:$0xff]
        %v5443 = vld [vmem:[#allocation10] sm:$0x3f]
        %v5445 = vperm.slane %v5443, 0
        %v5446 = vperm.slane %v5443, 1
        %v5447 = vperm.slane %v5443, 2
        %v5448 = vperm.slane %v5443, 3
        %v5449 = vperm.slane %v5443, 4
        %v5450 = vperm.slane %v5443, 5
        %v5505 = vunpack.c.l.b16 %v5107
        %v5506 = vunpack.c.l.b16 %v5108
        %v5507 = vunpack.c.l.b16 %v5109
        %v5508 = vunpack.c.l.b16 %v5110
        %v5509 = vunpack.c.l.b16 %v5111
        %v5510 = vunpack.c.l.b16 %v5112
        %v5511 = vunpack.c.l.b16 %v5113
        %v5512 = vunpack.c.l.b16 %v5114
        %v5513 = vunpack.c.l.b16 %v5115
        %v5514 = vunpack.c.l.b16 %v5116
        %v5515 = vunpack.c.l.b16 %v5117
        %v5516 = vunpack.c.l.b16 %v5118
        %v5517 = vunpack.c.l.b16 %v5119
        %v5518 = vunpack.c.l.b16 %v5120
        %v5519 = vunpack.c.l.b16 %v5121
        %v5520 = vunpack.c.l.b16 %v5122
        %v5521 = vunpack.c.l.b16 %v5123
        %v5522 = vunpack.c.l.b16 %v5124
        %v5523 = vunpack.c.l.b16 %v5125
        %v5524 = vunpack.c.l.b16 %v5126
        %v5525 = vunpack.c.l.b16 %v5127
        %v5526 = vunpack.c.l.b16 %v5128
        %v5527 = vunpack.c.l.b16 %v5129
        %v5528 = vunpack.c.l.b16 %v5130
        %v5529 = vunpack.c.l.b16 %v5131
        %v5530 = vunpack.c.l.b16 %v5132
        %v5531 = vunpack.c.l.b16 %v5133
        %v5532 = vunpack.c.l.b16 %v5134
        %v5533 = vunpack.c.l.b16 %v5135
        %v5534 = vunpack.c.l.b16 %v5136
        %v5535 = vunpack.c.l.b16 %v5137
        %v5536 = vunpack.c.l.b16 %v5138
        %v5537 = vunpack.c.l.b16 %v5139
        %v5538 = vunpack.c.l.b16 %v5140
        %v5539 = vunpack.c.l.b16 %v5141
        %v5540 = vunpack.c.l.b16 %v5142
        %v5541 = vunpack.c.l.b16 %v5143
        %v5542 = vunpack.c.l.b16 %v5144
        %v5543 = vunpack.c.l.b16 %v5145
        %v5544 = vunpack.c.l.b16 %v5146
        %v5545 = vunpack.c.l.b16 %v5147
        %v5546 = vunpack.c.l.b16 %v5148
        %v5547 = vunpack.c.l.b16 %v5149
        %v5548 = vunpack.c.l.b16 %v5150
        %v5549 = vunpack.c.l.b16 %v5151
        %v5550 = vunpack.c.l.b16 %v5152
        %v5551 = vunpack.c.l.b16 %v5153
        %v5552 = vunpack.c.l.b16 %v5154
        %vm5553 = vcmask 1041409
        %v5554 = vsel %vm5553, %v5511, %v5505
        %vm5555 = vcmask 1042434
        %v5556 = vsel %vm5555, %v5517, %v5554
        %vm5557 = vcmask 1043459
        %v5558 = vsel %vm5557, %v5523, %v5556
        %vm5559 = vcmask 1044484
        %v5560 = vsel %vm5559, %v5529, %v5558
        %vm5561 = vcmask 1045509
        %v5562 = vsel %vm5561, %v5535, %v5560
        %vm5563 = vcmask 1046534
        %v5564 = vsel %vm5563, %v5541, %v5562
        %vm5565 = vcmask 1047559
        %v5566 = vsel %vm5565, %v5547, %v5564
        %v5567 = vsel %vm5553, %v5512, %v5506
        %v5568 = vsel %vm5555, %v5518, %v5567
        %v5569 = vsel %vm5557, %v5524, %v5568
        %v5570 = vsel %vm5559, %v5530, %v5569
        %v5571 = vsel %vm5561, %v5536, %v5570
        %v5572 = vsel %vm5563, %v5542, %v5571
        %v5573 = vsel %vm5565, %v5548, %v5572
        %v5574 = vsel %vm5553, %v5513, %v5507
        %v5575 = vsel %vm5555, %v5519, %v5574
        %v5576 = vsel %vm5557, %v5525, %v5575
        %v5577 = vsel %vm5559, %v5531, %v5576
        %v5578 = vsel %vm5561, %v5537, %v5577
        %v5579 = vsel %vm5563, %v5543, %v5578
        %v5580 = vsel %vm5565, %v5549, %v5579
        %v5581 = vsel %vm5553, %v5514, %v5508
        %v5582 = vsel %vm5555, %v5520, %v5581
        %v5583 = vsel %vm5557, %v5526, %v5582
        %v5584 = vsel %vm5559, %v5532, %v5583
        %v5585 = vsel %vm5561, %v5538, %v5584
        %v5586 = vsel %vm5563, %v5544, %v5585
        %v5587 = vsel %vm5565, %v5550, %v5586
        %v5588 = vsel %vm5553, %v5515, %v5509
        %v5589 = vsel %vm5555, %v5521, %v5588
        %v5590 = vsel %vm5557, %v5527, %v5589
        %v5591 = vsel %vm5559, %v5533, %v5590
        %v5592 = vsel %vm5561, %v5539, %v5591
        %v5593 = vsel %vm5563, %v5545, %v5592
        %v5594 = vsel %vm5565, %v5551, %v5593
        %v5595 = vsel %vm5553, %v5516, %v5510
        %v5596 = vsel %vm5555, %v5522, %v5595
        %v5597 = vsel %vm5557, %v5528, %v5596
        %v5598 = vsel %vm5559, %v5534, %v5597
        %v5599 = vsel %vm5561, %v5540, %v5598
        %v5600 = vsel %vm5563, %v5546, %v5599
        %v5601 = vsel %vm5565, %v5552, %v5600
        %v5602 = vpack.c.b16 %v5566, %v5566
        %v5603 = vpack.c.b16 %v5573, %v5573
        %v5604 = vpack.c.b16 %v5580, %v5580
        %v5605 = vpack.c.b16 %v5587, %v5587
        %v5606 = vpack.c.b16 %v5594, %v5594
        %v5607 = vpack.c.b16 %v5601, %v5601
        %v5902 = vunpack.c.l.b16 %v5155
        %v5903 = vunpack.c.h.b16 %v5155
        %v5904 = vunpack.c.l.b16 %v5156
        %v5905 = vunpack.c.h.b16 %v5156
        %v5906 = vunpack.c.l.b16 %v5157
        %v5907 = vunpack.c.h.b16 %v5157
        %v5908 = vunpack.c.l.b16 %v5158
        %v5909 = vunpack.c.h.b16 %v5158
        %v5910 = vunpack.c.l.b16 %v5159
        %v5911 = vunpack.c.h.b16 %v5159
        %v5912 = vunpack.c.l.b16 %v5160
        %v5913 = vunpack.c.h.b16 %v5160
        %v5914 = vunpack.c.l.b16 %v5161
        %v5915 = vunpack.c.h.b16 %v5161
        %v5916 = vunpack.c.l.b16 %v5162
        %v5917 = vunpack.c.h.b16 %v5162
        %v5918 = vunpack.c.l.b16 %v5163
        %v5919 = vunpack.c.h.b16 %v5163
        %v5920 = vunpack.c.l.b16 %v5164
        %v5921 = vunpack.c.h.b16 %v5164
        %v5922 = vunpack.c.l.b16 %v5165
        %v5923 = vunpack.c.h.b16 %v5165
        %v5924 = vunpack.c.l.b16 %v5166
        %v5925 = vunpack.c.h.b16 %v5166
        %v5926 = vunpack.c.l.b16 %v5167
        %v5927 = vunpack.c.h.b16 %v5167
        %v5928 = vunpack.c.l.b16 %v5168
        %v5929 = vunpack.c.h.b16 %v5168
        %v5930 = vunpack.c.l.b16 %v5169
        %v5931 = vunpack.c.h.b16 %v5169
        %v5932 = vunpack.c.l.b16 %v5170
        %v5933 = vunpack.c.h.b16 %v5170
        %v5934 = vunpack.c.l.b16 %v5171
        %v5935 = vunpack.c.h.b16 %v5171
        %v5936 = vunpack.c.l.b16 %v5172
        %v5937 = vunpack.c.h.b16 %v5172
        %v5938 = vunpack.c.l.b16 %v5173
        %v5939 = vunpack.c.h.b16 %v5173
        %v5940 = vunpack.c.l.b16 %v5174
        %v5941 = vunpack.c.h.b16 %v5174
        %v5942 = vunpack.c.l.b16 %v5175
        %v5943 = vunpack.c.h.b16 %v5175
        %v5944 = vunpack.c.l.b16 %v5176
        %v5945 = vunpack.c.h.b16 %v5176
        %v5946 = vunpack.c.l.b16 %v5177
        %v5947 = vunpack.c.h.b16 %v5177
        %v5948 = vunpack.c.l.b16 %v5178
        %v5949 = vunpack.c.h.b16 %v5178
        %v5950 = vunpack.c.l.b16 %v5179
        %v5951 = vunpack.c.h.b16 %v5179
        %v5952 = vunpack.c.l.b16 %v5180
        %v5953 = vunpack.c.h.b16 %v5180
        %v5954 = vunpack.c.l.b16 %v5181
        %v5955 = vunpack.c.h.b16 %v5181
        %v5956 = vunpack.c.l.b16 %v5182
        %v5957 = vunpack.c.h.b16 %v5182
        %v5958 = vunpack.c.l.b16 %v5183
        %v5959 = vunpack.c.h.b16 %v5183
        %v5960 = vunpack.c.l.b16 %v5184
        %v5961 = vunpack.c.h.b16 %v5184
        %v5962 = vunpack.c.l.b16 %v5185
        %v5963 = vunpack.c.h.b16 %v5185
        %v5964 = vunpack.c.l.b16 %v5186
        %v5965 = vunpack.c.h.b16 %v5186
        %v5966 = vunpack.c.l.b16 %v5187
        %v5967 = vunpack.c.h.b16 %v5187
        %v5968 = vunpack.c.l.b16 %v5188
        %v5969 = vunpack.c.h.b16 %v5188
        %v5970 = vunpack.c.l.b16 %v5189
        %v5971 = vunpack.c.h.b16 %v5189
        %v5972 = vunpack.c.l.b16 %v5190
        %v5973 = vunpack.c.h.b16 %v5190
        %v5974 = vunpack.c.l.b16 %v5191
        %v5975 = vunpack.c.h.b16 %v5191
        %v5976 = vunpack.c.l.b16 %v5192
        %v5977 = vunpack.c.h.b16 %v5192
        %v5978 = vunpack.c.l.b16 %v5193
        %v5979 = vunpack.c.h.b16 %v5193
        %v5980 = vunpack.c.l.b16 %v5194
        %v5981 = vunpack.c.h.b16 %v5194
        %v5982 = vunpack.c.l.b16 %v5195
        %v5983 = vunpack.c.h.b16 %v5195
        %v5984 = vunpack.c.l.b16 %v5196
        %v5985 = vunpack.c.h.b16 %v5196
        %v5986 = vunpack.c.l.b16 %v5197
        %v5987 = vunpack.c.h.b16 %v5197
        %v5988 = vunpack.c.l.b16 %v5198
        %v5989 = vunpack.c.h.b16 %v5198
        %v5990 = vunpack.c.l.b16 %v5199
        %v5991 = vunpack.c.h.b16 %v5199
        %v5992 = vunpack.c.l.b16 %v5200
        %v5993 = vunpack.c.h.b16 %v5200
        %v5994 = vunpack.c.l.b16 %v5201
        %v5995 = vunpack.c.h.b16 %v5201
        %v5996 = vunpack.c.l.b16 %v5202
        %v5997 = vunpack.c.h.b16 %v5202
        %v5998 = vunpack.c.l.b16 %v5203
        %v5999 = vunpack.c.h.b16 %v5203
        %v6000 = vunpack.c.l.b16 %v5204
        %v6001 = vunpack.c.h.b16 %v5204
        %v6002 = vunpack.c.l.b16 %v5205
        %v6003 = vunpack.c.h.b16 %v5205
        %v6004 = vunpack.c.l.b16 %v5206
        %v6005 = vunpack.c.h.b16 %v5206
        %v6006 = vunpack.c.l.b16 %v5207
        %v6007 = vunpack.c.h.b16 %v5207
        %v6008 = vunpack.c.l.b16 %v5208
        %v6009 = vunpack.c.h.b16 %v5208
        %v6010 = vunpack.c.l.b16 %v5209
        %v6011 = vunpack.c.h.b16 %v5209
        %v6012 = vunpack.c.l.b16 %v5210
        %v6013 = vunpack.c.h.b16 %v5210
        %v6014 = vunpack.c.l.b16 %v5211
        %v6015 = vunpack.c.h.b16 %v5211
        %v6016 = vunpack.c.l.b16 %v5212
        %v6017 = vunpack.c.h.b16 %v5212
        %v6018 = vunpack.c.l.b16 %v5213
        %v6019 = vunpack.c.h.b16 %v5213
        %v6020 = vunpack.c.l.b16 %v5214
        %v6021 = vunpack.c.h.b16 %v5214
        %v6022 = vunpack.c.l.b16 %v5215
        %v6023 = vunpack.c.h.b16 %v5215
        %v6024 = vunpack.c.l.b16 %v5216
        %v6025 = vunpack.c.h.b16 %v5216
        %v6026 = vunpack.c.l.b16 %v5217
        %v6027 = vunpack.c.h.b16 %v5217
        %v6028 = vunpack.c.l.b16 %v5218
        %v6029 = vunpack.c.h.b16 %v5218
        %v6030 = vunpack.c.l.b16 %v5219
        %v6031 = vunpack.c.h.b16 %v5219
        %v6032 = vunpack.c.l.b16 %v5220
        %v6033 = vunpack.c.h.b16 %v5220
        %v6034 = vunpack.c.l.b16 %v5221
        %v6035 = vunpack.c.h.b16 %v5221
        %v6036 = vunpack.c.l.b16 %v5222
        %v6037 = vunpack.c.h.b16 %v5222
        %v6038 = vunpack.c.l.b16 %v5223
        %v6039 = vunpack.c.h.b16 %v5223
        %v6040 = vunpack.c.l.b16 %v5224
        %v6041 = vunpack.c.h.b16 %v5224
        %v6042 = vunpack.c.l.b16 %v5225
        %v6043 = vunpack.c.h.b16 %v5225
        %v6044 = vunpack.c.l.b16 %v5226
        %v6045 = vunpack.c.h.b16 %v5226
        %v6046 = vunpack.c.l.b16 %v5227
        %v6047 = vunpack.c.h.b16 %v5227
        %v6048 = vunpack.c.l.b16 %v5228
        %v6049 = vunpack.c.h.b16 %v5228
        %v6050 = vunpack.c.l.b16 %v5229
        %v6051 = vunpack.c.h.b16 %v5229
        %v6052 = vunpack.c.l.b16 %v5230
        %v6053 = vunpack.c.h.b16 %v5230
        %v6054 = vunpack.c.l.b16 %v5231
        %v6055 = vunpack.c.h.b16 %v5231
        %v6056 = vunpack.c.l.b16 %v5232
        %v6057 = vunpack.c.h.b16 %v5232
        %v6058 = vunpack.c.l.b16 %v5233
        %v6059 = vunpack.c.h.b16 %v5233
        %v6060 = vunpack.c.l.b16 %v5234
        %v6061 = vunpack.c.h.b16 %v5234
        %v6062 = vunpack.c.l.b16 %v5235
        %v6063 = vunpack.c.h.b16 %v5235
        %v6064 = vunpack.c.l.b16 %v5236
        %v6065 = vunpack.c.h.b16 %v5236
        %v6066 = vunpack.c.l.b16 %v5237
        %v6067 = vunpack.c.h.b16 %v5237
        %v6068 = vunpack.c.l.b16 %v5238
        %v6069 = vunpack.c.h.b16 %v5238
        %v6070 = vunpack.c.l.b16 %v5239
        %v6071 = vunpack.c.h.b16 %v5239
        %v6072 = vunpack.c.l.b16 %v5240
        %v6073 = vunpack.c.h.b16 %v5240
        %v6074 = vunpack.c.l.b16 %v5241
        %v6075 = vunpack.c.h.b16 %v5241
        %v6076 = vunpack.c.l.b16 %v5242
        %v6077 = vunpack.c.h.b16 %v5242
        %v6078 = vunpack.c.l.b16 %v5243
        %v6079 = vunpack.c.h.b16 %v5243
        %v6080 = vunpack.c.l.b16 %v5244
        %v6081 = vunpack.c.h.b16 %v5244
        %v6082 = vunpack.c.l.b16 %v5245
        %v6083 = vunpack.c.h.b16 %v5245
        %v6084 = vunpack.c.l.b16 %v5246
        %v6085 = vunpack.c.h.b16 %v5246
        %v6086 = vunpack.c.l.b16 %v5247
        %v6087 = vunpack.c.h.b16 %v5247
        %v6088 = vunpack.c.l.b16 %v5248
        %v6089 = vunpack.c.h.b16 %v5248
        %v6090 = vunpack.c.l.b16 %v5249
        %v6091 = vunpack.c.h.b16 %v5249
        %v6092 = vunpack.c.l.b16 %v5250
        %v6093 = vunpack.c.h.b16 %v5250
        %v6094 = vunpack.c.l.b16 %v5251
        %v6095 = vunpack.c.h.b16 %v5251
        %v6096 = vunpack.c.l.b16 %v5252
        %v6097 = vunpack.c.h.b16 %v5252
        %v6098 = vunpack.c.l.b16 %v5253
        %v6099 = vunpack.c.h.b16 %v5253
        %v6100 = vunpack.c.l.b16 %v5254
        %v6101 = vunpack.c.h.b16 %v5254
        %v6102 = vunpack.c.l.b16 %v5255
        %v6103 = vunpack.c.h.b16 %v5255
        %v6104 = vunpack.c.l.b16 %v5256
        %v6105 = vunpack.c.h.b16 %v5256
        %v6106 = vunpack.c.l.b16 %v5257
        %v6107 = vunpack.c.h.b16 %v5257
        %v6108 = vunpack.c.l.b16 %v5258
        %v6109 = vunpack.c.h.b16 %v5258
        %v6110 = vunpack.c.l.b16 %v5259
        %v6111 = vunpack.c.h.b16 %v5259
        %v6112 = vunpack.c.l.b16 %v5260
        %v6113 = vunpack.c.h.b16 %v5260
        %v6114 = vunpack.c.l.b16 %v5261
        %v6115 = vunpack.c.h.b16 %v5261
        %v6116 = vunpack.c.l.b16 %v5262
        %v6117 = vunpack.c.h.b16 %v5262
        %v6118 = vunpack.c.l.b16 %v5263
        %v6119 = vunpack.c.h.b16 %v5263
        %v6120 = vunpack.c.l.b16 %v5264
        %v6121 = vunpack.c.h.b16 %v5264
        %v6122 = vunpack.c.l.b16 %v5265
        %v6123 = vunpack.c.h.b16 %v5265
        %v6124 = vunpack.c.l.b16 %v5266
        %v6125 = vunpack.c.h.b16 %v5266
        %v6126 = vunpack.c.l.b16 %v5267
        %v6127 = vunpack.c.h.b16 %v5267
        %v6128 = vunpack.c.l.b16 %v5268
        %v6129 = vunpack.c.h.b16 %v5268
        %v6130 = vunpack.c.l.b16 %v5269
        %v6131 = vunpack.c.h.b16 %v5269
        %v6132 = vunpack.c.l.b16 %v5270
        %v6133 = vunpack.c.h.b16 %v5270
        %v6134 = vunpack.c.l.b16 %v5271
        %v6135 = vunpack.c.h.b16 %v5271
        %v6136 = vunpack.c.l.b16 %v5272
        %v6137 = vunpack.c.h.b16 %v5272
        %v6138 = vunpack.c.l.b16 %v5273
        %v6139 = vunpack.c.h.b16 %v5273
        %v6140 = vunpack.c.l.b16 %v5274
        %v6141 = vunpack.c.h.b16 %v5274
        %v6142 = vunpack.c.l.b16 %v5275
        %v6143 = vunpack.c.h.b16 %v5275
        %v6144 = vunpack.c.l.b16 %v5276
        %v6145 = vunpack.c.h.b16 %v5276
        %v6146 = vunpack.c.l.b16 %v5277
        %v6147 = vunpack.c.h.b16 %v5277
        %v6148 = vunpack.c.l.b16 %v5278
        %v6149 = vunpack.c.h.b16 %v5278
        %v6150 = vunpack.c.l.b16 %v5279
        %v6151 = vunpack.c.h.b16 %v5279
        %v6152 = vunpack.c.l.b16 %v5280
        %v6153 = vunpack.c.h.b16 %v5280
        %v6154 = vunpack.c.l.b16 %v5281
        %v6155 = vunpack.c.h.b16 %v5281
        %v6156 = vunpack.c.l.b16 %v5282
        %v6157 = vunpack.c.h.b16 %v5282
        %v6158 = vunpack.c.l.b16 %v5283
        %v6159 = vunpack.c.h.b16 %v5283
        %v6160 = vunpack.c.l.b16 %v5284
        %v6161 = vunpack.c.h.b16 %v5284
        %v6162 = vunpack.c.l.b16 %v5285
        %v6163 = vunpack.c.h.b16 %v5285
        %v6164 = vunpack.c.l.b16 %v5286
        %v6165 = vunpack.c.h.b16 %v5286
        %v6166 = vunpack.c.l.b16 %v5287
        %v6167 = vunpack.c.h.b16 %v5287
        %v6168 = vunpack.c.l.b16 %v5288
        %v6169 = vunpack.c.h.b16 %v5288
        %v6170 = vunpack.c.l.b16 %v5289
        %v6171 = vunpack.c.h.b16 %v5289
        %v6172 = vunpack.c.l.b16 %v5290
        %v6173 = vunpack.c.h.b16 %v5290
        %v6174 = vunpack.c.l.b16 %v5291
        %v6175 = vunpack.c.h.b16 %v5291
        %v6176 = vunpack.c.l.b16 %v5292
        %v6177 = vunpack.c.h.b16 %v5292
        %v6178 = vunpack.c.l.b16 %v5293
        %v6179 = vunpack.c.h.b16 %v5293
        %v6180 = vunpack.c.l.b16 %v5294
        %v6181 = vunpack.c.h.b16 %v5294
        %v6182 = vunpack.c.l.b16 %v5295
        %v6183 = vunpack.c.h.b16 %v5295
        %v6184 = vunpack.c.l.b16 %v5296
        %v6185 = vunpack.c.h.b16 %v5296
        %v6186 = vunpack.c.l.b16 %v5297
        %v6187 = vunpack.c.h.b16 %v5297
        %v6188 = vunpack.c.l.b16 %v5298
        %v6189 = vunpack.c.h.b16 %v5298
        %v6190 = vunpack.c.l.b16 %v5299
        %v6191 = vunpack.c.h.b16 %v5299
        %v6192 = vunpack.c.l.b16 %v5300
        %v6193 = vunpack.c.h.b16 %v5300
        %v6194 = vunpack.c.l.b16 %v5301
        %v6195 = vunpack.c.h.b16 %v5301
        %v6196 = vunpack.c.l.b16 %v5302
        %v6197 = vunpack.c.h.b16 %v5302
        %v6198 = vunpack.c.l.b16 %v5303
        %v6199 = vunpack.c.h.b16 %v5303
        %v6200 = vunpack.c.l.b16 %v5304
        %v6201 = vunpack.c.h.b16 %v5304
        %v6202 = vunpack.c.l.b16 %v5305
        %v6203 = vunpack.c.h.b16 %v5305
        %v6204 = vunpack.c.l.b16 %v5306
        %v6205 = vunpack.c.h.b16 %v5306
        %v6206 = vunpack.c.l.b16 %v5307
        %v6207 = vunpack.c.h.b16 %v5307
        %v6208 = vunpack.c.l.b16 %v5308
        %v6209 = vunpack.c.h.b16 %v5308
        %v6210 = vunpack.c.l.b16 %v5309
        %v6211 = vunpack.c.h.b16 %v5309
        %v6212 = vunpack.c.l.b16 %v5310
        %v6213 = vunpack.c.h.b16 %v5310
        %v6214 = vunpack.c.l.b16 %v5311
        %v6215 = vunpack.c.h.b16 %v5311
        %v6216 = vunpack.c.l.b16 %v5312
        %v6217 = vunpack.c.h.b16 %v5312
        %v6218 = vunpack.c.l.b16 %v5313
        %v6219 = vunpack.c.h.b16 %v5313
        %v6220 = vunpack.c.l.b16 %v5314
        %v6221 = vunpack.c.h.b16 %v5314
        %v6222 = vunpack.c.l.b16 %v5315
        %v6223 = vunpack.c.h.b16 %v5315
        %v6224 = vunpack.c.l.b16 %v5316
        %v6225 = vunpack.c.h.b16 %v5316
        %v6226 = vunpack.c.l.b16 %v5317
        %v6227 = vunpack.c.h.b16 %v5317
        %v6228 = vunpack.c.l.b16 %v5318
        %v6229 = vunpack.c.h.b16 %v5318
        %v6230 = vunpack.c.l.b16 %v5319
        %v6231 = vunpack.c.h.b16 %v5319
        %v6232 = vunpack.c.l.b16 %v5320
        %v6233 = vunpack.c.h.b16 %v5320
        %v6234 = vunpack.c.l.b16 %v5321
        %v6235 = vunpack.c.h.b16 %v5321
        %v6236 = vunpack.c.l.b16 %v5322
        %v6237 = vunpack.c.h.b16 %v5322
        %v6238 = vunpack.c.l.b16 %v5323
        %v6239 = vunpack.c.h.b16 %v5323
        %v6240 = vunpack.c.l.b16 %v5324
        %v6241 = vunpack.c.h.b16 %v5324
        %v6242 = vunpack.c.l.b16 %v5325
        %v6243 = vunpack.c.h.b16 %v5325
        %v6244 = vunpack.c.l.b16 %v5326
        %v6245 = vunpack.c.h.b16 %v5326
        %v6246 = vunpack.c.l.b16 %v5327
        %v6247 = vunpack.c.h.b16 %v5327
        %v6248 = vunpack.c.l.b16 %v5328
        %v6249 = vunpack.c.h.b16 %v5328
        %v6250 = vunpack.c.l.b16 %v5329
        %v6251 = vunpack.c.h.b16 %v5329
        %v6252 = vunpack.c.l.b16 %v5330
        %v6253 = vunpack.c.h.b16 %v5330
        %v6254 = vunpack.c.l.b16 %v5331
        %v6255 = vunpack.c.h.b16 %v5331
        %v6256 = vunpack.c.l.b16 %v5332
        %v6257 = vunpack.c.h.b16 %v5332
        %v6258 = vunpack.c.l.b16 %v5333
        %v6259 = vunpack.c.h.b16 %v5333
        %v6260 = vunpack.c.l.b16 %v5334
        %v6261 = vunpack.c.h.b16 %v5334
        %v6262 = vunpack.c.l.b16 %v5335
        %v6263 = vunpack.c.h.b16 %v5335
        %v6264 = vunpack.c.l.b16 %v5336
        %v6265 = vunpack.c.h.b16 %v5336
        %v6266 = vunpack.c.l.b16 %v5337
        %v6267 = vunpack.c.h.b16 %v5337
        %v6268 = vunpack.c.l.b16 %v5338
        %v6269 = vunpack.c.h.b16 %v5338
        %v6270 = vunpack.c.l.b16 %v5339
        %v6271 = vunpack.c.h.b16 %v5339
        %v6272 = vunpack.c.l.b16 %v5340
        %v6273 = vunpack.c.h.b16 %v5340
        %v6274 = vunpack.c.l.b16 %v5341
        %v6275 = vunpack.c.h.b16 %v5341
        %v6276 = vunpack.c.l.b16 %v5342
        %v6277 = vunpack.c.h.b16 %v5342
        %v6278 = vunpack.c.l.b16 %v5343
        %v6279 = vunpack.c.h.b16 %v5343
        %v6280 = vunpack.c.l.b16 %v5344
        %v6281 = vunpack.c.h.b16 %v5344
        %v6282 = vunpack.c.l.b16 %v5345
        %v6283 = vunpack.c.h.b16 %v5345
        %v6284 = vunpack.c.l.b16 %v5346
        %v6285 = vunpack.c.h.b16 %v5346
        %v6286 = vunpack.c.l.b16 %v5347
        %v6287 = vunpack.c.h.b16 %v5347
        %v6288 = vunpack.c.l.b16 %v5348
        %v6289 = vunpack.c.h.b16 %v5348
        %v6290 = vunpack.c.l.b16 %v5349
        %v6291 = vunpack.c.h.b16 %v5349
        %v6292 = vunpack.c.l.b16 %v5350
        %v6293 = vunpack.c.h.b16 %v5350
        %v6294 = vunpack.c.l.b16 %v5351
        %v6295 = vunpack.c.h.b16 %v5351
        %v6296 = vunpack.c.l.b16 %v5352
        %v6297 = vunpack.c.h.b16 %v5352
        %v6298 = vunpack.c.l.b16 %v5353
        %v6299 = vunpack.c.h.b16 %v5353
        %v6300 = vunpack.c.l.b16 %v5354
        %v6301 = vunpack.c.h.b16 %v5354
        %v6302 = vunpack.c.l.b16 %v5355
        %v6303 = vunpack.c.h.b16 %v5355
        %v6304 = vunpack.c.l.b16 %v5356
        %v6305 = vunpack.c.h.b16 %v5356
        %v6306 = vunpack.c.l.b16 %v5357
        %v6307 = vunpack.c.h.b16 %v5357
        %v6308 = vunpack.c.l.b16 %v5358
        %v6309 = vunpack.c.h.b16 %v5358
        %v6310 = vunpack.c.l.b16 %v5359
        %v6311 = vunpack.c.h.b16 %v5359
        %v6312 = vunpack.c.l.b16 %v5360
        %v6313 = vunpack.c.h.b16 %v5360
        %v6314 = vunpack.c.l.b16 %v5361
        %v6315 = vunpack.c.h.b16 %v5361
        %v6316 = vunpack.c.l.b16 %v5362
        %v6317 = vunpack.c.h.b16 %v5362
        %v6318 = vunpack.c.l.b16 %v5363
        %v6319 = vunpack.c.h.b16 %v5363
        %v6320 = vunpack.c.l.b16 %v5364
        %v6321 = vunpack.c.h.b16 %v5364
        %v6322 = vunpack.c.l.b16 %v5365
        %v6323 = vunpack.c.h.b16 %v5365
        %v6324 = vunpack.c.l.b16 %v5366
        %v6325 = vunpack.c.h.b16 %v5366
        %v6326 = vunpack.c.l.b16 %v5367
        %v6327 = vunpack.c.h.b16 %v5367
        %v6328 = vunpack.c.l.b16 %v5368
        %v6329 = vunpack.c.h.b16 %v5368
        %v6330 = vunpack.c.l.b16 %v5369
        %v6331 = vunpack.c.h.b16 %v5369
        %v6332 = vunpack.c.l.b16 %v5370
        %v6333 = vunpack.c.h.b16 %v5370
        %v6334 = vunpack.c.l.b16 %v5371
        %v6335 = vunpack.c.h.b16 %v5371
        %v6336 = vunpack.c.l.b16 %v5372
        %v6337 = vunpack.c.h.b16 %v5372
        %v6338 = vunpack.c.l.b16 %v5373
        %v6339 = vunpack.c.h.b16 %v5373
        %v6340 = vunpack.c.l.b16 %v5374
        %v6341 = vunpack.c.h.b16 %v5374
        %v6342 = vunpack.c.l.b16 %v5375
        %v6343 = vunpack.c.h.b16 %v5375
        %v6344 = vunpack.c.l.b16 %v5376
        %v6345 = vunpack.c.h.b16 %v5376
        %v6346 = vunpack.c.l.b16 %v5377
        %v6347 = vunpack.c.h.b16 %v5377
        %v6348 = vunpack.c.l.b16 %v5378
        %v6349 = vunpack.c.h.b16 %v5378
        %v6350 = vunpack.c.l.b16 %v5379
        %v6351 = vunpack.c.h.b16 %v5379
        %v6352 = vunpack.c.l.b16 %v5380
        %v6353 = vunpack.c.h.b16 %v5380
        %v6354 = vunpack.c.l.b16 %v5381
        %v6355 = vunpack.c.h.b16 %v5381
        %v6356 = vunpack.c.l.b16 %v5382
        %v6357 = vunpack.c.h.b16 %v5382
        %v6358 = vunpack.c.l.b16 %v5383
        %v6359 = vunpack.c.h.b16 %v5383
        %v6360 = vunpack.c.l.b16 %v5384
        %v6361 = vunpack.c.h.b16 %v5384
        %v6362 = vunpack.c.l.b16 %v5385
        %v6363 = vunpack.c.h.b16 %v5385
        %v6364 = vunpack.c.l.b16 %v5386
        %v6365 = vunpack.c.h.b16 %v5386
        %v6366 = vunpack.c.l.b16 %v5387
        %v6367 = vunpack.c.h.b16 %v5387
        %v6368 = vunpack.c.l.b16 %v5388
        %v6369 = vunpack.c.h.b16 %v5388
        %v6370 = vunpack.c.l.b16 %v5389
        %v6371 = vunpack.c.h.b16 %v5389
        %v6372 = vunpack.c.l.b16 %v5390
        %v6373 = vunpack.c.h.b16 %v5390
        %v6374 = vunpack.c.l.b16 %v5391
        %v6375 = vunpack.c.h.b16 %v5391
        %v6376 = vunpack.c.l.b16 %v5392
        %v6377 = vunpack.c.h.b16 %v5392
        %v6378 = vunpack.c.l.b16 %v5393
        %v6379 = vunpack.c.h.b16 %v5393
        %v6380 = vunpack.c.l.b16 %v5394
        %v6381 = vunpack.c.h.b16 %v5394
        %v6382 = vunpack.c.l.b16 %v5395
        %v6383 = vunpack.c.h.b16 %v5395
        %v6384 = vunpack.c.l.b16 %v5396
        %v6385 = vunpack.c.h.b16 %v5396
        %v6386 = vunpack.c.l.b16 %v5397
        %v6387 = vunpack.c.h.b16 %v5397
        %v6388 = vunpack.c.l.b16 %v5398
        %v6389 = vunpack.c.h.b16 %v5398
        %v6390 = vunpack.c.l.b16 %v5399
        %v6391 = vunpack.c.h.b16 %v5399
        %v6392 = vunpack.c.l.b16 %v5400
        %v6393 = vunpack.c.h.b16 %v5400
        %v6394 = vunpack.c.l.b16 %v5401
        %v6395 = vunpack.c.h.b16 %v5401
        %v6396 = vunpack.c.l.b16 %v5402
        %v6397 = vunpack.c.h.b16 %v5402
        %v6398 = vunpack.c.l.b16 %v5403
        %v6399 = vunpack.c.h.b16 %v5403
        %v6400 = vunpack.c.l.b16 %v5404
        %v6401 = vunpack.c.h.b16 %v5404
        %v6402 = vunpack.c.l.b16 %v5405
        %v6403 = vunpack.c.h.b16 %v5405
        %v6404 = vunpack.c.l.b16 %v5406
        %v6405 = vunpack.c.h.b16 %v5406
        %v6406 = vunpack.c.l.b16 %v5407
        %v6407 = vunpack.c.h.b16 %v5407
        %v6408 = vunpack.c.l.b16 %v5408
        %v6409 = vunpack.c.h.b16 %v5408
        %v6410 = vunpack.c.l.b16 %v5409
        %v6411 = vunpack.c.h.b16 %v5409
        %v6412 = vunpack.c.l.b16 %v5410
        %v6413 = vunpack.c.h.b16 %v5410
        %v6414 = vunpack.c.l.b16 %v5411
        %v6415 = vunpack.c.h.b16 %v5411
        %v6416 = vunpack.c.l.b16 %v5412
        %v6417 = vunpack.c.h.b16 %v5412
        %v6418 = vunpack.c.l.b16 %v5413
        %v6419 = vunpack.c.h.b16 %v5413
        %v6420 = vunpack.c.l.b16 %v5414
        %v6421 = vunpack.c.h.b16 %v5414
        %v6422 = vunpack.c.l.b16 %v5415
        %v6423 = vunpack.c.h.b16 %v5415
        %v6424 = vunpack.c.l.b16 %v5416
        %v6425 = vunpack.c.h.b16 %v5416
        %v6426 = vunpack.c.l.b16 %v5417
        %v6427 = vunpack.c.h.b16 %v5417
        %v6428 = vunpack.c.l.b16 %v5418
        %v6429 = vunpack.c.h.b16 %v5418
        %v6430 = vunpack.c.l.b16 %v5419
        %v6431 = vunpack.c.h.b16 %v5419
        %v6432 = vunpack.c.l.b16 %v5420
        %v6433 = vunpack.c.h.b16 %v5420
        %v6434 = vunpack.c.l.b16 %v5421
        %v6435 = vunpack.c.h.b16 %v5421
        %v6436 = vunpack.c.l.b16 %v5422
        %v6437 = vunpack.c.h.b16 %v5422
        %v6438 = vunpack.c.l.b16 %v5423
        %v6439 = vunpack.c.h.b16 %v5423
        %v6440 = vunpack.c.l.b16 %v5424
        %v6441 = vunpack.c.h.b16 %v5424
        %v6442 = vunpack.c.l.b16 %v5425
        %v6443 = vunpack.c.h.b16 %v5425
        %v6444 = vunpack.c.l.b16 %v5426
        %v6445 = vunpack.c.h.b16 %v5426
        %v6446 = vunpack.c.l.b16 %v5427
        %v6447 = vunpack.c.h.b16 %v5427
        %v6448 = vunpack.c.l.b16 %v5428
        %v6449 = vunpack.c.h.b16 %v5428
        %v6450 = vunpack.c.l.b16 %v5429
        %v6451 = vunpack.c.h.b16 %v5429
        %v6452 = vunpack.c.l.b16 %v5430
        %v6453 = vunpack.c.h.b16 %v5430
        %v6454 = vunpack.c.l.b16 %v5431
        %v6455 = vunpack.c.h.b16 %v5431
        %v6456 = vunpack.c.l.b16 %v5432
        %v6457 = vunpack.c.h.b16 %v5432
        %v6458 = vunpack.c.l.b16 %v5433
        %v6459 = vunpack.c.h.b16 %v5433
        %v6460 = vunpack.c.l.b16 %v5434
        %v6461 = vunpack.c.h.b16 %v5434
        %v6462 = vunpack.c.l.b16 %v5435
        %v6463 = vunpack.c.h.b16 %v5435
        %v6464 = vunpack.c.l.b16 %v5436
        %v6465 = vunpack.c.h.b16 %v5436
        %v6466 = vunpack.c.l.b16 %v5437
        %v6467 = vunpack.c.h.b16 %v5437
        %v6468 = vunpack.c.l.b16 %v5438
        %v6469 = vunpack.c.h.b16 %v5438
        %v6470 = vunpack.c.l.b16 %v5439
        %v6471 = vunpack.c.h.b16 %v5439
        %v6472 = vunpack.c.l.b16 %v5440
        %v6473 = vunpack.c.h.b16 %v5440
        %v6474 = vunpack.c.l.b16 %v5441
        %v6475 = vunpack.c.h.b16 %v5441
        %v6476 = vunpack.c.l.b16 %v5442
        %v6477 = vunpack.c.h.b16 %v5442
        %v6478 = vpack.c.b16 %v5908, %v5902
        %v6479 = vpack.c.b16 %v5909, %v5903
        %v6480 = vpack.c.b16 %v5910, %v5904
        %v6481 = vpack.c.b16 %v5911, %v5905
        %v6482 = vpack.c.b16 %v5912, %v5906
        %v6483 = vpack.c.b16 %v5913, %v5907
        %v6484 = vpack.c.b16 %v5920, %v5914
        %v6485 = vpack.c.b16 %v5921, %v5915
        %v6486 = vpack.c.b16 %v5922, %v5916
        %v6487 = vpack.c.b16 %v5923, %v5917
        %v6488 = vpack.c.b16 %v5924, %v5918
        %v6489 = vpack.c.b16 %v5925, %v5919
        %v6490 = vpack.c.b16 %v5932, %v5926
        %v6491 = vpack.c.b16 %v5933, %v5927
        %v6492 = vpack.c.b16 %v5934, %v5928
        %v6493 = vpack.c.b16 %v5935, %v5929
        %v6494 = vpack.c.b16 %v5936, %v5930
        %v6495 = vpack.c.b16 %v5937, %v5931
        %v6496 = vpack.c.b16 %v5944, %v5938
        %v6497 = vpack.c.b16 %v5945, %v5939
        %v6498 = vpack.c.b16 %v5946, %v5940
        %v6499 = vpack.c.b16 %v5947, %v5941
        %v6500 = vpack.c.b16 %v5948, %v5942
        %v6501 = vpack.c.b16 %v5949, %v5943
        %v6502 = vpack.c.b16 %v5956, %v5950
        %v6503 = vpack.c.b16 %v5957, %v5951
        %v6504 = vpack.c.b16 %v5958, %v5952
        %v6505 = vpack.c.b16 %v5959, %v5953
        %v6506 = vpack.c.b16 %v5960, %v5954
        %v6507 = vpack.c.b16 %v5961, %v5955
        %v6508 = vpack.c.b16 %v5968, %v5962
        %v6509 = vpack.c.b16 %v5969, %v5963
        %v6510 = vpack.c.b16 %v5970, %v5964
        %v6511 = vpack.c.b16 %v5971, %v5965
        %v6512 = vpack.c.b16 %v5972, %v5966
        %v6513 = vpack.c.b16 %v5973, %v5967
        %v6514 = vpack.c.b16 %v5980, %v5974
        %v6515 = vpack.c.b16 %v5981, %v5975
        %v6516 = vpack.c.b16 %v5982, %v5976
        %v6517 = vpack.c.b16 %v5983, %v5977
        %v6518 = vpack.c.b16 %v5984, %v5978
        %v6519 = vpack.c.b16 %v5985, %v5979
        %v6520 = vpack.c.b16 %v5992, %v5986
        %v6521 = vpack.c.b16 %v5993, %v5987
        %v6522 = vpack.c.b16 %v5994, %v5988
        %v6523 = vpack.c.b16 %v5995, %v5989
        %v6524 = vpack.c.b16 %v5996, %v5990
        %v6525 = vpack.c.b16 %v5997, %v5991
        %v6526 = vpack.c.b16 %v6004, %v5998
        %v6527 = vpack.c.b16 %v6005, %v5999
        %v6528 = vpack.c.b16 %v6006, %v6000
        %v6529 = vpack.c.b16 %v6007, %v6001
        %v6530 = vpack.c.b16 %v6008, %v6002
        %v6531 = vpack.c.b16 %v6009, %v6003
        %v6532 = vpack.c.b16 %v6016, %v6010
        %v6533 = vpack.c.b16 %v6017, %v6011
        %v6534 = vpack.c.b16 %v6018, %v6012
        %v6535 = vpack.c.b16 %v6019, %v6013
        %v6536 = vpack.c.b16 %v6020, %v6014
        %v6537 = vpack.c.b16 %v6021, %v6015
        %v6538 = vpack.c.b16 %v6028, %v6022
        %v6539 = vpack.c.b16 %v6029, %v6023
        %v6540 = vpack.c.b16 %v6030, %v6024
        %v6541 = vpack.c.b16 %v6031, %v6025
        %v6542 = vpack.c.b16 %v6032, %v6026
        %v6543 = vpack.c.b16 %v6033, %v6027
        %v6544 = vpack.c.b16 %v6040, %v6034
        %v6545 = vpack.c.b16 %v6041, %v6035
        %v6546 = vpack.c.b16 %v6042, %v6036
        %v6547 = vpack.c.b16 %v6043, %v6037
        %v6548 = vpack.c.b16 %v6044, %v6038
        %v6549 = vpack.c.b16 %v6045, %v6039
        %v6550 = vpack.c.b16 %v6052, %v6046
        %v6551 = vpack.c.b16 %v6053, %v6047
        %v6552 = vpack.c.b16 %v6054, %v6048
        %v6553 = vpack.c.b16 %v6055, %v6049
        %v6554 = vpack.c.b16 %v6056, %v6050
        %v6555 = vpack.c.b16 %v6057, %v6051
        %v6556 = vpack.c.b16 %v6064, %v6058
        %v6557 = vpack.c.b16 %v6065, %v6059
        %v6558 = vpack.c.b16 %v6066, %v6060
        %v6559 = vpack.c.b16 %v6067, %v6061
        %v6560 = vpack.c.b16 %v6068, %v6062
        %v6561 = vpack.c.b16 %v6069, %v6063
        %v6562 = vpack.c.b16 %v6076, %v6070
        %v6563 = vpack.c.b16 %v6077, %v6071
        %v6564 = vpack.c.b16 %v6078, %v6072
        %v6565 = vpack.c.b16 %v6079, %v6073
        %v6566 = vpack.c.b16 %v6080, %v6074
        %v6567 = vpack.c.b16 %v6081, %v6075
        %v6568 = vpack.c.b16 %v6088, %v6082
        %v6569 = vpack.c.b16 %v6089, %v6083
        %v6570 = vpack.c.b16 %v6090, %v6084
        %v6571 = vpack.c.b16 %v6091, %v6085
        %v6572 = vpack.c.b16 %v6092, %v6086
        %v6573 = vpack.c.b16 %v6093, %v6087
        %v6574 = vpack.c.b16 %v6100, %v6094
        %v6575 = vpack.c.b16 %v6101, %v6095
        %v6576 = vpack.c.b16 %v6102, %v6096
        %v6577 = vpack.c.b16 %v6103, %v6097
        %v6578 = vpack.c.b16 %v6104, %v6098
        %v6579 = vpack.c.b16 %v6105, %v6099
        %v6580 = vpack.c.b16 %v6112, %v6106
        %v6581 = vpack.c.b16 %v6113, %v6107
        %v6582 = vpack.c.b16 %v6114, %v6108
        %v6583 = vpack.c.b16 %v6115, %v6109
        %v6584 = vpack.c.b16 %v6116, %v6110
        %v6585 = vpack.c.b16 %v6117, %v6111
        %v6586 = vpack.c.b16 %v6124, %v6118
        %v6587 = vpack.c.b16 %v6125, %v6119
        %v6588 = vpack.c.b16 %v6126, %v6120
        %v6589 = vpack.c.b16 %v6127, %v6121
        %v6590 = vpack.c.b16 %v6128, %v6122
        %v6591 = vpack.c.b16 %v6129, %v6123
        %v6592 = vpack.c.b16 %v6136, %v6130
        %v6593 = vpack.c.b16 %v6137, %v6131
        %v6594 = vpack.c.b16 %v6138, %v6132
        %v6595 = vpack.c.b16 %v6139, %v6133
        %v6596 = vpack.c.b16 %v6140, %v6134
        %v6597 = vpack.c.b16 %v6141, %v6135
        %v6598 = vpack.c.b16 %v6148, %v6142
        %v6599 = vpack.c.b16 %v6149, %v6143
        %v6600 = vpack.c.b16 %v6150, %v6144
        %v6601 = vpack.c.b16 %v6151, %v6145
        %v6602 = vpack.c.b16 %v6152, %v6146
        %v6603 = vpack.c.b16 %v6153, %v6147
        %v6604 = vpack.c.b16 %v6160, %v6154
        %v6605 = vpack.c.b16 %v6161, %v6155
        %v6606 = vpack.c.b16 %v6162, %v6156
        %v6607 = vpack.c.b16 %v6163, %v6157
        %v6608 = vpack.c.b16 %v6164, %v6158
        %v6609 = vpack.c.b16 %v6165, %v6159
        %v6610 = vpack.c.b16 %v6172, %v6166
        %v6611 = vpack.c.b16 %v6173, %v6167
        %v6612 = vpack.c.b16 %v6174, %v6168
        %v6613 = vpack.c.b16 %v6175, %v6169
        %v6614 = vpack.c.b16 %v6176, %v6170
        %v6615 = vpack.c.b16 %v6177, %v6171
        %v6616 = vpack.c.b16 %v6184, %v6178
        %v6617 = vpack.c.b16 %v6185, %v6179
        %v6618 = vpack.c.b16 %v6186, %v6180
        %v6619 = vpack.c.b16 %v6187, %v6181
        %v6620 = vpack.c.b16 %v6188, %v6182
        %v6621 = vpack.c.b16 %v6189, %v6183
        %v6622 = vpack.c.b16 %v6196, %v6190
        %v6623 = vpack.c.b16 %v6197, %v6191
        %v6624 = vpack.c.b16 %v6198, %v6192
        %v6625 = vpack.c.b16 %v6199, %v6193
        %v6626 = vpack.c.b16 %v6200, %v6194
        %v6627 = vpack.c.b16 %v6201, %v6195
        %v6628 = vpack.c.b16 %v6208, %v6202
        %v6629 = vpack.c.b16 %v6209, %v6203
        %v6630 = vpack.c.b16 %v6210, %v6204
        %v6631 = vpack.c.b16 %v6211, %v6205
        %v6632 = vpack.c.b16 %v6212, %v6206
        %v6633 = vpack.c.b16 %v6213, %v6207
        %v6634 = vpack.c.b16 %v6220, %v6214
        %v6635 = vpack.c.b16 %v6221, %v6215
        %v6636 = vpack.c.b16 %v6222, %v6216
        %v6637 = vpack.c.b16 %v6223, %v6217
        %v6638 = vpack.c.b16 %v6224, %v6218
        %v6639 = vpack.c.b16 %v6225, %v6219
        %v6640 = vpack.c.b16 %v6232, %v6226
        %v6641 = vpack.c.b16 %v6233, %v6227
        %v6642 = vpack.c.b16 %v6234, %v6228
        %v6643 = vpack.c.b16 %v6235, %v6229
        %v6644 = vpack.c.b16 %v6236, %v6230
        %v6645 = vpack.c.b16 %v6237, %v6231
        %v6646 = vpack.c.b16 %v6244, %v6238
        %v6647 = vpack.c.b16 %v6245, %v6239
        %v6648 = vpack.c.b16 %v6246, %v6240
        %v6649 = vpack.c.b16 %v6247, %v6241
        %v6650 = vpack.c.b16 %v6248, %v6242
        %v6651 = vpack.c.b16 %v6249, %v6243
        %v6652 = vpack.c.b16 %v6256, %v6250
        %v6653 = vpack.c.b16 %v6257, %v6251
        %v6654 = vpack.c.b16 %v6258, %v6252
        %v6655 = vpack.c.b16 %v6259, %v6253
        %v6656 = vpack.c.b16 %v6260, %v6254
        %v6657 = vpack.c.b16 %v6261, %v6255
        %v6658 = vpack.c.b16 %v6268, %v6262
        %v6659 = vpack.c.b16 %v6269, %v6263
        %v6660 = vpack.c.b16 %v6270, %v6264
        %v6661 = vpack.c.b16 %v6271, %v6265
        %v6662 = vpack.c.b16 %v6272, %v6266
        %v6663 = vpack.c.b16 %v6273, %v6267
        %v6664 = vpack.c.b16 %v6280, %v6274
        %v6665 = vpack.c.b16 %v6281, %v6275
        %v6666 = vpack.c.b16 %v6282, %v6276
        %v6667 = vpack.c.b16 %v6283, %v6277
        %v6668 = vpack.c.b16 %v6284, %v6278
        %v6669 = vpack.c.b16 %v6285, %v6279
        %v6670 = vpack.c.b16 %v6292, %v6286
        %v6671 = vpack.c.b16 %v6293, %v6287
        %v6672 = vpack.c.b16 %v6294, %v6288
        %v6673 = vpack.c.b16 %v6295, %v6289
        %v6674 = vpack.c.b16 %v6296, %v6290
        %v6675 = vpack.c.b16 %v6297, %v6291
        %v6676 = vpack.c.b16 %v6304, %v6298
        %v6677 = vpack.c.b16 %v6305, %v6299
        %v6678 = vpack.c.b16 %v6306, %v6300
        %v6679 = vpack.c.b16 %v6307, %v6301
        %v6680 = vpack.c.b16 %v6308, %v6302
        %v6681 = vpack.c.b16 %v6309, %v6303
        %v6682 = vpack.c.b16 %v6316, %v6310
        %v6683 = vpack.c.b16 %v6317, %v6311
        %v6684 = vpack.c.b16 %v6318, %v6312
        %v6685 = vpack.c.b16 %v6319, %v6313
        %v6686 = vpack.c.b16 %v6320, %v6314
        %v6687 = vpack.c.b16 %v6321, %v6315
        %v6688 = vpack.c.b16 %v6328, %v6322
        %v6689 = vpack.c.b16 %v6329, %v6323
        %v6690 = vpack.c.b16 %v6330, %v6324
        %v6691 = vpack.c.b16 %v6331, %v6325
        %v6692 = vpack.c.b16 %v6332, %v6326
        %v6693 = vpack.c.b16 %v6333, %v6327
        %v6694 = vpack.c.b16 %v6340, %v6334
        %v6695 = vpack.c.b16 %v6341, %v6335
        %v6696 = vpack.c.b16 %v6342, %v6336
        %v6697 = vpack.c.b16 %v6343, %v6337
        %v6698 = vpack.c.b16 %v6344, %v6338
        %v6699 = vpack.c.b16 %v6345, %v6339
        %v6700 = vpack.c.b16 %v6352, %v6346
        %v6701 = vpack.c.b16 %v6353, %v6347
        %v6702 = vpack.c.b16 %v6354, %v6348
        %v6703 = vpack.c.b16 %v6355, %v6349
        %v6704 = vpack.c.b16 %v6356, %v6350
        %v6705 = vpack.c.b16 %v6357, %v6351
        %v6706 = vpack.c.b16 %v6364, %v6358
        %v6707 = vpack.c.b16 %v6365, %v6359
        %v6708 = vpack.c.b16 %v6366, %v6360
        %v6709 = vpack.c.b16 %v6367, %v6361
        %v6710 = vpack.c.b16 %v6368, %v6362
        %v6711 = vpack.c.b16 %v6369, %v6363
        %v6712 = vpack.c.b16 %v6376, %v6370
        %v6713 = vpack.c.b16 %v6377, %v6371
        %v6714 = vpack.c.b16 %v6378, %v6372
        %v6715 = vpack.c.b16 %v6379, %v6373
        %v6716 = vpack.c.b16 %v6380, %v6374
        %v6717 = vpack.c.b16 %v6381, %v6375
        %v6718 = vpack.c.b16 %v6388, %v6382
        %v6719 = vpack.c.b16 %v6389, %v6383
        %v6720 = vpack.c.b16 %v6390, %v6384
        %v6721 = vpack.c.b16 %v6391, %v6385
        %v6722 = vpack.c.b16 %v6392, %v6386
        %v6723 = vpack.c.b16 %v6393, %v6387
        %v6724 = vpack.c.b16 %v6400, %v6394
        %v6725 = vpack.c.b16 %v6401, %v6395
        %v6726 = vpack.c.b16 %v6402, %v6396
        %v6727 = vpack.c.b16 %v6403, %v6397
        %v6728 = vpack.c.b16 %v6404, %v6398
        %v6729 = vpack.c.b16 %v6405, %v6399
        %v6730 = vpack.c.b16 %v6412, %v6406
        %v6731 = vpack.c.b16 %v6413, %v6407
        %v6732 = vpack.c.b16 %v6414, %v6408
        %v6733 = vpack.c.b16 %v6415, %v6409
        %v6734 = vpack.c.b16 %v6416, %v6410
        %v6735 = vpack.c.b16 %v6417, %v6411
        %v6736 = vpack.c.b16 %v6424, %v6418
        %v6737 = vpack.c.b16 %v6425, %v6419
        %v6738 = vpack.c.b16 %v6426, %v6420
        %v6739 = vpack.c.b16 %v6427, %v6421
        %v6740 = vpack.c.b16 %v6428, %v6422
        %v6741 = vpack.c.b16 %v6429, %v6423
        %v6742 = vpack.c.b16 %v6436, %v6430
        %v6743 = vpack.c.b16 %v6437, %v6431
        %v6744 = vpack.c.b16 %v6438, %v6432
        %v6745 = vpack.c.b16 %v6439, %v6433
        %v6746 = vpack.c.b16 %v6440, %v6434
        %v6747 = vpack.c.b16 %v6441, %v6435
        %v6748 = vpack.c.b16 %v6448, %v6442
        %v6749 = vpack.c.b16 %v6449, %v6443
        %v6750 = vpack.c.b16 %v6450, %v6444
        %v6751 = vpack.c.b16 %v6451, %v6445
        %v6752 = vpack.c.b16 %v6452, %v6446
        %v6753 = vpack.c.b16 %v6453, %v6447
        %v6754 = vpack.c.b16 %v6460, %v6454
        %v6755 = vpack.c.b16 %v6461, %v6455
        %v6756 = vpack.c.b16 %v6462, %v6456
        %v6757 = vpack.c.b16 %v6463, %v6457
        %v6758 = vpack.c.b16 %v6464, %v6458
        %v6759 = vpack.c.b16 %v6465, %v6459
        %v6760 = vpack.c.b16 %v6472, %v6466
        %v6761 = vpack.c.b16 %v6473, %v6467
        %v6762 = vpack.c.b16 %v6474, %v6468
        %v6763 = vpack.c.b16 %v6475, %v6469
        %v6764 = vpack.c.b16 %v6476, %v6470
        %v6765 = vpack.c.b16 %v6477, %v6471
        %7054 = vmatpush.bf16.msra.mxu0 %v6520
        %7055 = vmatpush.bf16.msra.mxu0 %v6514
        %7056 = vmatpush.bf16.msra.mxu0 %v6508
        %7057 = vmatpush.bf16.msra.mxu0 %v6502
        %7058 = vmatpush.bf16.msra.mxu0 %v6496
        %7059 = vmatpush.bf16.msra.mxu0 %v6490
        %7060 = vmatpush.bf16.msra.mxu0 %v6484
        %7061 = vmatpush.bf16.msra.mxu0 %v6478
        %7062 = vmatmul.bf16.gmra.mxu0 %v5602
        %v7063 = vpop.f32.mrf.mxu0
        %v7064 = vadd.f32 %v5445, %v7063
        %v7065 = vpop.f32.mrf.mxu0
        %7066 = vdwg.mxu0
        %7067 = vmatpush.bf16.msra.mxu0 %v6568
        %7068 = vmatpush.bf16.msra.mxu0 %v6562
        %7069 = vmatpush.bf16.msra.mxu0 %v6556
        %7070 = vmatpush.bf16.msra.mxu0 %v6550
        %7071 = vmatpush.bf16.msra.mxu0 %v6544
        %7072 = vmatpush.bf16.msra.mxu0 %v6538
        %7073 = vmatpush.bf16.msra.mxu0 %v6532
        %7074 = vmatpush.bf16.msra.mxu0 %v6526
        %7075 = vmatmul.bf16.gmra.mxu0 %v5603
        %v7076 = vpop.f32.mrf.mxu0
        %v7077 = vadd.f32 %v7064, %v7076
        %v7078 = vpop.f32.mrf.mxu0
        %7079 = vdwg.mxu0
        %7080 = vmatpush.bf16.msra.mxu0 %v6616
        %7081 = vmatpush.bf16.msra.mxu0 %v6610
        %7082 = vmatpush.bf16.msra.mxu0 %v6604
        %7083 = vmatpush.bf16.msra.mxu0 %v6598
        %7084 = vmatpush.bf16.msra.mxu0 %v6592
        %7085 = vmatpush.bf16.msra.mxu0 %v6586
        %7086 = vmatpush.bf16.msra.mxu0 %v6580
        %7087 = vmatpush.bf16.msra.mxu0 %v6574
        %7088 = vmatmul.bf16.gmra.mxu0 %v5604
        %v7089 = vpop.f32.mrf.mxu0
        %v7090 = vadd.f32 %v7077, %v7089
        %v7091 = vpop.f32.mrf.mxu0
        %7092 = vdwg.mxu0
        %7093 = vmatpush.bf16.msra.mxu0 %v6664
        %7094 = vmatpush.bf16.msra.mxu0 %v6658
        %7095 = vmatpush.bf16.msra.mxu0 %v6652
        %7096 = vmatpush.bf16.msra.mxu0 %v6646
        %7097 = vmatpush.bf16.msra.mxu0 %v6640
        %7098 = vmatpush.bf16.msra.mxu0 %v6634
        %7099 = vmatpush.bf16.msra.mxu0 %v6628
        %7100 = vmatpush.bf16.msra.mxu0 %v6622
        %7101 = vmatmul.bf16.gmra.mxu0 %v5605
        %v7102 = vpop.f32.mrf.mxu0
        %v7103 = vadd.f32 %v7090, %v7102
        %v7104 = vpop.f32.mrf.mxu0
        %7105 = vdwg.mxu0
        %7106 = vmatpush.bf16.msra.mxu0 %v6712
        %7107 = vmatpush.bf16.msra.mxu0 %v6706
        %7108 = vmatpush.bf16.msra.mxu0 %v6700
        %7109 = vmatpush.bf16.msra.mxu0 %v6694
        %7110 = vmatpush.bf16.msra.mxu0 %v6688
        %7111 = vmatpush.bf16.msra.mxu0 %v6682
        %7112 = vmatpush.bf16.msra.mxu0 %v6676
        %7113 = vmatpush.bf16.msra.mxu0 %v6670
        %7114 = vmatmul.bf16.gmra.mxu0 %v5606
        %v7115 = vpop.f32.mrf.mxu0
        %v7116 = vadd.f32 %v7103, %v7115
        %v7117 = vpop.f32.mrf.mxu0
        %7118 = vdwg.mxu0
        %7119 = vmatpush.bf16.msra.mxu0 %v6760
        %7120 = vmatpush.bf16.msra.mxu0 %v6754
        %7121 = vmatpush.bf16.msra.mxu0 %v6748
        %7122 = vmatpush.bf16.msra.mxu0 %v6742
        %7123 = vmatpush.bf16.msra.mxu0 %v6736
        %7124 = vmatpush.bf16.msra.mxu0 %v6730
        %7125 = vmatpush.bf16.msra.mxu0 %v6724
        %7126 = vmatpush.bf16.msra.mxu0 %v6718
        %7127 = vmatmul.bf16.gmra.mxu0 %v5607
        %v7128 = vpop.f32.mrf.mxu0
        %v7129 = vadd.f32 %v7116, %v7128
        %v7130 = vpop.f32.mrf.mxu0
        %7131 = vdwg.mxu0
        %7132 = vmatpush.bf16.msra.mxu0 %v6521
        %7133 = vmatpush.bf16.msra.mxu0 %v6515
        %7134 = vmatpush.bf16.msra.mxu0 %v6509
        %7135 = vmatpush.bf16.msra.mxu0 %v6503
        %7136 = vmatpush.bf16.msra.mxu0 %v6497
        %7137 = vmatpush.bf16.msra.mxu0 %v6491
        %7138 = vmatpush.bf16.msra.mxu0 %v6485
        %7139 = vmatpush.bf16.msra.mxu0 %v6479
        %7140 = vmatmul.bf16.gmra.mxu0 %v5602
        %v7141 = vpop.f32.mrf.mxu0
        %v7142 = vadd.f32 %v5446, %v7141
        %v7143 = vpop.f32.mrf.mxu0
        %7144 = vdwg.mxu0
        %7145 = vmatpush.bf16.msra.mxu0 %v6569
        %7146 = vmatpush.bf16.msra.mxu0 %v6563
        %7147 = vmatpush.bf16.msra.mxu0 %v6557
        %7148 = vmatpush.bf16.msra.mxu0 %v6551
        %7149 = vmatpush.bf16.msra.mxu0 %v6545
        %7150 = vmatpush.bf16.msra.mxu0 %v6539
        %7151 = vmatpush.bf16.msra.mxu0 %v6533
        %7152 = vmatpush.bf16.msra.mxu0 %v6527
        %7153 = vmatmul.bf16.gmra.mxu0 %v5603
        %v7154 = vpop.f32.mrf.mxu0
        %v7155 = vadd.f32 %v7142, %v7154
        %v7156 = vpop.f32.mrf.mxu0
        %7157 = vdwg.mxu0
        %7158 = vmatpush.bf16.msra.mxu0 %v6617
        %7159 = vmatpush.bf16.msra.mxu0 %v6611
        %7160 = vmatpush.bf16.msra.mxu0 %v6605
        %7161 = vmatpush.bf16.msra.mxu0 %v6599
        %7162 = vmatpush.bf16.msra.mxu0 %v6593
        %7163 = vmatpush.bf16.msra.mxu0 %v6587
        %7164 = vmatpush.bf16.msra.mxu0 %v6581
        %7165 = vmatpush.bf16.msra.mxu0 %v6575
        %7166 = vmatmul.bf16.gmra.mxu0 %v5604
        %v7167 = vpop.f32.mrf.mxu0
        %v7168 = vadd.f32 %v7155, %v7167
        %v7169 = vpop.f32.mrf.mxu0
        %7170 = vdwg.mxu0
        %7171 = vmatpush.bf16.msra.mxu0 %v6665
        %7172 = vmatpush.bf16.msra.mxu0 %v6659
        %7173 = vmatpush.bf16.msra.mxu0 %v6653
        %7174 = vmatpush.bf16.msra.mxu0 %v6647
        %7175 = vmatpush.bf16.msra.mxu0 %v6641
        %7176 = vmatpush.bf16.msra.mxu0 %v6635
        %7177 = vmatpush.bf16.msra.mxu0 %v6629
        %7178 = vmatpush.bf16.msra.mxu0 %v6623
        %7179 = vmatmul.bf16.gmra.mxu0 %v5605
        %v7180 = vpop.f32.mrf.mxu0
        %v7181 = vadd.f32 %v7168, %v7180
        %v7182 = vpop.f32.mrf.mxu0
        %7183 = vdwg.mxu0
        %7184 = vmatpush.bf16.msra.mxu0 %v6713
        %7185 = vmatpush.bf16.msra.mxu0 %v6707
        %7186 = vmatpush.bf16.msra.mxu0 %v6701
        %7187 = vmatpush.bf16.msra.mxu0 %v6695
        %7188 = vmatpush.bf16.msra.mxu0 %v6689
        %7189 = vmatpush.bf16.msra.mxu0 %v6683
        %7190 = vmatpush.bf16.msra.mxu0 %v6677
        %7191 = vmatpush.bf16.msra.mxu0 %v6671
        %7192 = vmatmul.bf16.gmra.mxu0 %v5606
        %v7193 = vpop.f32.mrf.mxu0
        %v7194 = vadd.f32 %v7181, %v7193
        %v7195 = vpop.f32.mrf.mxu0
        %7196 = vdwg.mxu0
        %7197 = vmatpush.bf16.msra.mxu0 %v6761
        %7198 = vmatpush.bf16.msra.mxu0 %v6755
        %7199 = vmatpush.bf16.msra.mxu0 %v6749
        %7200 = vmatpush.bf16.msra.mxu0 %v6743
        %7201 = vmatpush.bf16.msra.mxu0 %v6737
        %7202 = vmatpush.bf16.msra.mxu0 %v6731
        %7203 = vmatpush.bf16.msra.mxu0 %v6725
        %7204 = vmatpush.bf16.msra.mxu0 %v6719
        %7205 = vmatmul.bf16.gmra.mxu0 %v5607
        %v7206 = vpop.f32.mrf.mxu0
        %v7207 = vadd.f32 %v7194, %v7206
        %v7208 = vpop.f32.mrf.mxu0
        %7209 = vdwg.mxu0
        %7210 = vmatpush.bf16.msra.mxu0 %v6522
        %7211 = vmatpush.bf16.msra.mxu0 %v6516
        %7212 = vmatpush.bf16.msra.mxu0 %v6510
        %7213 = vmatpush.bf16.msra.mxu0 %v6504
        %7214 = vmatpush.bf16.msra.mxu0 %v6498
        %7215 = vmatpush.bf16.msra.mxu0 %v6492
        %7216 = vmatpush.bf16.msra.mxu0 %v6486
        %7217 = vmatpush.bf16.msra.mxu0 %v6480
        %7218 = vmatmul.bf16.gmra.mxu0 %v5602
        %v7219 = vpop.f32.mrf.mxu0
        %v7220 = vadd.f32 %v5447, %v7219
        %v7221 = vpop.f32.mrf.mxu0
        %7222 = vdwg.mxu0
        %7223 = vmatpush.bf16.msra.mxu0 %v6570
        %7224 = vmatpush.bf16.msra.mxu0 %v6564
        %7225 = vmatpush.bf16.msra.mxu0 %v6558
        %7226 = vmatpush.bf16.msra.mxu0 %v6552
        %7227 = vmatpush.bf16.msra.mxu0 %v6546
        %7228 = vmatpush.bf16.msra.mxu0 %v6540
        %7229 = vmatpush.bf16.msra.mxu0 %v6534
        %7230 = vmatpush.bf16.msra.mxu0 %v6528
        %7231 = vmatmul.bf16.gmra.mxu0 %v5603
        %v7232 = vpop.f32.mrf.mxu0
        %v7233 = vadd.f32 %v7220, %v7232
        %v7234 = vpop.f32.mrf.mxu0
        %7235 = vdwg.mxu0
        %7236 = vmatpush.bf16.msra.mxu0 %v6618
        %7237 = vmatpush.bf16.msra.mxu0 %v6612
        %7238 = vmatpush.bf16.msra.mxu0 %v6606
        %7239 = vmatpush.bf16.msra.mxu0 %v6600
        %7240 = vmatpush.bf16.msra.mxu0 %v6594
        %7241 = vmatpush.bf16.msra.mxu0 %v6588
        %7242 = vmatpush.bf16.msra.mxu0 %v6582
        %7243 = vmatpush.bf16.msra.mxu0 %v6576
        %7244 = vmatmul.bf16.gmra.mxu0 %v5604
        %v7245 = vpop.f32.mrf.mxu0
        %v7246 = vadd.f32 %v7233, %v7245
        %v7247 = vpop.f32.mrf.mxu0
        %7248 = vdwg.mxu0
        %7249 = vmatpush.bf16.msra.mxu0 %v6666
        %7250 = vmatpush.bf16.msra.mxu0 %v6660
        %7251 = vmatpush.bf16.msra.mxu0 %v6654
        %7252 = vmatpush.bf16.msra.mxu0 %v6648
        %7253 = vmatpush.bf16.msra.mxu0 %v6642
        %7254 = vmatpush.bf16.msra.mxu0 %v6636
        %7255 = vmatpush.bf16.msra.mxu0 %v6630
        %7256 = vmatpush.bf16.msra.mxu0 %v6624
        %7257 = vmatmul.bf16.gmra.mxu0 %v5605
        %v7258 = vpop.f32.mrf.mxu0
        %v7259 = vadd.f32 %v7246, %v7258
        %v7260 = vpop.f32.mrf.mxu0
        %7261 = vdwg.mxu0
        %7262 = vmatpush.bf16.msra.mxu0 %v6714
        %7263 = vmatpush.bf16.msra.mxu0 %v6708
        %7264 = vmatpush.bf16.msra.mxu0 %v6702
        %7265 = vmatpush.bf16.msra.mxu0 %v6696
        %7266 = vmatpush.bf16.msra.mxu0 %v6690
        %7267 = vmatpush.bf16.msra.mxu0 %v6684
        %7268 = vmatpush.bf16.msra.mxu0 %v6678
        %7269 = vmatpush.bf16.msra.mxu0 %v6672
        %7270 = vmatmul.bf16.gmra.mxu0 %v5606
        %v7271 = vpop.f32.mrf.mxu0
        %v7272 = vadd.f32 %v7259, %v7271
        %v7273 = vpop.f32.mrf.mxu0
        %7274 = vdwg.mxu0
        %7275 = vmatpush.bf16.msra.mxu0 %v6762
        %7276 = vmatpush.bf16.msra.mxu0 %v6756
        %7277 = vmatpush.bf16.msra.mxu0 %v6750
        %7278 = vmatpush.bf16.msra.mxu0 %v6744
        %7279 = vmatpush.bf16.msra.mxu0 %v6738
        %7280 = vmatpush.bf16.msra.mxu0 %v6732
        %7281 = vmatpush.bf16.msra.mxu0 %v6726
        %7282 = vmatpush.bf16.msra.mxu0 %v6720
        %7283 = vmatmul.bf16.gmra.mxu0 %v5607
        %v7284 = vpop.f32.mrf.mxu0
        %v7285 = vadd.f32 %v7272, %v7284
        %v7286 = vpop.f32.mrf.mxu0
        %7287 = vdwg.mxu0
        %7288 = vmatpush.bf16.msra.mxu0 %v6523
        %7289 = vmatpush.bf16.msra.mxu0 %v6517
        %7290 = vmatpush.bf16.msra.mxu0 %v6511
        %7291 = vmatpush.bf16.msra.mxu0 %v6505
        %7292 = vmatpush.bf16.msra.mxu0 %v6499
        %7293 = vmatpush.bf16.msra.mxu0 %v6493
        %7294 = vmatpush.bf16.msra.mxu0 %v6487
        %7295 = vmatpush.bf16.msra.mxu0 %v6481
        %7296 = vmatmul.bf16.gmra.mxu0 %v5602
        %v7297 = vpop.f32.mrf.mxu0
        %v7298 = vadd.f32 %v5448, %v7297
        %v7299 = vpop.f32.mrf.mxu0
        %7300 = vdwg.mxu0
        %7301 = vmatpush.bf16.msra.mxu0 %v6571
        %7302 = vmatpush.bf16.msra.mxu0 %v6565
        %7303 = vmatpush.bf16.msra.mxu0 %v6559
        %7304 = vmatpush.bf16.msra.mxu0 %v6553
        %7305 = vmatpush.bf16.msra.mxu0 %v6547
        %7306 = vmatpush.bf16.msra.mxu0 %v6541
        %7307 = vmatpush.bf16.msra.mxu0 %v6535
        %7308 = vmatpush.bf16.msra.mxu0 %v6529
        %7309 = vmatmul.bf16.gmra.mxu0 %v5603
        %v7310 = vpop.f32.mrf.mxu0
        %v7311 = vadd.f32 %v7298, %v7310
        %v7312 = vpop.f32.mrf.mxu0
        %7313 = vdwg.mxu0
        %7314 = vmatpush.bf16.msra.mxu0 %v6619
        %7315 = vmatpush.bf16.msra.mxu0 %v6613
        %7316 = vmatpush.bf16.msra.mxu0 %v6607
        %7317 = vmatpush.bf16.msra.mxu0 %v6601
        %7318 = vmatpush.bf16.msra.mxu0 %v6595
        %7319 = vmatpush.bf16.msra.mxu0 %v6589
        %7320 = vmatpush.bf16.msra.mxu0 %v6583
        %7321 = vmatpush.bf16.msra.mxu0 %v6577
        %7322 = vmatmul.bf16.gmra.mxu0 %v5604
        %v7323 = vpop.f32.mrf.mxu0
        %v7324 = vadd.f32 %v7311, %v7323
        %v7325 = vpop.f32.mrf.mxu0
        %7326 = vdwg.mxu0
        %7327 = vmatpush.bf16.msra.mxu0 %v6667
        %7328 = vmatpush.bf16.msra.mxu0 %v6661
        %7329 = vmatpush.bf16.msra.mxu0 %v6655
        %7330 = vmatpush.bf16.msra.mxu0 %v6649
        %7331 = vmatpush.bf16.msra.mxu0 %v6643
        %7332 = vmatpush.bf16.msra.mxu0 %v6637
        %7333 = vmatpush.bf16.msra.mxu0 %v6631
        %7334 = vmatpush.bf16.msra.mxu0 %v6625
        %7335 = vmatmul.bf16.gmra.mxu0 %v5605
        %v7336 = vpop.f32.mrf.mxu0
        %v7337 = vadd.f32 %v7324, %v7336
        %v7338 = vpop.f32.mrf.mxu0
        %7339 = vdwg.mxu0
        %7340 = vmatpush.bf16.msra.mxu0 %v6715
        %7341 = vmatpush.bf16.msra.mxu0 %v6709
        %7342 = vmatpush.bf16.msra.mxu0 %v6703
        %7343 = vmatpush.bf16.msra.mxu0 %v6697
        %7344 = vmatpush.bf16.msra.mxu0 %v6691
        %7345 = vmatpush.bf16.msra.mxu0 %v6685
        %7346 = vmatpush.bf16.msra.mxu0 %v6679
        %7347 = vmatpush.bf16.msra.mxu0 %v6673
        %7348 = vmatmul.bf16.gmra.mxu0 %v5606
        %v7349 = vpop.f32.mrf.mxu0
        %v7350 = vadd.f32 %v7337, %v7349
        %v7351 = vpop.f32.mrf.mxu0
        %7352 = vdwg.mxu0
        %7353 = vmatpush.bf16.msra.mxu0 %v6763
        %7354 = vmatpush.bf16.msra.mxu0 %v6757
        %7355 = vmatpush.bf16.msra.mxu0 %v6751
        %7356 = vmatpush.bf16.msra.mxu0 %v6745
        %7357 = vmatpush.bf16.msra.mxu0 %v6739
        %7358 = vmatpush.bf16.msra.mxu0 %v6733
        %7359 = vmatpush.bf16.msra.mxu0 %v6727
        %7360 = vmatpush.bf16.msra.mxu0 %v6721
        %7361 = vmatmul.bf16.gmra.mxu0 %v5607
        %v7362 = vpop.f32.mrf.mxu0
        %v7363 = vadd.f32 %v7350, %v7362
        %v7364 = vpop.f32.mrf.mxu0
        %7365 = vdwg.mxu0
        %7366 = vmatpush.bf16.msra.mxu0 %v6524
        %7367 = vmatpush.bf16.msra.mxu0 %v6518
        %7368 = vmatpush.bf16.msra.mxu0 %v6512
        %7369 = vmatpush.bf16.msra.mxu0 %v6506
        %7370 = vmatpush.bf16.msra.mxu0 %v6500
        %7371 = vmatpush.bf16.msra.mxu0 %v6494
        %7372 = vmatpush.bf16.msra.mxu0 %v6488
        %7373 = vmatpush.bf16.msra.mxu0 %v6482
        %7374 = vmatmul.bf16.gmra.mxu0 %v5602
        %v7375 = vpop.f32.mrf.mxu0
        %v7376 = vadd.f32 %v5449, %v7375
        %v7377 = vpop.f32.mrf.mxu0
        %7378 = vdwg.mxu0
        %7379 = vmatpush.bf16.msra.mxu0 %v6572
        %7380 = vmatpush.bf16.msra.mxu0 %v6566
        %7381 = vmatpush.bf16.msra.mxu0 %v6560
        %7382 = vmatpush.bf16.msra.mxu0 %v6554
        %7383 = vmatpush.bf16.msra.mxu0 %v6548
        %7384 = vmatpush.bf16.msra.mxu0 %v6542
        %7385 = vmatpush.bf16.msra.mxu0 %v6536
        %7386 = vmatpush.bf16.msra.mxu0 %v6530
        %7387 = vmatmul.bf16.gmra.mxu0 %v5603
        %v7388 = vpop.f32.mrf.mxu0
        %v7389 = vadd.f32 %v7376, %v7388
        %v7390 = vpop.f32.mrf.mxu0
        %7391 = vdwg.mxu0
        %7392 = vmatpush.bf16.msra.mxu0 %v6620
        %7393 = vmatpush.bf16.msra.mxu0 %v6614
        %7394 = vmatpush.bf16.msra.mxu0 %v6608
        %7395 = vmatpush.bf16.msra.mxu0 %v6602
        %7396 = vmatpush.bf16.msra.mxu0 %v6596
        %7397 = vmatpush.bf16.msra.mxu0 %v6590
        %7398 = vmatpush.bf16.msra.mxu0 %v6584
        %7399 = vmatpush.bf16.msra.mxu0 %v6578
        %7400 = vmatmul.bf16.gmra.mxu0 %v5604
        %v7401 = vpop.f32.mrf.mxu0
        %v7402 = vadd.f32 %v7389, %v7401
        %v7403 = vpop.f32.mrf.mxu0
        %7404 = vdwg.mxu0
        %7405 = vmatpush.bf16.msra.mxu0 %v6668
        %7406 = vmatpush.bf16.msra.mxu0 %v6662
        %7407 = vmatpush.bf16.msra.mxu0 %v6656
        %7408 = vmatpush.bf16.msra.mxu0 %v6650
        %7409 = vmatpush.bf16.msra.mxu0 %v6644
        %7410 = vmatpush.bf16.msra.mxu0 %v6638
        %7411 = vmatpush.bf16.msra.mxu0 %v6632
        %7412 = vmatpush.bf16.msra.mxu0 %v6626
        %7413 = vmatmul.bf16.gmra.mxu0 %v5605
        %v7414 = vpop.f32.mrf.mxu0
        %v7415 = vadd.f32 %v7402, %v7414
        %v7416 = vpop.f32.mrf.mxu0
        %7417 = vdwg.mxu0
        %7418 = vmatpush.bf16.msra.mxu0 %v6716
        %7419 = vmatpush.bf16.msra.mxu0 %v6710
        %7420 = vmatpush.bf16.msra.mxu0 %v6704
        %7421 = vmatpush.bf16.msra.mxu0 %v6698
        %7422 = vmatpush.bf16.msra.mxu0 %v6692
        %7423 = vmatpush.bf16.msra.mxu0 %v6686
        %7424 = vmatpush.bf16.msra.mxu0 %v6680
        %7425 = vmatpush.bf16.msra.mxu0 %v6674
        %7426 = vmatmul.bf16.gmra.mxu0 %v5606
        %v7427 = vpop.f32.mrf.mxu0
        %v7428 = vadd.f32 %v7415, %v7427
        %v7429 = vpop.f32.mrf.mxu0
        %7430 = vdwg.mxu0
        %7431 = vmatpush.bf16.msra.mxu0 %v6764
        %7432 = vmatpush.bf16.msra.mxu0 %v6758
        %7433 = vmatpush.bf16.msra.mxu0 %v6752
        %7434 = vmatpush.bf16.msra.mxu0 %v6746
        %7435 = vmatpush.bf16.msra.mxu0 %v6740
        %7436 = vmatpush.bf16.msra.mxu0 %v6734
        %7437 = vmatpush.bf16.msra.mxu0 %v6728
        %7438 = vmatpush.bf16.msra.mxu0 %v6722
        %7439 = vmatmul.bf16.gmra.mxu0 %v5607
        %v7440 = vpop.f32.mrf.mxu0
        %v7441 = vadd.f32 %v7428, %v7440
        %v7442 = vpop.f32.mrf.mxu0
        %7443 = vdwg.mxu0
        %7444 = vmatpush.bf16.msra.mxu0 %v6525
        %7445 = vmatpush.bf16.msra.mxu0 %v6519
        %7446 = vmatpush.bf16.msra.mxu0 %v6513
        %7447 = vmatpush.bf16.msra.mxu0 %v6507
        %7448 = vmatpush.bf16.msra.mxu0 %v6501
        %7449 = vmatpush.bf16.msra.mxu0 %v6495
        %7450 = vmatpush.bf16.msra.mxu0 %v6489
        %7451 = vmatpush.bf16.msra.mxu0 %v6483
        %7452 = vmatmul.bf16.gmra.mxu0 %v5602
        %v7453 = vpop.f32.mrf.mxu0
        %v7454 = vadd.f32 %v5450, %v7453
        %v7455 = vpop.f32.mrf.mxu0
        %7456 = vdwg.mxu0
        %7457 = vmatpush.bf16.msra.mxu0 %v6573
        %7458 = vmatpush.bf16.msra.mxu0 %v6567
        %7459 = vmatpush.bf16.msra.mxu0 %v6561
        %7460 = vmatpush.bf16.msra.mxu0 %v6555
        %7461 = vmatpush.bf16.msra.mxu0 %v6549
        %7462 = vmatpush.bf16.msra.mxu0 %v6543
        %7463 = vmatpush.bf16.msra.mxu0 %v6537
        %7464 = vmatpush.bf16.msra.mxu0 %v6531
        %7465 = vmatmul.bf16.gmra.mxu0 %v5603
        %v7466 = vpop.f32.mrf.mxu0
        %v7467 = vadd.f32 %v7454, %v7466
        %v7468 = vpop.f32.mrf.mxu0
        %7469 = vdwg.mxu0
        %7470 = vmatpush.bf16.msra.mxu0 %v6621
        %7471 = vmatpush.bf16.msra.mxu0 %v6615
        %7472 = vmatpush.bf16.msra.mxu0 %v6609
        %7473 = vmatpush.bf16.msra.mxu0 %v6603
        %7474 = vmatpush.bf16.msra.mxu0 %v6597
        %7475 = vmatpush.bf16.msra.mxu0 %v6591
        %7476 = vmatpush.bf16.msra.mxu0 %v6585
        %7477 = vmatpush.bf16.msra.mxu0 %v6579
        %7478 = vmatmul.bf16.gmra.mxu0 %v5604
        %v7479 = vpop.f32.mrf.mxu0
        %v7480 = vadd.f32 %v7467, %v7479
        %v7481 = vpop.f32.mrf.mxu0
        %7482 = vdwg.mxu0
        %7483 = vmatpush.bf16.msra.mxu0 %v6669
        %7484 = vmatpush.bf16.msra.mxu0 %v6663
        %7485 = vmatpush.bf16.msra.mxu0 %v6657
        %7486 = vmatpush.bf16.msra.mxu0 %v6651
        %7487 = vmatpush.bf16.msra.mxu0 %v6645
        %7488 = vmatpush.bf16.msra.mxu0 %v6639
        %7489 = vmatpush.bf16.msra.mxu0 %v6633
        %7490 = vmatpush.bf16.msra.mxu0 %v6627
        %7491 = vmatmul.bf16.gmra.mxu0 %v5605
        %v7492 = vpop.f32.mrf.mxu0
        %v7493 = vadd.f32 %v7480, %v7492
        %v7494 = vpop.f32.mrf.mxu0
        %7495 = vdwg.mxu0
        %7496 = vmatpush.bf16.msra.mxu0 %v6717
        %7497 = vmatpush.bf16.msra.mxu0 %v6711
        %7498 = vmatpush.bf16.msra.mxu0 %v6705
        %7499 = vmatpush.bf16.msra.mxu0 %v6699
        %7500 = vmatpush.bf16.msra.mxu0 %v6693
        %7501 = vmatpush.bf16.msra.mxu0 %v6687
        %7502 = vmatpush.bf16.msra.mxu0 %v6681
        %7503 = vmatpush.bf16.msra.mxu0 %v6675
        %7504 = vmatmul.bf16.gmra.mxu0 %v5606
        %v7505 = vpop.f32.mrf.mxu0
        %v7506 = vadd.f32 %v7493, %v7505
        %v7507 = vpop.f32.mrf.mxu0
        %7508 = vdwg.mxu0
        %7509 = vmatpush.bf16.msra.mxu0 %v6765
        %7510 = vmatpush.bf16.msra.mxu0 %v6759
        %7511 = vmatpush.bf16.msra.mxu0 %v6753
        %7512 = vmatpush.bf16.msra.mxu0 %v6747
        %7513 = vmatpush.bf16.msra.mxu0 %v6741
        %7514 = vmatpush.bf16.msra.mxu0 %v6735
        %7515 = vmatpush.bf16.msra.mxu0 %v6729
        %7516 = vmatpush.bf16.msra.mxu0 %v6723
        %7517 = vmatmul.bf16.gmra.mxu0 %v5607
        %v7518 = vpop.f32.mrf.mxu0
        %v7519 = vadd.f32 %v7506, %v7518
        %v7520 = vpop.f32.mrf.mxu0
        %7521 = vdwg.mxu0
        %vm7522 = vcmp.gt.f32.partialorder %v7129, 0.0
        %vm7523 = vcmp.gt.f32.partialorder %v7207, 0.0
        %vm7524 = vcmp.gt.f32.partialorder %v7285, 0.0
        %vm7525 = vcmp.gt.f32.partialorder %v7363, 0.0
        %vm7526 = vcmp.gt.f32.partialorder %v7441, 0.0
        %vm7527 = vcmp.gt.f32.partialorder %v7519, 0.0
        %v7528 = vmul.f32 %v7129, 0.01
        %v7529 = vmul.f32 %v7207, 0.01
        %v7530 = vmul.f32 %v7285, 0.01
        %v7531 = vmul.f32 %v7363, 0.01
        %v7532 = vmul.f32 %v7441, 0.01
        %v7533 = vmul.f32 %v7519, 0.01
        %v7534 = vsel %vm7522, %v7129, %v7528
        %v7535 = vsel %vm7523, %v7207, %v7529
        %v7536 = vsel %vm7524, %v7285, %v7530
        %v7537 = vsel %vm7525, %v7363, %v7531
        %v7538 = vsel %vm7526, %v7441, %v7532
        %v7539 = vsel %vm7527, %v7519, %v7533
        %v7540 = vpack.c.bf16 %v7534, %v7534
        %v7541 = vpack.c.bf16 %v7535, %v7535
        %v7542 = vpack.c.bf16 %v7536, %v7536
        %v7543 = vpack.c.bf16 %v7537, %v7537
        %v7544 = vpack.c.bf16 %v7538, %v7538
        %v7545 = vpack.c.bf16 %v7539, %v7539
        %v7546 = vld [vmem:[#allocation11] sm:$0xf]
        %v7547 = vld [vmem:[#allocation11 + $0x4] sm:$0xf]
        %v7548 = vld [vmem:[#allocation11 + $0x8] sm:$0xf]
        %v7549 = vld [vmem:[#allocation11 + $0xc] sm:$0xf]
        %v7550 = vld [vmem:[#allocation11 + $0x10] sm:$0xf]
        %v7551 = vld [vmem:[#allocation11 + $0x14] sm:$0xf]
        %v7552 = vld [vmem:[#allocation11 + $0x18] sm:$0xf]
        %v7553 = vld [vmem:[#allocation11 + $0x1c] sm:$0xf]
        %v7554 = vld [vmem:[#allocation11 + $0x20] sm:$0xf]
        %v7555 = vld [vmem:[#allocation11 + $0x24] sm:$0xf]
        %v7556 = vld [vmem:[#allocation11 + $0x28] sm:$0xf]
        %v7557 = vld [vmem:[#allocation11 + $0x2c] sm:$0xf]
        %v7558 = vld [vmem:[#allocation11 + $0x30] sm:$0xf]
        %v7559 = vld [vmem:[#allocation11 + $0x34] sm:$0xf]
        %v7560 = vld [vmem:[#allocation11 + $0x38] sm:$0xf]
        %v7561 = vld [vmem:[#allocation11 + $0x3c] sm:$0xf]
        %v7562 = vld [vmem:[#allocation11 + $0x40] sm:$0xf]
        %v7563 = vld [vmem:[#allocation11 + $0x44] sm:$0xf]
        %v7564 = vld [vmem:[#allocation11 + $0x48] sm:$0xf]
        %v7565 = vld [vmem:[#allocation11 + $0x4c] sm:$0xf]
        %v7566 = vld [vmem:[#allocation11 + $0x50] sm:$0xf]
        %v7567 = vld [vmem:[#allocation11 + $0x54] sm:$0xf]
        %v7568 = vld [vmem:[#allocation11 + $0x58] sm:$0xf]
        %v7569 = vld [vmem:[#allocation11 + $0x5c] sm:$0xf]
        %v7570 = vld [vmem:[#allocation11 + $0x60] sm:$0xf]
        %v7571 = vld [vmem:[#allocation11 + $0x64] sm:$0xf]
        %v7572 = vld [vmem:[#allocation11 + $0x68] sm:$0xf]
        %v7573 = vld [vmem:[#allocation11 + $0x6c] sm:$0xf]
        %v7574 = vld [vmem:[#allocation11 + $0x70] sm:$0xf]
        %v7575 = vld [vmem:[#allocation11 + $0x74] sm:$0xf]
        %v7576 = vld [vmem:[#allocation11 + $0x78] sm:$0xf]
        %v7577 = vld [vmem:[#allocation11 + $0x7c] sm:$0xf]
        %v7578 = vld [vmem:[#allocation11 + $0x80] sm:$0xf]
        %v7579 = vld [vmem:[#allocation11 + $0x84] sm:$0xf]
        %v7580 = vld [vmem:[#allocation11 + $0x88] sm:$0xf]
        %v7581 = vld [vmem:[#allocation11 + $0x8c] sm:$0xf]
        %v7582 = vld [vmem:[#allocation11 + $0x90] sm:$0xf]
        %v7583 = vld [vmem:[#allocation11 + $0x94] sm:$0xf]
        %v7584 = vld [vmem:[#allocation11 + $0x98] sm:$0xf]
        %v7585 = vld [vmem:[#allocation11 + $0x9c] sm:$0xf]
        %v7586 = vld [vmem:[#allocation11 + $0xa0] sm:$0xf]
        %v7587 = vld [vmem:[#allocation11 + $0xa4] sm:$0xf]
        %v7588 = vld [vmem:[#allocation11 + $0xa8] sm:$0xf]
        %v7589 = vld [vmem:[#allocation11 + $0xac] sm:$0xf]
        %v7590 = vld [vmem:[#allocation11 + $0xb0] sm:$0xf]
        %v7591 = vld [vmem:[#allocation11 + $0xb4] sm:$0xf]
        %v7592 = vld [vmem:[#allocation11 + $0xb8] sm:$0xf]
        %v7593 = vld [vmem:[#allocation11 + $0xbc] sm:$0xf]
        %v7594 = vld [vmem:[#allocation11 + $0xc0] sm:$0xf]
        %v7595 = vld [vmem:[#allocation11 + $0xc4] sm:$0xf]
        %v7596 = vld [vmem:[#allocation11 + $0xc8] sm:$0xf]
        %v7597 = vld [vmem:[#allocation11 + $0xcc] sm:$0xf]
        %v7598 = vld [vmem:[#allocation11 + $0xd0] sm:$0xf]
        %v7599 = vld [vmem:[#allocation11 + $0xd4] sm:$0xf]
        %v7600 = vld [vmem:[#allocation11 + $0xd8] sm:$0xf]
        %v7601 = vld [vmem:[#allocation11 + $0xdc] sm:$0xf]
        %v7602 = vld [vmem:[#allocation11 + $0xe0] sm:$0xf]
        %v7603 = vld [vmem:[#allocation11 + $0xe4] sm:$0xf]
        %v7604 = vld [vmem:[#allocation11 + $0xe8] sm:$0xf]
        %v7605 = vld [vmem:[#allocation11 + $0xec] sm:$0xf]
        %v7606 = vld [vmem:[#allocation11 + $0xf0] sm:$0xf]
        %v7607 = vld [vmem:[#allocation11 + $0xf4] sm:$0xf]
        %v7608 = vld [vmem:[#allocation11 + $0xf8] sm:$0xf]
        %v7609 = vld [vmem:[#allocation11 + $0xfc] sm:$0xf]
        %v7610 = vld [vmem:[#allocation11 + $0x100] sm:$0xf]
        %v7611 = vld [vmem:[#allocation11 + $0x104] sm:$0xf]
        %v7612 = vld [vmem:[#allocation11 + $0x108] sm:$0xf]
        %v7613 = vld [vmem:[#allocation11 + $0x10c] sm:$0xf]
        %v7614 = vld [vmem:[#allocation11 + $0x110] sm:$0xf]
        %v7615 = vld [vmem:[#allocation11 + $0x114] sm:$0xf]
        %v7616 = vld [vmem:[#allocation11 + $0x118] sm:$0xf]
        %v7617 = vld [vmem:[#allocation11 + $0x11c] sm:$0xf]
        %v7618 = vld [vmem:[#allocation11 + $0x120] sm:$0xf]
        %v7619 = vld [vmem:[#allocation11 + $0x124] sm:$0xf]
        %v7620 = vld [vmem:[#allocation11 + $0x128] sm:$0xf]
        %v7621 = vld [vmem:[#allocation11 + $0x12c] sm:$0xf]
        %v7622 = vld [vmem:[#allocation11 + $0x130] sm:$0xf]
        %v7623 = vld [vmem:[#allocation11 + $0x134] sm:$0xf]
        %v7624 = vld [vmem:[#allocation11 + $0x138] sm:$0xf]
        %v7625 = vld [vmem:[#allocation11 + $0x13c] sm:$0xf]
        %v7626 = vld [vmem:[#allocation11 + $0x140] sm:$0xf]
        %v7627 = vld [vmem:[#allocation11 + $0x144] sm:$0xf]
        %v7628 = vld [vmem:[#allocation11 + $0x148] sm:$0xf]
        %v7629 = vld [vmem:[#allocation11 + $0x14c] sm:$0xf]
        %v7630 = vld [vmem:[#allocation11 + $0x150] sm:$0xf]
        %v7631 = vld [vmem:[#allocation11 + $0x154] sm:$0xf]
        %v7632 = vld [vmem:[#allocation11 + $0x158] sm:$0xf]
        %v7633 = vld [vmem:[#allocation11 + $0x15c] sm:$0xf]
        %v7634 = vld [vmem:[#allocation11 + $0x160] sm:$0xf]
        %v7635 = vld [vmem:[#allocation11 + $0x164] sm:$0xf]
        %v7636 = vld [vmem:[#allocation11 + $0x168] sm:$0xf]
        %v7637 = vld [vmem:[#allocation11 + $0x16c] sm:$0xf]
        %v7638 = vld [vmem:[#allocation11 + $0x170] sm:$0xf]
        %v7639 = vld [vmem:[#allocation11 + $0x174] sm:$0xf]
        %v7640 = vld [vmem:[#allocation11 + $0x178] sm:$0xf]
        %v7641 = vld [vmem:[#allocation11 + $0x17c] sm:$0xf]
        %v7642 = vld [vmem:[#allocation13] sm:$0x1]
        %v7644 = vperm.slane %v7642, 0
        %v7742 = vunpack.c.l.b16 %v7546
        %v7743 = vunpack.c.l.b16 %v7547
        %v7744 = vunpack.c.l.b16 %v7548
        %v7745 = vunpack.c.l.b16 %v7549
        %v7746 = vunpack.c.l.b16 %v7550
        %v7747 = vunpack.c.l.b16 %v7551
        %v7748 = vunpack.c.l.b16 %v7552
        %v7749 = vunpack.c.l.b16 %v7553
        %v7750 = vunpack.c.l.b16 %v7554
        %v7751 = vunpack.c.l.b16 %v7555
        %v7752 = vunpack.c.l.b16 %v7556
        %v7753 = vunpack.c.l.b16 %v7557
        %v7754 = vunpack.c.l.b16 %v7558
        %v7755 = vunpack.c.l.b16 %v7559
        %v7756 = vunpack.c.l.b16 %v7560
        %v7757 = vunpack.c.l.b16 %v7561
        %v7758 = vunpack.c.l.b16 %v7562
        %v7759 = vunpack.c.l.b16 %v7563
        %v7760 = vunpack.c.l.b16 %v7564
        %v7761 = vunpack.c.l.b16 %v7565
        %v7762 = vunpack.c.l.b16 %v7566
        %v7763 = vunpack.c.l.b16 %v7567
        %v7764 = vunpack.c.l.b16 %v7568
        %v7765 = vunpack.c.l.b16 %v7569
        %v7766 = vunpack.c.l.b16 %v7570
        %v7767 = vunpack.c.l.b16 %v7571
        %v7768 = vunpack.c.l.b16 %v7572
        %v7769 = vunpack.c.l.b16 %v7573
        %v7770 = vunpack.c.l.b16 %v7574
        %v7771 = vunpack.c.l.b16 %v7575
        %v7772 = vunpack.c.l.b16 %v7576
        %v7773 = vunpack.c.l.b16 %v7577
        %v7774 = vunpack.c.l.b16 %v7578
        %v7775 = vunpack.c.l.b16 %v7579
        %v7776 = vunpack.c.l.b16 %v7580
        %v7777 = vunpack.c.l.b16 %v7581
        %v7778 = vunpack.c.l.b16 %v7582
        %v7779 = vunpack.c.l.b16 %v7583
        %v7780 = vunpack.c.l.b16 %v7584
        %v7781 = vunpack.c.l.b16 %v7585
        %v7782 = vunpack.c.l.b16 %v7586
        %v7783 = vunpack.c.l.b16 %v7587
        %v7784 = vunpack.c.l.b16 %v7588
        %v7785 = vunpack.c.l.b16 %v7589
        %v7786 = vunpack.c.l.b16 %v7590
        %v7787 = vunpack.c.l.b16 %v7591
        %v7788 = vunpack.c.l.b16 %v7592
        %v7789 = vunpack.c.l.b16 %v7593
        %v7790 = vunpack.c.l.b16 %v7594
        %v7791 = vunpack.c.l.b16 %v7595
        %v7792 = vunpack.c.l.b16 %v7596
        %v7793 = vunpack.c.l.b16 %v7597
        %v7794 = vunpack.c.l.b16 %v7598
        %v7795 = vunpack.c.l.b16 %v7599
        %v7796 = vunpack.c.l.b16 %v7600
        %v7797 = vunpack.c.l.b16 %v7601
        %v7798 = vunpack.c.l.b16 %v7602
        %v7799 = vunpack.c.l.b16 %v7603
        %v7800 = vunpack.c.l.b16 %v7604
        %v7801 = vunpack.c.l.b16 %v7605
        %v7802 = vunpack.c.l.b16 %v7606
        %v7803 = vunpack.c.l.b16 %v7607
        %v7804 = vunpack.c.l.b16 %v7608
        %v7805 = vunpack.c.l.b16 %v7609
        %v7806 = vunpack.c.l.b16 %v7610
        %v7807 = vunpack.c.l.b16 %v7611
        %v7808 = vunpack.c.l.b16 %v7612
        %v7809 = vunpack.c.l.b16 %v7613
        %v7810 = vunpack.c.l.b16 %v7614
        %v7811 = vunpack.c.l.b16 %v7615
        %v7812 = vunpack.c.l.b16 %v7616
        %v7813 = vunpack.c.l.b16 %v7617
        %v7814 = vunpack.c.l.b16 %v7618
        %v7815 = vunpack.c.l.b16 %v7619
        %v7816 = vunpack.c.l.b16 %v7620
        %v7817 = vunpack.c.l.b16 %v7621
        %v7818 = vunpack.c.l.b16 %v7622
        %v7819 = vunpack.c.l.b16 %v7623
        %v7820 = vunpack.c.l.b16 %v7624
        %v7821 = vunpack.c.l.b16 %v7625
        %v7822 = vunpack.c.l.b16 %v7626
        %v7823 = vunpack.c.l.b16 %v7627
        %v7824 = vunpack.c.l.b16 %v7628
        %v7825 = vunpack.c.l.b16 %v7629
        %v7826 = vunpack.c.l.b16 %v7630
        %v7827 = vunpack.c.l.b16 %v7631
        %v7828 = vunpack.c.l.b16 %v7632
        %v7829 = vunpack.c.l.b16 %v7633
        %v7830 = vunpack.c.l.b16 %v7634
        %v7831 = vunpack.c.l.b16 %v7635
        %v7832 = vunpack.c.l.b16 %v7636
        %v7833 = vunpack.c.l.b16 %v7637
        %v7834 = vunpack.c.l.b16 %v7638
        %v7835 = vunpack.c.l.b16 %v7639
        %v7836 = vunpack.c.l.b16 %v7640
        %v7837 = vunpack.c.l.b16 %v7641
        %v7838 = vpack.c.b16 %v7743, %v7742
        %v7839 = vpack.c.b16 %v7745, %v7744
        %v7840 = vpack.c.b16 %v7747, %v7746
        %v7841 = vpack.c.b16 %v7749, %v7748
        %v7842 = vpack.c.b16 %v7751, %v7750
        %v7843 = vpack.c.b16 %v7753, %v7752
        %v7844 = vpack.c.b16 %v7755, %v7754
        %v7845 = vpack.c.b16 %v7757, %v7756
        %v7846 = vpack.c.b16 %v7759, %v7758
        %v7847 = vpack.c.b16 %v7761, %v7760
        %v7848 = vpack.c.b16 %v7763, %v7762
        %v7849 = vpack.c.b16 %v7765, %v7764
        %v7850 = vpack.c.b16 %v7767, %v7766
        %v7851 = vpack.c.b16 %v7769, %v7768
        %v7852 = vpack.c.b16 %v7771, %v7770
        %v7853 = vpack.c.b16 %v7773, %v7772
        %v7854 = vpack.c.b16 %v7775, %v7774
        %v7855 = vpack.c.b16 %v7777, %v7776
        %v7856 = vpack.c.b16 %v7779, %v7778
        %v7857 = vpack.c.b16 %v7781, %v7780
        %v7858 = vpack.c.b16 %v7783, %v7782
        %v7859 = vpack.c.b16 %v7785, %v7784
        %v7860 = vpack.c.b16 %v7787, %v7786
        %v7861 = vpack.c.b16 %v7789, %v7788
        %v7862 = vpack.c.b16 %v7791, %v7790
        %v7863 = vpack.c.b16 %v7793, %v7792
        %v7864 = vpack.c.b16 %v7795, %v7794
        %v7865 = vpack.c.b16 %v7797, %v7796
        %v7866 = vpack.c.b16 %v7799, %v7798
        %v7867 = vpack.c.b16 %v7801, %v7800
        %v7868 = vpack.c.b16 %v7803, %v7802
        %v7869 = vpack.c.b16 %v7805, %v7804
        %v7870 = vpack.c.b16 %v7807, %v7806
        %v7871 = vpack.c.b16 %v7809, %v7808
        %v7872 = vpack.c.b16 %v7811, %v7810
        %v7873 = vpack.c.b16 %v7813, %v7812
        %v7874 = vpack.c.b16 %v7815, %v7814
        %v7875 = vpack.c.b16 %v7817, %v7816
        %v7876 = vpack.c.b16 %v7819, %v7818
        %v7877 = vpack.c.b16 %v7821, %v7820
        %v7878 = vpack.c.b16 %v7823, %v7822
        %v7879 = vpack.c.b16 %v7825, %v7824
        %v7880 = vpack.c.b16 %v7827, %v7826
        %v7881 = vpack.c.b16 %v7829, %v7828
        %v7882 = vpack.c.b16 %v7831, %v7830
        %v7883 = vpack.c.b16 %v7833, %v7832
        %v7884 = vpack.c.b16 %v7835, %v7834
        %v7885 = vpack.c.b16 %v7837, %v7836
        %7934 = vmatpush.bf16.msra.mxu0 %v7845
        %7935 = vmatpush.bf16.msra.mxu0 %v7844
        %7936 = vmatpush.bf16.msra.mxu0 %v7843
        %7937 = vmatpush.bf16.msra.mxu0 %v7842
        %7938 = vmatpush.bf16.msra.mxu0 %v7841
        %7939 = vmatpush.bf16.msra.mxu0 %v7840
        %7940 = vmatpush.bf16.msra.mxu0 %v7839
        %7941 = vmatpush.bf16.msra.mxu0 %v7838
        %7942 = vmatmul.bf16.gmra.mxu0 %v7540
        %v7943 = vpop.f32.mrf.mxu0
        %v7944 = vadd.f32 %v7644, %v7943
        %v7945 = vpop.f32.mrf.mxu0
        %7946 = vdwg.mxu0
        %7947 = vmatpush.bf16.msra.mxu0 %v7853
        %7948 = vmatpush.bf16.msra.mxu0 %v7852
        %7949 = vmatpush.bf16.msra.mxu0 %v7851
        %7950 = vmatpush.bf16.msra.mxu0 %v7850
        %7951 = vmatpush.bf16.msra.mxu0 %v7849
        %7952 = vmatpush.bf16.msra.mxu0 %v7848
        %7953 = vmatpush.bf16.msra.mxu0 %v7847
        %7954 = vmatpush.bf16.msra.mxu0 %v7846
        %7955 = vmatmul.bf16.gmra.mxu0 %v7541
        %v7956 = vpop.f32.mrf.mxu0
        %v7957 = vadd.f32 %v7944, %v7956
        %v7958 = vpop.f32.mrf.mxu0
        %7959 = vdwg.mxu0
        %7960 = vmatpush.bf16.msra.mxu0 %v7861
        %7961 = vmatpush.bf16.msra.mxu0 %v7860
        %7962 = vmatpush.bf16.msra.mxu0 %v7859
        %7963 = vmatpush.bf16.msra.mxu0 %v7858
        %7964 = vmatpush.bf16.msra.mxu0 %v7857
        %7965 = vmatpush.bf16.msra.mxu0 %v7856
        %7966 = vmatpush.bf16.msra.mxu0 %v7855
        %7967 = vmatpush.bf16.msra.mxu0 %v7854
        %7968 = vmatmul.bf16.gmra.mxu0 %v7542
        %v7969 = vpop.f32.mrf.mxu0
        %v7970 = vadd.f32 %v7957, %v7969
        %v7971 = vpop.f32.mrf.mxu0
        %7972 = vdwg.mxu0
        %7973 = vmatpush.bf16.msra.mxu0 %v7869
        %7974 = vmatpush.bf16.msra.mxu0 %v7868
        %7975 = vmatpush.bf16.msra.mxu0 %v7867
        %7976 = vmatpush.bf16.msra.mxu0 %v7866
        %7977 = vmatpush.bf16.msra.mxu0 %v7865
        %7978 = vmatpush.bf16.msra.mxu0 %v7864
        %7979 = vmatpush.bf16.msra.mxu0 %v7863
        %7980 = vmatpush.bf16.msra.mxu0 %v7862
        %7981 = vmatmul.bf16.gmra.mxu0 %v7543
        %v7982 = vpop.f32.mrf.mxu0
        %v7983 = vadd.f32 %v7970, %v7982
        %v7984 = vpop.f32.mrf.mxu0
        %7985 = vdwg.mxu0
        %7986 = vmatpush.bf16.msra.mxu0 %v7877
        %7987 = vmatpush.bf16.msra.mxu0 %v7876
        %7988 = vmatpush.bf16.msra.mxu0 %v7875
        %7989 = vmatpush.bf16.msra.mxu0 %v7874
        %7990 = vmatpush.bf16.msra.mxu0 %v7873
        %7991 = vmatpush.bf16.msra.mxu0 %v7872
        %7992 = vmatpush.bf16.msra.mxu0 %v7871
        %7993 = vmatpush.bf16.msra.mxu0 %v7870
        %7994 = vmatmul.bf16.gmra.mxu0 %v7544
        %v7995 = vpop.f32.mrf.mxu0
        %v7996 = vadd.f32 %v7983, %v7995
        %v7997 = vpop.f32.mrf.mxu0
        %7998 = vdwg.mxu0
        %7999 = vmatpush.bf16.msra.mxu0 %v7885
        %8000 = vmatpush.bf16.msra.mxu0 %v7884
        %8001 = vmatpush.bf16.msra.mxu0 %v7883
        %8002 = vmatpush.bf16.msra.mxu0 %v7882
        %8003 = vmatpush.bf16.msra.mxu0 %v7881
        %8004 = vmatpush.bf16.msra.mxu0 %v7880
        %8005 = vmatpush.bf16.msra.mxu0 %v7879
        %8006 = vmatpush.bf16.msra.mxu0 %v7878
        %8007 = vmatmul.bf16.gmra.mxu0 %v7545
        %v8008 = vpop.f32.mrf.mxu0
        %v8009 = vadd.f32 %v7996, %v8008
        %v8010 = vpop.f32.mrf.mxu0
        %8011 = vdwg.mxu0
        %8012 = vst [vmem:[%s392] sm:$0xff] %v8009
        %s8013 = sand.u32 %s187, 1
        %s8014 = scalar_lea.sflag [#allocation4], %s8013
        %s8015 = sand.u32 %s187, 1
        %s8016 = smul.addr %s8015, 8
        %s8017 = scalar_lea.vmem [#allocation14], %s8016
        // Predicated region
        $region77: #{tpu_custom_call.1} parent=47 // pred_check
          %p8018 = pneg %p197
        $region78: #{tpu_custom_call.1} parent=47 // pred_check_branch
          %8020 = sbr.rel (%p8018) target = $region80
        $region79: #{tpu_custom_call.1} parent=47 // pred_region
          %8022 = vsyncadd %s8014, 0
          %s8023 = smul.addr %s27, 8
          %s8024 = scalar_lea.hbm %s7, %s8023
          %s8026 = sshll.u32 %s8017, 4
          %s8027 = int_to_ptr.vmem [resolvable:$true] %s8026
          %s8028 = sshll.u32 %s8024, 4
          %s8029 = int_to_ptr.hbm [resolvable:$true] %s8028
          %8031 = dma.vmem_to_hbm [thread:$0]  %s8027, 128, %s8029, %s8014
        $region80: #{tpu_custom_call.1} parent=47 // pred_fallthru
          _
      $region48: #{tpu_custom_call.1} parent=5 // pred_fallthru
        _
      %p8032 = scmp.le.s32.totalorder 2, %s22
      // Predicated region
      $region81: #{tpu_custom_call.1} parent=5 // pred_check
        %p8033 = pneg %p8032
      $region82: #{tpu_custom_call.1} parent=5 // pred_check_branch
        %8035 = sbr.rel (%p8033) target = $region84
      $region83: #{tpu_custom_call.1} parent=5 // pred_region
        %s8036 = ssub.s32 %s22, 2
        // Predicated region
        $region85: #{tpu_custom_call.1} parent=83 // pred_check
          %p8037 = pneg %p203
        $region86: #{tpu_custom_call.1} parent=83 // pred_check_branch
          %8039 = sbr.rel (%p8037) target = $region88
        $region87: #{tpu_custom_call.1} parent=83 // pred_region
          %s8040 = sand.u32 %s188, 1
          %s8041 = scalar_lea.sflag [#allocation4], %s8040
          %s8042 = sand.u32 %s188, 1
          %s8043 = smul.addr %s8042, 8
          %s8044 = scalar_lea.vmem [#allocation14], %s8043
          %8046 = dma.done %s8041, 128
        $region88: #{tpu_custom_call.1} parent=83 // pred_fallthru
          _
      $region84: #{tpu_custom_call.1} parent=5 // pred_fallthru
        _
    $region6: #{tpu_custom_call.1} parent=1 // loop_footer
      %s26 = sadd.s32 1, %s22
    $region7: #{tpu_custom_call.1} parent=1 // loop_footer_branch
      %21 = sbr.rel target = $region3
    $region8: #{tpu_custom_call.1} parent=1 // loop_exit
      _
    %8047 = vsyncpa [#allocation3], 1
    %s8048 = scalar_lea.sflag [#allocation3], 1
    %8049 = vsyncpa %s8048, 1
    %8050 = vsyncpa [#allocation6], 1
    %8051 = vsyncpa [#allocation9], 1
    %8052 = vsyncpa [#allocation12], 1
    %8053 = vsyncpa [#allocation4], 1
    %s8054 = scalar_lea.sflag [#allocation4], 1
    %8055 = vsyncpa %s8054, 1

</llo_original>
